<compile_context>
chip_gen: v7x
topology: tpu7x:2x2x1
jax: 0.10.0
libtpu: 0.0.40
codegen_flags: <defaults>
</compile_context>

<pallas_src>
import numpy as np
import jax
import jax.numpy as jnp
from jax.experimental import pallas as pl
from jax.experimental.pallas import tpu as pltpu

F32 = jnp.float32


# ----------------------------------------------------------------------------
# small in-kernel helpers
# ----------------------------------------------------------------------------
def _silu(x):
    return x * (1.0 / (1.0 + jnp.exp(-x)))


def _sortnet(vals):
    """Ascending elementwise sort of a short list of equal-shaped arrays
    (odd-even transposition network — exact equivalent of torch.sort)."""
    vals = list(vals)
    m = len(vals)
    for p in range(m):
        for i in range(p % 2, m - 1, 2):
            lo = jnp.minimum(vals[i], vals[i + 1])
            hi = jnp.maximum(vals[i], vals[i + 1])
            vals[i], vals[i + 1] = lo, hi
    return vals


def _dot(a, b):
    return jnp.dot(a, b, preferred_element_type=F32)


# ----------------------------------------------------------------------------
# fused forward kernel
# ----------------------------------------------------------------------------
def make_fused_kernel(n_layers, n_nodes, batch, hidden):
    m = n_nodes - 1
    N = batch * n_nodes
    E = N * m
    H = hidden

    def kernel(*refs):
        (c_row_ref, c_col_ref, nbx_ref, nby_ref, nbz_ref,      # geometry data
         h0_ref, ea_ref, nmask_ref, emask_ref,                 # features / masks
         srow_ref, scol_ref, pseg_ref, pg_ref,                 # constant 0/1 matrices
         embed_w, embed_b, A_proj, w_proj, A_seg, w_seg,       # shared weights
         we1_hr, we1_hc, we1_g, we1_e, we1_a, be1,             # per-layer edge MLP
         we2, be2,
         wn1_h, wn1_a, wn1_x, bn1, wn2, bn2,                   # per-layer node MLP
         wd1, bd1, wd2, bd2,                                   # node decoder
         A_g, w_g,                                             # graph sort-embed
         wg1, bg1, wg2, bg2, wg3, bg3,                         # graph decoder
         out_ref) = refs

        # ======================================================================
        # geometry (coord2gram) — coords are layer-invariant, compute ONCE
        # ======================================================================
        cr = c_row_ref[...]; cc = c_col_ref[...]
        rx, ry, rz = cr[:, 0:1], cr[:, 1:2], cr[:, 2:3]
        sx, sy, sz = cc[:, 0:1], cc[:, 1:2], cc[:, 2:3]
        # perpendicular vector = cross(coord[row], coord[col])
        px = ry * sz - rz * sy
        py = rz * sx - rx * sz
        pz = rx * sy - ry * sx

        def norm3(ax, ay, az):
            return jnp.sqrt(ax * ax + ay * ay + az * az)

        n_p = norm3(px, py, pz)
        n_r = norm3(rx, ry, rz)
        n_c = norm3(sx, sy, sz)
        d_pr = norm3(px - rx, py - ry, pz - rz)
        d_pc = norm3(px - sx, py - sy, pz - sz)
        d_rc = norm3(rx - sx, ry - sy, rz - sz)
        # flattened upper-gram (rows/cols = perp, coord[row], coord[col]; diag = norms)
        gram_cols = [n_p, d_pr, d_pc, d_pr, n_r, d_rc, d_pc, d_rc, n_c]  # 9 x (E,1)

        # distances from the 3 frame vectors to the m neighbours — (E, m) planes
        nbx = nbx_ref[...]; nby = nby_ref[...]; nbz = nbz_ref[...]
        d0 = norm3(px - nbx, py - nby, pz - nbz)
        d1 = norm3(rx - nbx, ry - nby, rz - nbz)
        d2 = norm3(sx - nbx, sy - nby, sz - nbz)

        q = ((jnp.abs(d0) + jnp.abs(d1) + jnp.abs(d2)) != 0.0).astype(F32)  # (E,m)
        k = jnp.sum(q, axis=1, keepdims=True)                               # (E,1)

        Ap = A_proj[...]   # (3, H)
        wp = w_proj[...]   # (m, H)
        Ap0, Ap1, Ap2 = Ap[0:1, :], Ap[1:2, :], Ap[2:3, :]    # hoisted row slices
        prods = []
        for j in range(m):
            pj = (d0[:, j:j + 1] * Ap0
                  + d1[:, j:j + 1] * Ap1
                  + d2[:, j:j + 1] * Ap2)                                    # (E,H)
            prods.append(jnp.where(q[:, j:j + 1] == 0.0, jnp.inf, pj))

        # interpolate_weights — guarded denominator (reference NaNs for k<=1)
        jr = jax.lax.broadcasted_iota(jnp.int32, (1, m), 1).astype(F32)      # (1,m)
        denom = jnp.maximum(k - 1.0, 1.0)                                    # (E,1)
        w_eff = []
        for i in range(m):
            coef = jnp.maximum(1.0 - jnp.abs(i * (m - 1) / denom - jr), 0.0)  # (E,m)
            w_eff.append(_dot(coef, wp))                                       # (E,H)

        s = _sortnet(prods)
        geo_emb = jnp.where(s[0] == jnp.inf, 0.0, s[0]) * w_eff[0]
        for r in range(1, m):
            geo_emb = geo_emb + jnp.where(s[r] == jnp.inf, 0.0, s[r]) * w_eff[r]

        # ======================================================================
        # initial node embedding + layer-invariant operands
        # ======================================================================
        h0 = h0_ref[...]
        h = _dot(h0, embed_w[...]) + embed_b[...]          # (N, H)

        Srow = srow_ref[...]; Scol = scol_ref[...]
        Pseg = pseg_ref[...]
        Aseg = A_seg[...]; wseg = w_seg[...]
        ea = ea_ref[...]; emask = emask_ref[...]

        # ======================================================================
        # E_GCL_mask layers (Python-unrolled; everything stays in VMEM/vregs)
        # ======================================================================
        for l in range(n_layers):
            # --- edge MLP: split first-layer matmuls, no concat ---------------
            pre = (_dot(Srow, _dot(h, we1_hr[l]))     # h[row]  contribution
                   + _dot(Scol, _dot(h, we1_hc[l]))   # h[col]  contribution
                   + _dot(geo_emb, we1_e[l])          # geometric embedding
                   + _dot(ea, we1_a[l])               # edge_attr
                   + be1[l])
            wgm = we1_g[l]                            # (9, H): gram block
            for c in range(9):
                pre = pre + gram_cols[c] * wgm[c:c + 1, :]
            y = _silu(pre)
            edge_feat = _silu(_dot(y, we2[l]) + be2[l]) * emask      # (E, H)

            # --- segment sort-embedding: one batched dot + aligned slices -----
            pe = _dot(Pseg, _dot(edge_feat, Aseg))    # (E,H), slot-major rows
            seg = [pe[j * N:(j + 1) * N, :] for j in range(m)]       # m x (N,H)
            sseg = _sortnet(seg)
            agg = sseg[0] * wseg[0:1, :]
            for r in range(1, m):
                agg = agg + sseg[r] * wseg[r:r + 1, :]

            # --- node MLP (split matmuls for cat([h, agg, h0])) + residual ----
            pre_n = (_dot(h, wn1_h[l]) + _dot(agg, wn1_a[l])
                     + _dot(h0, wn1_x[l]) + bn1[l])
            h = h + _dot(_silu(pre_n), wn2[l]) + bn2[l]

        # ======================================================================
        # node decoder + node mask
        # ======================================================================
        hd = _dot(_silu(_dot(h, wd1[...]) + bd1[...]), wd2[...]) + bd2[...]
        hd = hd * nmask_ref[...]

        # ======================================================================
        # graph-level sort-embedding + graph decoder
        # ======================================================================
        gp = _dot(pg_ref[...], _dot(hd, A_g[...]))    # (N,H), node-slot-major
        gcols = [gp[j * batch:(j + 1) * batch, :] for j in range(n_nodes)]
        gsort = _sortnet(gcols)
        wgv = w_g[...]
        gemb = gsort[0] * wgv[0:1, :]
        for r in range(1, n_nodes):
            gemb = gemb + gsort[r] * wgv[r:r + 1, :]

        z = _silu(_dot(gemb, wg1[...]) + bg1[...])
        z = _silu(_dot(z, wg2[...]) + bg2[...])
        out_ref[...] = _dot(z, wg3[...]) + bg3[...]

    return kernel


# ----------------------------------------------------------------------------
# constant selection / permutation matrices (built once from the static edges)
# ----------------------------------------------------------------------------
def build_edge_constants(row, col, n_nodes, batch):
    row = np.asarray(row); col = np.asarray(col)
    N = batch * n_nodes
    m = n_nodes - 1
    E = row.shape[0]
    S_row = np.zeros((E, N), np.float32); S_row[np.arange(E), row] = 1.0
    S_col = np.zeros((E, N), np.float32); S_col[np.arange(E), col] = 1.0
    # (P_seg @ z)[j*N + n] = z[n*m + j]  → slot-major regroup of per-node edges
    P_seg = np.zeros((E, E), np.float32)
    for n in range(N):
        for j in range(m):
            P_seg[j * N + n, n * m + j] = 1.0
    # (P_g @ z)[j*batch + b] = z[b*n_nodes + j] → node-slot-major per-graph regroup
    P_g = np.zeros((N, N), np.float32)
    for b in range(batch):
        for j in range(n_nodes):
            P_g[j * batch + b, b * n_nodes + j] = 1.0
    return (jnp.asarray(S_row), jnp.asarray(S_col),
            jnp.asarray(P_seg), jnp.asarray(P_g))


# ----------------------------------------------------------------------------
# parameters (deterministic synthetic init, per-layer blocks stacked on axis 0)
# ----------------------------------------------------------------------------
def init_params(key, in_node_nf, in_edge_nf, hidden, n_nodes, n_layers):
    m = n_nodes - 1
    H = hidden
    keys = iter(jax.random.split(key, 128))

    def W(shape, scale=None):
        if scale is None:
            scale = float(shape[0]) ** -0.5
        return (scale * jax.random.normal(next(keys), shape, dtype=F32)).astype(F32)

    def Z(shape):
        return jnp.zeros(shape, F32)

    def WL(shape, scale=None):
        return jnp.stack([W(shape, scale) for _ in range(n_layers)], axis=0)

    p = {}
    p['embed_w'] = W((in_node_nf, H)); p['embed_b'] = Z((1, H))
    # geometric (varying-set-size) sort-embedding — shared across layers
    p['A_proj'] = W((3, H), 1.0); p['w_proj'] = W((m, H), 1.0)
    # segment (edge-aggregation) sort-embedding — shared across layers
    p['A_seg'] = W((H, H)); p['w_seg'] = W((m, H), 1.0)

    es = float(2 * H + 9 + H + in_edge_nf) ** -0.5
    ns = float(2 * H + in_node_nf) ** -0.5
    p['we1_hr'] = WL((H, H), es); p['we1_hc'] = WL((H, H), es)
    p['we1_g'] = WL((9, H), es);  p['we1_e'] = WL((H, H), es)
    p['we1_a'] = WL((in_edge_nf, H), es); p['be1'] = Z((n_layers, 1, H))
    p['we2'] = WL((H, H)); p['be2'] = Z((n_layers, 1, H))
    p['wn1_h'] = WL((H, H), ns); p['wn1_a'] = WL((H, H), ns)
    p['wn1_x'] = WL((in_node_nf, H), ns); p['bn1'] = Z((n_layers, 1, H))
    p['wn2'] = WL((H, H)); p['bn2'] = Z((n_layers, 1, H))

    p['wd1'] = W((H, H)); p['bd1'] = Z((1, H))
    p['wd2'] = W((H, H)); p['bd2'] = Z((1, H))
    p['A_g'] = W((H, H)); p['w_g'] = W((n_nodes, H), 1.0)
    p['wg1'] = W((H, H)); p['bg1'] = Z((1, H))
    p['wg2'] = W((H, H)); p['bg2'] = Z((1, H))
    p['wg3'] = W((H, 1)); p['bg3'] = Z((1, 1))
    return p


# ----------------------------------------------------------------------------
# forward (one fused pallas_call)
# ----------------------------------------------------------------------------
def egnn_forward(x, h0, params, edges, edge_attr, node_mask, edge_mask,
                 n_nodes, batch):
    row, col = edges
    N = h0.shape[0]
    m = n_nodes - 1
    H = params['wd1'].shape[0]
    n_layers = int(params['we2'].shape[0])

    # one-time coordinate gathers (static indices, coords fixed across layers)
    c_row = x[row]                         # (E, 3)
    c_col = x[col]                         # (E, 3)
    neighbors = col.reshape(N, m)          # neighbours per source node
    nb = x[neighbors[row]]                 # (E, m, 3)
    nbx, nby, nbz = nb[..., 0], nb[..., 1], nb[..., 2]

    S_row, S_col, P_seg, P_g = build_edge_constants(row, col, n_nodes, batch)

    args = (
        c_row, c_col, nbx, nby, nbz, h0, edge_attr, node_mask, edge_mask,
        S_row, S_col, P_seg, P_g,
        params['embed_w'], params['embed_b'],
        params['A_proj'], params['w_proj'],
        params['A_seg'], params['w_seg'],
        params['we1_hr'], params['we1_hc'], params['we1_g'],
        params['we1_e'], params['we1_a'], params['be1'],
        params['we2'], params['be2'],
        params['wn1_h'], params['wn1_a'], params['wn1_x'], params['bn1'],
        params['wn2'], params['bn2'],
        params['wd1'], params['bd1'], params['wd2'], params['bd2'],
        params['A_g'], params['w_g'],
        params['wg1'], params['bg1'], params['wg2'], params['bg2'],
        params['wg3'], params['bg3'],
    )

    vmem = pl.BlockSpec(memory_space=pltpu.MemorySpace.VMEM)
    return pl.pallas_call(
        make_fused_kernel(n_layers, n_nodes, batch, H),
        out_shape=jax.ShapeDtypeStruct((batch, 1), F32),
        in_specs=[vmem] * len(args),
        out_specs=vmem,
        compiler_params=pltpu.CompilerParams(
            vmem_limit_bytes=32 * 1024 * 1024),
    )(*args)


# ----------------------------------------------------------------------------
# main
# ----------------------------------------------------------------------------
if __name__ == "__main__":
    B, n_nodes = 2, 4
    in_node_nf, in_edge_nf, hidden, n_layers = 5, 2, 32, 4
    N = B * n_nodes

    # fully connected (no self-loop) edges per graph, sorted by source node
    rows, cols = [], []
    for b in range(B):
        for i in range(n_nodes):
            for j in range(n_nodes):
                if i != j:
                    rows.append(b * n_nodes + i)
                    cols.append(b * n_nodes + j)
    row = jnp.array(rows, dtype=jnp.int32)
    col = jnp.array(cols, dtype=jnp.int32)
    E = int(row.shape[0])

    key = jax.random.PRNGKey(0)
    k_x, k_h0, k_ea, k_p = jax.random.split(key, 4)
    x = jax.random.normal(k_x, (N, 3), dtype=F32)                 # coordinates
    h0 = jax.random.normal(k_h0, (N, in_node_nf), dtype=F32)      # node feats
    edge_attr = jax.random.normal(k_ea, (E, in_edge_nf), dtype=F32)
    node_mask = jnp.ones((N, 1), F32).at[3, 0].set(0.0)
    edge_mask = (node_mask[row] * node_mask[col]).astype(F32)

    params = init_params(k_p, in_node_nf, in_edge_nf, hidden, n_nodes, n_layers)

    pred = egnn_forward(x, h0, params, (row, col), edge_attr,
                        node_mask, edge_mask, n_nodes, B)
    pred = jax.block_until_ready(pred)
    assert pred.shape == (B, 1) and bool(jnp.all(jnp.isfinite(pred)))
    print("KERNEL_OK")
</pallas_src>

<mosaic_0001>
module attributes {stable_mosaic.version = 11 : i64} {
  func.func @kernel(%arg0: memref<24x3xf32, #tpu.memory_space<vmem>>, %arg1: memref<24x3xf32, #tpu.memory_space<vmem>>, %arg2: memref<24x3xf32, #tpu.memory_space<vmem>>, %arg3: memref<24x3xf32, #tpu.memory_space<vmem>>, %arg4: memref<24x3xf32, #tpu.memory_space<vmem>>, %arg5: memref<8x5xf32, #tpu.memory_space<vmem>>, %arg6: memref<24x2xf32, #tpu.memory_space<vmem>>, %arg7: memref<8x1xf32, #tpu.memory_space<vmem>>, %arg8: memref<24x1xf32, #tpu.memory_space<vmem>>, %arg9: memref<24x8xf32, #tpu.memory_space<vmem>>, %arg10: memref<24x8xf32, #tpu.memory_space<vmem>>, %arg11: memref<24x24xf32, #tpu.memory_space<vmem>>, %arg12: memref<8x8xf32, #tpu.memory_space<vmem>>, %arg13: memref<5x32xf32, #tpu.memory_space<vmem>>, %arg14: memref<1x32xf32, #tpu.memory_space<vmem>>, %arg15: memref<3x32xf32, #tpu.memory_space<vmem>>, %arg16: memref<3x32xf32, #tpu.memory_space<vmem>>, %arg17: memref<32x32xf32, #tpu.memory_space<vmem>>, %arg18: memref<3x32xf32, #tpu.memory_space<vmem>>, %arg19: memref<4x32x32xf32, #tpu.memory_space<vmem>>, %arg20: memref<4x32x32xf32, #tpu.memory_space<vmem>>, %arg21: memref<4x9x32xf32, #tpu.memory_space<vmem>>, %arg22: memref<4x32x32xf32, #tpu.memory_space<vmem>>, %arg23: memref<4x2x32xf32, #tpu.memory_space<vmem>>, %arg24: memref<4x1x32xf32, #tpu.memory_space<vmem>>, %arg25: memref<4x32x32xf32, #tpu.memory_space<vmem>>, %arg26: memref<4x1x32xf32, #tpu.memory_space<vmem>>, %arg27: memref<4x32x32xf32, #tpu.memory_space<vmem>>, %arg28: memref<4x32x32xf32, #tpu.memory_space<vmem>>, %arg29: memref<4x5x32xf32, #tpu.memory_space<vmem>>, %arg30: memref<4x1x32xf32, #tpu.memory_space<vmem>>, %arg31: memref<4x32x32xf32, #tpu.memory_space<vmem>>, %arg32: memref<4x1x32xf32, #tpu.memory_space<vmem>>, %arg33: memref<32x32xf32, #tpu.memory_space<vmem>>, %arg34: memref<1x32xf32, #tpu.memory_space<vmem>>, %arg35: memref<32x32xf32, #tpu.memory_space<vmem>>, %arg36: memref<1x32xf32, #tpu.memory_space<vmem>>, %arg37: memref<32x32xf32, #tpu.memory_space<vmem>>, %arg38: memref<4x32xf32, #tpu.memory_space<vmem>>, %arg39: memref<32x32xf32, #tpu.memory_space<vmem>>, %arg40: memref<1x32xf32, #tpu.memory_space<vmem>>, %arg41: memref<32x32xf32, #tpu.memory_space<vmem>>, %arg42: memref<1x32xf32, #tpu.memory_space<vmem>>, %arg43: memref<32x1xf32, #tpu.memory_space<vmem>>, %arg44: memref<1x1xf32, #tpu.memory_space<vmem>>, %arg45: memref<2x1xf32, #tpu.memory_space<vmem>>) attributes {dimension_semantics = [], scalar_prefetch = 0 : i64, scratch_operands = 0 : i64, tpu.core_type = #tpu.core_type<tc>} {
    %c0 = arith.constant 0 : index
    %c0_0 = arith.constant 0 : index
    %0 = vector.load %arg0[%c0, %c0_0] : memref<24x3xf32, #tpu.memory_space<vmem>>, vector<24x3xf32>
    %c0_1 = arith.constant 0 : index
    %c0_2 = arith.constant 0 : index
    %1 = vector.load %arg1[%c0_1, %c0_2] : memref<24x3xf32, #tpu.memory_space<vmem>>, vector<24x3xf32>
    %2 = vector.extract_strided_slice %0 {offsets = [0, 0], sizes = [24, 1], strides = [1, 1]} : vector<24x3xf32> to vector<24x1xf32>
    %3 = vector.extract_strided_slice %0 {offsets = [0, 1], sizes = [24, 1], strides = [1, 1]} : vector<24x3xf32> to vector<24x1xf32>
    %4 = vector.extract_strided_slice %0 {offsets = [0, 2], sizes = [24, 1], strides = [1, 1]} : vector<24x3xf32> to vector<24x1xf32>
    %5 = vector.extract_strided_slice %1 {offsets = [0, 0], sizes = [24, 1], strides = [1, 1]} : vector<24x3xf32> to vector<24x1xf32>
    %6 = vector.extract_strided_slice %1 {offsets = [0, 1], sizes = [24, 1], strides = [1, 1]} : vector<24x3xf32> to vector<24x1xf32>
    %7 = vector.extract_strided_slice %1 {offsets = [0, 2], sizes = [24, 1], strides = [1, 1]} : vector<24x3xf32> to vector<24x1xf32>
    %8 = arith.mulf %3, %7 : vector<24x1xf32>
    %9 = arith.mulf %4, %6 : vector<24x1xf32>
    %10 = arith.subf %8, %9 : vector<24x1xf32>
    %11 = arith.mulf %4, %5 : vector<24x1xf32>
    %12 = arith.mulf %2, %7 : vector<24x1xf32>
    %13 = arith.subf %11, %12 : vector<24x1xf32>
    %14 = arith.mulf %2, %6 : vector<24x1xf32>
    %15 = arith.mulf %3, %5 : vector<24x1xf32>
    %16 = arith.subf %14, %15 : vector<24x1xf32>
    %17 = arith.mulf %10, %10 : vector<24x1xf32>
    %18 = arith.mulf %13, %13 : vector<24x1xf32>
    %19 = arith.addf %17, %18 : vector<24x1xf32>
    %20 = arith.mulf %16, %16 : vector<24x1xf32>
    %21 = arith.addf %19, %20 : vector<24x1xf32>
    %22 = math.sqrt %21 : vector<24x1xf32>
    %23 = arith.mulf %2, %2 : vector<24x1xf32>
    %24 = arith.mulf %3, %3 : vector<24x1xf32>
    %25 = arith.addf %23, %24 : vector<24x1xf32>
    %26 = arith.mulf %4, %4 : vector<24x1xf32>
    %27 = arith.addf %25, %26 : vector<24x1xf32>
    %28 = math.sqrt %27 : vector<24x1xf32>
    %29 = arith.mulf %5, %5 : vector<24x1xf32>
    %30 = arith.mulf %6, %6 : vector<24x1xf32>
    %31 = arith.addf %29, %30 : vector<24x1xf32>
    %32 = arith.mulf %7, %7 : vector<24x1xf32>
    %33 = arith.addf %31, %32 : vector<24x1xf32>
    %34 = math.sqrt %33 : vector<24x1xf32>
    %35 = arith.subf %10, %2 : vector<24x1xf32>
    %36 = arith.subf %13, %3 : vector<24x1xf32>
    %37 = arith.subf %16, %4 : vector<24x1xf32>
    %38 = arith.mulf %35, %35 : vector<24x1xf32>
    %39 = arith.mulf %36, %36 : vector<24x1xf32>
    %40 = arith.addf %38, %39 : vector<24x1xf32>
    %41 = arith.mulf %37, %37 : vector<24x1xf32>
    %42 = arith.addf %40, %41 : vector<24x1xf32>
    %43 = math.sqrt %42 : vector<24x1xf32>
    %44 = arith.subf %10, %5 : vector<24x1xf32>
    %45 = arith.subf %13, %6 : vector<24x1xf32>
    %46 = arith.subf %16, %7 : vector<24x1xf32>
    %47 = arith.mulf %44, %44 : vector<24x1xf32>
    %48 = arith.mulf %45, %45 : vector<24x1xf32>
    %49 = arith.addf %47, %48 : vector<24x1xf32>
    %50 = arith.mulf %46, %46 : vector<24x1xf32>
    %51 = arith.addf %49, %50 : vector<24x1xf32>
    %52 = math.sqrt %51 : vector<24x1xf32>
    %53 = arith.subf %2, %5 : vector<24x1xf32>
    %54 = arith.subf %3, %6 : vector<24x1xf32>
    %55 = arith.subf %4, %7 : vector<24x1xf32>
    %56 = arith.mulf %53, %53 : vector<24x1xf32>
    %57 = arith.mulf %54, %54 : vector<24x1xf32>
    %58 = arith.addf %56, %57 : vector<24x1xf32>
    %59 = arith.mulf %55, %55 : vector<24x1xf32>
    %60 = arith.addf %58, %59 : vector<24x1xf32>
    %61 = math.sqrt %60 : vector<24x1xf32>
    %c0_3 = arith.constant 0 : index
    %c0_4 = arith.constant 0 : index
    %62 = vector.load %arg2[%c0_3, %c0_4] : memref<24x3xf32, #tpu.memory_space<vmem>>, vector<24x3xf32>
    %c0_5 = arith.constant 0 : index
    %c0_6 = arith.constant 0 : index
    %63 = vector.load %arg3[%c0_5, %c0_6] : memref<24x3xf32, #tpu.memory_space<vmem>>, vector<24x3xf32>
    %c0_7 = arith.constant 0 : index
    %c0_8 = arith.constant 0 : index
    %64 = vector.load %arg4[%c0_7, %c0_8] : memref<24x3xf32, #tpu.memory_space<vmem>>, vector<24x3xf32>
    %65 = vector.broadcast %10 : vector<24x1xf32> to vector<24x3xf32>
    %66 = arith.subf %65, %62 : vector<24x3xf32>
    %67 = vector.broadcast %13 : vector<24x1xf32> to vector<24x3xf32>
    %68 = arith.subf %67, %63 : vector<24x3xf32>
    %69 = vector.broadcast %16 : vector<24x1xf32> to vector<24x3xf32>
    %70 = arith.subf %69, %64 : vector<24x3xf32>
    %71 = arith.mulf %66, %66 : vector<24x3xf32>
    %72 = arith.mulf %68, %68 : vector<24x3xf32>
    %73 = arith.addf %71, %72 : vector<24x3xf32>
    %74 = arith.mulf %70, %70 : vector<24x3xf32>
    %75 = arith.addf %73, %74 : vector<24x3xf32>
    %76 = math.sqrt %75 : vector<24x3xf32>
    %77 = vector.broadcast %2 : vector<24x1xf32> to vector<24x3xf32>
    %78 = arith.subf %77, %62 : vector<24x3xf32>
    %79 = vector.broadcast %3 : vector<24x1xf32> to vector<24x3xf32>
    %80 = arith.subf %79, %63 : vector<24x3xf32>
    %81 = vector.broadcast %4 : vector<24x1xf32> to vector<24x3xf32>
    %82 = arith.subf %81, %64 : vector<24x3xf32>
    %83 = arith.mulf %78, %78 : vector<24x3xf32>
    %84 = arith.mulf %80, %80 : vector<24x3xf32>
    %85 = arith.addf %83, %84 : vector<24x3xf32>
    %86 = arith.mulf %82, %82 : vector<24x3xf32>
    %87 = arith.addf %85, %86 : vector<24x3xf32>
    %88 = math.sqrt %87 : vector<24x3xf32>
    %89 = vector.broadcast %5 : vector<24x1xf32> to vector<24x3xf32>
    %90 = arith.subf %89, %62 : vector<24x3xf32>
    %91 = vector.broadcast %6 : vector<24x1xf32> to vector<24x3xf32>
    %92 = arith.subf %91, %63 : vector<24x3xf32>
    %93 = vector.broadcast %7 : vector<24x1xf32> to vector<24x3xf32>
    %94 = arith.subf %93, %64 : vector<24x3xf32>
    %95 = arith.mulf %90, %90 : vector<24x3xf32>
    %96 = arith.mulf %92, %92 : vector<24x3xf32>
    %97 = arith.addf %95, %96 : vector<24x3xf32>
    %98 = arith.mulf %94, %94 : vector<24x3xf32>
    %99 = arith.addf %97, %98 : vector<24x3xf32>
    %100 = math.sqrt %99 : vector<24x3xf32>
    %101 = math.absf %76 : vector<24x3xf32>
    %102 = math.absf %88 : vector<24x3xf32>
    %103 = arith.addf %101, %102 : vector<24x3xf32>
    %104 = math.absf %100 : vector<24x3xf32>
    %105 = arith.addf %103, %104 : vector<24x3xf32>
    %cst = arith.constant 0.000000e+00 : f32
    %106 = vector.broadcast %cst : f32 to vector<24x3xf32>
    %107 = arith.cmpf one, %105, %106 : vector<24x3xf32>
    %108 = arith.extui %107 : vector<24x3xi1> to vector<24x3xi32>
    %109 = arith.sitofp %108 : vector<24x3xi32> to vector<24x3xf32>
    %cst_9 = arith.constant dense<0.000000e+00> : vector<24xf32>
    %110 = vector.multi_reduction <add>, %109, %cst_9 [1] : vector<24x3xf32> to vector<24xf32>
    %111 = vector.shape_cast %110 : vector<24xf32> to vector<24x1xf32>
    %c0_10 = arith.constant 0 : index
    %c0_11 = arith.constant 0 : index
    %112 = vector.load %arg15[%c0_10, %c0_11] : memref<3x32xf32, #tpu.memory_space<vmem>>, vector<3x32xf32>
    %c0_12 = arith.constant 0 : index
    %c0_13 = arith.constant 0 : index
    %113 = vector.load %arg16[%c0_12, %c0_13] : memref<3x32xf32, #tpu.memory_space<vmem>>, vector<3x32xf32>
    %114 = vector.extract_strided_slice %112 {offsets = [0, 0], sizes = [1, 32], strides = [1, 1]} : vector<3x32xf32> to vector<1x32xf32>
    %115 = vector.extract_strided_slice %112 {offsets = [1, 0], sizes = [1, 32], strides = [1, 1]} : vector<3x32xf32> to vector<1x32xf32>
    %116 = vector.extract_strided_slice %112 {offsets = [2, 0], sizes = [1, 32], strides = [1, 1]} : vector<3x32xf32> to vector<1x32xf32>
    %117 = vector.extract_strided_slice %76 {offsets = [0, 0], sizes = [24, 1], strides = [1, 1]} : vector<24x3xf32> to vector<24x1xf32>
    %118 = vector.broadcast %117 : vector<24x1xf32> to vector<24x32xf32>
    %119 = vector.broadcast %114 : vector<1x32xf32> to vector<24x32xf32>
    %120 = arith.mulf %118, %119 : vector<24x32xf32>
    %121 = vector.extract_strided_slice %88 {offsets = [0, 0], sizes = [24, 1], strides = [1, 1]} : vector<24x3xf32> to vector<24x1xf32>
    %122 = vector.broadcast %121 : vector<24x1xf32> to vector<24x32xf32>
    %123 = vector.broadcast %115 : vector<1x32xf32> to vector<24x32xf32>
    %124 = arith.mulf %122, %123 : vector<24x32xf32>
    %125 = arith.addf %120, %124 : vector<24x32xf32>
    %126 = vector.extract_strided_slice %100 {offsets = [0, 0], sizes = [24, 1], strides = [1, 1]} : vector<24x3xf32> to vector<24x1xf32>
    %127 = vector.broadcast %126 : vector<24x1xf32> to vector<24x32xf32>
    %128 = vector.broadcast %116 : vector<1x32xf32> to vector<24x32xf32>
    %129 = arith.mulf %127, %128 : vector<24x32xf32>
    %130 = arith.addf %125, %129 : vector<24x32xf32>
    %131 = vector.extract_strided_slice %109 {offsets = [0, 0], sizes = [24, 1], strides = [1, 1]} : vector<24x3xf32> to vector<24x1xf32>
    %cst_14 = arith.constant 0.000000e+00 : f32
    %132 = vector.broadcast %cst_14 : f32 to vector<24x1xf32>
    %133 = arith.cmpf oeq, %131, %132 : vector<24x1xf32>
    %cst_15 = arith.constant 0x7F800000 : f32
    %134 = vector.shape_cast %133 : vector<24x1xi1> to vector<24x1xi1>
    %135 = vector.broadcast %134 : vector<24x1xi1> to vector<24x32xi1>
    %136 = vector.broadcast %cst_15 : f32 to vector<24x32xf32>
    %137 = arith.select %135, %136, %130 : vector<24x32xi1>, vector<24x32xf32>
    %138 = vector.extract_strided_slice %76 {offsets = [0, 1], sizes = [24, 1], strides = [1, 1]} : vector<24x3xf32> to vector<24x1xf32>
    %139 = vector.broadcast %138 : vector<24x1xf32> to vector<24x32xf32>
    %140 = vector.broadcast %114 : vector<1x32xf32> to vector<24x32xf32>
    %141 = arith.mulf %139, %140 : vector<24x32xf32>
    %142 = vector.extract_strided_slice %88 {offsets = [0, 1], sizes = [24, 1], strides = [1, 1]} : vector<24x3xf32> to vector<24x1xf32>
    %143 = vector.broadcast %142 : vector<24x1xf32> to vector<24x32xf32>
    %144 = vector.broadcast %115 : vector<1x32xf32> to vector<24x32xf32>
    %145 = arith.mulf %143, %144 : vector<24x32xf32>
    %146 = arith.addf %141, %145 : vector<24x32xf32>
    %147 = vector.extract_strided_slice %100 {offsets = [0, 1], sizes = [24, 1], strides = [1, 1]} : vector<24x3xf32> to vector<24x1xf32>
    %148 = vector.broadcast %147 : vector<24x1xf32> to vector<24x32xf32>
    %149 = vector.broadcast %116 : vector<1x32xf32> to vector<24x32xf32>
    %150 = arith.mulf %148, %149 : vector<24x32xf32>
    %151 = arith.addf %146, %150 : vector<24x32xf32>
    %152 = vector.extract_strided_slice %109 {offsets = [0, 1], sizes = [24, 1], strides = [1, 1]} : vector<24x3xf32> to vector<24x1xf32>
    %cst_16 = arith.constant 0.000000e+00 : f32
    %153 = vector.broadcast %cst_16 : f32 to vector<24x1xf32>
    %154 = arith.cmpf oeq, %152, %153 : vector<24x1xf32>
    %cst_17 = arith.constant 0x7F800000 : f32
    %155 = vector.shape_cast %154 : vector<24x1xi1> to vector<24x1xi1>
    %156 = vector.broadcast %155 : vector<24x1xi1> to vector<24x32xi1>
    %157 = vector.broadcast %cst_17 : f32 to vector<24x32xf32>
    %158 = arith.select %156, %157, %151 : vector<24x32xi1>, vector<24x32xf32>
    %159 = vector.extract_strided_slice %76 {offsets = [0, 2], sizes = [24, 1], strides = [1, 1]} : vector<24x3xf32> to vector<24x1xf32>
    %160 = vector.broadcast %159 : vector<24x1xf32> to vector<24x32xf32>
    %161 = vector.broadcast %114 : vector<1x32xf32> to vector<24x32xf32>
    %162 = arith.mulf %160, %161 : vector<24x32xf32>
    %163 = vector.extract_strided_slice %88 {offsets = [0, 2], sizes = [24, 1], strides = [1, 1]} : vector<24x3xf32> to vector<24x1xf32>
    %164 = vector.broadcast %163 : vector<24x1xf32> to vector<24x32xf32>
    %165 = vector.broadcast %115 : vector<1x32xf32> to vector<24x32xf32>
    %166 = arith.mulf %164, %165 : vector<24x32xf32>
    %167 = arith.addf %162, %166 : vector<24x32xf32>
    %168 = vector.extract_strided_slice %100 {offsets = [0, 2], sizes = [24, 1], strides = [1, 1]} : vector<24x3xf32> to vector<24x1xf32>
    %169 = vector.broadcast %168 : vector<24x1xf32> to vector<24x32xf32>
    %170 = vector.broadcast %116 : vector<1x32xf32> to vector<24x32xf32>
    %171 = arith.mulf %169, %170 : vector<24x32xf32>
    %172 = arith.addf %167, %171 : vector<24x32xf32>
    %173 = vector.extract_strided_slice %109 {offsets = [0, 2], sizes = [24, 1], strides = [1, 1]} : vector<24x3xf32> to vector<24x1xf32>
    %cst_18 = arith.constant 0.000000e+00 : f32
    %174 = vector.broadcast %cst_18 : f32 to vector<24x1xf32>
    %175 = arith.cmpf oeq, %173, %174 : vector<24x1xf32>
    %cst_19 = arith.constant 0x7F800000 : f32
    %176 = vector.shape_cast %175 : vector<24x1xi1> to vector<24x1xi1>
    %177 = vector.broadcast %176 : vector<24x1xi1> to vector<24x32xi1>
    %178 = vector.broadcast %cst_19 : f32 to vector<24x32xf32>
    %179 = arith.select %177, %178, %172 : vector<24x32xi1>, vector<24x32xf32>
    %180 = tpu.iota {dimensions = array<i32: 1>} : vector<1x3xi32>
    %181 = arith.sitofp %180 : vector<1x3xi32> to vector<1x3xf32>
    %cst_20 = arith.constant 1.000000e+00 : f32
    %182 = vector.broadcast %cst_20 : f32 to vector<24x1xf32>
    %183 = arith.subf %111, %182 : vector<24x1xf32>
    %cst_21 = arith.constant 1.000000e+00 : f32
    %184 = vector.broadcast %cst_21 : f32 to vector<24x1xf32>
    %185 = arith.maximumf %183, %184 : vector<24x1xf32>
    %cst_22 = arith.constant 0.000000e+00 : f32
    %186 = vector.broadcast %cst_22 : f32 to vector<24x1xf32>
    %187 = arith.divf %186, %185 : vector<24x1xf32>
    %188 = vector.broadcast %187 : vector<24x1xf32> to vector<24x3xf32>
    %189 = vector.broadcast %181 : vector<1x3xf32> to vector<24x3xf32>
    %190 = arith.subf %188, %189 : vector<24x3xf32>
    %191 = math.absf %190 : vector<24x3xf32>
    %cst_23 = arith.constant 1.000000e+00 : f32
    %192 = vector.broadcast %cst_23 : f32 to vector<24x3xf32>
    %193 = arith.subf %192, %191 : vector<24x3xf32>
    %cst_24 = arith.constant 0.000000e+00 : f32
    %194 = vector.broadcast %cst_24 : f32 to vector<24x3xf32>
    %195 = arith.maximumf %193, %194 : vector<24x3xf32>
    %cst_25 = arith.constant dense<0.000000e+00> : vector<24x32xf32>
    %196 = tpu.matmul %195, %113, %cst_25 {dimension_numbers = #tpu.dot_dimension_numbers<[1], [0], [0], [1], [0, 0, 1, 1], [], []>} : vector<24x3xf32>, vector<3x32xf32>, vector<24x32xf32> -> vector<24x32xf32>
    %cst_26 = arith.constant 2.000000e+00 : f32
    %197 = vector.broadcast %cst_26 : f32 to vector<24x1xf32>
    %198 = arith.divf %197, %185 : vector<24x1xf32>
    %199 = vector.broadcast %198 : vector<24x1xf32> to vector<24x3xf32>
    %200 = vector.broadcast %181 : vector<1x3xf32> to vector<24x3xf32>
    %201 = arith.subf %199, %200 : vector<24x3xf32>
    %202 = math.absf %201 : vector<24x3xf32>
    %cst_27 = arith.constant 1.000000e+00 : f32
    %203 = vector.broadcast %cst_27 : f32 to vector<24x3xf32>
    %204 = arith.subf %203, %202 : vector<24x3xf32>
    %cst_28 = arith.constant 0.000000e+00 : f32
    %205 = vector.broadcast %cst_28 : f32 to vector<24x3xf32>
    %206 = arith.maximumf %204, %205 : vector<24x3xf32>
    %cst_29 = arith.constant dense<0.000000e+00> : vector<24x32xf32>
    %207 = tpu.matmul %206, %113, %cst_29 {dimension_numbers = #tpu.dot_dimension_numbers<[1], [0], [0], [1], [0, 0, 1, 1], [], []>} : vector<24x3xf32>, vector<3x32xf32>, vector<24x32xf32> -> vector<24x32xf32>
    %cst_30 = arith.constant 4.000000e+00 : f32
    %208 = vector.broadcast %cst_30 : f32 to vector<24x1xf32>
    %209 = arith.divf %208, %185 : vector<24x1xf32>
    %210 = vector.broadcast %209 : vector<24x1xf32> to vector<24x3xf32>
    %211 = vector.broadcast %181 : vector<1x3xf32> to vector<24x3xf32>
    %212 = arith.subf %210, %211 : vector<24x3xf32>
    %213 = math.absf %212 : vector<24x3xf32>
    %cst_31 = arith.constant 1.000000e+00 : f32
    %214 = vector.broadcast %cst_31 : f32 to vector<24x3xf32>
    %215 = arith.subf %214, %213 : vector<24x3xf32>
    %cst_32 = arith.constant 0.000000e+00 : f32
    %216 = vector.broadcast %cst_32 : f32 to vector<24x3xf32>
    %217 = arith.maximumf %215, %216 : vector<24x3xf32>
    %cst_33 = arith.constant dense<0.000000e+00> : vector<24x32xf32>
    %218 = tpu.matmul %217, %113, %cst_33 {dimension_numbers = #tpu.dot_dimension_numbers<[1], [0], [0], [1], [0, 0, 1, 1], [], []>} : vector<24x3xf32>, vector<3x32xf32>, vector<24x32xf32> -> vector<24x32xf32>
    %219 = arith.minimumf %137, %158 : vector<24x32xf32>
    %220 = arith.maximumf %137, %158 : vector<24x32xf32>
    %221 = arith.minimumf %220, %179 : vector<24x32xf32>
    %222 = arith.maximumf %220, %179 : vector<24x32xf32>
    %223 = arith.minimumf %219, %221 : vector<24x32xf32>
    %224 = arith.maximumf %219, %221 : vector<24x32xf32>
    %cst_34 = arith.constant 0x7F800000 : f32
    %225 = vector.broadcast %cst_34 : f32 to vector<24x32xf32>
    %226 = arith.cmpf oeq, %223, %225 : vector<24x32xf32>
    %cst_35 = arith.constant 0.000000e+00 : f32
    %227 = vector.broadcast %cst_35 : f32 to vector<24x32xf32>
    %228 = arith.select %226, %227, %223 : vector<24x32xi1>, vector<24x32xf32>
    %229 = arith.mulf %228, %196 : vector<24x32xf32>
    %cst_36 = arith.constant 0x7F800000 : f32
    %230 = vector.broadcast %cst_36 : f32 to vector<24x32xf32>
    %231 = arith.cmpf oeq, %224, %230 : vector<24x32xf32>
    %cst_37 = arith.constant 0.000000e+00 : f32
    %232 = vector.broadcast %cst_37 : f32 to vector<24x32xf32>
    %233 = arith.select %231, %232, %224 : vector<24x32xi1>, vector<24x32xf32>
    %234 = arith.mulf %233, %207 : vector<24x32xf32>
    %235 = arith.addf %229, %234 : vector<24x32xf32>
    %cst_38 = arith.constant 0x7F800000 : f32
    %236 = vector.broadcast %cst_38 : f32 to vector<24x32xf32>
    %237 = arith.cmpf oeq, %222, %236 : vector<24x32xf32>
    %cst_39 = arith.constant 0.000000e+00 : f32
    %238 = vector.broadcast %cst_39 : f32 to vector<24x32xf32>
    %239 = arith.select %237, %238, %222 : vector<24x32xi1>, vector<24x32xf32>
    %240 = arith.mulf %239, %218 : vector<24x32xf32>
    %241 = arith.addf %235, %240 : vector<24x32xf32>
    %c0_40 = arith.constant 0 : index
    %c0_41 = arith.constant 0 : index
    %242 = vector.load %arg5[%c0_40, %c0_41] : memref<8x5xf32, #tpu.memory_space<vmem>>, vector<8x5xf32>
    %c0_42 = arith.constant 0 : index
    %c0_43 = arith.constant 0 : index
    %243 = vector.load %arg13[%c0_42, %c0_43] : memref<5x32xf32, #tpu.memory_space<vmem>>, vector<5x32xf32>
    %cst_44 = arith.constant dense<0.000000e+00> : vector<8x32xf32>
    %244 = tpu.matmul %242, %243, %cst_44 {dimension_numbers = #tpu.dot_dimension_numbers<[1], [0], [0], [1], [0, 0, 1, 1], [], []>} : vector<8x5xf32>, vector<5x32xf32>, vector<8x32xf32> -> vector<8x32xf32>
    %c0_45 = arith.constant 0 : index
    %c0_46 = arith.constant 0 : index
    %245 = vector.load %arg14[%c0_45, %c0_46] : memref<1x32xf32, #tpu.memory_space<vmem>>, vector<1x32xf32>
    %246 = vector.broadcast %245 : vector<1x32xf32> to vector<8x32xf32>
    %247 = arith.addf %244, %246 : vector<8x32xf32>
    %c0_47 = arith.constant 0 : index
    %c0_48 = arith.constant 0 : index
    %248 = vector.load %arg9[%c0_47, %c0_48] : memref<24x8xf32, #tpu.memory_space<vmem>>, vector<24x8xf32>
    %c0_49 = arith.constant 0 : index
    %c0_50 = arith.constant 0 : index
    %249 = vector.load %arg10[%c0_49, %c0_50] : memref<24x8xf32, #tpu.memory_space<vmem>>, vector<24x8xf32>
    %c0_51 = arith.constant 0 : index
    %c0_52 = arith.constant 0 : index
    %250 = vector.load %arg11[%c0_51, %c0_52] : memref<24x24xf32, #tpu.memory_space<vmem>>, vector<24x24xf32>
    %c0_53 = arith.constant 0 : index
    %c0_54 = arith.constant 0 : index
    %251 = vector.load %arg17[%c0_53, %c0_54] : memref<32x32xf32, #tpu.memory_space<vmem>>, vector<32x32xf32>
    %c0_55 = arith.constant 0 : index
    %c0_56 = arith.constant 0 : index
    %252 = vector.load %arg18[%c0_55, %c0_56] : memref<3x32xf32, #tpu.memory_space<vmem>>, vector<3x32xf32>
    %c0_57 = arith.constant 0 : index
    %c0_58 = arith.constant 0 : index
    %253 = vector.load %arg6[%c0_57, %c0_58] : memref<24x2xf32, #tpu.memory_space<vmem>>, vector<24x2xf32>
    %c0_59 = arith.constant 0 : index
    %c0_60 = arith.constant 0 : index
    %254 = vector.load %arg8[%c0_59, %c0_60] : memref<24x1xf32, #tpu.memory_space<vmem>>, vector<24x1xf32>
    %c0_61 = arith.constant 0 : index
    %c0_62 = arith.constant 0 : index
    %c0_63 = arith.constant 0 : index
    %255 = vector.load %arg19[%c0_61, %c0_62, %c0_63] : memref<4x32x32xf32, #tpu.memory_space<vmem>>, vector<1x32x32xf32>
    %256 = vector.shape_cast %255 : vector<1x32x32xf32> to vector<32x32xf32>
    %cst_64 = arith.constant dense<0.000000e+00> : vector<8x32xf32>
    %257 = tpu.matmul %247, %256, %cst_64 {dimension_numbers = #tpu.dot_dimension_numbers<[1], [0], [0], [1], [0, 0, 1, 1], [], []>} : vector<8x32xf32>, vector<32x32xf32>, vector<8x32xf32> -> vector<8x32xf32>
    %cst_65 = arith.constant dense<0.000000e+00> : vector<24x32xf32>
    %258 = tpu.matmul %248, %257, %cst_65 {dimension_numbers = #tpu.dot_dimension_numbers<[1], [0], [0], [1], [0, 0, 1, 1], [], []>} : vector<24x8xf32>, vector<8x32xf32>, vector<24x32xf32> -> vector<24x32xf32>
    %c0_66 = arith.constant 0 : index
    %c0_67 = arith.constant 0 : index
    %c0_68 = arith.constant 0 : index
    %259 = vector.load %arg20[%c0_66, %c0_67, %c0_68] : memref<4x32x32xf32, #tpu.memory_space<vmem>>, vector<1x32x32xf32>
    %260 = vector.shape_cast %259 : vector<1x32x32xf32> to vector<32x32xf32>
    %cst_69 = arith.constant dense<0.000000e+00> : vector<8x32xf32>
    %261 = tpu.matmul %247, %260, %cst_69 {dimension_numbers = #tpu.dot_dimension_numbers<[1], [0], [0], [1], [0, 0, 1, 1], [], []>} : vector<8x32xf32>, vector<32x32xf32>, vector<8x32xf32> -> vector<8x32xf32>
    %cst_70 = arith.constant dense<0.000000e+00> : vector<24x32xf32>
    %262 = tpu.matmul %249, %261, %cst_70 {dimension_numbers = #tpu.dot_dimension_numbers<[1], [0], [0], [1], [0, 0, 1, 1], [], []>} : vector<24x8xf32>, vector<8x32xf32>, vector<24x32xf32> -> vector<24x32xf32>
    %263 = arith.addf %258, %262 : vector<24x32xf32>
    %c0_71 = arith.constant 0 : index
    %c0_72 = arith.constant 0 : index
    %c0_73 = arith.constant 0 : index
    %264 = vector.load %arg22[%c0_71, %c0_72, %c0_73] : memref<4x32x32xf32, #tpu.memory_space<vmem>>, vector<1x32x32xf32>
    %265 = vector.shape_cast %264 : vector<1x32x32xf32> to vector<32x32xf32>
    %cst_74 = arith.constant dense<0.000000e+00> : vector<24x32xf32>
    %266 = tpu.matmul %241, %265, %cst_74 {dimension_numbers = #tpu.dot_dimension_numbers<[1], [0], [0], [1], [0, 0, 1, 1], [], []>} : vector<24x32xf32>, vector<32x32xf32>, vector<24x32xf32> -> vector<24x32xf32>
    %267 = arith.addf %263, %266 : vector<24x32xf32>
    %c0_75 = arith.constant 0 : index
    %c0_76 = arith.constant 0 : index
    %c0_77 = arith.constant 0 : index
    %268 = vector.load %arg23[%c0_75, %c0_76, %c0_77] : memref<4x2x32xf32, #tpu.memory_space<vmem>>, vector<1x2x32xf32>
    %269 = vector.shape_cast %268 : vector<1x2x32xf32> to vector<2x32xf32>
    %cst_78 = arith.constant dense<0.000000e+00> : vector<24x32xf32>
    %270 = tpu.matmul %253, %269, %cst_78 {dimension_numbers = #tpu.dot_dimension_numbers<[1], [0], [0], [1], [0, 0, 1, 1], [], []>} : vector<24x2xf32>, vector<2x32xf32>, vector<24x32xf32> -> vector<24x32xf32>
    %271 = arith.addf %267, %270 : vector<24x32xf32>
    %c0_79 = arith.constant 0 : index
    %c0_80 = arith.constant 0 : index
    %c0_81 = arith.constant 0 : index
    %272 = vector.load %arg24[%c0_79, %c0_80, %c0_81] : memref<4x1x32xf32, #tpu.memory_space<vmem>>, vector<1x1x32xf32>
    %273 = vector.shape_cast %272 : vector<1x1x32xf32> to vector<1x32xf32>
    %274 = vector.broadcast %273 : vector<1x32xf32> to vector<24x32xf32>
    %275 = arith.addf %271, %274 : vector<24x32xf32>
    %c0_82 = arith.constant 0 : index
    %c0_83 = arith.constant 0 : index
    %c0_84 = arith.constant 0 : index
    %276 = vector.load %arg21[%c0_82, %c0_83, %c0_84] : memref<4x9x32xf32, #tpu.memory_space<vmem>>, vector<1x9x32xf32>
    %277 = vector.shape_cast %276 : vector<1x9x32xf32> to vector<9x32xf32>
    %278 = vector.extract_strided_slice %277 {offsets = [0, 0], sizes = [1, 32], strides = [1, 1]} : vector<9x32xf32> to vector<1x32xf32>
    %279 = vector.broadcast %22 : vector<24x1xf32> to vector<24x32xf32>
    %280 = vector.broadcast %278 : vector<1x32xf32> to vector<24x32xf32>
    %281 = arith.mulf %279, %280 : vector<24x32xf32>
    %282 = arith.addf %275, %281 : vector<24x32xf32>
    %283 = vector.extract_strided_slice %277 {offsets = [1, 0], sizes = [1, 32], strides = [1, 1]} : vector<9x32xf32> to vector<1x32xf32>
    %284 = vector.broadcast %43 : vector<24x1xf32> to vector<24x32xf32>
    %285 = vector.broadcast %283 : vector<1x32xf32> to vector<24x32xf32>
    %286 = arith.mulf %284, %285 : vector<24x32xf32>
    %287 = arith.addf %282, %286 : vector<24x32xf32>
    %288 = vector.extract_strided_slice %277 {offsets = [2, 0], sizes = [1, 32], strides = [1, 1]} : vector<9x32xf32> to vector<1x32xf32>
    %289 = vector.broadcast %52 : vector<24x1xf32> to vector<24x32xf32>
    %290 = vector.broadcast %288 : vector<1x32xf32> to vector<24x32xf32>
    %291 = arith.mulf %289, %290 : vector<24x32xf32>
    %292 = arith.addf %287, %291 : vector<24x32xf32>
    %293 = vector.extract_strided_slice %277 {offsets = [3, 0], sizes = [1, 32], strides = [1, 1]} : vector<9x32xf32> to vector<1x32xf32>
    %294 = vector.broadcast %43 : vector<24x1xf32> to vector<24x32xf32>
    %295 = vector.broadcast %293 : vector<1x32xf32> to vector<24x32xf32>
    %296 = arith.mulf %294, %295 : vector<24x32xf32>
    %297 = arith.addf %292, %296 : vector<24x32xf32>
    %298 = vector.extract_strided_slice %277 {offsets = [4, 0], sizes = [1, 32], strides = [1, 1]} : vector<9x32xf32> to vector<1x32xf32>
    %299 = vector.broadcast %28 : vector<24x1xf32> to vector<24x32xf32>
    %300 = vector.broadcast %298 : vector<1x32xf32> to vector<24x32xf32>
    %301 = arith.mulf %299, %300 : vector<24x32xf32>
    %302 = arith.addf %297, %301 : vector<24x32xf32>
    %303 = vector.extract_strided_slice %277 {offsets = [5, 0], sizes = [1, 32], strides = [1, 1]} : vector<9x32xf32> to vector<1x32xf32>
    %304 = vector.broadcast %61 : vector<24x1xf32> to vector<24x32xf32>
    %305 = vector.broadcast %303 : vector<1x32xf32> to vector<24x32xf32>
    %306 = arith.mulf %304, %305 : vector<24x32xf32>
    %307 = arith.addf %302, %306 : vector<24x32xf32>
    %308 = vector.extract_strided_slice %277 {offsets = [6, 0], sizes = [1, 32], strides = [1, 1]} : vector<9x32xf32> to vector<1x32xf32>
    %309 = vector.broadcast %52 : vector<24x1xf32> to vector<24x32xf32>
    %310 = vector.broadcast %308 : vector<1x32xf32> to vector<24x32xf32>
    %311 = arith.mulf %309, %310 : vector<24x32xf32>
    %312 = arith.addf %307, %311 : vector<24x32xf32>
    %313 = vector.extract_strided_slice %277 {offsets = [7, 0], sizes = [1, 32], strides = [1, 1]} : vector<9x32xf32> to vector<1x32xf32>
    %314 = vector.broadcast %61 : vector<24x1xf32> to vector<24x32xf32>
    %315 = vector.broadcast %313 : vector<1x32xf32> to vector<24x32xf32>
    %316 = arith.mulf %314, %315 : vector<24x32xf32>
    %317 = arith.addf %312, %316 : vector<24x32xf32>
    %318 = vector.extract_strided_slice %277 {offsets = [8, 0], sizes = [1, 32], strides = [1, 1]} : vector<9x32xf32> to vector<1x32xf32>
    %319 = vector.broadcast %34 : vector<24x1xf32> to vector<24x32xf32>
    %320 = vector.broadcast %318 : vector<1x32xf32> to vector<24x32xf32>
    %321 = arith.mulf %319, %320 : vector<24x32xf32>
    %322 = arith.addf %317, %321 : vector<24x32xf32>
    %cst_85 = arith.constant 0.000000e+00 : f32
    %323 = vector.broadcast %cst_85 : f32 to vector<24x32xf32>
    %324 = arith.subf %323, %322 : vector<24x32xf32>
    %325 = math.exp %324 : vector<24x32xf32>
    %cst_86 = arith.constant 1.000000e+00 : f32
    %326 = vector.broadcast %cst_86 : f32 to vector<24x32xf32>
    %327 = arith.addf %326, %325 : vector<24x32xf32>
    %cst_87 = arith.constant 1.000000e+00 : f32
    %328 = vector.broadcast %cst_87 : f32 to vector<24x32xf32>
    %329 = arith.divf %328, %327 : vector<24x32xf32>
    %330 = arith.mulf %322, %329 : vector<24x32xf32>
    %c0_88 = arith.constant 0 : index
    %c0_89 = arith.constant 0 : index
    %c0_90 = arith.constant 0 : index
    %331 = vector.load %arg25[%c0_88, %c0_89, %c0_90] : memref<4x32x32xf32, #tpu.memory_space<vmem>>, vector<1x32x32xf32>
    %332 = vector.shape_cast %331 : vector<1x32x32xf32> to vector<32x32xf32>
    %cst_91 = arith.constant dense<0.000000e+00> : vector<24x32xf32>
    %333 = tpu.matmul %330, %332, %cst_91 {dimension_numbers = #tpu.dot_dimension_numbers<[1], [0], [0], [1], [0, 0, 1, 1], [], []>} : vector<24x32xf32>, vector<32x32xf32>, vector<24x32xf32> -> vector<24x32xf32>
    %c0_92 = arith.constant 0 : index
    %c0_93 = arith.constant 0 : index
    %c0_94 = arith.constant 0 : index
    %334 = vector.load %arg26[%c0_92, %c0_93, %c0_94] : memref<4x1x32xf32, #tpu.memory_space<vmem>>, vector<1x1x32xf32>
    %335 = vector.shape_cast %334 : vector<1x1x32xf32> to vector<1x32xf32>
    %336 = vector.broadcast %335 : vector<1x32xf32> to vector<24x32xf32>
    %337 = arith.addf %333, %336 : vector<24x32xf32>
    %cst_95 = arith.constant 0.000000e+00 : f32
    %338 = vector.broadcast %cst_95 : f32 to vector<24x32xf32>
    %339 = arith.subf %338, %337 : vector<24x32xf32>
    %340 = math.exp %339 : vector<24x32xf32>
    %cst_96 = arith.constant 1.000000e+00 : f32
    %341 = vector.broadcast %cst_96 : f32 to vector<24x32xf32>
    %342 = arith.addf %341, %340 : vector<24x32xf32>
    %cst_97 = arith.constant 1.000000e+00 : f32
    %343 = vector.broadcast %cst_97 : f32 to vector<24x32xf32>
    %344 = arith.divf %343, %342 : vector<24x32xf32>
    %345 = arith.mulf %337, %344 : vector<24x32xf32>
    %346 = vector.broadcast %254 : vector<24x1xf32> to vector<24x32xf32>
    %347 = arith.mulf %345, %346 : vector<24x32xf32>
    %cst_98 = arith.constant dense<0.000000e+00> : vector<24x32xf32>
    %348 = tpu.matmul %347, %251, %cst_98 {dimension_numbers = #tpu.dot_dimension_numbers<[1], [0], [0], [1], [0, 0, 1, 1], [], []>} : vector<24x32xf32>, vector<32x32xf32>, vector<24x32xf32> -> vector<24x32xf32>
    %cst_99 = arith.constant dense<0.000000e+00> : vector<24x32xf32>
    %349 = tpu.matmul %250, %348, %cst_99 {dimension_numbers = #tpu.dot_dimension_numbers<[1], [0], [0], [1], [0, 0, 1, 1], [], []>} : vector<24x24xf32>, vector<24x32xf32>, vector<24x32xf32> -> vector<24x32xf32>
    %350 = vector.extract_strided_slice %349 {offsets = [0, 0], sizes = [8, 32], strides = [1, 1]} : vector<24x32xf32> to vector<8x32xf32>
    %351 = vector.extract_strided_slice %349 {offsets = [8, 0], sizes = [8, 32], strides = [1, 1]} : vector<24x32xf32> to vector<8x32xf32>
    %352 = vector.extract_strided_slice %349 {offsets = [16, 0], sizes = [8, 32], strides = [1, 1]} : vector<24x32xf32> to vector<8x32xf32>
    %353 = arith.minimumf %350, %351 : vector<8x32xf32>
    %354 = arith.maximumf %350, %351 : vector<8x32xf32>
    %355 = arith.minimumf %354, %352 : vector<8x32xf32>
    %356 = arith.maximumf %354, %352 : vector<8x32xf32>
    %357 = arith.minimumf %353, %355 : vector<8x32xf32>
    %358 = arith.maximumf %353, %355 : vector<8x32xf32>
    %359 = vector.extract_strided_slice %252 {offsets = [0, 0], sizes = [1, 32], strides = [1, 1]} : vector<3x32xf32> to vector<1x32xf32>
    %360 = vector.broadcast %359 : vector<1x32xf32> to vector<8x32xf32>
    %361 = arith.mulf %357, %360 : vector<8x32xf32>
    %362 = vector.extract_strided_slice %252 {offsets = [1, 0], sizes = [1, 32], strides = [1, 1]} : vector<3x32xf32> to vector<1x32xf32>
    %363 = vector.broadcast %362 : vector<1x32xf32> to vector<8x32xf32>
    %364 = arith.mulf %358, %363 : vector<8x32xf32>
    %365 = arith.addf %361, %364 : vector<8x32xf32>
    %366 = vector.extract_strided_slice %252 {offsets = [2, 0], sizes = [1, 32], strides = [1, 1]} : vector<3x32xf32> to vector<1x32xf32>
    %367 = vector.broadcast %366 : vector<1x32xf32> to vector<8x32xf32>
    %368 = arith.mulf %356, %367 : vector<8x32xf32>
    %369 = arith.addf %365, %368 : vector<8x32xf32>
    %c0_100 = arith.constant 0 : index
    %c0_101 = arith.constant 0 : index
    %c0_102 = arith.constant 0 : index
    %370 = vector.load %arg27[%c0_100, %c0_101, %c0_102] : memref<4x32x32xf32, #tpu.memory_space<vmem>>, vector<1x32x32xf32>
    %371 = vector.shape_cast %370 : vector<1x32x32xf32> to vector<32x32xf32>
    %cst_103 = arith.constant dense<0.000000e+00> : vector<8x32xf32>
    %372 = tpu.matmul %247, %371, %cst_103 {dimension_numbers = #tpu.dot_dimension_numbers<[1], [0], [0], [1], [0, 0, 1, 1], [], []>} : vector<8x32xf32>, vector<32x32xf32>, vector<8x32xf32> -> vector<8x32xf32>
    %c0_104 = arith.constant 0 : index
    %c0_105 = arith.constant 0 : index
    %c0_106 = arith.constant 0 : index
    %373 = vector.load %arg28[%c0_104, %c0_105, %c0_106] : memref<4x32x32xf32, #tpu.memory_space<vmem>>, vector<1x32x32xf32>
    %374 = vector.shape_cast %373 : vector<1x32x32xf32> to vector<32x32xf32>
    %cst_107 = arith.constant dense<0.000000e+00> : vector<8x32xf32>
    %375 = tpu.matmul %369, %374, %cst_107 {dimension_numbers = #tpu.dot_dimension_numbers<[1], [0], [0], [1], [0, 0, 1, 1], [], []>} : vector<8x32xf32>, vector<32x32xf32>, vector<8x32xf32> -> vector<8x32xf32>
    %376 = arith.addf %372, %375 : vector<8x32xf32>
    %c0_108 = arith.constant 0 : index
    %c0_109 = arith.constant 0 : index
    %c0_110 = arith.constant 0 : index
    %377 = vector.load %arg29[%c0_108, %c0_109, %c0_110] : memref<4x5x32xf32, #tpu.memory_space<vmem>>, vector<1x5x32xf32>
    %378 = vector.shape_cast %377 : vector<1x5x32xf32> to vector<5x32xf32>
    %cst_111 = arith.constant dense<0.000000e+00> : vector<8x32xf32>
    %379 = tpu.matmul %242, %378, %cst_111 {dimension_numbers = #tpu.dot_dimension_numbers<[1], [0], [0], [1], [0, 0, 1, 1], [], []>} : vector<8x5xf32>, vector<5x32xf32>, vector<8x32xf32> -> vector<8x32xf32>
    %380 = arith.addf %376, %379 : vector<8x32xf32>
    %c0_112 = arith.constant 0 : index
    %c0_113 = arith.constant 0 : index
    %c0_114 = arith.constant 0 : index
    %381 = vector.load %arg30[%c0_112, %c0_113, %c0_114] : memref<4x1x32xf32, #tpu.memory_space<vmem>>, vector<1x1x32xf32>
    %382 = vector.shape_cast %381 : vector<1x1x32xf32> to vector<1x32xf32>
    %383 = vector.broadcast %382 : vector<1x32xf32> to vector<8x32xf32>
    %384 = arith.addf %380, %383 : vector<8x32xf32>
    %cst_115 = arith.constant 0.000000e+00 : f32
    %385 = vector.broadcast %cst_115 : f32 to vector<8x32xf32>
    %386 = arith.subf %385, %384 : vector<8x32xf32>
    %387 = math.exp %386 : vector<8x32xf32>
    %cst_116 = arith.constant 1.000000e+00 : f32
    %388 = vector.broadcast %cst_116 : f32 to vector<8x32xf32>
    %389 = arith.addf %388, %387 : vector<8x32xf32>
    %cst_117 = arith.constant 1.000000e+00 : f32
    %390 = vector.broadcast %cst_117 : f32 to vector<8x32xf32>
    %391 = arith.divf %390, %389 : vector<8x32xf32>
    %392 = arith.mulf %384, %391 : vector<8x32xf32>
    %c0_118 = arith.constant 0 : index
    %c0_119 = arith.constant 0 : index
    %c0_120 = arith.constant 0 : index
    %393 = vector.load %arg31[%c0_118, %c0_119, %c0_120] : memref<4x32x32xf32, #tpu.memory_space<vmem>>, vector<1x32x32xf32>
    %394 = vector.shape_cast %393 : vector<1x32x32xf32> to vector<32x32xf32>
    %cst_121 = arith.constant dense<0.000000e+00> : vector<8x32xf32>
    %395 = tpu.matmul %392, %394, %cst_121 {dimension_numbers = #tpu.dot_dimension_numbers<[1], [0], [0], [1], [0, 0, 1, 1], [], []>} : vector<8x32xf32>, vector<32x32xf32>, vector<8x32xf32> -> vector<8x32xf32>
    %396 = arith.addf %247, %395 : vector<8x32xf32>
    %c0_122 = arith.constant 0 : index
    %c0_123 = arith.constant 0 : index
    %c0_124 = arith.constant 0 : index
    %397 = vector.load %arg32[%c0_122, %c0_123, %c0_124] : memref<4x1x32xf32, #tpu.memory_space<vmem>>, vector<1x1x32xf32>
    %398 = vector.shape_cast %397 : vector<1x1x32xf32> to vector<1x32xf32>
    %399 = vector.broadcast %398 : vector<1x32xf32> to vector<8x32xf32>
    %400 = arith.addf %396, %399 : vector<8x32xf32>
    %c1 = arith.constant 1 : index
    %c0_125 = arith.constant 0 : index
    %c0_126 = arith.constant 0 : index
    %401 = vector.load %arg19[%c1, %c0_125, %c0_126] : memref<4x32x32xf32, #tpu.memory_space<vmem>>, vector<1x32x32xf32>
    %402 = vector.shape_cast %401 : vector<1x32x32xf32> to vector<32x32xf32>
    %cst_127 = arith.constant dense<0.000000e+00> : vector<8x32xf32>
    %403 = tpu.matmul %400, %402, %cst_127 {dimension_numbers = #tpu.dot_dimension_numbers<[1], [0], [0], [1], [0, 0, 1, 1], [], []>} : vector<8x32xf32>, vector<32x32xf32>, vector<8x32xf32> -> vector<8x32xf32>
    %cst_128 = arith.constant dense<0.000000e+00> : vector<24x32xf32>
    %404 = tpu.matmul %248, %403, %cst_128 {dimension_numbers = #tpu.dot_dimension_numbers<[1], [0], [0], [1], [0, 0, 1, 1], [], []>} : vector<24x8xf32>, vector<8x32xf32>, vector<24x32xf32> -> vector<24x32xf32>
    %c1_129 = arith.constant 1 : index
    %c0_130 = arith.constant 0 : index
    %c0_131 = arith.constant 0 : index
    %405 = vector.load %arg20[%c1_129, %c0_130, %c0_131] : memref<4x32x32xf32, #tpu.memory_space<vmem>>, vector<1x32x32xf32>
    %406 = vector.shape_cast %405 : vector<1x32x32xf32> to vector<32x32xf32>
    %cst_132 = arith.constant dense<0.000000e+00> : vector<8x32xf32>
    %407 = tpu.matmul %400, %406, %cst_132 {dimension_numbers = #tpu.dot_dimension_numbers<[1], [0], [0], [1], [0, 0, 1, 1], [], []>} : vector<8x32xf32>, vector<32x32xf32>, vector<8x32xf32> -> vector<8x32xf32>
    %cst_133 = arith.constant dense<0.000000e+00> : vector<24x32xf32>
    %408 = tpu.matmul %249, %407, %cst_133 {dimension_numbers = #tpu.dot_dimension_numbers<[1], [0], [0], [1], [0, 0, 1, 1], [], []>} : vector<24x8xf32>, vector<8x32xf32>, vector<24x32xf32> -> vector<24x32xf32>
    %409 = arith.addf %404, %408 : vector<24x32xf32>
    %c1_134 = arith.constant 1 : index
    %c0_135 = arith.constant 0 : index
    %c0_136 = arith.constant 0 : index
    %410 = vector.load %arg22[%c1_134, %c0_135, %c0_136] : memref<4x32x32xf32, #tpu.memory_space<vmem>>, vector<1x32x32xf32>
    %411 = vector.shape_cast %410 : vector<1x32x32xf32> to vector<32x32xf32>
    %cst_137 = arith.constant dense<0.000000e+00> : vector<24x32xf32>
    %412 = tpu.matmul %241, %411, %cst_137 {dimension_numbers = #tpu.dot_dimension_numbers<[1], [0], [0], [1], [0, 0, 1, 1], [], []>} : vector<24x32xf32>, vector<32x32xf32>, vector<24x32xf32> -> vector<24x32xf32>
    %413 = arith.addf %409, %412 : vector<24x32xf32>
    %c1_138 = arith.constant 1 : index
    %c0_139 = arith.constant 0 : index
    %c0_140 = arith.constant 0 : index
    %414 = vector.load %arg23[%c1_138, %c0_139, %c0_140] : memref<4x2x32xf32, #tpu.memory_space<vmem>>, vector<1x2x32xf32>
    %415 = vector.shape_cast %414 : vector<1x2x32xf32> to vector<2x32xf32>
    %cst_141 = arith.constant dense<0.000000e+00> : vector<24x32xf32>
    %416 = tpu.matmul %253, %415, %cst_141 {dimension_numbers = #tpu.dot_dimension_numbers<[1], [0], [0], [1], [0, 0, 1, 1], [], []>} : vector<24x2xf32>, vector<2x32xf32>, vector<24x32xf32> -> vector<24x32xf32>
    %417 = arith.addf %413, %416 : vector<24x32xf32>
    %c1_142 = arith.constant 1 : index
    %c0_143 = arith.constant 0 : index
    %c0_144 = arith.constant 0 : index
    %418 = vector.load %arg24[%c1_142, %c0_143, %c0_144] : memref<4x1x32xf32, #tpu.memory_space<vmem>>, vector<1x1x32xf32>
    %419 = vector.shape_cast %418 : vector<1x1x32xf32> to vector<1x32xf32>
    %420 = vector.broadcast %419 : vector<1x32xf32> to vector<24x32xf32>
    %421 = arith.addf %417, %420 : vector<24x32xf32>
    %c1_145 = arith.constant 1 : index
    %c0_146 = arith.constant 0 : index
    %c0_147 = arith.constant 0 : index
    %422 = vector.load %arg21[%c1_145, %c0_146, %c0_147] : memref<4x9x32xf32, #tpu.memory_space<vmem>>, vector<1x9x32xf32>
    %423 = vector.shape_cast %422 : vector<1x9x32xf32> to vector<9x32xf32>
    %424 = vector.extract_strided_slice %423 {offsets = [0, 0], sizes = [1, 32], strides = [1, 1]} : vector<9x32xf32> to vector<1x32xf32>
    %425 = vector.broadcast %22 : vector<24x1xf32> to vector<24x32xf32>
    %426 = vector.broadcast %424 : vector<1x32xf32> to vector<24x32xf32>
    %427 = arith.mulf %425, %426 : vector<24x32xf32>
    %428 = arith.addf %421, %427 : vector<24x32xf32>
    %429 = vector.extract_strided_slice %423 {offsets = [1, 0], sizes = [1, 32], strides = [1, 1]} : vector<9x32xf32> to vector<1x32xf32>
    %430 = vector.broadcast %43 : vector<24x1xf32> to vector<24x32xf32>
    %431 = vector.broadcast %429 : vector<1x32xf32> to vector<24x32xf32>
    %432 = arith.mulf %430, %431 : vector<24x32xf32>
    %433 = arith.addf %428, %432 : vector<24x32xf32>
    %434 = vector.extract_strided_slice %423 {offsets = [2, 0], sizes = [1, 32], strides = [1, 1]} : vector<9x32xf32> to vector<1x32xf32>
    %435 = vector.broadcast %52 : vector<24x1xf32> to vector<24x32xf32>
    %436 = vector.broadcast %434 : vector<1x32xf32> to vector<24x32xf32>
    %437 = arith.mulf %435, %436 : vector<24x32xf32>
    %438 = arith.addf %433, %437 : vector<24x32xf32>
    %439 = vector.extract_strided_slice %423 {offsets = [3, 0], sizes = [1, 32], strides = [1, 1]} : vector<9x32xf32> to vector<1x32xf32>
    %440 = vector.broadcast %43 : vector<24x1xf32> to vector<24x32xf32>
    %441 = vector.broadcast %439 : vector<1x32xf32> to vector<24x32xf32>
    %442 = arith.mulf %440, %441 : vector<24x32xf32>
    %443 = arith.addf %438, %442 : vector<24x32xf32>
    %444 = vector.extract_strided_slice %423 {offsets = [4, 0], sizes = [1, 32], strides = [1, 1]} : vector<9x32xf32> to vector<1x32xf32>
    %445 = vector.broadcast %28 : vector<24x1xf32> to vector<24x32xf32>
    %446 = vector.broadcast %444 : vector<1x32xf32> to vector<24x32xf32>
    %447 = arith.mulf %445, %446 : vector<24x32xf32>
    %448 = arith.addf %443, %447 : vector<24x32xf32>
    %449 = vector.extract_strided_slice %423 {offsets = [5, 0], sizes = [1, 32], strides = [1, 1]} : vector<9x32xf32> to vector<1x32xf32>
    %450 = vector.broadcast %61 : vector<24x1xf32> to vector<24x32xf32>
    %451 = vector.broadcast %449 : vector<1x32xf32> to vector<24x32xf32>
    %452 = arith.mulf %450, %451 : vector<24x32xf32>
    %453 = arith.addf %448, %452 : vector<24x32xf32>
    %454 = vector.extract_strided_slice %423 {offsets = [6, 0], sizes = [1, 32], strides = [1, 1]} : vector<9x32xf32> to vector<1x32xf32>
    %455 = vector.broadcast %52 : vector<24x1xf32> to vector<24x32xf32>
    %456 = vector.broadcast %454 : vector<1x32xf32> to vector<24x32xf32>
    %457 = arith.mulf %455, %456 : vector<24x32xf32>
    %458 = arith.addf %453, %457 : vector<24x32xf32>
    %459 = vector.extract_strided_slice %423 {offsets = [7, 0], sizes = [1, 32], strides = [1, 1]} : vector<9x32xf32> to vector<1x32xf32>
    %460 = vector.broadcast %61 : vector<24x1xf32> to vector<24x32xf32>
    %461 = vector.broadcast %459 : vector<1x32xf32> to vector<24x32xf32>
    %462 = arith.mulf %460, %461 : vector<24x32xf32>
    %463 = arith.addf %458, %462 : vector<24x32xf32>
    %464 = vector.extract_strided_slice %423 {offsets = [8, 0], sizes = [1, 32], strides = [1, 1]} : vector<9x32xf32> to vector<1x32xf32>
    %465 = vector.broadcast %34 : vector<24x1xf32> to vector<24x32xf32>
    %466 = vector.broadcast %464 : vector<1x32xf32> to vector<24x32xf32>
    %467 = arith.mulf %465, %466 : vector<24x32xf32>
    %468 = arith.addf %463, %467 : vector<24x32xf32>
    %cst_148 = arith.constant 0.000000e+00 : f32
    %469 = vector.broadcast %cst_148 : f32 to vector<24x32xf32>
    %470 = arith.subf %469, %468 : vector<24x32xf32>
    %471 = math.exp %470 : vector<24x32xf32>
    %cst_149 = arith.constant 1.000000e+00 : f32
    %472 = vector.broadcast %cst_149 : f32 to vector<24x32xf32>
    %473 = arith.addf %472, %471 : vector<24x32xf32>
    %cst_150 = arith.constant 1.000000e+00 : f32
    %474 = vector.broadcast %cst_150 : f32 to vector<24x32xf32>
    %475 = arith.divf %474, %473 : vector<24x32xf32>
    %476 = arith.mulf %468, %475 : vector<24x32xf32>
    %c1_151 = arith.constant 1 : index
    %c0_152 = arith.constant 0 : index
    %c0_153 = arith.constant 0 : index
    %477 = vector.load %arg25[%c1_151, %c0_152, %c0_153] : memref<4x32x32xf32, #tpu.memory_space<vmem>>, vector<1x32x32xf32>
    %478 = vector.shape_cast %477 : vector<1x32x32xf32> to vector<32x32xf32>
    %cst_154 = arith.constant dense<0.000000e+00> : vector<24x32xf32>
    %479 = tpu.matmul %476, %478, %cst_154 {dimension_numbers = #tpu.dot_dimension_numbers<[1], [0], [0], [1], [0, 0, 1, 1], [], []>} : vector<24x32xf32>, vector<32x32xf32>, vector<24x32xf32> -> vector<24x32xf32>
    %c1_155 = arith.constant 1 : index
    %c0_156 = arith.constant 0 : index
    %c0_157 = arith.constant 0 : index
    %480 = vector.load %arg26[%c1_155, %c0_156, %c0_157] : memref<4x1x32xf32, #tpu.memory_space<vmem>>, vector<1x1x32xf32>
    %481 = vector.shape_cast %480 : vector<1x1x32xf32> to vector<1x32xf32>
    %482 = vector.broadcast %481 : vector<1x32xf32> to vector<24x32xf32>
    %483 = arith.addf %479, %482 : vector<24x32xf32>
    %cst_158 = arith.constant 0.000000e+00 : f32
    %484 = vector.broadcast %cst_158 : f32 to vector<24x32xf32>
    %485 = arith.subf %484, %483 : vector<24x32xf32>
    %486 = math.exp %485 : vector<24x32xf32>
    %cst_159 = arith.constant 1.000000e+00 : f32
    %487 = vector.broadcast %cst_159 : f32 to vector<24x32xf32>
    %488 = arith.addf %487, %486 : vector<24x32xf32>
    %cst_160 = arith.constant 1.000000e+00 : f32
    %489 = vector.broadcast %cst_160 : f32 to vector<24x32xf32>
    %490 = arith.divf %489, %488 : vector<24x32xf32>
    %491 = arith.mulf %483, %490 : vector<24x32xf32>
    %492 = vector.broadcast %254 : vector<24x1xf32> to vector<24x32xf32>
    %493 = arith.mulf %491, %492 : vector<24x32xf32>
    %cst_161 = arith.constant dense<0.000000e+00> : vector<24x32xf32>
    %494 = tpu.matmul %493, %251, %cst_161 {dimension_numbers = #tpu.dot_dimension_numbers<[1], [0], [0], [1], [0, 0, 1, 1], [], []>} : vector<24x32xf32>, vector<32x32xf32>, vector<24x32xf32> -> vector<24x32xf32>
    %cst_162 = arith.constant dense<0.000000e+00> : vector<24x32xf32>
    %495 = tpu.matmul %250, %494, %cst_162 {dimension_numbers = #tpu.dot_dimension_numbers<[1], [0], [0], [1], [0, 0, 1, 1], [], []>} : vector<24x24xf32>, vector<24x32xf32>, vector<24x32xf32> -> vector<24x32xf32>
    %496 = vector.extract_strided_slice %495 {offsets = [0, 0], sizes = [8, 32], strides = [1, 1]} : vector<24x32xf32> to vector<8x32xf32>
    %497 = vector.extract_strided_slice %495 {offsets = [8, 0], sizes = [8, 32], strides = [1, 1]} : vector<24x32xf32> to vector<8x32xf32>
    %498 = vector.extract_strided_slice %495 {offsets = [16, 0], sizes = [8, 32], strides = [1, 1]} : vector<24x32xf32> to vector<8x32xf32>
    %499 = arith.minimumf %496, %497 : vector<8x32xf32>
    %500 = arith.maximumf %496, %497 : vector<8x32xf32>
    %501 = arith.minimumf %500, %498 : vector<8x32xf32>
    %502 = arith.maximumf %500, %498 : vector<8x32xf32>
    %503 = arith.minimumf %499, %501 : vector<8x32xf32>
    %504 = arith.maximumf %499, %501 : vector<8x32xf32>
    %505 = vector.extract_strided_slice %252 {offsets = [0, 0], sizes = [1, 32], strides = [1, 1]} : vector<3x32xf32> to vector<1x32xf32>
    %506 = vector.broadcast %505 : vector<1x32xf32> to vector<8x32xf32>
    %507 = arith.mulf %503, %506 : vector<8x32xf32>
    %508 = vector.extract_strided_slice %252 {offsets = [1, 0], sizes = [1, 32], strides = [1, 1]} : vector<3x32xf32> to vector<1x32xf32>
    %509 = vector.broadcast %508 : vector<1x32xf32> to vector<8x32xf32>
    %510 = arith.mulf %504, %509 : vector<8x32xf32>
    %511 = arith.addf %507, %510 : vector<8x32xf32>
    %512 = vector.extract_strided_slice %252 {offsets = [2, 0], sizes = [1, 32], strides = [1, 1]} : vector<3x32xf32> to vector<1x32xf32>
    %513 = vector.broadcast %512 : vector<1x32xf32> to vector<8x32xf32>
    %514 = arith.mulf %502, %513 : vector<8x32xf32>
    %515 = arith.addf %511, %514 : vector<8x32xf32>
    %c1_163 = arith.constant 1 : index
    %c0_164 = arith.constant 0 : index
    %c0_165 = arith.constant 0 : index
    %516 = vector.load %arg27[%c1_163, %c0_164, %c0_165] : memref<4x32x32xf32, #tpu.memory_space<vmem>>, vector<1x32x32xf32>
    %517 = vector.shape_cast %516 : vector<1x32x32xf32> to vector<32x32xf32>
    %cst_166 = arith.constant dense<0.000000e+00> : vector<8x32xf32>
    %518 = tpu.matmul %400, %517, %cst_166 {dimension_numbers = #tpu.dot_dimension_numbers<[1], [0], [0], [1], [0, 0, 1, 1], [], []>} : vector<8x32xf32>, vector<32x32xf32>, vector<8x32xf32> -> vector<8x32xf32>
    %c1_167 = arith.constant 1 : index
    %c0_168 = arith.constant 0 : index
    %c0_169 = arith.constant 0 : index
    %519 = vector.load %arg28[%c1_167, %c0_168, %c0_169] : memref<4x32x32xf32, #tpu.memory_space<vmem>>, vector<1x32x32xf32>
    %520 = vector.shape_cast %519 : vector<1x32x32xf32> to vector<32x32xf32>
    %cst_170 = arith.constant dense<0.000000e+00> : vector<8x32xf32>
    %521 = tpu.matmul %515, %520, %cst_170 {dimension_numbers = #tpu.dot_dimension_numbers<[1], [0], [0], [1], [0, 0, 1, 1], [], []>} : vector<8x32xf32>, vector<32x32xf32>, vector<8x32xf32> -> vector<8x32xf32>
    %522 = arith.addf %518, %521 : vector<8x32xf32>
    %c1_171 = arith.constant 1 : index
    %c0_172 = arith.constant 0 : index
    %c0_173 = arith.constant 0 : index
    %523 = vector.load %arg29[%c1_171, %c0_172, %c0_173] : memref<4x5x32xf32, #tpu.memory_space<vmem>>, vector<1x5x32xf32>
    %524 = vector.shape_cast %523 : vector<1x5x32xf32> to vector<5x32xf32>
    %cst_174 = arith.constant dense<0.000000e+00> : vector<8x32xf32>
    %525 = tpu.matmul %242, %524, %cst_174 {dimension_numbers = #tpu.dot_dimension_numbers<[1], [0], [0], [1], [0, 0, 1, 1], [], []>} : vector<8x5xf32>, vector<5x32xf32>, vector<8x32xf32> -> vector<8x32xf32>
    %526 = arith.addf %522, %525 : vector<8x32xf32>
    %c1_175 = arith.constant 1 : index
    %c0_176 = arith.constant 0 : index
    %c0_177 = arith.constant 0 : index
    %527 = vector.load %arg30[%c1_175, %c0_176, %c0_177] : memref<4x1x32xf32, #tpu.memory_space<vmem>>, vector<1x1x32xf32>
    %528 = vector.shape_cast %527 : vector<1x1x32xf32> to vector<1x32xf32>
    %529 = vector.broadcast %528 : vector<1x32xf32> to vector<8x32xf32>
    %530 = arith.addf %526, %529 : vector<8x32xf32>
    %cst_178 = arith.constant 0.000000e+00 : f32
    %531 = vector.broadcast %cst_178 : f32 to vector<8x32xf32>
    %532 = arith.subf %531, %530 : vector<8x32xf32>
    %533 = math.exp %532 : vector<8x32xf32>
    %cst_179 = arith.constant 1.000000e+00 : f32
    %534 = vector.broadcast %cst_179 : f32 to vector<8x32xf32>
    %535 = arith.addf %534, %533 : vector<8x32xf32>
    %cst_180 = arith.constant 1.000000e+00 : f32
    %536 = vector.broadcast %cst_180 : f32 to vector<8x32xf32>
    %537 = arith.divf %536, %535 : vector<8x32xf32>
    %538 = arith.mulf %530, %537 : vector<8x32xf32>
    %c1_181 = arith.constant 1 : index
    %c0_182 = arith.constant 0 : index
    %c0_183 = arith.constant 0 : index
    %539 = vector.load %arg31[%c1_181, %c0_182, %c0_183] : memref<4x32x32xf32, #tpu.memory_space<vmem>>, vector<1x32x32xf32>
    %540 = vector.shape_cast %539 : vector<1x32x32xf32> to vector<32x32xf32>
    %cst_184 = arith.constant dense<0.000000e+00> : vector<8x32xf32>
    %541 = tpu.matmul %538, %540, %cst_184 {dimension_numbers = #tpu.dot_dimension_numbers<[1], [0], [0], [1], [0, 0, 1, 1], [], []>} : vector<8x32xf32>, vector<32x32xf32>, vector<8x32xf32> -> vector<8x32xf32>
    %542 = arith.addf %400, %541 : vector<8x32xf32>
    %c1_185 = arith.constant 1 : index
    %c0_186 = arith.constant 0 : index
    %c0_187 = arith.constant 0 : index
    %543 = vector.load %arg32[%c1_185, %c0_186, %c0_187] : memref<4x1x32xf32, #tpu.memory_space<vmem>>, vector<1x1x32xf32>
    %544 = vector.shape_cast %543 : vector<1x1x32xf32> to vector<1x32xf32>
    %545 = vector.broadcast %544 : vector<1x32xf32> to vector<8x32xf32>
    %546 = arith.addf %542, %545 : vector<8x32xf32>
    %c2 = arith.constant 2 : index
    %c0_188 = arith.constant 0 : index
    %c0_189 = arith.constant 0 : index
    %547 = vector.load %arg19[%c2, %c0_188, %c0_189] : memref<4x32x32xf32, #tpu.memory_space<vmem>>, vector<1x32x32xf32>
    %548 = vector.shape_cast %547 : vector<1x32x32xf32> to vector<32x32xf32>
    %cst_190 = arith.constant dense<0.000000e+00> : vector<8x32xf32>
    %549 = tpu.matmul %546, %548, %cst_190 {dimension_numbers = #tpu.dot_dimension_numbers<[1], [0], [0], [1], [0, 0, 1, 1], [], []>} : vector<8x32xf32>, vector<32x32xf32>, vector<8x32xf32> -> vector<8x32xf32>
    %cst_191 = arith.constant dense<0.000000e+00> : vector<24x32xf32>
    %550 = tpu.matmul %248, %549, %cst_191 {dimension_numbers = #tpu.dot_dimension_numbers<[1], [0], [0], [1], [0, 0, 1, 1], [], []>} : vector<24x8xf32>, vector<8x32xf32>, vector<24x32xf32> -> vector<24x32xf32>
    %c2_192 = arith.constant 2 : index
    %c0_193 = arith.constant 0 : index
    %c0_194 = arith.constant 0 : index
    %551 = vector.load %arg20[%c2_192, %c0_193, %c0_194] : memref<4x32x32xf32, #tpu.memory_space<vmem>>, vector<1x32x32xf32>
    %552 = vector.shape_cast %551 : vector<1x32x32xf32> to vector<32x32xf32>
    %cst_195 = arith.constant dense<0.000000e+00> : vector<8x32xf32>
    %553 = tpu.matmul %546, %552, %cst_195 {dimension_numbers = #tpu.dot_dimension_numbers<[1], [0], [0], [1], [0, 0, 1, 1], [], []>} : vector<8x32xf32>, vector<32x32xf32>, vector<8x32xf32> -> vector<8x32xf32>
    %cst_196 = arith.constant dense<0.000000e+00> : vector<24x32xf32>
    %554 = tpu.matmul %249, %553, %cst_196 {dimension_numbers = #tpu.dot_dimension_numbers<[1], [0], [0], [1], [0, 0, 1, 1], [], []>} : vector<24x8xf32>, vector<8x32xf32>, vector<24x32xf32> -> vector<24x32xf32>
    %555 = arith.addf %550, %554 : vector<24x32xf32>
    %c2_197 = arith.constant 2 : index
    %c0_198 = arith.constant 0 : index
    %c0_199 = arith.constant 0 : index
    %556 = vector.load %arg22[%c2_197, %c0_198, %c0_199] : memref<4x32x32xf32, #tpu.memory_space<vmem>>, vector<1x32x32xf32>
    %557 = vector.shape_cast %556 : vector<1x32x32xf32> to vector<32x32xf32>
    %cst_200 = arith.constant dense<0.000000e+00> : vector<24x32xf32>
    %558 = tpu.matmul %241, %557, %cst_200 {dimension_numbers = #tpu.dot_dimension_numbers<[1], [0], [0], [1], [0, 0, 1, 1], [], []>} : vector<24x32xf32>, vector<32x32xf32>, vector<24x32xf32> -> vector<24x32xf32>
    %559 = arith.addf %555, %558 : vector<24x32xf32>
    %c2_201 = arith.constant 2 : index
    %c0_202 = arith.constant 0 : index
    %c0_203 = arith.constant 0 : index
    %560 = vector.load %arg23[%c2_201, %c0_202, %c0_203] : memref<4x2x32xf32, #tpu.memory_space<vmem>>, vector<1x2x32xf32>
    %561 = vector.shape_cast %560 : vector<1x2x32xf32> to vector<2x32xf32>
    %cst_204 = arith.constant dense<0.000000e+00> : vector<24x32xf32>
    %562 = tpu.matmul %253, %561, %cst_204 {dimension_numbers = #tpu.dot_dimension_numbers<[1], [0], [0], [1], [0, 0, 1, 1], [], []>} : vector<24x2xf32>, vector<2x32xf32>, vector<24x32xf32> -> vector<24x32xf32>
    %563 = arith.addf %559, %562 : vector<24x32xf32>
    %c2_205 = arith.constant 2 : index
    %c0_206 = arith.constant 0 : index
    %c0_207 = arith.constant 0 : index
    %564 = vector.load %arg24[%c2_205, %c0_206, %c0_207] : memref<4x1x32xf32, #tpu.memory_space<vmem>>, vector<1x1x32xf32>
    %565 = vector.shape_cast %564 : vector<1x1x32xf32> to vector<1x32xf32>
    %566 = vector.broadcast %565 : vector<1x32xf32> to vector<24x32xf32>
    %567 = arith.addf %563, %566 : vector<24x32xf32>
    %c2_208 = arith.constant 2 : index
    %c0_209 = arith.constant 0 : index
    %c0_210 = arith.constant 0 : index
    %568 = vector.load %arg21[%c2_208, %c0_209, %c0_210] : memref<4x9x32xf32, #tpu.memory_space<vmem>>, vector<1x9x32xf32>
    %569 = vector.shape_cast %568 : vector<1x9x32xf32> to vector<9x32xf32>
    %570 = vector.extract_strided_slice %569 {offsets = [0, 0], sizes = [1, 32], strides = [1, 1]} : vector<9x32xf32> to vector<1x32xf32>
    %571 = vector.broadcast %22 : vector<24x1xf32> to vector<24x32xf32>
    %572 = vector.broadcast %570 : vector<1x32xf32> to vector<24x32xf32>
    %573 = arith.mulf %571, %572 : vector<24x32xf32>
    %574 = arith.addf %567, %573 : vector<24x32xf32>
    %575 = vector.extract_strided_slice %569 {offsets = [1, 0], sizes = [1, 32], strides = [1, 1]} : vector<9x32xf32> to vector<1x32xf32>
    %576 = vector.broadcast %43 : vector<24x1xf32> to vector<24x32xf32>
    %577 = vector.broadcast %575 : vector<1x32xf32> to vector<24x32xf32>
    %578 = arith.mulf %576, %577 : vector<24x32xf32>
    %579 = arith.addf %574, %578 : vector<24x32xf32>
    %580 = vector.extract_strided_slice %569 {offsets = [2, 0], sizes = [1, 32], strides = [1, 1]} : vector<9x32xf32> to vector<1x32xf32>
    %581 = vector.broadcast %52 : vector<24x1xf32> to vector<24x32xf32>
    %582 = vector.broadcast %580 : vector<1x32xf32> to vector<24x32xf32>
    %583 = arith.mulf %581, %582 : vector<24x32xf32>
    %584 = arith.addf %579, %583 : vector<24x32xf32>
    %585 = vector.extract_strided_slice %569 {offsets = [3, 0], sizes = [1, 32], strides = [1, 1]} : vector<9x32xf32> to vector<1x32xf32>
    %586 = vector.broadcast %43 : vector<24x1xf32> to vector<24x32xf32>
    %587 = vector.broadcast %585 : vector<1x32xf32> to vector<24x32xf32>
    %588 = arith.mulf %586, %587 : vector<24x32xf32>
    %589 = arith.addf %584, %588 : vector<24x32xf32>
    %590 = vector.extract_strided_slice %569 {offsets = [4, 0], sizes = [1, 32], strides = [1, 1]} : vector<9x32xf32> to vector<1x32xf32>
    %591 = vector.broadcast %28 : vector<24x1xf32> to vector<24x32xf32>
    %592 = vector.broadcast %590 : vector<1x32xf32> to vector<24x32xf32>
    %593 = arith.mulf %591, %592 : vector<24x32xf32>
    %594 = arith.addf %589, %593 : vector<24x32xf32>
    %595 = vector.extract_strided_slice %569 {offsets = [5, 0], sizes = [1, 32], strides = [1, 1]} : vector<9x32xf32> to vector<1x32xf32>
    %596 = vector.broadcast %61 : vector<24x1xf32> to vector<24x32xf32>
    %597 = vector.broadcast %595 : vector<1x32xf32> to vector<24x32xf32>
    %598 = arith.mulf %596, %597 : vector<24x32xf32>
    %599 = arith.addf %594, %598 : vector<24x32xf32>
    %600 = vector.extract_strided_slice %569 {offsets = [6, 0], sizes = [1, 32], strides = [1, 1]} : vector<9x32xf32> to vector<1x32xf32>
    %601 = vector.broadcast %52 : vector<24x1xf32> to vector<24x32xf32>
    %602 = vector.broadcast %600 : vector<1x32xf32> to vector<24x32xf32>
    %603 = arith.mulf %601, %602 : vector<24x32xf32>
    %604 = arith.addf %599, %603 : vector<24x32xf32>
    %605 = vector.extract_strided_slice %569 {offsets = [7, 0], sizes = [1, 32], strides = [1, 1]} : vector<9x32xf32> to vector<1x32xf32>
    %606 = vector.broadcast %61 : vector<24x1xf32> to vector<24x32xf32>
    %607 = vector.broadcast %605 : vector<1x32xf32> to vector<24x32xf32>
    %608 = arith.mulf %606, %607 : vector<24x32xf32>
    %609 = arith.addf %604, %608 : vector<24x32xf32>
    %610 = vector.extract_strided_slice %569 {offsets = [8, 0], sizes = [1, 32], strides = [1, 1]} : vector<9x32xf32> to vector<1x32xf32>
    %611 = vector.broadcast %34 : vector<24x1xf32> to vector<24x32xf32>
    %612 = vector.broadcast %610 : vector<1x32xf32> to vector<24x32xf32>
    %613 = arith.mulf %611, %612 : vector<24x32xf32>
    %614 = arith.addf %609, %613 : vector<24x32xf32>
    %cst_211 = arith.constant 0.000000e+00 : f32
    %615 = vector.broadcast %cst_211 : f32 to vector<24x32xf32>
    %616 = arith.subf %615, %614 : vector<24x32xf32>
    %617 = math.exp %616 : vector<24x32xf32>
    %cst_212 = arith.constant 1.000000e+00 : f32
    %618 = vector.broadcast %cst_212 : f32 to vector<24x32xf32>
    %619 = arith.addf %618, %617 : vector<24x32xf32>
    %cst_213 = arith.constant 1.000000e+00 : f32
    %620 = vector.broadcast %cst_213 : f32 to vector<24x32xf32>
    %621 = arith.divf %620, %619 : vector<24x32xf32>
    %622 = arith.mulf %614, %621 : vector<24x32xf32>
    %c2_214 = arith.constant 2 : index
    %c0_215 = arith.constant 0 : index
    %c0_216 = arith.constant 0 : index
    %623 = vector.load %arg25[%c2_214, %c0_215, %c0_216] : memref<4x32x32xf32, #tpu.memory_space<vmem>>, vector<1x32x32xf32>
    %624 = vector.shape_cast %623 : vector<1x32x32xf32> to vector<32x32xf32>
    %cst_217 = arith.constant dense<0.000000e+00> : vector<24x32xf32>
    %625 = tpu.matmul %622, %624, %cst_217 {dimension_numbers = #tpu.dot_dimension_numbers<[1], [0], [0], [1], [0, 0, 1, 1], [], []>} : vector<24x32xf32>, vector<32x32xf32>, vector<24x32xf32> -> vector<24x32xf32>
    %c2_218 = arith.constant 2 : index
    %c0_219 = arith.constant 0 : index
    %c0_220 = arith.constant 0 : index
    %626 = vector.load %arg26[%c2_218, %c0_219, %c0_220] : memref<4x1x32xf32, #tpu.memory_space<vmem>>, vector<1x1x32xf32>
    %627 = vector.shape_cast %626 : vector<1x1x32xf32> to vector<1x32xf32>
    %628 = vector.broadcast %627 : vector<1x32xf32> to vector<24x32xf32>
    %629 = arith.addf %625, %628 : vector<24x32xf32>
    %cst_221 = arith.constant 0.000000e+00 : f32
    %630 = vector.broadcast %cst_221 : f32 to vector<24x32xf32>
    %631 = arith.subf %630, %629 : vector<24x32xf32>
    %632 = math.exp %631 : vector<24x32xf32>
    %cst_222 = arith.constant 1.000000e+00 : f32
    %633 = vector.broadcast %cst_222 : f32 to vector<24x32xf32>
    %634 = arith.addf %633, %632 : vector<24x32xf32>
    %cst_223 = arith.constant 1.000000e+00 : f32
    %635 = vector.broadcast %cst_223 : f32 to vector<24x32xf32>
    %636 = arith.divf %635, %634 : vector<24x32xf32>
    %637 = arith.mulf %629, %636 : vector<24x32xf32>
    %638 = vector.broadcast %254 : vector<24x1xf32> to vector<24x32xf32>
    %639 = arith.mulf %637, %638 : vector<24x32xf32>
    %cst_224 = arith.constant dense<0.000000e+00> : vector<24x32xf32>
    %640 = tpu.matmul %639, %251, %cst_224 {dimension_numbers = #tpu.dot_dimension_numbers<[1], [0], [0], [1], [0, 0, 1, 1], [], []>} : vector<24x32xf32>, vector<32x32xf32>, vector<24x32xf32> -> vector<24x32xf32>
    %cst_225 = arith.constant dense<0.000000e+00> : vector<24x32xf32>
    %641 = tpu.matmul %250, %640, %cst_225 {dimension_numbers = #tpu.dot_dimension_numbers<[1], [0], [0], [1], [0, 0, 1, 1], [], []>} : vector<24x24xf32>, vector<24x32xf32>, vector<24x32xf32> -> vector<24x32xf32>
    %642 = vector.extract_strided_slice %641 {offsets = [0, 0], sizes = [8, 32], strides = [1, 1]} : vector<24x32xf32> to vector<8x32xf32>
    %643 = vector.extract_strided_slice %641 {offsets = [8, 0], sizes = [8, 32], strides = [1, 1]} : vector<24x32xf32> to vector<8x32xf32>
    %644 = vector.extract_strided_slice %641 {offsets = [16, 0], sizes = [8, 32], strides = [1, 1]} : vector<24x32xf32> to vector<8x32xf32>
    %645 = arith.minimumf %642, %643 : vector<8x32xf32>
    %646 = arith.maximumf %642, %643 : vector<8x32xf32>
    %647 = arith.minimumf %646, %644 : vector<8x32xf32>
    %648 = arith.maximumf %646, %644 : vector<8x32xf32>
    %649 = arith.minimumf %645, %647 : vector<8x32xf32>
    %650 = arith.maximumf %645, %647 : vector<8x32xf32>
    %651 = vector.extract_strided_slice %252 {offsets = [0, 0], sizes = [1, 32], strides = [1, 1]} : vector<3x32xf32> to vector<1x32xf32>
    %652 = vector.broadcast %651 : vector<1x32xf32> to vector<8x32xf32>
    %653 = arith.mulf %649, %652 : vector<8x32xf32>
    %654 = vector.extract_strided_slice %252 {offsets = [1, 0], sizes = [1, 32], strides = [1, 1]} : vector<3x32xf32> to vector<1x32xf32>
    %655 = vector.broadcast %654 : vector<1x32xf32> to vector<8x32xf32>
    %656 = arith.mulf %650, %655 : vector<8x32xf32>
    %657 = arith.addf %653, %656 : vector<8x32xf32>
    %658 = vector.extract_strided_slice %252 {offsets = [2, 0], sizes = [1, 32], strides = [1, 1]} : vector<3x32xf32> to vector<1x32xf32>
    %659 = vector.broadcast %658 : vector<1x32xf32> to vector<8x32xf32>
    %660 = arith.mulf %648, %659 : vector<8x32xf32>
    %661 = arith.addf %657, %660 : vector<8x32xf32>
    %c2_226 = arith.constant 2 : index
    %c0_227 = arith.constant 0 : index
    %c0_228 = arith.constant 0 : index
    %662 = vector.load %arg27[%c2_226, %c0_227, %c0_228] : memref<4x32x32xf32, #tpu.memory_space<vmem>>, vector<1x32x32xf32>
    %663 = vector.shape_cast %662 : vector<1x32x32xf32> to vector<32x32xf32>
    %cst_229 = arith.constant dense<0.000000e+00> : vector<8x32xf32>
    %664 = tpu.matmul %546, %663, %cst_229 {dimension_numbers = #tpu.dot_dimension_numbers<[1], [0], [0], [1], [0, 0, 1, 1], [], []>} : vector<8x32xf32>, vector<32x32xf32>, vector<8x32xf32> -> vector<8x32xf32>
    %c2_230 = arith.constant 2 : index
    %c0_231 = arith.constant 0 : index
    %c0_232 = arith.constant 0 : index
    %665 = vector.load %arg28[%c2_230, %c0_231, %c0_232] : memref<4x32x32xf32, #tpu.memory_space<vmem>>, vector<1x32x32xf32>
    %666 = vector.shape_cast %665 : vector<1x32x32xf32> to vector<32x32xf32>
    %cst_233 = arith.constant dense<0.000000e+00> : vector<8x32xf32>
    %667 = tpu.matmul %661, %666, %cst_233 {dimension_numbers = #tpu.dot_dimension_numbers<[1], [0], [0], [1], [0, 0, 1, 1], [], []>} : vector<8x32xf32>, vector<32x32xf32>, vector<8x32xf32> -> vector<8x32xf32>
    %668 = arith.addf %664, %667 : vector<8x32xf32>
    %c2_234 = arith.constant 2 : index
    %c0_235 = arith.constant 0 : index
    %c0_236 = arith.constant 0 : index
    %669 = vector.load %arg29[%c2_234, %c0_235, %c0_236] : memref<4x5x32xf32, #tpu.memory_space<vmem>>, vector<1x5x32xf32>
    %670 = vector.shape_cast %669 : vector<1x5x32xf32> to vector<5x32xf32>
    %cst_237 = arith.constant dense<0.000000e+00> : vector<8x32xf32>
    %671 = tpu.matmul %242, %670, %cst_237 {dimension_numbers = #tpu.dot_dimension_numbers<[1], [0], [0], [1], [0, 0, 1, 1], [], []>} : vector<8x5xf32>, vector<5x32xf32>, vector<8x32xf32> -> vector<8x32xf32>
    %672 = arith.addf %668, %671 : vector<8x32xf32>
    %c2_238 = arith.constant 2 : index
    %c0_239 = arith.constant 0 : index
    %c0_240 = arith.constant 0 : index
    %673 = vector.load %arg30[%c2_238, %c0_239, %c0_240] : memref<4x1x32xf32, #tpu.memory_space<vmem>>, vector<1x1x32xf32>
    %674 = vector.shape_cast %673 : vector<1x1x32xf32> to vector<1x32xf32>
    %675 = vector.broadcast %674 : vector<1x32xf32> to vector<8x32xf32>
    %676 = arith.addf %672, %675 : vector<8x32xf32>
    %cst_241 = arith.constant 0.000000e+00 : f32
    %677 = vector.broadcast %cst_241 : f32 to vector<8x32xf32>
    %678 = arith.subf %677, %676 : vector<8x32xf32>
    %679 = math.exp %678 : vector<8x32xf32>
    %cst_242 = arith.constant 1.000000e+00 : f32
    %680 = vector.broadcast %cst_242 : f32 to vector<8x32xf32>
    %681 = arith.addf %680, %679 : vector<8x32xf32>
    %cst_243 = arith.constant 1.000000e+00 : f32
    %682 = vector.broadcast %cst_243 : f32 to vector<8x32xf32>
    %683 = arith.divf %682, %681 : vector<8x32xf32>
    %684 = arith.mulf %676, %683 : vector<8x32xf32>
    %c2_244 = arith.constant 2 : index
    %c0_245 = arith.constant 0 : index
    %c0_246 = arith.constant 0 : index
    %685 = vector.load %arg31[%c2_244, %c0_245, %c0_246] : memref<4x32x32xf32, #tpu.memory_space<vmem>>, vector<1x32x32xf32>
    %686 = vector.shape_cast %685 : vector<1x32x32xf32> to vector<32x32xf32>
    %cst_247 = arith.constant dense<0.000000e+00> : vector<8x32xf32>
    %687 = tpu.matmul %684, %686, %cst_247 {dimension_numbers = #tpu.dot_dimension_numbers<[1], [0], [0], [1], [0, 0, 1, 1], [], []>} : vector<8x32xf32>, vector<32x32xf32>, vector<8x32xf32> -> vector<8x32xf32>
    %688 = arith.addf %546, %687 : vector<8x32xf32>
    %c2_248 = arith.constant 2 : index
    %c0_249 = arith.constant 0 : index
    %c0_250 = arith.constant 0 : index
    %689 = vector.load %arg32[%c2_248, %c0_249, %c0_250] : memref<4x1x32xf32, #tpu.memory_space<vmem>>, vector<1x1x32xf32>
    %690 = vector.shape_cast %689 : vector<1x1x32xf32> to vector<1x32xf32>
    %691 = vector.broadcast %690 : vector<1x32xf32> to vector<8x32xf32>
    %692 = arith.addf %688, %691 : vector<8x32xf32>
    %c3 = arith.constant 3 : index
    %c0_251 = arith.constant 0 : index
    %c0_252 = arith.constant 0 : index
    %693 = vector.load %arg19[%c3, %c0_251, %c0_252] : memref<4x32x32xf32, #tpu.memory_space<vmem>>, vector<1x32x32xf32>
    %694 = vector.shape_cast %693 : vector<1x32x32xf32> to vector<32x32xf32>
    %cst_253 = arith.constant dense<0.000000e+00> : vector<8x32xf32>
    %695 = tpu.matmul %692, %694, %cst_253 {dimension_numbers = #tpu.dot_dimension_numbers<[1], [0], [0], [1], [0, 0, 1, 1], [], []>} : vector<8x32xf32>, vector<32x32xf32>, vector<8x32xf32> -> vector<8x32xf32>
    %cst_254 = arith.constant dense<0.000000e+00> : vector<24x32xf32>
    %696 = tpu.matmul %248, %695, %cst_254 {dimension_numbers = #tpu.dot_dimension_numbers<[1], [0], [0], [1], [0, 0, 1, 1], [], []>} : vector<24x8xf32>, vector<8x32xf32>, vector<24x32xf32> -> vector<24x32xf32>
    %c3_255 = arith.constant 3 : index
    %c0_256 = arith.constant 0 : index
    %c0_257 = arith.constant 0 : index
    %697 = vector.load %arg20[%c3_255, %c0_256, %c0_257] : memref<4x32x32xf32, #tpu.memory_space<vmem>>, vector<1x32x32xf32>
    %698 = vector.shape_cast %697 : vector<1x32x32xf32> to vector<32x32xf32>
    %cst_258 = arith.constant dense<0.000000e+00> : vector<8x32xf32>
    %699 = tpu.matmul %692, %698, %cst_258 {dimension_numbers = #tpu.dot_dimension_numbers<[1], [0], [0], [1], [0, 0, 1, 1], [], []>} : vector<8x32xf32>, vector<32x32xf32>, vector<8x32xf32> -> vector<8x32xf32>
    %cst_259 = arith.constant dense<0.000000e+00> : vector<24x32xf32>
    %700 = tpu.matmul %249, %699, %cst_259 {dimension_numbers = #tpu.dot_dimension_numbers<[1], [0], [0], [1], [0, 0, 1, 1], [], []>} : vector<24x8xf32>, vector<8x32xf32>, vector<24x32xf32> -> vector<24x32xf32>
    %701 = arith.addf %696, %700 : vector<24x32xf32>
    %c3_260 = arith.constant 3 : index
    %c0_261 = arith.constant 0 : index
    %c0_262 = arith.constant 0 : index
    %702 = vector.load %arg22[%c3_260, %c0_261, %c0_262] : memref<4x32x32xf32, #tpu.memory_space<vmem>>, vector<1x32x32xf32>
    %703 = vector.shape_cast %702 : vector<1x32x32xf32> to vector<32x32xf32>
    %cst_263 = arith.constant dense<0.000000e+00> : vector<24x32xf32>
    %704 = tpu.matmul %241, %703, %cst_263 {dimension_numbers = #tpu.dot_dimension_numbers<[1], [0], [0], [1], [0, 0, 1, 1], [], []>} : vector<24x32xf32>, vector<32x32xf32>, vector<24x32xf32> -> vector<24x32xf32>
    %705 = arith.addf %701, %704 : vector<24x32xf32>
    %c3_264 = arith.constant 3 : index
    %c0_265 = arith.constant 0 : index
    %c0_266 = arith.constant 0 : index
    %706 = vector.load %arg23[%c3_264, %c0_265, %c0_266] : memref<4x2x32xf32, #tpu.memory_space<vmem>>, vector<1x2x32xf32>
    %707 = vector.shape_cast %706 : vector<1x2x32xf32> to vector<2x32xf32>
    %cst_267 = arith.constant dense<0.000000e+00> : vector<24x32xf32>
    %708 = tpu.matmul %253, %707, %cst_267 {dimension_numbers = #tpu.dot_dimension_numbers<[1], [0], [0], [1], [0, 0, 1, 1], [], []>} : vector<24x2xf32>, vector<2x32xf32>, vector<24x32xf32> -> vector<24x32xf32>
    %709 = arith.addf %705, %708 : vector<24x32xf32>
    %c3_268 = arith.constant 3 : index
    %c0_269 = arith.constant 0 : index
    %c0_270 = arith.constant 0 : index
    %710 = vector.load %arg24[%c3_268, %c0_269, %c0_270] : memref<4x1x32xf32, #tpu.memory_space<vmem>>, vector<1x1x32xf32>
    %711 = vector.shape_cast %710 : vector<1x1x32xf32> to vector<1x32xf32>
    %712 = vector.broadcast %711 : vector<1x32xf32> to vector<24x32xf32>
    %713 = arith.addf %709, %712 : vector<24x32xf32>
    %c3_271 = arith.constant 3 : index
    %c0_272 = arith.constant 0 : index
    %c0_273 = arith.constant 0 : index
    %714 = vector.load %arg21[%c3_271, %c0_272, %c0_273] : memref<4x9x32xf32, #tpu.memory_space<vmem>>, vector<1x9x32xf32>
    %715 = vector.shape_cast %714 : vector<1x9x32xf32> to vector<9x32xf32>
    %716 = vector.extract_strided_slice %715 {offsets = [0, 0], sizes = [1, 32], strides = [1, 1]} : vector<9x32xf32> to vector<1x32xf32>
    %717 = vector.broadcast %22 : vector<24x1xf32> to vector<24x32xf32>
    %718 = vector.broadcast %716 : vector<1x32xf32> to vector<24x32xf32>
    %719 = arith.mulf %717, %718 : vector<24x32xf32>
    %720 = arith.addf %713, %719 : vector<24x32xf32>
    %721 = vector.extract_strided_slice %715 {offsets = [1, 0], sizes = [1, 32], strides = [1, 1]} : vector<9x32xf32> to vector<1x32xf32>
    %722 = vector.broadcast %43 : vector<24x1xf32> to vector<24x32xf32>
    %723 = vector.broadcast %721 : vector<1x32xf32> to vector<24x32xf32>
    %724 = arith.mulf %722, %723 : vector<24x32xf32>
    %725 = arith.addf %720, %724 : vector<24x32xf32>
    %726 = vector.extract_strided_slice %715 {offsets = [2, 0], sizes = [1, 32], strides = [1, 1]} : vector<9x32xf32> to vector<1x32xf32>
    %727 = vector.broadcast %52 : vector<24x1xf32> to vector<24x32xf32>
    %728 = vector.broadcast %726 : vector<1x32xf32> to vector<24x32xf32>
    %729 = arith.mulf %727, %728 : vector<24x32xf32>
    %730 = arith.addf %725, %729 : vector<24x32xf32>
    %731 = vector.extract_strided_slice %715 {offsets = [3, 0], sizes = [1, 32], strides = [1, 1]} : vector<9x32xf32> to vector<1x32xf32>
    %732 = vector.broadcast %43 : vector<24x1xf32> to vector<24x32xf32>
    %733 = vector.broadcast %731 : vector<1x32xf32> to vector<24x32xf32>
    %734 = arith.mulf %732, %733 : vector<24x32xf32>
    %735 = arith.addf %730, %734 : vector<24x32xf32>
    %736 = vector.extract_strided_slice %715 {offsets = [4, 0], sizes = [1, 32], strides = [1, 1]} : vector<9x32xf32> to vector<1x32xf32>
    %737 = vector.broadcast %28 : vector<24x1xf32> to vector<24x32xf32>
    %738 = vector.broadcast %736 : vector<1x32xf32> to vector<24x32xf32>
    %739 = arith.mulf %737, %738 : vector<24x32xf32>
    %740 = arith.addf %735, %739 : vector<24x32xf32>
    %741 = vector.extract_strided_slice %715 {offsets = [5, 0], sizes = [1, 32], strides = [1, 1]} : vector<9x32xf32> to vector<1x32xf32>
    %742 = vector.broadcast %61 : vector<24x1xf32> to vector<24x32xf32>
    %743 = vector.broadcast %741 : vector<1x32xf32> to vector<24x32xf32>
    %744 = arith.mulf %742, %743 : vector<24x32xf32>
    %745 = arith.addf %740, %744 : vector<24x32xf32>
    %746 = vector.extract_strided_slice %715 {offsets = [6, 0], sizes = [1, 32], strides = [1, 1]} : vector<9x32xf32> to vector<1x32xf32>
    %747 = vector.broadcast %52 : vector<24x1xf32> to vector<24x32xf32>
    %748 = vector.broadcast %746 : vector<1x32xf32> to vector<24x32xf32>
    %749 = arith.mulf %747, %748 : vector<24x32xf32>
    %750 = arith.addf %745, %749 : vector<24x32xf32>
    %751 = vector.extract_strided_slice %715 {offsets = [7, 0], sizes = [1, 32], strides = [1, 1]} : vector<9x32xf32> to vector<1x32xf32>
    %752 = vector.broadcast %61 : vector<24x1xf32> to vector<24x32xf32>
    %753 = vector.broadcast %751 : vector<1x32xf32> to vector<24x32xf32>
    %754 = arith.mulf %752, %753 : vector<24x32xf32>
    %755 = arith.addf %750, %754 : vector<24x32xf32>
    %756 = vector.extract_strided_slice %715 {offsets = [8, 0], sizes = [1, 32], strides = [1, 1]} : vector<9x32xf32> to vector<1x32xf32>
    %757 = vector.broadcast %34 : vector<24x1xf32> to vector<24x32xf32>
    %758 = vector.broadcast %756 : vector<1x32xf32> to vector<24x32xf32>
    %759 = arith.mulf %757, %758 : vector<24x32xf32>
    %760 = arith.addf %755, %759 : vector<24x32xf32>
    %cst_274 = arith.constant 0.000000e+00 : f32
    %761 = vector.broadcast %cst_274 : f32 to vector<24x32xf32>
    %762 = arith.subf %761, %760 : vector<24x32xf32>
    %763 = math.exp %762 : vector<24x32xf32>
    %cst_275 = arith.constant 1.000000e+00 : f32
    %764 = vector.broadcast %cst_275 : f32 to vector<24x32xf32>
    %765 = arith.addf %764, %763 : vector<24x32xf32>
    %cst_276 = arith.constant 1.000000e+00 : f32
    %766 = vector.broadcast %cst_276 : f32 to vector<24x32xf32>
    %767 = arith.divf %766, %765 : vector<24x32xf32>
    %768 = arith.mulf %760, %767 : vector<24x32xf32>
    %c3_277 = arith.constant 3 : index
    %c0_278 = arith.constant 0 : index
    %c0_279 = arith.constant 0 : index
    %769 = vector.load %arg25[%c3_277, %c0_278, %c0_279] : memref<4x32x32xf32, #tpu.memory_space<vmem>>, vector<1x32x32xf32>
    %770 = vector.shape_cast %769 : vector<1x32x32xf32> to vector<32x32xf32>
    %cst_280 = arith.constant dense<0.000000e+00> : vector<24x32xf32>
    %771 = tpu.matmul %768, %770, %cst_280 {dimension_numbers = #tpu.dot_dimension_numbers<[1], [0], [0], [1], [0, 0, 1, 1], [], []>} : vector<24x32xf32>, vector<32x32xf32>, vector<24x32xf32> -> vector<24x32xf32>
    %c3_281 = arith.constant 3 : index
    %c0_282 = arith.constant 0 : index
    %c0_283 = arith.constant 0 : index
    %772 = vector.load %arg26[%c3_281, %c0_282, %c0_283] : memref<4x1x32xf32, #tpu.memory_space<vmem>>, vector<1x1x32xf32>
    %773 = vector.shape_cast %772 : vector<1x1x32xf32> to vector<1x32xf32>
    %774 = vector.broadcast %773 : vector<1x32xf32> to vector<24x32xf32>
    %775 = arith.addf %771, %774 : vector<24x32xf32>
    %cst_284 = arith.constant 0.000000e+00 : f32
    %776 = vector.broadcast %cst_284 : f32 to vector<24x32xf32>
    %777 = arith.subf %776, %775 : vector<24x32xf32>
    %778 = math.exp %777 : vector<24x32xf32>
    %cst_285 = arith.constant 1.000000e+00 : f32
    %779 = vector.broadcast %cst_285 : f32 to vector<24x32xf32>
    %780 = arith.addf %779, %778 : vector<24x32xf32>
    %cst_286 = arith.constant 1.000000e+00 : f32
    %781 = vector.broadcast %cst_286 : f32 to vector<24x32xf32>
    %782 = arith.divf %781, %780 : vector<24x32xf32>
    %783 = arith.mulf %775, %782 : vector<24x32xf32>
    %784 = vector.broadcast %254 : vector<24x1xf32> to vector<24x32xf32>
    %785 = arith.mulf %783, %784 : vector<24x32xf32>
    %cst_287 = arith.constant dense<0.000000e+00> : vector<24x32xf32>
    %786 = tpu.matmul %785, %251, %cst_287 {dimension_numbers = #tpu.dot_dimension_numbers<[1], [0], [0], [1], [0, 0, 1, 1], [], []>} : vector<24x32xf32>, vector<32x32xf32>, vector<24x32xf32> -> vector<24x32xf32>
    %cst_288 = arith.constant dense<0.000000e+00> : vector<24x32xf32>
    %787 = tpu.matmul %250, %786, %cst_288 {dimension_numbers = #tpu.dot_dimension_numbers<[1], [0], [0], [1], [0, 0, 1, 1], [], []>} : vector<24x24xf32>, vector<24x32xf32>, vector<24x32xf32> -> vector<24x32xf32>
    %788 = vector.extract_strided_slice %787 {offsets = [0, 0], sizes = [8, 32], strides = [1, 1]} : vector<24x32xf32> to vector<8x32xf32>
    %789 = vector.extract_strided_slice %787 {offsets = [8, 0], sizes = [8, 32], strides = [1, 1]} : vector<24x32xf32> to vector<8x32xf32>
    %790 = vector.extract_strided_slice %787 {offsets = [16, 0], sizes = [8, 32], strides = [1, 1]} : vector<24x32xf32> to vector<8x32xf32>
    %791 = arith.minimumf %788, %789 : vector<8x32xf32>
    %792 = arith.maximumf %788, %789 : vector<8x32xf32>
    %793 = arith.minimumf %792, %790 : vector<8x32xf32>
    %794 = arith.maximumf %792, %790 : vector<8x32xf32>
    %795 = arith.minimumf %791, %793 : vector<8x32xf32>
    %796 = arith.maximumf %791, %793 : vector<8x32xf32>
    %797 = vector.extract_strided_slice %252 {offsets = [0, 0], sizes = [1, 32], strides = [1, 1]} : vector<3x32xf32> to vector<1x32xf32>
    %798 = vector.broadcast %797 : vector<1x32xf32> to vector<8x32xf32>
    %799 = arith.mulf %795, %798 : vector<8x32xf32>
    %800 = vector.extract_strided_slice %252 {offsets = [1, 0], sizes = [1, 32], strides = [1, 1]} : vector<3x32xf32> to vector<1x32xf32>
    %801 = vector.broadcast %800 : vector<1x32xf32> to vector<8x32xf32>
    %802 = arith.mulf %796, %801 : vector<8x32xf32>
    %803 = arith.addf %799, %802 : vector<8x32xf32>
    %804 = vector.extract_strided_slice %252 {offsets = [2, 0], sizes = [1, 32], strides = [1, 1]} : vector<3x32xf32> to vector<1x32xf32>
    %805 = vector.broadcast %804 : vector<1x32xf32> to vector<8x32xf32>
    %806 = arith.mulf %794, %805 : vector<8x32xf32>
    %807 = arith.addf %803, %806 : vector<8x32xf32>
    %c3_289 = arith.constant 3 : index
    %c0_290 = arith.constant 0 : index
    %c0_291 = arith.constant 0 : index
    %808 = vector.load %arg27[%c3_289, %c0_290, %c0_291] : memref<4x32x32xf32, #tpu.memory_space<vmem>>, vector<1x32x32xf32>
    %809 = vector.shape_cast %808 : vector<1x32x32xf32> to vector<32x32xf32>
    %cst_292 = arith.constant dense<0.000000e+00> : vector<8x32xf32>
    %810 = tpu.matmul %692, %809, %cst_292 {dimension_numbers = #tpu.dot_dimension_numbers<[1], [0], [0], [1], [0, 0, 1, 1], [], []>} : vector<8x32xf32>, vector<32x32xf32>, vector<8x32xf32> -> vector<8x32xf32>
    %c3_293 = arith.constant 3 : index
    %c0_294 = arith.constant 0 : index
    %c0_295 = arith.constant 0 : index
    %811 = vector.load %arg28[%c3_293, %c0_294, %c0_295] : memref<4x32x32xf32, #tpu.memory_space<vmem>>, vector<1x32x32xf32>
    %812 = vector.shape_cast %811 : vector<1x32x32xf32> to vector<32x32xf32>
    %cst_296 = arith.constant dense<0.000000e+00> : vector<8x32xf32>
    %813 = tpu.matmul %807, %812, %cst_296 {dimension_numbers = #tpu.dot_dimension_numbers<[1], [0], [0], [1], [0, 0, 1, 1], [], []>} : vector<8x32xf32>, vector<32x32xf32>, vector<8x32xf32> -> vector<8x32xf32>
    %814 = arith.addf %810, %813 : vector<8x32xf32>
    %c3_297 = arith.constant 3 : index
    %c0_298 = arith.constant 0 : index
    %c0_299 = arith.constant 0 : index
    %815 = vector.load %arg29[%c3_297, %c0_298, %c0_299] : memref<4x5x32xf32, #tpu.memory_space<vmem>>, vector<1x5x32xf32>
    %816 = vector.shape_cast %815 : vector<1x5x32xf32> to vector<5x32xf32>
    %cst_300 = arith.constant dense<0.000000e+00> : vector<8x32xf32>
    %817 = tpu.matmul %242, %816, %cst_300 {dimension_numbers = #tpu.dot_dimension_numbers<[1], [0], [0], [1], [0, 0, 1, 1], [], []>} : vector<8x5xf32>, vector<5x32xf32>, vector<8x32xf32> -> vector<8x32xf32>
    %818 = arith.addf %814, %817 : vector<8x32xf32>
    %c3_301 = arith.constant 3 : index
    %c0_302 = arith.constant 0 : index
    %c0_303 = arith.constant 0 : index
    %819 = vector.load %arg30[%c3_301, %c0_302, %c0_303] : memref<4x1x32xf32, #tpu.memory_space<vmem>>, vector<1x1x32xf32>
    %820 = vector.shape_cast %819 : vector<1x1x32xf32> to vector<1x32xf32>
    %821 = vector.broadcast %820 : vector<1x32xf32> to vector<8x32xf32>
    %822 = arith.addf %818, %821 : vector<8x32xf32>
    %cst_304 = arith.constant 0.000000e+00 : f32
    %823 = vector.broadcast %cst_304 : f32 to vector<8x32xf32>
    %824 = arith.subf %823, %822 : vector<8x32xf32>
    %825 = math.exp %824 : vector<8x32xf32>
    %cst_305 = arith.constant 1.000000e+00 : f32
    %826 = vector.broadcast %cst_305 : f32 to vector<8x32xf32>
    %827 = arith.addf %826, %825 : vector<8x32xf32>
    %cst_306 = arith.constant 1.000000e+00 : f32
    %828 = vector.broadcast %cst_306 : f32 to vector<8x32xf32>
    %829 = arith.divf %828, %827 : vector<8x32xf32>
    %830 = arith.mulf %822, %829 : vector<8x32xf32>
    %c3_307 = arith.constant 3 : index
    %c0_308 = arith.constant 0 : index
    %c0_309 = arith.constant 0 : index
    %831 = vector.load %arg31[%c3_307, %c0_308, %c0_309] : memref<4x32x32xf32, #tpu.memory_space<vmem>>, vector<1x32x32xf32>
    %832 = vector.shape_cast %831 : vector<1x32x32xf32> to vector<32x32xf32>
    %cst_310 = arith.constant dense<0.000000e+00> : vector<8x32xf32>
    %833 = tpu.matmul %830, %832, %cst_310 {dimension_numbers = #tpu.dot_dimension_numbers<[1], [0], [0], [1], [0, 0, 1, 1], [], []>} : vector<8x32xf32>, vector<32x32xf32>, vector<8x32xf32> -> vector<8x32xf32>
    %834 = arith.addf %692, %833 : vector<8x32xf32>
    %c3_311 = arith.constant 3 : index
    %c0_312 = arith.constant 0 : index
    %c0_313 = arith.constant 0 : index
    %835 = vector.load %arg32[%c3_311, %c0_312, %c0_313] : memref<4x1x32xf32, #tpu.memory_space<vmem>>, vector<1x1x32xf32>
    %836 = vector.shape_cast %835 : vector<1x1x32xf32> to vector<1x32xf32>
    %837 = vector.broadcast %836 : vector<1x32xf32> to vector<8x32xf32>
    %838 = arith.addf %834, %837 : vector<8x32xf32>
    %c0_314 = arith.constant 0 : index
    %c0_315 = arith.constant 0 : index
    %839 = vector.load %arg33[%c0_314, %c0_315] : memref<32x32xf32, #tpu.memory_space<vmem>>, vector<32x32xf32>
    %cst_316 = arith.constant dense<0.000000e+00> : vector<8x32xf32>
    %840 = tpu.matmul %838, %839, %cst_316 {dimension_numbers = #tpu.dot_dimension_numbers<[1], [0], [0], [1], [0, 0, 1, 1], [], []>} : vector<8x32xf32>, vector<32x32xf32>, vector<8x32xf32> -> vector<8x32xf32>
    %c0_317 = arith.constant 0 : index
    %c0_318 = arith.constant 0 : index
    %841 = vector.load %arg34[%c0_317, %c0_318] : memref<1x32xf32, #tpu.memory_space<vmem>>, vector<1x32xf32>
    %842 = vector.broadcast %841 : vector<1x32xf32> to vector<8x32xf32>
    %843 = arith.addf %840, %842 : vector<8x32xf32>
    %cst_319 = arith.constant 0.000000e+00 : f32
    %844 = vector.broadcast %cst_319 : f32 to vector<8x32xf32>
    %845 = arith.subf %844, %843 : vector<8x32xf32>
    %846 = math.exp %845 : vector<8x32xf32>
    %cst_320 = arith.constant 1.000000e+00 : f32
    %847 = vector.broadcast %cst_320 : f32 to vector<8x32xf32>
    %848 = arith.addf %847, %846 : vector<8x32xf32>
    %cst_321 = arith.constant 1.000000e+00 : f32
    %849 = vector.broadcast %cst_321 : f32 to vector<8x32xf32>
    %850 = arith.divf %849, %848 : vector<8x32xf32>
    %851 = arith.mulf %843, %850 : vector<8x32xf32>
    %c0_322 = arith.constant 0 : index
    %c0_323 = arith.constant 0 : index
    %852 = vector.load %arg35[%c0_322, %c0_323] : memref<32x32xf32, #tpu.memory_space<vmem>>, vector<32x32xf32>
    %cst_324 = arith.constant dense<0.000000e+00> : vector<8x32xf32>
    %853 = tpu.matmul %851, %852, %cst_324 {dimension_numbers = #tpu.dot_dimension_numbers<[1], [0], [0], [1], [0, 0, 1, 1], [], []>} : vector<8x32xf32>, vector<32x32xf32>, vector<8x32xf32> -> vector<8x32xf32>
    %c0_325 = arith.constant 0 : index
    %c0_326 = arith.constant 0 : index
    %854 = vector.load %arg36[%c0_325, %c0_326] : memref<1x32xf32, #tpu.memory_space<vmem>>, vector<1x32xf32>
    %855 = vector.broadcast %854 : vector<1x32xf32> to vector<8x32xf32>
    %856 = arith.addf %853, %855 : vector<8x32xf32>
    %c0_327 = arith.constant 0 : index
    %c0_328 = arith.constant 0 : index
    %857 = vector.load %arg7[%c0_327, %c0_328] : memref<8x1xf32, #tpu.memory_space<vmem>>, vector<8x1xf32>
    %858 = vector.broadcast %857 : vector<8x1xf32> to vector<8x32xf32>
    %859 = arith.mulf %856, %858 : vector<8x32xf32>
    %c0_329 = arith.constant 0 : index
    %c0_330 = arith.constant 0 : index
    %860 = vector.load %arg12[%c0_329, %c0_330] : memref<8x8xf32, #tpu.memory_space<vmem>>, vector<8x8xf32>
    %c0_331 = arith.constant 0 : index
    %c0_332 = arith.constant 0 : index
    %861 = vector.load %arg37[%c0_331, %c0_332] : memref<32x32xf32, #tpu.memory_space<vmem>>, vector<32x32xf32>
    %cst_333 = arith.constant dense<0.000000e+00> : vector<8x32xf32>
    %862 = tpu.matmul %859, %861, %cst_333 {dimension_numbers = #tpu.dot_dimension_numbers<[1], [0], [0], [1], [0, 0, 1, 1], [], []>} : vector<8x32xf32>, vector<32x32xf32>, vector<8x32xf32> -> vector<8x32xf32>
    %cst_334 = arith.constant dense<0.000000e+00> : vector<8x32xf32>
    %863 = tpu.matmul %860, %862, %cst_334 {dimension_numbers = #tpu.dot_dimension_numbers<[1], [0], [0], [1], [0, 0, 1, 1], [], []>} : vector<8x8xf32>, vector<8x32xf32>, vector<8x32xf32> -> vector<8x32xf32>
    %864 = vector.extract_strided_slice %863 {offsets = [0, 0], sizes = [2, 32], strides = [1, 1]} : vector<8x32xf32> to vector<2x32xf32>
    %865 = vector.extract_strided_slice %863 {offsets = [2, 0], sizes = [2, 32], strides = [1, 1]} : vector<8x32xf32> to vector<2x32xf32>
    %866 = vector.extract_strided_slice %863 {offsets = [4, 0], sizes = [2, 32], strides = [1, 1]} : vector<8x32xf32> to vector<2x32xf32>
    %867 = vector.extract_strided_slice %863 {offsets = [6, 0], sizes = [2, 32], strides = [1, 1]} : vector<8x32xf32> to vector<2x32xf32>
    %868 = arith.minimumf %864, %865 : vector<2x32xf32>
    %869 = arith.maximumf %864, %865 : vector<2x32xf32>
    %870 = arith.minimumf %866, %867 : vector<2x32xf32>
    %871 = arith.maximumf %866, %867 : vector<2x32xf32>
    %872 = arith.minimumf %869, %870 : vector<2x32xf32>
    %873 = arith.maximumf %869, %870 : vector<2x32xf32>
    %874 = arith.minimumf %868, %872 : vector<2x32xf32>
    %875 = arith.maximumf %868, %872 : vector<2x32xf32>
    %876 = arith.minimumf %873, %871 : vector<2x32xf32>
    %877 = arith.maximumf %873, %871 : vector<2x32xf32>
    %878 = arith.minimumf %875, %876 : vector<2x32xf32>
    %879 = arith.maximumf %875, %876 : vector<2x32xf32>
    %c0_335 = arith.constant 0 : index
    %c0_336 = arith.constant 0 : index
    %880 = vector.load %arg38[%c0_335, %c0_336] : memref<4x32xf32, #tpu.memory_space<vmem>>, vector<4x32xf32>
    %881 = vector.extract_strided_slice %880 {offsets = [0, 0], sizes = [1, 32], strides = [1, 1]} : vector<4x32xf32> to vector<1x32xf32>
    %882 = vector.broadcast %881 : vector<1x32xf32> to vector<2x32xf32>
    %883 = arith.mulf %874, %882 : vector<2x32xf32>
    %884 = vector.extract_strided_slice %880 {offsets = [1, 0], sizes = [1, 32], strides = [1, 1]} : vector<4x32xf32> to vector<1x32xf32>
    %885 = vector.broadcast %884 : vector<1x32xf32> to vector<2x32xf32>
    %886 = arith.mulf %878, %885 : vector<2x32xf32>
    %887 = arith.addf %883, %886 : vector<2x32xf32>
    %888 = vector.extract_strided_slice %880 {offsets = [2, 0], sizes = [1, 32], strides = [1, 1]} : vector<4x32xf32> to vector<1x32xf32>
    %889 = vector.broadcast %888 : vector<1x32xf32> to vector<2x32xf32>
    %890 = arith.mulf %879, %889 : vector<2x32xf32>
    %891 = arith.addf %887, %890 : vector<2x32xf32>
    %892 = vector.extract_strided_slice %880 {offsets = [3, 0], sizes = [1, 32], strides = [1, 1]} : vector<4x32xf32> to vector<1x32xf32>
    %893 = vector.broadcast %892 : vector<1x32xf32> to vector<2x32xf32>
    %894 = arith.mulf %877, %893 : vector<2x32xf32>
    %895 = arith.addf %891, %894 : vector<2x32xf32>
    %c0_337 = arith.constant 0 : index
    %c0_338 = arith.constant 0 : index
    %896 = vector.load %arg39[%c0_337, %c0_338] : memref<32x32xf32, #tpu.memory_space<vmem>>, vector<32x32xf32>
    %cst_339 = arith.constant dense<0.000000e+00> : vector<2x32xf32>
    %897 = tpu.matmul %895, %896, %cst_339 {dimension_numbers = #tpu.dot_dimension_numbers<[1], [0], [0], [1], [0, 0, 1, 1], [], []>} : vector<2x32xf32>, vector<32x32xf32>, vector<2x32xf32> -> vector<2x32xf32>
    %c0_340 = arith.constant 0 : index
    %c0_341 = arith.constant 0 : index
    %898 = vector.load %arg40[%c0_340, %c0_341] : memref<1x32xf32, #tpu.memory_space<vmem>>, vector<1x32xf32>
    %899 = vector.broadcast %898 : vector<1x32xf32> to vector<2x32xf32>
    %900 = arith.addf %897, %899 : vector<2x32xf32>
    %cst_342 = arith.constant 0.000000e+00 : f32
    %901 = vector.broadcast %cst_342 : f32 to vector<2x32xf32>
    %902 = arith.subf %901, %900 : vector<2x32xf32>
    %903 = math.exp %902 : vector<2x32xf32>
    %cst_343 = arith.constant 1.000000e+00 : f32
    %904 = vector.broadcast %cst_343 : f32 to vector<2x32xf32>
    %905 = arith.addf %904, %903 : vector<2x32xf32>
    %cst_344 = arith.constant 1.000000e+00 : f32
    %906 = vector.broadcast %cst_344 : f32 to vector<2x32xf32>
    %907 = arith.divf %906, %905 : vector<2x32xf32>
    %908 = arith.mulf %900, %907 : vector<2x32xf32>
    %c0_345 = arith.constant 0 : index
    %c0_346 = arith.constant 0 : index
    %909 = vector.load %arg41[%c0_345, %c0_346] : memref<32x32xf32, #tpu.memory_space<vmem>>, vector<32x32xf32>
    %cst_347 = arith.constant dense<0.000000e+00> : vector<2x32xf32>
    %910 = tpu.matmul %908, %909, %cst_347 {dimension_numbers = #tpu.dot_dimension_numbers<[1], [0], [0], [1], [0, 0, 1, 1], [], []>} : vector<2x32xf32>, vector<32x32xf32>, vector<2x32xf32> -> vector<2x32xf32>
    %c0_348 = arith.constant 0 : index
    %c0_349 = arith.constant 0 : index
    %911 = vector.load %arg42[%c0_348, %c0_349] : memref<1x32xf32, #tpu.memory_space<vmem>>, vector<1x32xf32>
    %912 = vector.broadcast %911 : vector<1x32xf32> to vector<2x32xf32>
    %913 = arith.addf %910, %912 : vector<2x32xf32>
    %cst_350 = arith.constant 0.000000e+00 : f32
    %914 = vector.broadcast %cst_350 : f32 to vector<2x32xf32>
    %915 = arith.subf %914, %913 : vector<2x32xf32>
    %916 = math.exp %915 : vector<2x32xf32>
    %cst_351 = arith.constant 1.000000e+00 : f32
    %917 = vector.broadcast %cst_351 : f32 to vector<2x32xf32>
    %918 = arith.addf %917, %916 : vector<2x32xf32>
    %cst_352 = arith.constant 1.000000e+00 : f32
    %919 = vector.broadcast %cst_352 : f32 to vector<2x32xf32>
    %920 = arith.divf %919, %918 : vector<2x32xf32>
    %921 = arith.mulf %913, %920 : vector<2x32xf32>
    %c0_353 = arith.constant 0 : index
    %c0_354 = arith.constant 0 : index
    %922 = vector.load %arg43[%c0_353, %c0_354] : memref<32x1xf32, #tpu.memory_space<vmem>>, vector<32x1xf32>
    %cst_355 = arith.constant dense<0.000000e+00> : vector<2x1xf32>
    %923 = tpu.matmul %921, %922, %cst_355 {dimension_numbers = #tpu.dot_dimension_numbers<[1], [0], [0], [1], [0, 0, 1, 1], [], []>} : vector<2x32xf32>, vector<32x1xf32>, vector<2x1xf32> -> vector<2x1xf32>
    %c0_356 = arith.constant 0 : index
    %c0_357 = arith.constant 0 : index
    %924 = vector.load %arg44[%c0_356, %c0_357] : memref<1x1xf32, #tpu.memory_space<vmem>>, vector<1x1xf32>
    %925 = vector.broadcast %924 : vector<1x1xf32> to vector<2x1xf32>
    %926 = arith.addf %923, %925 : vector<2x1xf32>
    %c0_358 = arith.constant 0 : index
    %c0_359 = arith.constant 0 : index
    %927 = vector.load %arg45[%c0_358, %c0_359] : memref<2x1xf32, #tpu.memory_space<vmem>>, vector<2x1xf32>
    tpu.vector_store %arg45[%c0_358, %c0_359], %926 {strides = array<i32>} : memref<2x1xf32, #tpu.memory_space<vmem>>, vector<2x1xf32>,
    return
  }
}

</mosaic_0001>

<llo_original>
// kernel: tpu_custom_call.1
$region0: #{tpu_custom_call.1}
  #allocation0 [shape = 'u32[]', space=smem, size = 0x4, offset = 0x4, fixed_abs, tag = 'smem constant byte address 0x4 - core index']
  #allocation1 [shape = 'u32[144,128]{1,0:T(1,128)}', space=vmem, size = 0x12000, scoped, tag = 'internal scratch']
  #allocation2 [shape = 'f32[1,1]{1,0:T(1,128)S(1)}', space=vmem, size = 0x200, scoped, tag = 'scoped memory for tpu_custom_call.1']
  %s0 = inlined_call_operand.smem [shape: u32[46], index: -1, kind: input, shape index: {}]
  %s1 = sld [smem:[%s0]]
  %s2 = scalar_lea.smem %s0, 1
  %s3 = sld [smem:[%s2]]
  %s4 = scalar_lea.smem %s0, 2
  %s5 = sld [smem:[%s4]]
  %s6 = scalar_lea.smem %s0, 3
  %s7 = sld [smem:[%s6]]
  %s8 = scalar_lea.smem %s0, 4
  %s9 = sld [smem:[%s8]]
  %s10 = scalar_lea.smem %s0, 5
  %s11 = sld [smem:[%s10]]
  %s12 = scalar_lea.smem %s0, 6
  %s13 = sld [smem:[%s12]]
  %s14 = scalar_lea.smem %s0, 7
  %s15 = sld [smem:[%s14]]
  %s16 = scalar_lea.smem %s0, 8
  %s17 = sld [smem:[%s16]]
  %s18 = scalar_lea.smem %s0, 9
  %s19 = sld [smem:[%s18]]
  %s20 = scalar_lea.smem %s0, 10
  %s21 = sld [smem:[%s20]]
  %s22 = scalar_lea.smem %s0, 11
  %s23 = sld [smem:[%s22]]
  %s24 = scalar_lea.smem %s0, 12
  %s25 = sld [smem:[%s24]]
  %s26 = scalar_lea.smem %s0, 13
  %s27 = sld [smem:[%s26]]
  %s28 = scalar_lea.smem %s0, 14
  %s29 = sld [smem:[%s28]]
  %s30 = scalar_lea.smem %s0, 15
  %s31 = sld [smem:[%s30]]
  %s32 = scalar_lea.smem %s0, 16
  %s33 = sld [smem:[%s32]]
  %s34 = scalar_lea.smem %s0, 17
  %s35 = sld [smem:[%s34]]
  %s36 = scalar_lea.smem %s0, 18
  %s37 = sld [smem:[%s36]]
  %s38 = scalar_lea.smem %s0, 19
  %s39 = sld [smem:[%s38]]
  %s40 = scalar_lea.smem %s0, 20
  %s41 = sld [smem:[%s40]]
  %s42 = scalar_lea.smem %s0, 21
  %s43 = sld [smem:[%s42]]
  %s44 = scalar_lea.smem %s0, 22
  %s45 = sld [smem:[%s44]]
  %s46 = scalar_lea.smem %s0, 23
  %s47 = sld [smem:[%s46]]
  %s48 = scalar_lea.smem %s0, 24
  %s49 = sld [smem:[%s48]]
  %s50 = scalar_lea.smem %s0, 25
  %s51 = sld [smem:[%s50]]
  %s52 = scalar_lea.smem %s0, 26
  %s53 = sld [smem:[%s52]]
  %s54 = scalar_lea.smem %s0, 27
  %s55 = sld [smem:[%s54]]
  %s56 = scalar_lea.smem %s0, 28
  %s57 = sld [smem:[%s56]]
  %s58 = scalar_lea.smem %s0, 29
  %s59 = sld [smem:[%s58]]
  %s60 = scalar_lea.smem %s0, 30
  %s61 = sld [smem:[%s60]]
  %s62 = scalar_lea.smem %s0, 31
  %s63 = sld [smem:[%s62]]
  %s64 = scalar_lea.smem %s0, 32
  %s65 = sld [smem:[%s64]]
  %s66 = scalar_lea.smem %s0, 33
  %s67 = sld [smem:[%s66]]
  %s68 = scalar_lea.smem %s0, 34
  %s69 = sld [smem:[%s68]]
  %s70 = scalar_lea.smem %s0, 35
  %s71 = sld [smem:[%s70]]
  %s72 = scalar_lea.smem %s0, 36
  %s73 = sld [smem:[%s72]]
  %s74 = scalar_lea.smem %s0, 37
  %s75 = sld [smem:[%s74]]
  %s76 = scalar_lea.smem %s0, 38
  %s77 = sld [smem:[%s76]]
  %s78 = scalar_lea.smem %s0, 39
  %s79 = sld [smem:[%s78]]
  %s80 = scalar_lea.smem %s0, 40
  %s81 = sld [smem:[%s80]]
  %s82 = scalar_lea.smem %s0, 41
  %s83 = sld [smem:[%s82]]
  %s84 = scalar_lea.smem %s0, 42
  %s85 = sld [smem:[%s84]]
  %s86 = scalar_lea.smem %s0, 43
  %s87 = sld [smem:[%s86]]
  %s88 = scalar_lea.smem %s0, 44
  %s89 = sld [smem:[%s88]]
  %s90 = scalar_lea.smem %s0, 45
  %s91 = sld [smem:[%s90]]
  %s92 = sld [smem:[#allocation0]]
  $region270: #{tpu_custom_call.1} parent=0
    _
  %s94 = ssub.s32 1, %s92
  %s95 = scalar_select 0, %s94, %s92
  %v96 = vstv %s89
  %97 = vst [vmem:[#allocation2] sm:$0x1] %v96
  $region1: #{tpu_custom_call.1} parent=0
    #allocation3 [shape = 'u8[4096]{0}', space=vmem, size = 0x1000, scoped, tag = 'input window, operand 5, single buffered']
    #allocation4 [shape = 's32[1]{0}', space=sflag, size = 0x4, scoped, tag = 'scoped memory for tpu_custom_call.1']
    #allocation5 [shape = 'u8[12288]{0}', space=vmem, size = 0x3000, scoped, tag = 'input window, operand 11, single buffered']
    #allocation6 [shape = 's32[1]{0}', space=sflag, size = 0x4, scoped, tag = 'scoped memory for tpu_custom_call.1']
    #allocation7 [shape = 'u8[4096]{0}', space=vmem, size = 0x1000, scoped, tag = 'input window, operand 12, single buffered']
    #allocation8 [shape = 'u8[4096]{0}', space=vmem, size = 0x1000, scoped, tag = 'input window, operand 13, single buffered']
    #allocation9 [shape = 's32[1]{0}', space=sflag, size = 0x4, scoped, tag = 'scoped memory for tpu_custom_call.1']
    #allocation10 [shape = 'u8[2048]{0}', space=vmem, size = 0x800, scoped, tag = 'input window, operand 15, single buffered']
    #allocation11 [shape = 'u8[2048]{0}', space=vmem, size = 0x800, scoped, tag = 'input window, operand 16, single buffered']
    #allocation12 [shape = 's32[1]{0}', space=sflag, size = 0x4, scoped, tag = 'scoped memory for tpu_custom_call.1']
    #allocation13 [shape = 'u8[16384]{0}', space=vmem, size = 0x4000, scoped, tag = 'input window, operand 17, single buffered']
    #allocation14 [shape = 'u8[2048]{0}', space=vmem, size = 0x800, scoped, tag = 'input window, operand 18, single buffered']
    #allocation15 [shape = 's32[1]{0}', space=sflag, size = 0x4, scoped, tag = 'scoped memory for tpu_custom_call.1']
    #allocation16 [shape = 'u8[4096]{0}', space=vmem, size = 0x1000, scoped, tag = 'input window, operand 23, single buffered']
    #allocation17 [shape = 'u8[2048]{0}', space=vmem, size = 0x800, scoped, tag = 'input window, operand 24, single buffered']
    #allocation18 [shape = 's32[1]{0}', space=sflag, size = 0x4, scoped, tag = 'scoped memory for tpu_custom_call.1']
    #allocation19 [shape = 'u8[2048]{0}', space=vmem, size = 0x800, scoped, tag = 'input window, operand 26, single buffered']
    #allocation20 [shape = 'u8[65536]{0}', space=vmem, size = 0x10000, scoped, tag = 'input window, operand 27, single buffered']
    #allocation21 [shape = 's32[1]{0}', space=sflag, size = 0x4, scoped, tag = 'scoped memory for tpu_custom_call.1']
    #allocation22 [shape = 'u8[65536]{0}', space=vmem, size = 0x10000, scoped, tag = 'input window, operand 28, single buffered']
    #allocation23 [shape = 'u8[2048]{0}', space=vmem, size = 0x800, scoped, tag = 'input window, operand 30, single buffered']
    #allocation24 [shape = 's32[1]{0}', space=sflag, size = 0x4, scoped, tag = 'scoped memory for tpu_custom_call.1']
    #allocation25 [shape = 'u8[65536]{0}', space=vmem, size = 0x10000, scoped, tag = 'input window, operand 31, single buffered']
    #allocation26 [shape = 'u8[2048]{0}', space=vmem, size = 0x800, scoped, tag = 'input window, operand 32, single buffered']
    #allocation27 [shape = 's32[1]{0}', space=sflag, size = 0x4, scoped, tag = 'scoped memory for tpu_custom_call.1']
    #allocation28 [shape = 'u8[512]{0}', space=vmem, size = 0x400, scoped, tag = 'input window, operand 34, single buffered']
    #allocation29 [shape = 'u8[16384]{0}', space=vmem, size = 0x4000, scoped, tag = 'input window, operand 37, single buffered']
    #allocation30 [shape = 's32[1]{0}', space=sflag, size = 0x4, scoped, tag = 'scoped memory for tpu_custom_call.1']
    #allocation31 [shape = 'u8[16384]{0}', space=vmem, size = 0x4000, scoped, tag = 'input window, operand 39, single buffered']
    #allocation32 [shape = 'u8[16384]{0}', space=vmem, size = 0x4000, scoped, tag = 'input window, operand 41, single buffered']
    #allocation33 [shape = 's32[1]{0}', space=sflag, size = 0x4, scoped, tag = 'scoped memory for tpu_custom_call.1']
    %98 = vsyncpa [#allocation4], 0
    %99 = vsyncpa [#allocation6], 0
    %100 = vsyncpa [#allocation9], 0
    %101 = vsyncpa [#allocation12], 0
    %102 = vsyncpa [#allocation15], 0
    %103 = vsyncpa [#allocation18], 0
    %104 = vsyncpa [#allocation21], 0
    %105 = vsyncpa [#allocation24], 0
    %106 = vsyncpa [#allocation27], 0
    %107 = vsyncpa [#allocation30], 0
    %108 = vsyncpa [#allocation33], 0
    // Predicated region
    $region2: #{tpu_custom_call.1} parent=1 // pred_check
      _
    $region3: #{tpu_custom_call.1} parent=1 // pred_check_branch
      %110 = sbr.rel (0) target = $region5
    $region4: #{tpu_custom_call.1} parent=1 // pred_region
      _
    $region5: #{tpu_custom_call.1} parent=1 // pred_fallthru
      _
    // Predicated region
    $region6: #{tpu_custom_call.1} parent=1 // pred_check
      _
    $region7: #{tpu_custom_call.1} parent=1 // pred_check_branch
      %112 = sbr.rel (0) target = $region9
    $region8: #{tpu_custom_call.1} parent=1 // pred_region
      _
    $region9: #{tpu_custom_call.1} parent=1 // pred_fallthru
      _
    // Predicated region
    $region10: #{tpu_custom_call.1} parent=1 // pred_check
      _
    $region11: #{tpu_custom_call.1} parent=1 // pred_check_branch
      %114 = sbr.rel (0) target = $region13
    $region12: #{tpu_custom_call.1} parent=1 // pred_region
      _
    $region13: #{tpu_custom_call.1} parent=1 // pred_fallthru
      _
    // Predicated region
    $region14: #{tpu_custom_call.1} parent=1 // pred_check
      _
    $region15: #{tpu_custom_call.1} parent=1 // pred_check_branch
      %116 = sbr.rel (0) target = $region17
    $region16: #{tpu_custom_call.1} parent=1 // pred_region
      _
    $region17: #{tpu_custom_call.1} parent=1 // pred_fallthru
      _
    // Predicated region
    $region18: #{tpu_custom_call.1} parent=1 // pred_check
      _
    $region19: #{tpu_custom_call.1} parent=1 // pred_check_branch
      %118 = sbr.rel (0) target = $region21
    $region20: #{tpu_custom_call.1} parent=1 // pred_region
      _
    $region21: #{tpu_custom_call.1} parent=1 // pred_fallthru
      _
    // Predicated region
    $region22: #{tpu_custom_call.1} parent=1 // pred_check
      _
    $region23: #{tpu_custom_call.1} parent=1 // pred_check_branch
      %120 = sbr.rel (0) target = $region25
    $region24: #{tpu_custom_call.1} parent=1 // pred_region
      %s122 = ssub.s32 128, 128
      %123 = vsyncadd [#allocation4], %s122
      %s125 = sshll.u32 [#allocation3], 4
      %s126 = int_to_ptr.vmem [resolvable:$true] %s125
      %128 = dma.hbm_to_vmem [thread:$0]  %s11, 128, %s126, [#allocation4]
    $region25: #{tpu_custom_call.1} parent=1 // pred_fallthru
      _
    // Predicated region
    $region26: #{tpu_custom_call.1} parent=1 // pred_check
      _
    $region27: #{tpu_custom_call.1} parent=1 // pred_check_branch
      %130 = sbr.rel (0) target = $region29
    $region28: #{tpu_custom_call.1} parent=1 // pred_region
      _
    $region29: #{tpu_custom_call.1} parent=1 // pred_fallthru
      _
    // Predicated region
    $region30: #{tpu_custom_call.1} parent=1 // pred_check
      _
    $region31: #{tpu_custom_call.1} parent=1 // pred_check_branch
      %132 = sbr.rel (0) target = $region33
    $region32: #{tpu_custom_call.1} parent=1 // pred_region
      _
    $region33: #{tpu_custom_call.1} parent=1 // pred_fallthru
      _
    // Predicated region
    $region34: #{tpu_custom_call.1} parent=1 // pred_check
      _
    $region35: #{tpu_custom_call.1} parent=1 // pred_check_branch
      %134 = sbr.rel (0) target = $region37
    $region36: #{tpu_custom_call.1} parent=1 // pred_region
      _
    $region37: #{tpu_custom_call.1} parent=1 // pred_fallthru
      _
    // Predicated region
    $region38: #{tpu_custom_call.1} parent=1 // pred_check
      _
    $region39: #{tpu_custom_call.1} parent=1 // pred_check_branch
      %136 = sbr.rel (0) target = $region41
    $region40: #{tpu_custom_call.1} parent=1 // pred_region
      _
    $region41: #{tpu_custom_call.1} parent=1 // pred_fallthru
      _
    // Predicated region
    $region42: #{tpu_custom_call.1} parent=1 // pred_check
      _
    $region43: #{tpu_custom_call.1} parent=1 // pred_check_branch
      %138 = sbr.rel (0) target = $region45
    $region44: #{tpu_custom_call.1} parent=1 // pred_region
      _
    $region45: #{tpu_custom_call.1} parent=1 // pred_fallthru
      _
    // Predicated region
    $region46: #{tpu_custom_call.1} parent=1 // pred_check
      _
    $region47: #{tpu_custom_call.1} parent=1 // pred_check_branch
      %140 = sbr.rel (0) target = $region49
    $region48: #{tpu_custom_call.1} parent=1 // pred_region
      %s142 = ssub.s32 384, 384
      %143 = vsyncadd [#allocation6], %s142
      %s144 = sshll.u32 [#allocation5], 4
      %s145 = int_to_ptr.vmem [resolvable:$true] %s144
      %150 = dma.hbm_to_vmem [thread:$0]  %s23, 384, %s145, [#allocation6], 128, 128, 8
    $region49: #{tpu_custom_call.1} parent=1 // pred_fallthru
      _
    // Predicated region
    $region50: #{tpu_custom_call.1} parent=1 // pred_check
      _
    $region51: #{tpu_custom_call.1} parent=1 // pred_check_branch
      %152 = sbr.rel (0) target = $region53
    $region52: #{tpu_custom_call.1} parent=1 // pred_region
      %s154 = ssub.s32 128, 128
      %155 = vsyncadd [#allocation6], %s154
      %s157 = sshll.u32 [#allocation7], 4
      %s158 = int_to_ptr.vmem [resolvable:$true] %s157
      %160 = dma.hbm_to_vmem [thread:$0]  %s25, 128, %s158, [#allocation6]
    $region53: #{tpu_custom_call.1} parent=1 // pred_fallthru
      _
    // Predicated region
    $region54: #{tpu_custom_call.1} parent=1 // pred_check
      _
    $region55: #{tpu_custom_call.1} parent=1 // pred_check_branch
      %162 = sbr.rel (0) target = $region57
    $region56: #{tpu_custom_call.1} parent=1 // pred_region
      %s164 = ssub.s32 128, 128
      %165 = vsyncadd [#allocation9], %s164
      %s167 = sshll.u32 [#allocation8], 4
      %s168 = int_to_ptr.vmem [resolvable:$true] %s167
      %170 = dma.hbm_to_vmem [thread:$0]  %s27, 128, %s168, [#allocation9]
    $region57: #{tpu_custom_call.1} parent=1 // pred_fallthru
      _
    // Predicated region
    $region58: #{tpu_custom_call.1} parent=1 // pred_check
      _
    $region59: #{tpu_custom_call.1} parent=1 // pred_check_branch
      %172 = sbr.rel (0) target = $region61
    $region60: #{tpu_custom_call.1} parent=1 // pred_region
      _
    $region61: #{tpu_custom_call.1} parent=1 // pred_fallthru
      _
    // Predicated region
    $region62: #{tpu_custom_call.1} parent=1 // pred_check
      _
    $region63: #{tpu_custom_call.1} parent=1 // pred_check_branch
      %174 = sbr.rel (0) target = $region65
    $region64: #{tpu_custom_call.1} parent=1 // pred_region
      %s176 = ssub.s32 64, 64
      %177 = vsyncadd [#allocation9], %s176
      %s179 = sshll.u32 [#allocation10], 4
      %s180 = int_to_ptr.vmem [resolvable:$true] %s179
      %182 = dma.hbm_to_vmem [thread:$0]  %s31, 64, %s180, [#allocation9]
    $region65: #{tpu_custom_call.1} parent=1 // pred_fallthru
      _
    // Predicated region
    $region66: #{tpu_custom_call.1} parent=1 // pred_check
      _
    $region67: #{tpu_custom_call.1} parent=1 // pred_check_branch
      %184 = sbr.rel (0) target = $region69
    $region68: #{tpu_custom_call.1} parent=1 // pred_region
      %s186 = ssub.s32 64, 64
      %187 = vsyncadd [#allocation12], %s186
      %s189 = sshll.u32 [#allocation11], 4
      %s190 = int_to_ptr.vmem [resolvable:$true] %s189
      %192 = dma.hbm_to_vmem [thread:$0]  %s33, 64, %s190, [#allocation12]
    $region69: #{tpu_custom_call.1} parent=1 // pred_fallthru
      _
    // Predicated region
    $region70: #{tpu_custom_call.1} parent=1 // pred_check
      _
    $region71: #{tpu_custom_call.1} parent=1 // pred_check_branch
      %194 = sbr.rel (0) target = $region73
    $region72: #{tpu_custom_call.1} parent=1 // pred_region
      %s196 = ssub.s32 512, 512
      %197 = vsyncadd [#allocation12], %s196
      %s198 = sshll.u32 [#allocation13], 4
      %s199 = int_to_ptr.vmem [resolvable:$true] %s198
      %204 = dma.hbm_to_vmem [thread:$0]  %s35, 512, %s199, [#allocation12], 128, 128, 8
    $region73: #{tpu_custom_call.1} parent=1 // pred_fallthru
      _
    // Predicated region
    $region74: #{tpu_custom_call.1} parent=1 // pred_check
      _
    $region75: #{tpu_custom_call.1} parent=1 // pred_check_branch
      %206 = sbr.rel (0) target = $region77
    $region76: #{tpu_custom_call.1} parent=1 // pred_region
      %s208 = ssub.s32 64, 64
      %209 = vsyncadd [#allocation15], %s208
      %s211 = sshll.u32 [#allocation14], 4
      %s212 = int_to_ptr.vmem [resolvable:$true] %s211
      %214 = dma.hbm_to_vmem [thread:$0]  %s37, 64, %s212, [#allocation15]
    $region77: #{tpu_custom_call.1} parent=1 // pred_fallthru
      _
    // Predicated region
    $region78: #{tpu_custom_call.1} parent=1 // pred_check
      _
    $region79: #{tpu_custom_call.1} parent=1 // pred_check_branch
      %216 = sbr.rel (0) target = $region81
    $region80: #{tpu_custom_call.1} parent=1 // pred_region
      _
    $region81: #{tpu_custom_call.1} parent=1 // pred_fallthru
      _
    // Predicated region
    $region82: #{tpu_custom_call.1} parent=1 // pred_check
      _
    $region83: #{tpu_custom_call.1} parent=1 // pred_check_branch
      %218 = sbr.rel (0) target = $region85
    $region84: #{tpu_custom_call.1} parent=1 // pred_region
      _
    $region85: #{tpu_custom_call.1} parent=1 // pred_fallthru
      _
    // Predicated region
    $region86: #{tpu_custom_call.1} parent=1 // pred_check
      _
    $region87: #{tpu_custom_call.1} parent=1 // pred_check_branch
      %220 = sbr.rel (0) target = $region89
    $region88: #{tpu_custom_call.1} parent=1 // pred_region
      _
    $region89: #{tpu_custom_call.1} parent=1 // pred_fallthru
      _
    // Predicated region
    $region90: #{tpu_custom_call.1} parent=1 // pred_check
      _
    $region91: #{tpu_custom_call.1} parent=1 // pred_check_branch
      %222 = sbr.rel (0) target = $region93
    $region92: #{tpu_custom_call.1} parent=1 // pred_region
      _
    $region93: #{tpu_custom_call.1} parent=1 // pred_fallthru
      _
    // Predicated region
    $region94: #{tpu_custom_call.1} parent=1 // pred_check
      _
    $region95: #{tpu_custom_call.1} parent=1 // pred_check_branch
      %224 = sbr.rel (0) target = $region97
    $region96: #{tpu_custom_call.1} parent=1 // pred_region
      %s226 = ssub.s32 128, 128
      %227 = vsyncadd [#allocation15], %s226
      %s228 = sshll.u32 [#allocation16], 4
      %s229 = int_to_ptr.vmem [resolvable:$true] %s228
      %234 = dma.hbm_to_vmem [thread:$0]  %s47, 128, %s229, [#allocation15], 32, 32, 2
    $region97: #{tpu_custom_call.1} parent=1 // pred_fallthru
      _
    // Predicated region
    $region98: #{tpu_custom_call.1} parent=1 // pred_check
      _
    $region99: #{tpu_custom_call.1} parent=1 // pred_check_branch
      %236 = sbr.rel (0) target = $region101
    $region100: #{tpu_custom_call.1} parent=1 // pred_region
      %s238 = ssub.s32 64, 64
      %239 = vsyncadd [#allocation18], %s238
      %s240 = sshll.u32 [#allocation17], 4
      %s241 = int_to_ptr.vmem [resolvable:$true] %s240
      %246 = dma.hbm_to_vmem [thread:$0]  %s49, 64, %s241, [#allocation18], 16, 16, 1
    $region101: #{tpu_custom_call.1} parent=1 // pred_fallthru
      _
    // Predicated region
    $region102: #{tpu_custom_call.1} parent=1 // pred_check
      _
    $region103: #{tpu_custom_call.1} parent=1 // pred_check_branch
      %248 = sbr.rel (0) target = $region105
    $region104: #{tpu_custom_call.1} parent=1 // pred_region
      _
    $region105: #{tpu_custom_call.1} parent=1 // pred_fallthru
      _
    // Predicated region
    $region106: #{tpu_custom_call.1} parent=1 // pred_check
      _
    $region107: #{tpu_custom_call.1} parent=1 // pred_check_branch
      %250 = sbr.rel (0) target = $region109
    $region108: #{tpu_custom_call.1} parent=1 // pred_region
      %s252 = ssub.s32 64, 64
      %253 = vsyncadd [#allocation18], %s252
      %s254 = sshll.u32 [#allocation19], 4
      %s255 = int_to_ptr.vmem [resolvable:$true] %s254
      %260 = dma.hbm_to_vmem [thread:$0]  %s53, 64, %s255, [#allocation18], 16, 16, 1
    $region109: #{tpu_custom_call.1} parent=1 // pred_fallthru
      _
    // Predicated region
    $region110: #{tpu_custom_call.1} parent=1 // pred_check
      _
    $region111: #{tpu_custom_call.1} parent=1 // pred_check_branch
      %262 = sbr.rel (0) target = $region113
    $region112: #{tpu_custom_call.1} parent=1 // pred_region
      %s264 = ssub.s32 2048, 2048
      %265 = vsyncadd [#allocation21], %s264
      %s266 = sshll.u32 [#allocation20], 4
      %s267 = int_to_ptr.vmem [resolvable:$true] %s266
      %272 = dma.hbm_to_vmem [thread:$0]  %s55, 2048, %s267, [#allocation21], 128, 128, 8
    $region113: #{tpu_custom_call.1} parent=1 // pred_fallthru
      _
    // Predicated region
    $region114: #{tpu_custom_call.1} parent=1 // pred_check
      _
    $region115: #{tpu_custom_call.1} parent=1 // pred_check_branch
      %274 = sbr.rel (0) target = $region117
    $region116: #{tpu_custom_call.1} parent=1 // pred_region
      %s276 = ssub.s32 2048, 2048
      %277 = vsyncadd [#allocation21], %s276
      %s278 = sshll.u32 [#allocation22], 4
      %s279 = int_to_ptr.vmem [resolvable:$true] %s278
      %284 = dma.hbm_to_vmem [thread:$0]  %s57, 2048, %s279, [#allocation21], 128, 128, 8
    $region117: #{tpu_custom_call.1} parent=1 // pred_fallthru
      _
    // Predicated region
    $region118: #{tpu_custom_call.1} parent=1 // pred_check
      _
    $region119: #{tpu_custom_call.1} parent=1 // pred_check_branch
      %286 = sbr.rel (0) target = $region121
    $region120: #{tpu_custom_call.1} parent=1 // pred_region
      _
    $region121: #{tpu_custom_call.1} parent=1 // pred_fallthru
      _
    // Predicated region
    $region122: #{tpu_custom_call.1} parent=1 // pred_check
      _
    $region123: #{tpu_custom_call.1} parent=1 // pred_check_branch
      %288 = sbr.rel (0) target = $region125
    $region124: #{tpu_custom_call.1} parent=1 // pred_region
      %s290 = ssub.s32 64, 64
      %291 = vsyncadd [#allocation24], %s290
      %s292 = sshll.u32 [#allocation23], 4
      %s293 = int_to_ptr.vmem [resolvable:$true] %s292
      %298 = dma.hbm_to_vmem [thread:$0]  %s61, 64, %s293, [#allocation24], 16, 16, 1
    $region125: #{tpu_custom_call.1} parent=1 // pred_fallthru
      _
    // Predicated region
    $region126: #{tpu_custom_call.1} parent=1 // pred_check
      _
    $region127: #{tpu_custom_call.1} parent=1 // pred_check_branch
      %300 = sbr.rel (0) target = $region129
    $region128: #{tpu_custom_call.1} parent=1 // pred_region
      %s302 = ssub.s32 2048, 2048
      %303 = vsyncadd [#allocation24], %s302
      %s304 = sshll.u32 [#allocation25], 4
      %s305 = int_to_ptr.vmem [resolvable:$true] %s304
      %310 = dma.hbm_to_vmem [thread:$0]  %s63, 2048, %s305, [#allocation24], 128, 128, 8
    $region129: #{tpu_custom_call.1} parent=1 // pred_fallthru
      _
    // Predicated region
    $region130: #{tpu_custom_call.1} parent=1 // pred_check
      _
    $region131: #{tpu_custom_call.1} parent=1 // pred_check_branch
      %312 = sbr.rel (0) target = $region133
    $region132: #{tpu_custom_call.1} parent=1 // pred_region
      %s314 = ssub.s32 64, 64
      %315 = vsyncadd [#allocation27], %s314
      %s316 = sshll.u32 [#allocation26], 4
      %s317 = int_to_ptr.vmem [resolvable:$true] %s316
      %322 = dma.hbm_to_vmem [thread:$0]  %s65, 64, %s317, [#allocation27], 16, 16, 1
    $region133: #{tpu_custom_call.1} parent=1 // pred_fallthru
      _
    // Predicated region
    $region134: #{tpu_custom_call.1} parent=1 // pred_check
      _
    $region135: #{tpu_custom_call.1} parent=1 // pred_check_branch
      %324 = sbr.rel (0) target = $region137
    $region136: #{tpu_custom_call.1} parent=1 // pred_region
      _
    $region137: #{tpu_custom_call.1} parent=1 // pred_fallthru
      _
    // Predicated region
    $region138: #{tpu_custom_call.1} parent=1 // pred_check
      _
    $region139: #{tpu_custom_call.1} parent=1 // pred_check_branch
      %326 = sbr.rel (0) target = $region141
    $region140: #{tpu_custom_call.1} parent=1 // pred_region
      %s328 = ssub.s32 16, 16
      %329 = vsyncadd [#allocation27], %s328
      %s331 = sshll.u32 [#allocation28], 4
      %s332 = int_to_ptr.vmem [resolvable:$true] %s331
      %334 = dma.hbm_to_vmem [thread:$0]  %s69, 16, %s332, [#allocation27]
    $region141: #{tpu_custom_call.1} parent=1 // pred_fallthru
      _
    // Predicated region
    $region142: #{tpu_custom_call.1} parent=1 // pred_check
      _
    $region143: #{tpu_custom_call.1} parent=1 // pred_check_branch
      %336 = sbr.rel (0) target = $region145
    $region144: #{tpu_custom_call.1} parent=1 // pred_region
      _
    $region145: #{tpu_custom_call.1} parent=1 // pred_fallthru
      _
    // Predicated region
    $region146: #{tpu_custom_call.1} parent=1 // pred_check
      _
    $region147: #{tpu_custom_call.1} parent=1 // pred_check_branch
      %338 = sbr.rel (0) target = $region149
    $region148: #{tpu_custom_call.1} parent=1 // pred_region
      _
    $region149: #{tpu_custom_call.1} parent=1 // pred_fallthru
      _
    // Predicated region
    $region150: #{tpu_custom_call.1} parent=1 // pred_check
      _
    $region151: #{tpu_custom_call.1} parent=1 // pred_check_branch
      %340 = sbr.rel (0) target = $region153
    $region152: #{tpu_custom_call.1} parent=1 // pred_region
      %s342 = ssub.s32 512, 512
      %343 = vsyncadd [#allocation30], %s342
      %s344 = sshll.u32 [#allocation29], 4
      %s345 = int_to_ptr.vmem [resolvable:$true] %s344
      %350 = dma.hbm_to_vmem [thread:$0]  %s75, 512, %s345, [#allocation30], 128, 128, 8
    $region153: #{tpu_custom_call.1} parent=1 // pred_fallthru
      _
    // Predicated region
    $region154: #{tpu_custom_call.1} parent=1 // pred_check
      _
    $region155: #{tpu_custom_call.1} parent=1 // pred_check_branch
      %352 = sbr.rel (0) target = $region157
    $region156: #{tpu_custom_call.1} parent=1 // pred_region
      _
    $region157: #{tpu_custom_call.1} parent=1 // pred_fallthru
      _
    // Predicated region
    $region158: #{tpu_custom_call.1} parent=1 // pred_check
      _
    $region159: #{tpu_custom_call.1} parent=1 // pred_check_branch
      %354 = sbr.rel (0) target = $region161
    $region160: #{tpu_custom_call.1} parent=1 // pred_region
      %s356 = ssub.s32 512, 512
      %357 = vsyncadd [#allocation30], %s356
      %s358 = sshll.u32 [#allocation31], 4
      %s359 = int_to_ptr.vmem [resolvable:$true] %s358
      %364 = dma.hbm_to_vmem [thread:$0]  %s79, 512, %s359, [#allocation30], 128, 128, 8
    $region161: #{tpu_custom_call.1} parent=1 // pred_fallthru
      _
    // Predicated region
    $region162: #{tpu_custom_call.1} parent=1 // pred_check
      _
    $region163: #{tpu_custom_call.1} parent=1 // pred_check_branch
      %366 = sbr.rel (0) target = $region165
    $region164: #{tpu_custom_call.1} parent=1 // pred_region
      _
    $region165: #{tpu_custom_call.1} parent=1 // pred_fallthru
      _
    // Predicated region
    $region166: #{tpu_custom_call.1} parent=1 // pred_check
      _
    $region167: #{tpu_custom_call.1} parent=1 // pred_check_branch
      %368 = sbr.rel (0) target = $region169
    $region168: #{tpu_custom_call.1} parent=1 // pred_region
      %s370 = ssub.s32 512, 512
      %371 = vsyncadd [#allocation33], %s370
      %s372 = sshll.u32 [#allocation32], 4
      %s373 = int_to_ptr.vmem [resolvable:$true] %s372
      %378 = dma.hbm_to_vmem [thread:$0]  %s83, 512, %s373, [#allocation33], 128, 128, 8
    $region169: #{tpu_custom_call.1} parent=1 // pred_fallthru
      _
    // Predicated region
    $region170: #{tpu_custom_call.1} parent=1 // pred_check
      _
    $region171: #{tpu_custom_call.1} parent=1 // pred_check_branch
      %380 = sbr.rel (0) target = $region173
    $region172: #{tpu_custom_call.1} parent=1 // pred_region
      _
    $region173: #{tpu_custom_call.1} parent=1 // pred_fallthru
      _
    // Predicated region
    $region174: #{tpu_custom_call.1} parent=1 // pred_check
      _
    $region175: #{tpu_custom_call.1} parent=1 // pred_check_branch
      %382 = sbr.rel (0) target = $region177
    $region176: #{tpu_custom_call.1} parent=1 // pred_region
      _
    $region177: #{tpu_custom_call.1} parent=1 // pred_fallthru
      _
    // Predicated region
    $region178: #{tpu_custom_call.1} parent=1 // pred_check
      _
    $region179: #{tpu_custom_call.1} parent=1 // pred_check_branch
      %384 = sbr.rel (0) target = $region181
    $region180: #{tpu_custom_call.1} parent=1 // pred_region
      _
    $region181: #{tpu_custom_call.1} parent=1 // pred_fallthru
      _
    // Predicated region
    $region182: #{tpu_custom_call.1} parent=1 // pred_check
      _
    $region183: #{tpu_custom_call.1} parent=1 // pred_check_branch
      %386 = sbr.rel (0) target = $region185
    $region184: #{tpu_custom_call.1} parent=1 // pred_region
      %387 = dma.done [#allocation4], 128
    $region185: #{tpu_custom_call.1} parent=1 // pred_fallthru
      _
    // Predicated region
    $region186: #{tpu_custom_call.1} parent=1 // pred_check
      _
    $region187: #{tpu_custom_call.1} parent=1 // pred_check_branch
      %389 = sbr.rel (0) target = $region189
    $region188: #{tpu_custom_call.1} parent=1 // pred_region
      %390 = dma.done [#allocation6], 384
    $region189: #{tpu_custom_call.1} parent=1 // pred_fallthru
      _
    // Predicated region
    $region190: #{tpu_custom_call.1} parent=1 // pred_check
      _
    $region191: #{tpu_custom_call.1} parent=1 // pred_check_branch
      %392 = sbr.rel (0) target = $region193
    $region192: #{tpu_custom_call.1} parent=1 // pred_region
      %393 = dma.done [#allocation6], 128
    $region193: #{tpu_custom_call.1} parent=1 // pred_fallthru
      _
    // Predicated region
    $region194: #{tpu_custom_call.1} parent=1 // pred_check
      _
    $region195: #{tpu_custom_call.1} parent=1 // pred_check_branch
      %395 = sbr.rel (0) target = $region197
    $region196: #{tpu_custom_call.1} parent=1 // pred_region
      %396 = dma.done [#allocation9], 128
    $region197: #{tpu_custom_call.1} parent=1 // pred_fallthru
      _
    // Predicated region
    $region198: #{tpu_custom_call.1} parent=1 // pred_check
      _
    $region199: #{tpu_custom_call.1} parent=1 // pred_check_branch
      %398 = sbr.rel (0) target = $region201
    $region200: #{tpu_custom_call.1} parent=1 // pred_region
      %399 = dma.done [#allocation9], 64
    $region201: #{tpu_custom_call.1} parent=1 // pred_fallthru
      _
    // Predicated region
    $region202: #{tpu_custom_call.1} parent=1 // pred_check
      _
    $region203: #{tpu_custom_call.1} parent=1 // pred_check_branch
      %401 = sbr.rel (0) target = $region205
    $region204: #{tpu_custom_call.1} parent=1 // pred_region
      %402 = dma.done [#allocation12], 64
    $region205: #{tpu_custom_call.1} parent=1 // pred_fallthru
      _
    // Predicated region
    $region206: #{tpu_custom_call.1} parent=1 // pred_check
      _
    $region207: #{tpu_custom_call.1} parent=1 // pred_check_branch
      %404 = sbr.rel (0) target = $region209
    $region208: #{tpu_custom_call.1} parent=1 // pred_region
      %405 = dma.done [#allocation12], 512
    $region209: #{tpu_custom_call.1} parent=1 // pred_fallthru
      _
    // Predicated region
    $region210: #{tpu_custom_call.1} parent=1 // pred_check
      _
    $region211: #{tpu_custom_call.1} parent=1 // pred_check_branch
      %407 = sbr.rel (0) target = $region213
    $region212: #{tpu_custom_call.1} parent=1 // pred_region
      %408 = dma.done [#allocation15], 64
    $region213: #{tpu_custom_call.1} parent=1 // pred_fallthru
      _
    // Predicated region
    $region214: #{tpu_custom_call.1} parent=1 // pred_check
      _
    $region215: #{tpu_custom_call.1} parent=1 // pred_check_branch
      %410 = sbr.rel (0) target = $region217
    $region216: #{tpu_custom_call.1} parent=1 // pred_region
      %411 = dma.done [#allocation15], 128
    $region217: #{tpu_custom_call.1} parent=1 // pred_fallthru
      _
    // Predicated region
    $region218: #{tpu_custom_call.1} parent=1 // pred_check
      _
    $region219: #{tpu_custom_call.1} parent=1 // pred_check_branch
      %413 = sbr.rel (0) target = $region221
    $region220: #{tpu_custom_call.1} parent=1 // pred_region
      %414 = dma.done [#allocation18], 64
    $region221: #{tpu_custom_call.1} parent=1 // pred_fallthru
      _
    // Predicated region
    $region222: #{tpu_custom_call.1} parent=1 // pred_check
      _
    $region223: #{tpu_custom_call.1} parent=1 // pred_check_branch
      %416 = sbr.rel (0) target = $region225
    $region224: #{tpu_custom_call.1} parent=1 // pred_region
      %417 = dma.done [#allocation18], 64
    $region225: #{tpu_custom_call.1} parent=1 // pred_fallthru
      _
    // Predicated region
    $region226: #{tpu_custom_call.1} parent=1 // pred_check
      _
    $region227: #{tpu_custom_call.1} parent=1 // pred_check_branch
      %419 = sbr.rel (0) target = $region229
    $region228: #{tpu_custom_call.1} parent=1 // pred_region
      %420 = dma.done [#allocation21], 2048
    $region229: #{tpu_custom_call.1} parent=1 // pred_fallthru
      _
    // Predicated region
    $region230: #{tpu_custom_call.1} parent=1 // pred_check
      _
    $region231: #{tpu_custom_call.1} parent=1 // pred_check_branch
      %422 = sbr.rel (0) target = $region233
    $region232: #{tpu_custom_call.1} parent=1 // pred_region
      %423 = dma.done [#allocation21], 2048
    $region233: #{tpu_custom_call.1} parent=1 // pred_fallthru
      _
    // Predicated region
    $region234: #{tpu_custom_call.1} parent=1 // pred_check
      _
    $region235: #{tpu_custom_call.1} parent=1 // pred_check_branch
      %425 = sbr.rel (0) target = $region237
    $region236: #{tpu_custom_call.1} parent=1 // pred_region
      %426 = dma.done [#allocation24], 64
    $region237: #{tpu_custom_call.1} parent=1 // pred_fallthru
      _
    // Predicated region
    $region238: #{tpu_custom_call.1} parent=1 // pred_check
      _
    $region239: #{tpu_custom_call.1} parent=1 // pred_check_branch
      %428 = sbr.rel (0) target = $region241
    $region240: #{tpu_custom_call.1} parent=1 // pred_region
      %429 = dma.done [#allocation24], 2048
    $region241: #{tpu_custom_call.1} parent=1 // pred_fallthru
      _
    // Predicated region
    $region242: #{tpu_custom_call.1} parent=1 // pred_check
      _
    $region243: #{tpu_custom_call.1} parent=1 // pred_check_branch
      %431 = sbr.rel (0) target = $region245
    $region244: #{tpu_custom_call.1} parent=1 // pred_region
      %432 = dma.done [#allocation27], 64
    $region245: #{tpu_custom_call.1} parent=1 // pred_fallthru
      _
    // Predicated region
    $region246: #{tpu_custom_call.1} parent=1 // pred_check
      _
    $region247: #{tpu_custom_call.1} parent=1 // pred_check_branch
      %434 = sbr.rel (0) target = $region249
    $region248: #{tpu_custom_call.1} parent=1 // pred_region
      %435 = dma.done [#allocation27], 16
    $region249: #{tpu_custom_call.1} parent=1 // pred_fallthru
      _
    // Predicated region
    $region250: #{tpu_custom_call.1} parent=1 // pred_check
      _
    $region251: #{tpu_custom_call.1} parent=1 // pred_check_branch
      %437 = sbr.rel (0) target = $region253
    $region252: #{tpu_custom_call.1} parent=1 // pred_region
      %438 = dma.done [#allocation30], 512
    $region253: #{tpu_custom_call.1} parent=1 // pred_fallthru
      _
    // Predicated region
    $region254: #{tpu_custom_call.1} parent=1 // pred_check
      _
    $region255: #{tpu_custom_call.1} parent=1 // pred_check_branch
      %440 = sbr.rel (0) target = $region257
    $region256: #{tpu_custom_call.1} parent=1 // pred_region
      %441 = dma.done [#allocation30], 512
    $region257: #{tpu_custom_call.1} parent=1 // pred_fallthru
      _
    // Predicated region
    $region258: #{tpu_custom_call.1} parent=1 // pred_check
      _
    $region259: #{tpu_custom_call.1} parent=1 // pred_check_branch
      %443 = sbr.rel (0) target = $region261
    $region260: #{tpu_custom_call.1} parent=1 // pred_region
      %444 = dma.done [#allocation33], 512
    $region261: #{tpu_custom_call.1} parent=1 // pred_fallthru
      _
    %v445 = vld [vmem:[%s1] sm:$0xff]
    %v446 = vld [vmem:[%s1 + $0x8] sm:$0xff]
    %v447 = vld [vmem:[%s1 + $0x10] sm:$0xff]
    %v448 = vld [vmem:[%s3] sm:$0xff]
    %v449 = vld [vmem:[%s3 + $0x8] sm:$0xff]
    %v450 = vld [vmem:[%s3 + $0x10] sm:$0xff]
    %454 = vrot.lane.b32.xlu0 %v448, 127
    %v455 = vpop.permute.xlu0 %454
    %456 = vrot.lane.b32.xlu0 %v449, 127
    %v457 = vpop.permute.xlu0 %456
    %458 = vrot.lane.b32.xlu0 %v450, 127
    %v459 = vpop.permute.xlu0 %458
    %v463 = vmul.f32 %v445, %v455
    %v464 = vmul.f32 %v446, %v457
    %v465 = vmul.f32 %v447, %v459
    %466 = vrot.lane.b32.xlu0 %v448, 1
    %v467 = vpop.permute.xlu0 %466
    %468 = vrot.lane.b32.xlu0 %v449, 1
    %v469 = vpop.permute.xlu0 %468
    %470 = vrot.lane.b32.xlu0 %v450, 1
    %v471 = vpop.permute.xlu0 %470
    %v475 = vmul.f32 %v445, %v467
    %v476 = vmul.f32 %v446, %v469
    %v477 = vmul.f32 %v447, %v471
    %481 = vrot.lane.b32.xlu0 %v475, 127
    %v482 = vpop.permute.xlu0 %481
    %483 = vrot.lane.b32.xlu0 %v476, 127
    %v484 = vpop.permute.xlu0 %483
    %485 = vrot.lane.b32.xlu0 %v477, 127
    %v486 = vpop.permute.xlu0 %485
    %v490 = vsub.f32 %v463, %v482
    %v491 = vsub.f32 %v464, %v484
    %v492 = vsub.f32 %v465, %v486
    %493 = vrot.lane.b32.xlu0 %v448, 2
    %v494 = vpop.permute.xlu0 %493
    %495 = vrot.lane.b32.xlu0 %v449, 2
    %v496 = vpop.permute.xlu0 %495
    %497 = vrot.lane.b32.xlu0 %v450, 2
    %v498 = vpop.permute.xlu0 %497
    %v502 = vmul.f32 %v445, %v494
    %v503 = vmul.f32 %v446, %v496
    %v504 = vmul.f32 %v447, %v498
    %505 = vrot.lane.b32.xlu0 %v448, 126
    %v506 = vpop.permute.xlu0 %505
    %507 = vrot.lane.b32.xlu0 %v449, 126
    %v508 = vpop.permute.xlu0 %507
    %509 = vrot.lane.b32.xlu0 %v450, 126
    %v510 = vpop.permute.xlu0 %509
    %v514 = vmul.f32 %v445, %v506
    %v515 = vmul.f32 %v446, %v508
    %v516 = vmul.f32 %v447, %v510
    %520 = vrot.lane.b32.xlu0 %v514, 2
    %v521 = vpop.permute.xlu0 %520
    %522 = vrot.lane.b32.xlu0 %v515, 2
    %v523 = vpop.permute.xlu0 %522
    %524 = vrot.lane.b32.xlu0 %v516, 2
    %v525 = vpop.permute.xlu0 %524
    %v529 = vsub.f32 %v502, %v521
    %v530 = vsub.f32 %v503, %v523
    %v531 = vsub.f32 %v504, %v525
    %v532 = vmul.f32 %v490, %v490
    %v533 = vmul.f32 %v491, %v491
    %v534 = vmul.f32 %v492, %v492
    %v535 = vmul.f32 %v529, %v529
    %v536 = vmul.f32 %v530, %v530
    %v537 = vmul.f32 %v531, %v531
    %541 = vrot.lane.b32.xlu0 %v535, 127
    %v542 = vpop.permute.xlu0 %541
    %543 = vrot.lane.b32.xlu0 %v536, 127
    %v544 = vpop.permute.xlu0 %543
    %545 = vrot.lane.b32.xlu0 %v537, 127
    %v546 = vpop.permute.xlu0 %545
    %v550 = vadd.f32 %v532, %v542
    %v551 = vadd.f32 %v533, %v544
    %v552 = vadd.f32 %v534, %v546
    %556 = vrot.lane.b32.xlu0 %v532, 1
    %v557 = vpop.permute.xlu0 %556
    %558 = vrot.lane.b32.xlu0 %v533, 1
    %v559 = vpop.permute.xlu0 %558
    %560 = vrot.lane.b32.xlu0 %v534, 1
    %v561 = vpop.permute.xlu0 %560
    %v565 = vadd.f32 %v550, %v557
    %v566 = vadd.f32 %v551, %v559
    %v567 = vadd.f32 %v552, %v561
    %v568 = vrsqrt.pop %v565
    %v569 = vmul.f32 %v565, %v568
    %vm570 = vcmp.eq.f32.partialorder %v565, inf
    %v571 = vsel %vm570, %v565, %v569
    %vm572 = vcmp.eq.f32.partialorder %v565, 0.0
    %v573 = vand.u32 %v565, 2147483648
    %v574 = vsel %vm572, %v573, %v571
    %v575 = vrsqrt.pop %v566
    %v576 = vmul.f32 %v566, %v575
    %vm577 = vcmp.eq.f32.partialorder %v566, inf
    %v578 = vsel %vm577, %v566, %v576
    %vm579 = vcmp.eq.f32.partialorder %v566, 0.0
    %v580 = vand.u32 %v566, 2147483648
    %v581 = vsel %vm579, %v580, %v578
    %v582 = vrsqrt.pop %v567
    %v583 = vmul.f32 %v567, %v582
    %vm584 = vcmp.eq.f32.partialorder %v567, inf
    %v585 = vsel %vm584, %v567, %v583
    %vm586 = vcmp.eq.f32.partialorder %v567, 0.0
    %v587 = vand.u32 %v567, 2147483648
    %v588 = vsel %vm586, %v587, %v585
    %v589 = vmul.f32 %v445, %v445
    %v590 = vmul.f32 %v446, %v446
    %v591 = vmul.f32 %v447, %v447
    %595 = vrot.lane.b32.xlu0 %v589, 127
    %v596 = vpop.permute.xlu0 %595
    %597 = vrot.lane.b32.xlu0 %v590, 127
    %v598 = vpop.permute.xlu0 %597
    %599 = vrot.lane.b32.xlu0 %v591, 127
    %v600 = vpop.permute.xlu0 %599
    %v604 = vadd.f32 %v589, %v596
    %v605 = vadd.f32 %v590, %v598
    %v606 = vadd.f32 %v591, %v600
    %607 = vrot.lane.b32.xlu0 %v589, 126
    %v608 = vpop.permute.xlu0 %607
    %609 = vrot.lane.b32.xlu0 %v590, 126
    %v610 = vpop.permute.xlu0 %609
    %611 = vrot.lane.b32.xlu0 %v591, 126
    %v612 = vpop.permute.xlu0 %611
    %v616 = vadd.f32 %v604, %v608
    %v617 = vadd.f32 %v605, %v610
    %v618 = vadd.f32 %v606, %v612
    %v619 = vrsqrt.pop %v616
    %v620 = vmul.f32 %v616, %v619
    %vm621 = vcmp.eq.f32.partialorder %v616, inf
    %v622 = vsel %vm621, %v616, %v620
    %vm623 = vcmp.eq.f32.partialorder %v616, 0.0
    %v624 = vand.u32 %v616, 2147483648
    %v625 = vsel %vm623, %v624, %v622
    %v626 = vrsqrt.pop %v617
    %v627 = vmul.f32 %v617, %v626
    %vm628 = vcmp.eq.f32.partialorder %v617, inf
    %v629 = vsel %vm628, %v617, %v627
    %vm630 = vcmp.eq.f32.partialorder %v617, 0.0
    %v631 = vand.u32 %v617, 2147483648
    %v632 = vsel %vm630, %v631, %v629
    %v633 = vrsqrt.pop %v618
    %v634 = vmul.f32 %v618, %v633
    %vm635 = vcmp.eq.f32.partialorder %v618, inf
    %v636 = vsel %vm635, %v618, %v634
    %vm637 = vcmp.eq.f32.partialorder %v618, 0.0
    %v638 = vand.u32 %v618, 2147483648
    %v639 = vsel %vm637, %v638, %v636
    %v640 = vmul.f32 %v448, %v448
    %v641 = vmul.f32 %v449, %v449
    %v642 = vmul.f32 %v450, %v450
    %646 = vrot.lane.b32.xlu0 %v640, 127
    %v647 = vpop.permute.xlu0 %646
    %648 = vrot.lane.b32.xlu0 %v641, 127
    %v649 = vpop.permute.xlu0 %648
    %650 = vrot.lane.b32.xlu0 %v642, 127
    %v651 = vpop.permute.xlu0 %650
    %v655 = vadd.f32 %v640, %v647
    %v656 = vadd.f32 %v641, %v649
    %v657 = vadd.f32 %v642, %v651
    %658 = vrot.lane.b32.xlu0 %v640, 126
    %v659 = vpop.permute.xlu0 %658
    %660 = vrot.lane.b32.xlu0 %v641, 126
    %v661 = vpop.permute.xlu0 %660
    %662 = vrot.lane.b32.xlu0 %v642, 126
    %v663 = vpop.permute.xlu0 %662
    %v667 = vadd.f32 %v655, %v659
    %v668 = vadd.f32 %v656, %v661
    %v669 = vadd.f32 %v657, %v663
    %v670 = vrsqrt.pop %v667
    %v671 = vmul.f32 %v667, %v670
    %vm672 = vcmp.eq.f32.partialorder %v667, inf
    %v673 = vsel %vm672, %v667, %v671
    %vm674 = vcmp.eq.f32.partialorder %v667, 0.0
    %v675 = vand.u32 %v667, 2147483648
    %v676 = vsel %vm674, %v675, %v673
    %v677 = vrsqrt.pop %v668
    %v678 = vmul.f32 %v668, %v677
    %vm679 = vcmp.eq.f32.partialorder %v668, inf
    %v680 = vsel %vm679, %v668, %v678
    %vm681 = vcmp.eq.f32.partialorder %v668, 0.0
    %v682 = vand.u32 %v668, 2147483648
    %v683 = vsel %vm681, %v682, %v680
    %v684 = vrsqrt.pop %v669
    %v685 = vmul.f32 %v669, %v684
    %vm686 = vcmp.eq.f32.partialorder %v669, inf
    %v687 = vsel %vm686, %v669, %v685
    %vm688 = vcmp.eq.f32.partialorder %v669, 0.0
    %v689 = vand.u32 %v669, 2147483648
    %v690 = vsel %vm688, %v689, %v687
    %694 = vrot.lane.b32.xlu0 %v445, 1
    %v695 = vpop.permute.xlu0 %694
    %696 = vrot.lane.b32.xlu0 %v446, 1
    %v697 = vpop.permute.xlu0 %696
    %698 = vrot.lane.b32.xlu0 %v447, 1
    %v699 = vpop.permute.xlu0 %698
    %v703 = vsub.f32 %v490, %v695
    %v704 = vsub.f32 %v491, %v697
    %v705 = vsub.f32 %v492, %v699
    %v706 = vsub.f32 %v529, %v695
    %v707 = vsub.f32 %v530, %v697
    %v708 = vsub.f32 %v531, %v699
    %709 = vrot.lane.b32.xlu0 %v445, 126
    %v710 = vpop.permute.xlu0 %709
    %711 = vrot.lane.b32.xlu0 %v446, 126
    %v712 = vpop.permute.xlu0 %711
    %713 = vrot.lane.b32.xlu0 %v447, 126
    %v714 = vpop.permute.xlu0 %713
    %v718 = vsub.f32 %v490, %v710
    %v719 = vsub.f32 %v491, %v712
    %v720 = vsub.f32 %v492, %v714
    %v721 = vmul.f32 %v703, %v703
    %v722 = vmul.f32 %v704, %v704
    %v723 = vmul.f32 %v705, %v705
    %v724 = vmul.f32 %v706, %v706
    %v725 = vmul.f32 %v707, %v707
    %v726 = vmul.f32 %v708, %v708
    %730 = vrot.lane.b32.xlu0 %v724, 127
    %v731 = vpop.permute.xlu0 %730
    %732 = vrot.lane.b32.xlu0 %v725, 127
    %v733 = vpop.permute.xlu0 %732
    %734 = vrot.lane.b32.xlu0 %v726, 127
    %v735 = vpop.permute.xlu0 %734
    %v739 = vadd.f32 %v721, %v731
    %v740 = vadd.f32 %v722, %v733
    %v741 = vadd.f32 %v723, %v735
    %v742 = vmul.f32 %v718, %v718
    %v743 = vmul.f32 %v719, %v719
    %v744 = vmul.f32 %v720, %v720
    %748 = vrot.lane.b32.xlu0 %v742, 1
    %v749 = vpop.permute.xlu0 %748
    %750 = vrot.lane.b32.xlu0 %v743, 1
    %v751 = vpop.permute.xlu0 %750
    %752 = vrot.lane.b32.xlu0 %v744, 1
    %v753 = vpop.permute.xlu0 %752
    %v757 = vadd.f32 %v739, %v749
    %v758 = vadd.f32 %v740, %v751
    %v759 = vadd.f32 %v741, %v753
    %v760 = vrsqrt.pop %v757
    %v761 = vmul.f32 %v757, %v760
    %vm762 = vcmp.eq.f32.partialorder %v757, inf
    %v763 = vsel %vm762, %v757, %v761
    %vm764 = vcmp.eq.f32.partialorder %v757, 0.0
    %v765 = vand.u32 %v757, 2147483648
    %v766 = vsel %vm764, %v765, %v763
    %v767 = vrsqrt.pop %v758
    %v768 = vmul.f32 %v758, %v767
    %vm769 = vcmp.eq.f32.partialorder %v758, inf
    %v770 = vsel %vm769, %v758, %v768
    %vm771 = vcmp.eq.f32.partialorder %v758, 0.0
    %v772 = vand.u32 %v758, 2147483648
    %v773 = vsel %vm771, %v772, %v770
    %v774 = vrsqrt.pop %v759
    %v775 = vmul.f32 %v759, %v774
    %vm776 = vcmp.eq.f32.partialorder %v759, inf
    %v777 = vsel %vm776, %v759, %v775
    %vm778 = vcmp.eq.f32.partialorder %v759, 0.0
    %v779 = vand.u32 %v759, 2147483648
    %v780 = vsel %vm778, %v779, %v777
    %v781 = vsub.f32 %v490, %v467
    %v782 = vsub.f32 %v491, %v469
    %v783 = vsub.f32 %v492, %v471
    %v784 = vsub.f32 %v529, %v467
    %v785 = vsub.f32 %v530, %v469
    %v786 = vsub.f32 %v531, %v471
    %v787 = vsub.f32 %v490, %v506
    %v788 = vsub.f32 %v491, %v508
    %v789 = vsub.f32 %v492, %v510
    %v790 = vmul.f32 %v781, %v781
    %v791 = vmul.f32 %v782, %v782
    %v792 = vmul.f32 %v783, %v783
    %v793 = vmul.f32 %v784, %v784
    %v794 = vmul.f32 %v785, %v785
    %v795 = vmul.f32 %v786, %v786
    %799 = vrot.lane.b32.xlu0 %v793, 127
    %v800 = vpop.permute.xlu0 %799
    %801 = vrot.lane.b32.xlu0 %v794, 127
    %v802 = vpop.permute.xlu0 %801
    %803 = vrot.lane.b32.xlu0 %v795, 127
    %v804 = vpop.permute.xlu0 %803
    %v808 = vadd.f32 %v790, %v800
    %v809 = vadd.f32 %v791, %v802
    %v810 = vadd.f32 %v792, %v804
    %v811 = vmul.f32 %v787, %v787
    %v812 = vmul.f32 %v788, %v788
    %v813 = vmul.f32 %v789, %v789
    %817 = vrot.lane.b32.xlu0 %v811, 1
    %v818 = vpop.permute.xlu0 %817
    %819 = vrot.lane.b32.xlu0 %v812, 1
    %v820 = vpop.permute.xlu0 %819
    %821 = vrot.lane.b32.xlu0 %v813, 1
    %v822 = vpop.permute.xlu0 %821
    %v826 = vadd.f32 %v808, %v818
    %v827 = vadd.f32 %v809, %v820
    %v828 = vadd.f32 %v810, %v822
    %v829 = vrsqrt.pop %v826
    %v830 = vmul.f32 %v826, %v829
    %vm831 = vcmp.eq.f32.partialorder %v826, inf
    %v832 = vsel %vm831, %v826, %v830
    %vm833 = vcmp.eq.f32.partialorder %v826, 0.0
    %v834 = vand.u32 %v826, 2147483648
    %v835 = vsel %vm833, %v834, %v832
    %v836 = vrsqrt.pop %v827
    %v837 = vmul.f32 %v827, %v836
    %vm838 = vcmp.eq.f32.partialorder %v827, inf
    %v839 = vsel %vm838, %v827, %v837
    %vm840 = vcmp.eq.f32.partialorder %v827, 0.0
    %v841 = vand.u32 %v827, 2147483648
    %v842 = vsel %vm840, %v841, %v839
    %v843 = vrsqrt.pop %v828
    %v844 = vmul.f32 %v828, %v843
    %vm845 = vcmp.eq.f32.partialorder %v828, inf
    %v846 = vsel %vm845, %v828, %v844
    %vm847 = vcmp.eq.f32.partialorder %v828, 0.0
    %v848 = vand.u32 %v828, 2147483648
    %v849 = vsel %vm847, %v848, %v846
    %v850 = vsub.f32 %v445, %v448
    %v851 = vsub.f32 %v446, %v449
    %v852 = vsub.f32 %v447, %v450
    %v853 = vmul.f32 %v850, %v850
    %v854 = vmul.f32 %v851, %v851
    %v855 = vmul.f32 %v852, %v852
    %859 = vrot.lane.b32.xlu0 %v853, 127
    %v860 = vpop.permute.xlu0 %859
    %861 = vrot.lane.b32.xlu0 %v854, 127
    %v862 = vpop.permute.xlu0 %861
    %863 = vrot.lane.b32.xlu0 %v855, 127
    %v864 = vpop.permute.xlu0 %863
    %v868 = vadd.f32 %v853, %v860
    %v869 = vadd.f32 %v854, %v862
    %v870 = vadd.f32 %v855, %v864
    %871 = vrot.lane.b32.xlu0 %v853, 126
    %v872 = vpop.permute.xlu0 %871
    %873 = vrot.lane.b32.xlu0 %v854, 126
    %v874 = vpop.permute.xlu0 %873
    %875 = vrot.lane.b32.xlu0 %v855, 126
    %v876 = vpop.permute.xlu0 %875
    %v880 = vadd.f32 %v868, %v872
    %v881 = vadd.f32 %v869, %v874
    %v882 = vadd.f32 %v870, %v876
    %v883 = vrsqrt.pop %v880
    %v884 = vmul.f32 %v880, %v883
    %vm885 = vcmp.eq.f32.partialorder %v880, inf
    %v886 = vsel %vm885, %v880, %v884
    %vm887 = vcmp.eq.f32.partialorder %v880, 0.0
    %v888 = vand.u32 %v880, 2147483648
    %v889 = vsel %vm887, %v888, %v886
    %v890 = vrsqrt.pop %v881
    %v891 = vmul.f32 %v881, %v890
    %vm892 = vcmp.eq.f32.partialorder %v881, inf
    %v893 = vsel %vm892, %v881, %v891
    %vm894 = vcmp.eq.f32.partialorder %v881, 0.0
    %v895 = vand.u32 %v881, 2147483648
    %v896 = vsel %vm894, %v895, %v893
    %v897 = vrsqrt.pop %v882
    %v898 = vmul.f32 %v882, %v897
    %vm899 = vcmp.eq.f32.partialorder %v882, inf
    %v900 = vsel %vm899, %v882, %v898
    %vm901 = vcmp.eq.f32.partialorder %v882, 0.0
    %v902 = vand.u32 %v882, 2147483648
    %v903 = vsel %vm901, %v902, %v900
    %v904 = vld [vmem:[%s5] sm:$0xff]
    %v905 = vld [vmem:[%s5 + $0x8] sm:$0xff]
    %v906 = vld [vmem:[%s5 + $0x10] sm:$0xff]
    %v907 = vld [vmem:[%s7] sm:$0xff]
    %v908 = vld [vmem:[%s7 + $0x8] sm:$0xff]
    %v909 = vld [vmem:[%s7 + $0x10] sm:$0xff]
    %v910 = vld [vmem:[%s9] sm:$0xff]
    %v911 = vld [vmem:[%s9 + $0x8] sm:$0xff]
    %v912 = vld [vmem:[%s9 + $0x10] sm:$0xff]
    %914 = vset.pattern.permute.xlu0 1
    %915 = vperm.xlu0 %914, %v490
    %v916 = vpop.permute.xlu0 %915
    %919 = vset.pattern.permute.xlu0 1
    %920 = vperm.xlu0 %919, %v491
    %v921 = vpop.permute.xlu0 %920
    %924 = vset.pattern.permute.xlu0 1
    %925 = vperm.xlu0 %924, %v492
    %v926 = vpop.permute.xlu0 %925
    %v928 = vsub.f32 %v916, %v904
    %v929 = vsub.f32 %v921, %v905
    %v930 = vsub.f32 %v926, %v906
    %932 = vset.pattern.permute.xlu0 2
    %933 = vperm.xlu0 %932, %v529
    %v934 = vpop.permute.xlu0 %933
    %937 = vset.pattern.permute.xlu0 2
    %938 = vperm.xlu0 %937, %v530
    %v939 = vpop.permute.xlu0 %938
    %942 = vset.pattern.permute.xlu0 2
    %943 = vperm.xlu0 %942, %v531
    %v944 = vpop.permute.xlu0 %943
    %v946 = vsub.f32 %v934, %v907
    %v947 = vsub.f32 %v939, %v908
    %v948 = vsub.f32 %v944, %v909
    %949 = vset.pattern.permute.xlu0 0
    %950 = vperm.xlu0 %949, %v490
    %v951 = vpop.permute.xlu0 %950
    %953 = vset.pattern.permute.xlu0 0
    %954 = vperm.xlu0 %953, %v491
    %v955 = vpop.permute.xlu0 %954
    %957 = vset.pattern.permute.xlu0 0
    %958 = vperm.xlu0 %957, %v492
    %v959 = vpop.permute.xlu0 %958
    %v961 = vsub.f32 %v951, %v910
    %v962 = vsub.f32 %v955, %v911
    %v963 = vsub.f32 %v959, %v912
    %v964 = vmul.f32 %v928, %v928
    %v965 = vmul.f32 %v929, %v929
    %v966 = vmul.f32 %v930, %v930
    %v967 = vmul.f32 %v946, %v946
    %v968 = vmul.f32 %v947, %v947
    %v969 = vmul.f32 %v948, %v948
    %v970 = vadd.f32 %v964, %v967
    %v971 = vadd.f32 %v965, %v968
    %v972 = vadd.f32 %v966, %v969
    %v973 = vmul.f32 %v961, %v961
    %v974 = vmul.f32 %v962, %v962
    %v975 = vmul.f32 %v963, %v963
    %v976 = vadd.f32 %v970, %v973
    %v977 = vadd.f32 %v971, %v974
    %v978 = vadd.f32 %v972, %v975
    %v979 = vrsqrt.pop %v976
    %v980 = vmul.f32 %v976, %v979
    %vm981 = vcmp.eq.f32.partialorder %v976, inf
    %v982 = vsel %vm981, %v976, %v980
    %vm983 = vcmp.eq.f32.partialorder %v976, 0.0
    %v984 = vand.u32 %v976, 2147483648
    %v985 = vsel %vm983, %v984, %v982
    %v986 = vrsqrt.pop %v977
    %v987 = vmul.f32 %v977, %v986
    %vm988 = vcmp.eq.f32.partialorder %v977, inf
    %v989 = vsel %vm988, %v977, %v987
    %vm990 = vcmp.eq.f32.partialorder %v977, 0.0
    %v991 = vand.u32 %v977, 2147483648
    %v992 = vsel %vm990, %v991, %v989
    %v993 = vrsqrt.pop %v978
    %v994 = vmul.f32 %v978, %v993
    %vm995 = vcmp.eq.f32.partialorder %v978, inf
    %v996 = vsel %vm995, %v978, %v994
    %vm997 = vcmp.eq.f32.partialorder %v978, 0.0
    %v998 = vand.u32 %v978, 2147483648
    %v999 = vsel %vm997, %v998, %v996
    %1000 = vset.pattern.permute.xlu0 0
    %1001 = vperm.xlu0 %1000, %v445
    %v1002 = vpop.permute.xlu0 %1001
    %1004 = vset.pattern.permute.xlu0 0
    %1005 = vperm.xlu0 %1004, %v446
    %v1006 = vpop.permute.xlu0 %1005
    %1008 = vset.pattern.permute.xlu0 0
    %1009 = vperm.xlu0 %1008, %v447
    %v1010 = vpop.permute.xlu0 %1009
    %v1012 = vsub.f32 %v1002, %v904
    %v1013 = vsub.f32 %v1006, %v905
    %v1014 = vsub.f32 %v1010, %v906
    %1015 = vset.pattern.permute.xlu0 1
    %1016 = vperm.xlu0 %1015, %v445
    %v1017 = vpop.permute.xlu0 %1016
    %1019 = vset.pattern.permute.xlu0 1
    %1020 = vperm.xlu0 %1019, %v446
    %v1021 = vpop.permute.xlu0 %1020
    %1023 = vset.pattern.permute.xlu0 1
    %1024 = vperm.xlu0 %1023, %v447
    %v1025 = vpop.permute.xlu0 %1024
    %v1027 = vsub.f32 %v1017, %v907
    %v1028 = vsub.f32 %v1021, %v908
    %v1029 = vsub.f32 %v1025, %v909
    %1030 = vset.pattern.permute.xlu0 2
    %1031 = vperm.xlu0 %1030, %v445
    %v1032 = vpop.permute.xlu0 %1031
    %1034 = vset.pattern.permute.xlu0 2
    %1035 = vperm.xlu0 %1034, %v446
    %v1036 = vpop.permute.xlu0 %1035
    %1038 = vset.pattern.permute.xlu0 2
    %1039 = vperm.xlu0 %1038, %v447
    %v1040 = vpop.permute.xlu0 %1039
    %v1042 = vsub.f32 %v1032, %v910
    %v1043 = vsub.f32 %v1036, %v911
    %v1044 = vsub.f32 %v1040, %v912
    %v1045 = vmul.f32 %v1012, %v1012
    %v1046 = vmul.f32 %v1013, %v1013
    %v1047 = vmul.f32 %v1014, %v1014
    %v1048 = vmul.f32 %v1027, %v1027
    %v1049 = vmul.f32 %v1028, %v1028
    %v1050 = vmul.f32 %v1029, %v1029
    %v1051 = vadd.f32 %v1045, %v1048
    %v1052 = vadd.f32 %v1046, %v1049
    %v1053 = vadd.f32 %v1047, %v1050
    %v1054 = vmul.f32 %v1042, %v1042
    %v1055 = vmul.f32 %v1043, %v1043
    %v1056 = vmul.f32 %v1044, %v1044
    %v1057 = vadd.f32 %v1051, %v1054
    %v1058 = vadd.f32 %v1052, %v1055
    %v1059 = vadd.f32 %v1053, %v1056
    %v1060 = vrsqrt.pop %v1057
    %v1061 = vmul.f32 %v1057, %v1060
    %vm1062 = vcmp.eq.f32.partialorder %v1057, inf
    %v1063 = vsel %vm1062, %v1057, %v1061
    %vm1064 = vcmp.eq.f32.partialorder %v1057, 0.0
    %v1065 = vand.u32 %v1057, 2147483648
    %v1066 = vsel %vm1064, %v1065, %v1063
    %v1067 = vrsqrt.pop %v1058
    %v1068 = vmul.f32 %v1058, %v1067
    %vm1069 = vcmp.eq.f32.partialorder %v1058, inf
    %v1070 = vsel %vm1069, %v1058, %v1068
    %vm1071 = vcmp.eq.f32.partialorder %v1058, 0.0
    %v1072 = vand.u32 %v1058, 2147483648
    %v1073 = vsel %vm1071, %v1072, %v1070
    %v1074 = vrsqrt.pop %v1059
    %v1075 = vmul.f32 %v1059, %v1074
    %vm1076 = vcmp.eq.f32.partialorder %v1059, inf
    %v1077 = vsel %vm1076, %v1059, %v1075
    %vm1078 = vcmp.eq.f32.partialorder %v1059, 0.0
    %v1079 = vand.u32 %v1059, 2147483648
    %v1080 = vsel %vm1078, %v1079, %v1077
    %1081 = vset.pattern.permute.xlu0 0
    %1082 = vperm.xlu0 %1081, %v448
    %v1083 = vpop.permute.xlu0 %1082
    %1085 = vset.pattern.permute.xlu0 0
    %1086 = vperm.xlu0 %1085, %v449
    %v1087 = vpop.permute.xlu0 %1086
    %1089 = vset.pattern.permute.xlu0 0
    %1090 = vperm.xlu0 %1089, %v450
    %v1091 = vpop.permute.xlu0 %1090
    %v1093 = vsub.f32 %v1083, %v904
    %v1094 = vsub.f32 %v1087, %v905
    %v1095 = vsub.f32 %v1091, %v906
    %1096 = vset.pattern.permute.xlu0 1
    %1097 = vperm.xlu0 %1096, %v448
    %v1098 = vpop.permute.xlu0 %1097
    %1100 = vset.pattern.permute.xlu0 1
    %1101 = vperm.xlu0 %1100, %v449
    %v1102 = vpop.permute.xlu0 %1101
    %1104 = vset.pattern.permute.xlu0 1
    %1105 = vperm.xlu0 %1104, %v450
    %v1106 = vpop.permute.xlu0 %1105
    %v1108 = vsub.f32 %v1098, %v907
    %v1109 = vsub.f32 %v1102, %v908
    %v1110 = vsub.f32 %v1106, %v909
    %1111 = vset.pattern.permute.xlu0 2
    %1112 = vperm.xlu0 %1111, %v448
    %v1113 = vpop.permute.xlu0 %1112
    %1115 = vset.pattern.permute.xlu0 2
    %1116 = vperm.xlu0 %1115, %v449
    %v1117 = vpop.permute.xlu0 %1116
    %1119 = vset.pattern.permute.xlu0 2
    %1120 = vperm.xlu0 %1119, %v450
    %v1121 = vpop.permute.xlu0 %1120
    %v1123 = vsub.f32 %v1113, %v910
    %v1124 = vsub.f32 %v1117, %v911
    %v1125 = vsub.f32 %v1121, %v912
    %v1126 = vmul.f32 %v1093, %v1093
    %v1127 = vmul.f32 %v1094, %v1094
    %v1128 = vmul.f32 %v1095, %v1095
    %v1129 = vmul.f32 %v1108, %v1108
    %v1130 = vmul.f32 %v1109, %v1109
    %v1131 = vmul.f32 %v1110, %v1110
    %v1132 = vadd.f32 %v1126, %v1129
    %v1133 = vadd.f32 %v1127, %v1130
    %v1134 = vadd.f32 %v1128, %v1131
    %v1135 = vmul.f32 %v1123, %v1123
    %v1136 = vmul.f32 %v1124, %v1124
    %v1137 = vmul.f32 %v1125, %v1125
    %v1138 = vadd.f32 %v1132, %v1135
    %v1139 = vadd.f32 %v1133, %v1136
    %v1140 = vadd.f32 %v1134, %v1137
    %v1141 = vrsqrt.pop %v1138
    %v1142 = vmul.f32 %v1138, %v1141
    %vm1143 = vcmp.eq.f32.partialorder %v1138, inf
    %v1144 = vsel %vm1143, %v1138, %v1142
    %vm1145 = vcmp.eq.f32.partialorder %v1138, 0.0
    %v1146 = vand.u32 %v1138, 2147483648
    %v1147 = vsel %vm1145, %v1146, %v1144
    %v1148 = vrsqrt.pop %v1139
    %v1149 = vmul.f32 %v1139, %v1148
    %vm1150 = vcmp.eq.f32.partialorder %v1139, inf
    %v1151 = vsel %vm1150, %v1139, %v1149
    %vm1152 = vcmp.eq.f32.partialorder %v1139, 0.0
    %v1153 = vand.u32 %v1139, 2147483648
    %v1154 = vsel %vm1152, %v1153, %v1151
    %v1155 = vrsqrt.pop %v1140
    %v1156 = vmul.f32 %v1140, %v1155
    %vm1157 = vcmp.eq.f32.partialorder %v1140, inf
    %v1158 = vsel %vm1157, %v1140, %v1156
    %vm1159 = vcmp.eq.f32.partialorder %v1140, 0.0
    %v1160 = vand.u32 %v1140, 2147483648
    %v1161 = vsel %vm1159, %v1160, %v1158
    %v1162 = vand.u32 2147483647, %v985
    %v1163 = vand.u32 2147483647, %v992
    %v1164 = vand.u32 2147483647, %v999
    %v1165 = vand.u32 2147483647, %v1066
    %v1166 = vand.u32 2147483647, %v1073
    %v1167 = vand.u32 2147483647, %v1080
    %v1168 = vadd.f32 %v1162, %v1165
    %v1169 = vadd.f32 %v1163, %v1166
    %v1170 = vadd.f32 %v1164, %v1167
    %v1171 = vand.u32 2147483647, %v1147
    %v1172 = vand.u32 2147483647, %v1154
    %v1173 = vand.u32 2147483647, %v1161
    %v1174 = vadd.f32 %v1168, %v1171
    %v1175 = vadd.f32 %v1169, %v1172
    %v1176 = vadd.f32 %v1170, %v1173
    %vm1177 = vcmp.ne.f32.partialorder %v1174, 0.0
    %vm1178 = vcmp.ne.f32.partialorder %v1175, 0.0
    %vm1179 = vcmp.ne.f32.partialorder %v1176, 0.0
    %v1180 = vsel %vm1177, 1, 0
    %v1181 = vsel %vm1178, 1, 0
    %v1182 = vsel %vm1179, 1, 0
    %v1183 = vcvt.s32.f32 %v1180
    %v1184 = vcvt.s32.f32 %v1181
    %v1185 = vcvt.s32.f32 %v1182
    %vm1186 = vcmask 23552
    %v1187 = vsel %vm1186, %v1183, 0.0
    %1188 = vadd.xlane.f32.xlu0 %v1187
    %v1189 = vpop.xlane.xlu0 %1188
    %v1190 = vsel %vm1186, %v1184, 0.0
    %1191 = vadd.xlane.f32.xlu0 %v1190
    %v1192 = vpop.xlane.xlu0 %1191
    %v1193 = vsel %vm1186, %v1185, 0.0
    %1194 = vadd.xlane.f32.xlu0 %v1193
    %v1195 = vpop.xlane.xlu0 %1194
    %v1196 = vld [vmem:[#allocation10] sm:$0x7]
    %v1197 = vld [vmem:[#allocation11] sm:$0x7]
    %1199 = vset.pattern.permute.xlu0 0
    %1200 = vperm.xlu0 %1199, %v985
    %v1201 = vpop.permute.xlu0 %1200
    %1204 = vset.pattern.permute.xlu0 0
    %1205 = vperm.xlu0 %1204, %v992
    %v1206 = vpop.permute.xlu0 %1205
    %1209 = vset.pattern.permute.xlu0 0
    %1210 = vperm.xlu0 %1209, %v999
    %v1211 = vpop.permute.xlu0 %1210
    %v1213 = vlaneseq
    %v1214 = vshrl.u32 %v1213, 7
    %v1215 = vsub.s32 0, %v1214
    %v1216 = vrot.slane %v1196, %v1215
    %v1217 = vmul.f32 %v1201, %v1216
    %v1218 = vmul.f32 %v1206, %v1216
    %v1219 = vmul.f32 %v1211, %v1216
    %1221 = vset.pattern.permute.xlu0 0
    %1222 = vperm.xlu0 %1221, %v1066
    %v1223 = vpop.permute.xlu0 %1222
    %1226 = vset.pattern.permute.xlu0 0
    %1227 = vperm.xlu0 %1226, %v1073
    %v1228 = vpop.permute.xlu0 %1227
    %1231 = vset.pattern.permute.xlu0 0
    %1232 = vperm.xlu0 %1231, %v1080
    %v1233 = vpop.permute.xlu0 %1232
    %v1235 = vlaneseq
    %v1236 = vshrl.u32 %v1235, 7
    %v1237 = vsub.s32 1, %v1236
    %v1238 = vrot.slane %v1196, %v1237
    %v1239 = vmul.f32 %v1223, %v1238
    %v1240 = vmul.f32 %v1228, %v1238
    %v1241 = vmul.f32 %v1233, %v1238
    %v1242 = vadd.f32 %v1217, %v1239
    %v1243 = vadd.f32 %v1218, %v1240
    %v1244 = vadd.f32 %v1219, %v1241
    %1246 = vset.pattern.permute.xlu0 0
    %1247 = vperm.xlu0 %1246, %v1147
    %v1248 = vpop.permute.xlu0 %1247
    %1251 = vset.pattern.permute.xlu0 0
    %1252 = vperm.xlu0 %1251, %v1154
    %v1253 = vpop.permute.xlu0 %1252
    %1256 = vset.pattern.permute.xlu0 0
    %1257 = vperm.xlu0 %1256, %v1161
    %v1258 = vpop.permute.xlu0 %1257
    %v1260 = vlaneseq
    %v1261 = vshrl.u32 %v1260, 7
    %v1262 = vsub.s32 2, %v1261
    %v1263 = vrot.slane %v1196, %v1262
    %v1264 = vmul.f32 %v1248, %v1263
    %v1265 = vmul.f32 %v1253, %v1263
    %v1266 = vmul.f32 %v1258, %v1263
    %v1267 = vadd.f32 %v1242, %v1264
    %v1268 = vadd.f32 %v1243, %v1265
    %v1269 = vadd.f32 %v1244, %v1266
    %vm1270 = vcmp.eq.f32.partialorder %v1183, 0.0
    %vm1271 = vcmp.eq.f32.partialorder %v1184, 0.0
    %vm1272 = vcmp.eq.f32.partialorder %v1185, 0.0
    %v1273 = vsel %vm1270, 1, 0
    %v1274 = vsel %vm1271, 1, 0
    %v1275 = vsel %vm1272, 1, 0
    %1276 = vset.pattern.permute.xlu0 0
    %1277 = vperm.xlu0 %1276, %v1273
    %v1278 = vpop.permute.xlu0 %1277
    %1279 = vset.pattern.permute.xlu0 0
    %1280 = vperm.xlu0 %1279, %v1274
    %v1281 = vpop.permute.xlu0 %1280
    %1282 = vset.pattern.permute.xlu0 0
    %1283 = vperm.xlu0 %1282, %v1275
    %v1284 = vpop.permute.xlu0 %1283
    %vm1285 = vcmp.eq.s32.totalorder %v1278, 1
    %vm1286 = vcmp.eq.s32.totalorder %v1281, 1
    %vm1287 = vcmp.eq.s32.totalorder %v1284, 1
    %v1288 = vsel %vm1285, inf, %v1267
    %v1289 = vsel %vm1286, inf, %v1268
    %v1290 = vsel %vm1287, inf, %v1269
    %1291 = vset.pattern.permute.xlu0 1
    %1292 = vperm.xlu0 %1291, %v985
    %v1293 = vpop.permute.xlu0 %1292
    %1295 = vset.pattern.permute.xlu0 1
    %1296 = vperm.xlu0 %1295, %v992
    %v1297 = vpop.permute.xlu0 %1296
    %1299 = vset.pattern.permute.xlu0 1
    %1300 = vperm.xlu0 %1299, %v999
    %v1301 = vpop.permute.xlu0 %1300
    %v1303 = vmul.f32 %v1293, %v1216
    %v1304 = vmul.f32 %v1297, %v1216
    %v1305 = vmul.f32 %v1301, %v1216
    %1306 = vset.pattern.permute.xlu0 1
    %1307 = vperm.xlu0 %1306, %v1066
    %v1308 = vpop.permute.xlu0 %1307
    %1310 = vset.pattern.permute.xlu0 1
    %1311 = vperm.xlu0 %1310, %v1073
    %v1312 = vpop.permute.xlu0 %1311
    %1314 = vset.pattern.permute.xlu0 1
    %1315 = vperm.xlu0 %1314, %v1080
    %v1316 = vpop.permute.xlu0 %1315
    %v1318 = vmul.f32 %v1308, %v1238
    %v1319 = vmul.f32 %v1312, %v1238
    %v1320 = vmul.f32 %v1316, %v1238
    %v1321 = vadd.f32 %v1303, %v1318
    %v1322 = vadd.f32 %v1304, %v1319
    %v1323 = vadd.f32 %v1305, %v1320
    %1324 = vset.pattern.permute.xlu0 1
    %1325 = vperm.xlu0 %1324, %v1147
    %v1326 = vpop.permute.xlu0 %1325
    %1328 = vset.pattern.permute.xlu0 1
    %1329 = vperm.xlu0 %1328, %v1154
    %v1330 = vpop.permute.xlu0 %1329
    %1332 = vset.pattern.permute.xlu0 1
    %1333 = vperm.xlu0 %1332, %v1161
    %v1334 = vpop.permute.xlu0 %1333
    %v1336 = vmul.f32 %v1326, %v1263
    %v1337 = vmul.f32 %v1330, %v1263
    %v1338 = vmul.f32 %v1334, %v1263
    %v1339 = vadd.f32 %v1321, %v1336
    %v1340 = vadd.f32 %v1322, %v1337
    %v1341 = vadd.f32 %v1323, %v1338
    %1342 = vset.pattern.permute.xlu0 1
    %1343 = vperm.xlu0 %1342, %v1273
    %v1344 = vpop.permute.xlu0 %1343
    %1345 = vset.pattern.permute.xlu0 1
    %1346 = vperm.xlu0 %1345, %v1274
    %v1347 = vpop.permute.xlu0 %1346
    %1348 = vset.pattern.permute.xlu0 1
    %1349 = vperm.xlu0 %1348, %v1275
    %v1350 = vpop.permute.xlu0 %1349
    %vm1351 = vcmp.eq.s32.totalorder %v1344, 1
    %vm1352 = vcmp.eq.s32.totalorder %v1347, 1
    %vm1353 = vcmp.eq.s32.totalorder %v1350, 1
    %v1354 = vsel %vm1351, inf, %v1339
    %v1355 = vsel %vm1352, inf, %v1340
    %v1356 = vsel %vm1353, inf, %v1341
    %1357 = vset.pattern.permute.xlu0 2
    %1358 = vperm.xlu0 %1357, %v985
    %v1359 = vpop.permute.xlu0 %1358
    %1361 = vset.pattern.permute.xlu0 2
    %1362 = vperm.xlu0 %1361, %v992
    %v1363 = vpop.permute.xlu0 %1362
    %1365 = vset.pattern.permute.xlu0 2
    %1366 = vperm.xlu0 %1365, %v999
    %v1367 = vpop.permute.xlu0 %1366
    %v1369 = vmul.f32 %v1359, %v1216
    %v1370 = vmul.f32 %v1363, %v1216
    %v1371 = vmul.f32 %v1367, %v1216
    %1372 = vset.pattern.permute.xlu0 2
    %1373 = vperm.xlu0 %1372, %v1066
    %v1374 = vpop.permute.xlu0 %1373
    %1376 = vset.pattern.permute.xlu0 2
    %1377 = vperm.xlu0 %1376, %v1073
    %v1378 = vpop.permute.xlu0 %1377
    %1380 = vset.pattern.permute.xlu0 2
    %1381 = vperm.xlu0 %1380, %v1080
    %v1382 = vpop.permute.xlu0 %1381
    %v1384 = vmul.f32 %v1374, %v1238
    %v1385 = vmul.f32 %v1378, %v1238
    %v1386 = vmul.f32 %v1382, %v1238
    %v1387 = vadd.f32 %v1369, %v1384
    %v1388 = vadd.f32 %v1370, %v1385
    %v1389 = vadd.f32 %v1371, %v1386
    %1390 = vset.pattern.permute.xlu0 2
    %1391 = vperm.xlu0 %1390, %v1147
    %v1392 = vpop.permute.xlu0 %1391
    %1394 = vset.pattern.permute.xlu0 2
    %1395 = vperm.xlu0 %1394, %v1154
    %v1396 = vpop.permute.xlu0 %1395
    %1398 = vset.pattern.permute.xlu0 2
    %1399 = vperm.xlu0 %1398, %v1161
    %v1400 = vpop.permute.xlu0 %1399
    %v1402 = vmul.f32 %v1392, %v1263
    %v1403 = vmul.f32 %v1396, %v1263
    %v1404 = vmul.f32 %v1400, %v1263
    %v1405 = vadd.f32 %v1387, %v1402
    %v1406 = vadd.f32 %v1388, %v1403
    %v1407 = vadd.f32 %v1389, %v1404
    %1408 = vset.pattern.permute.xlu0 2
    %1409 = vperm.xlu0 %1408, %v1273
    %v1410 = vpop.permute.xlu0 %1409
    %1411 = vset.pattern.permute.xlu0 2
    %1412 = vperm.xlu0 %1411, %v1274
    %v1413 = vpop.permute.xlu0 %1412
    %1414 = vset.pattern.permute.xlu0 2
    %1415 = vperm.xlu0 %1414, %v1275
    %v1416 = vpop.permute.xlu0 %1415
    %vm1417 = vcmp.eq.s32.totalorder %v1410, 1
    %vm1418 = vcmp.eq.s32.totalorder %v1413, 1
    %vm1419 = vcmp.eq.s32.totalorder %v1416, 1
    %v1420 = vsel %vm1417, inf, %v1405
    %v1421 = vsel %vm1418, inf, %v1406
    %v1422 = vsel %vm1419, inf, %v1407
    %v1423 = vlaneseq
    %v1424 = vand.u32 %v1423, 127
    %v1425 = vcvt.s32.f32 %v1424
    %v1426 = vsub.f32 %v1189, 1.0
    %v1427 = vsub.f32 %v1192, 1.0
    %v1428 = vsub.f32 %v1195, 1.0
    %v1429 = vmax.f32 %v1426, 1.0
    %v1430 = vmax.f32 %v1427, 1.0
    %v1431 = vmax.f32 %v1428, 1.0
    %v1432 = vrcp.pop %v1429
    %v1433 = vmul.f32 0.0, %v1432
    %v1434 = vrcp.pop %v1430
    %v1435 = vmul.f32 0.0, %v1434
    %v1436 = vrcp.pop %v1431
    %v1437 = vmul.f32 0.0, %v1436
    %v1438 = vsub.f32 %v1433, %v1425
    %v1439 = vsub.f32 %v1435, %v1425
    %v1440 = vsub.f32 %v1437, %v1425
    %v1441 = vand.u32 2147483647, %v1438
    %v1442 = vand.u32 2147483647, %v1439
    %v1443 = vand.u32 2147483647, %v1440
    %v1444 = vsub.f32 1.0, %v1441
    %v1445 = vsub.f32 1.0, %v1442
    %v1446 = vsub.f32 1.0, %v1443
    %v1447 = vmax.f32 %v1444, 0.0
    %v1448 = vmax.f32 %v1445, 0.0
    %v1449 = vmax.f32 %v1446, 0.0
    %v1451 = vsel %vm1186, %v1447, 0
    %v1454 = vsel %vm1186, %v1448, 0
    %v1457 = vsel %vm1186, %v1449, 0
    %vm1459 = vcmask 1042432
    %v1461 = vsel %vm1459, %v1197, 0
    %1463 = vmatprep.subr.mxu0 0.0
    %1464 = vmatpush1.msra.mxu0 %v1461
    %1465 = vmatprep.subr.mxu0 0.0
    %1466 = vmatpush1.msra.mxu0 0.0
    %1467 = vmatprep.subr.mxu0 0.0
    %1468 = vmatpush1.msra.mxu0 0.0
    %1469 = vmatprep.subr.mxu0 0.0
    %1470 = vmatpush1.msra.mxu0 0.0
    %1471 = vmatprep.subr.mxu0 0.0
    %1472 = vmatpush1.msra.mxu0 0.0
    %1473 = vmatprep.subr.mxu0 0.0
    %1474 = vmatpush1.msra.mxu0 0.0
    %1475 = vmatprep.subr.mxu0 0.0
    %1476 = vmatpush1.msra.mxu0 0.0
    %1477 = vmatprep.subr.mxu0 0.0
    %1478 = vmatpush1.msra.mxu0 0.0
    %1479 = vmatprep.subr.mxu0 0.0
    %1480 = vmatpush1.msra.mxu0 0.0
    %1481 = vmatprep.subr.mxu0 0.0
    %1482 = vmatpush1.msra.mxu0 0.0
    %1483 = vmatprep.subr.mxu0 0.0
    %1484 = vmatpush1.msra.mxu0 0.0
    %1485 = vmatprep.subr.mxu0 0.0
    %1486 = vmatpush1.msra.mxu0 0.0
    %1487 = vmatprep.subr.mxu0 0.0
    %1488 = vmatpush1.msra.mxu0 0.0
    %1489 = vmatprep.subr.mxu0 0.0
    %1490 = vmatpush1.msra.mxu0 0.0
    %1491 = vmatprep.subr.mxu0 0.0
    %1492 = vmatpush1.msra.mxu0 0.0
    %1493 = vmatprep.subr.mxu0 0.0
    %1494 = vmatpush1.msra.mxu0 0.0
    %1495 = vmatprep.subr.mxu0 0.0
    %1496 = vmatpush1.msra.mxu0 0.0
    %1497 = vmatprep.subr.mxu0 0.0
    %1498 = vmatpush1.msra.mxu0 0.0
    %1499 = vmatprep.subr.mxu0 0.0
    %1500 = vmatpush1.msra.mxu0 0.0
    %1501 = vmatprep.subr.mxu0 0.0
    %1502 = vmatpush1.msra.mxu0 0.0
    %1503 = vmatprep.subr.mxu0 0.0
    %1504 = vmatpush1.msra.mxu0 0.0
    %1505 = vmatprep.subr.mxu0 0.0
    %1506 = vmatpush1.msra.mxu0 0.0
    %1507 = vmatprep.subr.mxu0 0.0
    %1508 = vmatpush1.msra.mxu0 0.0
    %1509 = vmatprep.subr.mxu0 0.0
    %1510 = vmatpush1.msra.mxu0 0.0
    %1511 = vmatprep.subr.mxu0 0.0
    %1512 = vmatpush1.msra.mxu0 0.0
    %1513 = vmatprep.subr.mxu0 0.0
    %1514 = vmatpush1.msra.mxu0 0.0
    %1515 = vmatprep.subr.mxu0 0.0
    %1516 = vmatpush1.msra.mxu0 0.0
    %1517 = vmatprep.subr.mxu0 0.0
    %1518 = vmatpush1.msra.mxu0 0.0
    %1519 = vmatprep.subr.mxu0 0.0
    %1520 = vmatpush1.msra.mxu0 0.0
    %1521 = vmatprep.subr.mxu0 0.0
    %1522 = vmatpush1.msra.mxu0 0.0
    %1523 = vmatprep.subr.mxu0 0.0
    %1524 = vmatpush1.msra.mxu0 0.0
    %1525 = vmatprep.subr.mxu0 0.0
    %1526 = vmatpush1.msra.mxu0 0.0
    %1527 = vmatprep.mubr.f32.mxu0 0.0
    %1528 = vmatmul.mubr.f32.gmra.mrb[0].mxu0 %v1451
    %v1529 = vpop.f32.mrb[0].mxu0
    %v1530 = vadd.f32 0.0, %v1529
    %v1531 = vpop.f32.mrb[0].mxu0
    %1532 = vmatprep.mubr.f32.mxu0 0.0
    %1533 = vmatmul.mubr.f32.gmra.mrb[0].mxu0 %v1454
    %v1534 = vpop.f32.mrb[0].mxu0
    %v1535 = vadd.f32 0.0, %v1534
    %v1536 = vpop.f32.mrb[0].mxu0
    %1537 = vmatprep.mubr.f32.mxu0 0.0
    %1538 = vmatmul.mubr.f32.gmra.mrb[0].mxu0 %v1457
    %v1539 = vpop.f32.mrb[0].mxu0
    %v1540 = vadd.f32 0.0, %v1539
    %v1541 = vpop.f32.mrb[0].mxu0
    %1542 = vdwg.mxu0
    %v1543 = vmul.f32 2.0, %v1432
    %v1544 = vmul.f32 2.0, %v1434
    %v1545 = vmul.f32 2.0, %v1436
    %v1546 = vsub.f32 %v1543, %v1425
    %v1547 = vsub.f32 %v1544, %v1425
    %v1548 = vsub.f32 %v1545, %v1425
    %v1549 = vand.u32 2147483647, %v1546
    %v1550 = vand.u32 2147483647, %v1547
    %v1551 = vand.u32 2147483647, %v1548
    %v1552 = vsub.f32 1.0, %v1549
    %v1553 = vsub.f32 1.0, %v1550
    %v1554 = vsub.f32 1.0, %v1551
    %v1555 = vmax.f32 %v1552, 0.0
    %v1556 = vmax.f32 %v1553, 0.0
    %v1557 = vmax.f32 %v1554, 0.0
    %v1559 = vsel %vm1186, %v1555, 0
    %v1562 = vsel %vm1186, %v1556, 0
    %v1565 = vsel %vm1186, %v1557, 0
    %1567 = vmatprep.subr.mxu0 0.0
    %1568 = vmatpush1.msra.mxu0 %v1461
    %1569 = vmatprep.subr.mxu0 0.0
    %1570 = vmatpush1.msra.mxu0 0.0
    %1571 = vmatprep.subr.mxu0 0.0
    %1572 = vmatpush1.msra.mxu0 0.0
    %1573 = vmatprep.subr.mxu0 0.0
    %1574 = vmatpush1.msra.mxu0 0.0
    %1575 = vmatprep.subr.mxu0 0.0
    %1576 = vmatpush1.msra.mxu0 0.0
    %1577 = vmatprep.subr.mxu0 0.0
    %1578 = vmatpush1.msra.mxu0 0.0
    %1579 = vmatprep.subr.mxu0 0.0
    %1580 = vmatpush1.msra.mxu0 0.0
    %1581 = vmatprep.subr.mxu0 0.0
    %1582 = vmatpush1.msra.mxu0 0.0
    %1583 = vmatprep.subr.mxu0 0.0
    %1584 = vmatpush1.msra.mxu0 0.0
    %1585 = vmatprep.subr.mxu0 0.0
    %1586 = vmatpush1.msra.mxu0 0.0
    %1587 = vmatprep.subr.mxu0 0.0
    %1588 = vmatpush1.msra.mxu0 0.0
    %1589 = vmatprep.subr.mxu0 0.0
    %1590 = vmatpush1.msra.mxu0 0.0
    %1591 = vmatprep.subr.mxu0 0.0
    %1592 = vmatpush1.msra.mxu0 0.0
    %1593 = vmatprep.subr.mxu0 0.0
    %1594 = vmatpush1.msra.mxu0 0.0
    %1595 = vmatprep.subr.mxu0 0.0
    %1596 = vmatpush1.msra.mxu0 0.0
    %1597 = vmatprep.subr.mxu0 0.0
    %1598 = vmatpush1.msra.mxu0 0.0
    %1599 = vmatprep.subr.mxu0 0.0
    %1600 = vmatpush1.msra.mxu0 0.0
    %1601 = vmatprep.subr.mxu0 0.0
    %1602 = vmatpush1.msra.mxu0 0.0
    %1603 = vmatprep.subr.mxu0 0.0
    %1604 = vmatpush1.msra.mxu0 0.0
    %1605 = vmatprep.subr.mxu0 0.0
    %1606 = vmatpush1.msra.mxu0 0.0
    %1607 = vmatprep.subr.mxu0 0.0
    %1608 = vmatpush1.msra.mxu0 0.0
    %1609 = vmatprep.subr.mxu0 0.0
    %1610 = vmatpush1.msra.mxu0 0.0
    %1611 = vmatprep.subr.mxu0 0.0
    %1612 = vmatpush1.msra.mxu0 0.0
    %1613 = vmatprep.subr.mxu0 0.0
    %1614 = vmatpush1.msra.mxu0 0.0
    %1615 = vmatprep.subr.mxu0 0.0
    %1616 = vmatpush1.msra.mxu0 0.0
    %1617 = vmatprep.subr.mxu0 0.0
    %1618 = vmatpush1.msra.mxu0 0.0
    %1619 = vmatprep.subr.mxu0 0.0
    %1620 = vmatpush1.msra.mxu0 0.0
    %1621 = vmatprep.subr.mxu0 0.0
    %1622 = vmatpush1.msra.mxu0 0.0
    %1623 = vmatprep.subr.mxu0 0.0
    %1624 = vmatpush1.msra.mxu0 0.0
    %1625 = vmatprep.subr.mxu0 0.0
    %1626 = vmatpush1.msra.mxu0 0.0
    %1627 = vmatprep.subr.mxu0 0.0
    %1628 = vmatpush1.msra.mxu0 0.0
    %1629 = vmatprep.subr.mxu0 0.0
    %1630 = vmatpush1.msra.mxu0 0.0
    %1631 = vmatprep.mubr.f32.mxu0 0.0
    %1632 = vmatmul.mubr.f32.gmra.mrb[0].mxu0 %v1559
    %v1633 = vpop.f32.mrb[0].mxu0
    %v1634 = vadd.f32 0.0, %v1633
    %v1635 = vpop.f32.mrb[0].mxu0
    %1636 = vmatprep.mubr.f32.mxu0 0.0
    %1637 = vmatmul.mubr.f32.gmra.mrb[0].mxu0 %v1562
    %v1638 = vpop.f32.mrb[0].mxu0
    %v1639 = vadd.f32 0.0, %v1638
    %v1640 = vpop.f32.mrb[0].mxu0
    %1641 = vmatprep.mubr.f32.mxu0 0.0
    %1642 = vmatmul.mubr.f32.gmra.mrb[0].mxu0 %v1565
    %v1643 = vpop.f32.mrb[0].mxu0
    %v1644 = vadd.f32 0.0, %v1643
    %v1645 = vpop.f32.mrb[0].mxu0
    %1646 = vdwg.mxu0
    %v1647 = vmul.f32 4.0, %v1432
    %v1648 = vmul.f32 4.0, %v1434
    %v1649 = vmul.f32 4.0, %v1436
    %v1650 = vsub.f32 %v1647, %v1425
    %v1651 = vsub.f32 %v1648, %v1425
    %v1652 = vsub.f32 %v1649, %v1425
    %v1653 = vand.u32 2147483647, %v1650
    %v1654 = vand.u32 2147483647, %v1651
    %v1655 = vand.u32 2147483647, %v1652
    %v1656 = vsub.f32 1.0, %v1653
    %v1657 = vsub.f32 1.0, %v1654
    %v1658 = vsub.f32 1.0, %v1655
    %v1659 = vmax.f32 %v1656, 0.0
    %v1660 = vmax.f32 %v1657, 0.0
    %v1661 = vmax.f32 %v1658, 0.0
    %v1663 = vsel %vm1186, %v1659, 0
    %v1666 = vsel %vm1186, %v1660, 0
    %v1669 = vsel %vm1186, %v1661, 0
    %1671 = vmatprep.subr.mxu0 0.0
    %1672 = vmatpush1.msra.mxu0 %v1461
    %1673 = vmatprep.subr.mxu0 0.0
    %1674 = vmatpush1.msra.mxu0 0.0
    %1675 = vmatprep.subr.mxu0 0.0
    %1676 = vmatpush1.msra.mxu0 0.0
    %1677 = vmatprep.subr.mxu0 0.0
    %1678 = vmatpush1.msra.mxu0 0.0
    %1679 = vmatprep.subr.mxu0 0.0
    %1680 = vmatpush1.msra.mxu0 0.0
    %1681 = vmatprep.subr.mxu0 0.0
    %1682 = vmatpush1.msra.mxu0 0.0
    %1683 = vmatprep.subr.mxu0 0.0
    %1684 = vmatpush1.msra.mxu0 0.0
    %1685 = vmatprep.subr.mxu0 0.0
    %1686 = vmatpush1.msra.mxu0 0.0
    %1687 = vmatprep.subr.mxu0 0.0
    %1688 = vmatpush1.msra.mxu0 0.0
    %1689 = vmatprep.subr.mxu0 0.0
    %1690 = vmatpush1.msra.mxu0 0.0
    %1691 = vmatprep.subr.mxu0 0.0
    %1692 = vmatpush1.msra.mxu0 0.0
    %1693 = vmatprep.subr.mxu0 0.0
    %1694 = vmatpush1.msra.mxu0 0.0
    %1695 = vmatprep.subr.mxu0 0.0
    %1696 = vmatpush1.msra.mxu0 0.0
    %1697 = vmatprep.subr.mxu0 0.0
    %1698 = vmatpush1.msra.mxu0 0.0
    %1699 = vmatprep.subr.mxu0 0.0
    %1700 = vmatpush1.msra.mxu0 0.0
    %1701 = vmatprep.subr.mxu0 0.0
    %1702 = vmatpush1.msra.mxu0 0.0
    %1703 = vmatprep.subr.mxu0 0.0
    %1704 = vmatpush1.msra.mxu0 0.0
    %1705 = vmatprep.subr.mxu0 0.0
    %1706 = vmatpush1.msra.mxu0 0.0
    %1707 = vmatprep.subr.mxu0 0.0
    %1708 = vmatpush1.msra.mxu0 0.0
    %1709 = vmatprep.subr.mxu0 0.0
    %1710 = vmatpush1.msra.mxu0 0.0
    %1711 = vmatprep.subr.mxu0 0.0
    %1712 = vmatpush1.msra.mxu0 0.0
    %1713 = vmatprep.subr.mxu0 0.0
    %1714 = vmatpush1.msra.mxu0 0.0
    %1715 = vmatprep.subr.mxu0 0.0
    %1716 = vmatpush1.msra.mxu0 0.0
    %1717 = vmatprep.subr.mxu0 0.0
    %1718 = vmatpush1.msra.mxu0 0.0
    %1719 = vmatprep.subr.mxu0 0.0
    %1720 = vmatpush1.msra.mxu0 0.0
    %1721 = vmatprep.subr.mxu0 0.0
    %1722 = vmatpush1.msra.mxu0 0.0
    %1723 = vmatprep.subr.mxu0 0.0
    %1724 = vmatpush1.msra.mxu0 0.0
    %1725 = vmatprep.subr.mxu0 0.0
    %1726 = vmatpush1.msra.mxu0 0.0
    %1727 = vmatprep.subr.mxu0 0.0
    %1728 = vmatpush1.msra.mxu0 0.0
    %1729 = vmatprep.subr.mxu0 0.0
    %1730 = vmatpush1.msra.mxu0 0.0
    %1731 = vmatprep.subr.mxu0 0.0
    %1732 = vmatpush1.msra.mxu0 0.0
    %1733 = vmatprep.subr.mxu0 0.0
    %1734 = vmatpush1.msra.mxu0 0.0
    %1735 = vmatprep.mubr.f32.mxu0 0.0
    %1736 = vmatmul.mubr.f32.gmra.mrb[0].mxu0 %v1663
    %v1737 = vpop.f32.mrb[0].mxu0
    %v1738 = vadd.f32 0.0, %v1737
    %v1739 = vpop.f32.mrb[0].mxu0
    %1740 = vmatprep.mubr.f32.mxu0 0.0
    %1741 = vmatmul.mubr.f32.gmra.mrb[0].mxu0 %v1666
    %v1742 = vpop.f32.mrb[0].mxu0
    %v1743 = vadd.f32 0.0, %v1742
    %v1744 = vpop.f32.mrb[0].mxu0
    %1745 = vmatprep.mubr.f32.mxu0 0.0
    %1746 = vmatmul.mubr.f32.gmra.mrb[0].mxu0 %v1669
    %v1747 = vpop.f32.mrb[0].mxu0
    %v1748 = vadd.f32 0.0, %v1747
    %v1749 = vpop.f32.mrb[0].mxu0
    %1750 = vdwg.mxu0
    %v1751 = vmin.f32 %v1288, %v1354
    %v1752 = vmin.f32 %v1289, %v1355
    %v1753 = vmin.f32 %v1290, %v1356
    %v1754 = vmax.f32 %v1288, %v1354
    %v1755 = vmax.f32 %v1289, %v1355
    %v1756 = vmax.f32 %v1290, %v1356
    %v1757 = vmin.f32 %v1754, %v1420
    %v1758 = vmin.f32 %v1755, %v1421
    %v1759 = vmin.f32 %v1756, %v1422
    %v1760 = vmax.f32 %v1754, %v1420
    %v1761 = vmax.f32 %v1755, %v1421
    %v1762 = vmax.f32 %v1756, %v1422
    %v1763 = vmin.f32 %v1751, %v1757
    %v1764 = vmin.f32 %v1752, %v1758
    %v1765 = vmin.f32 %v1753, %v1759
    %v1766 = vmax.f32 %v1751, %v1757
    %v1767 = vmax.f32 %v1752, %v1758
    %v1768 = vmax.f32 %v1753, %v1759
    %vm1769 = vcmp.eq.f32.partialorder %v1763, inf
    %vm1770 = vcmp.eq.f32.partialorder %v1764, inf
    %vm1771 = vcmp.eq.f32.partialorder %v1765, inf
    %v1772 = vsel %vm1769, 0.0, %v1763
    %v1773 = vsel %vm1770, 0.0, %v1764
    %v1774 = vsel %vm1771, 0.0, %v1765
    %v1775 = vmul.f32 %v1772, %v1530
    %v1776 = vmul.f32 %v1773, %v1535
    %v1777 = vmul.f32 %v1774, %v1540
    %vm1778 = vcmp.eq.f32.partialorder %v1766, inf
    %vm1779 = vcmp.eq.f32.partialorder %v1767, inf
    %vm1780 = vcmp.eq.f32.partialorder %v1768, inf
    %v1781 = vsel %vm1778, 0.0, %v1766
    %v1782 = vsel %vm1779, 0.0, %v1767
    %v1783 = vsel %vm1780, 0.0, %v1768
    %v1784 = vmul.f32 %v1781, %v1634
    %v1785 = vmul.f32 %v1782, %v1639
    %v1786 = vmul.f32 %v1783, %v1644
    %v1787 = vadd.f32 %v1775, %v1784
    %v1788 = vadd.f32 %v1776, %v1785
    %v1789 = vadd.f32 %v1777, %v1786
    %vm1790 = vcmp.eq.f32.partialorder %v1760, inf
    %vm1791 = vcmp.eq.f32.partialorder %v1761, inf
    %vm1792 = vcmp.eq.f32.partialorder %v1762, inf
    %v1793 = vsel %vm1790, 0.0, %v1760
    %v1794 = vsel %vm1791, 0.0, %v1761
    %v1795 = vsel %vm1792, 0.0, %v1762
    %v1796 = vmul.f32 %v1793, %v1738
    %v1797 = vmul.f32 %v1794, %v1743
    %v1798 = vmul.f32 %v1795, %v1748
    %v1799 = vadd.f32 %v1787, %v1796
    %v1800 = vadd.f32 %v1788, %v1797
    %v1801 = vadd.f32 %v1789, %v1798
    %v1802 = vld [vmem:[#allocation3] sm:$0xff]
    %v1803 = vld [vmem:[#allocation8] sm:$0x1f]
    %v1804 = vld [vmem:[%s29] sm:$0x1]
    %v1806 = vlaneseq
    %v1807 = vshrl.u32 %v1806, 7
    %v1808 = vsub.s32 0, %v1807
    %v1809 = vrot.slane %v1804, %v1808
    %vm1811 = vcmask 39936
    %v1813 = vsel %vm1811, %v1802, 0
    %vm1815 = vcmask 1044480
    %v1817 = vsel %vm1815, %v1803, 0
    %1819 = vmatprep.subr.mxu0 0.0
    %1820 = vmatpush1.msra.mxu0 %v1817
    %1821 = vmatprep.subr.mxu0 0.0
    %1822 = vmatpush1.msra.mxu0 0.0
    %1823 = vmatprep.subr.mxu0 0.0
    %1824 = vmatpush1.msra.mxu0 0.0
    %1825 = vmatprep.subr.mxu0 0.0
    %1826 = vmatpush1.msra.mxu0 0.0
    %1827 = vmatprep.subr.mxu0 0.0
    %1828 = vmatpush1.msra.mxu0 0.0
    %1829 = vmatprep.subr.mxu0 0.0
    %1830 = vmatpush1.msra.mxu0 0.0
    %1831 = vmatprep.subr.mxu0 0.0
    %1832 = vmatpush1.msra.mxu0 0.0
    %1833 = vmatprep.subr.mxu0 0.0
    %1834 = vmatpush1.msra.mxu0 0.0
    %1835 = vmatprep.subr.mxu0 0.0
    %1836 = vmatpush1.msra.mxu0 0.0
    %1837 = vmatprep.subr.mxu0 0.0
    %1838 = vmatpush1.msra.mxu0 0.0
    %1839 = vmatprep.subr.mxu0 0.0
    %1840 = vmatpush1.msra.mxu0 0.0
    %1841 = vmatprep.subr.mxu0 0.0
    %1842 = vmatpush1.msra.mxu0 0.0
    %1843 = vmatprep.subr.mxu0 0.0
    %1844 = vmatpush1.msra.mxu0 0.0
    %1845 = vmatprep.subr.mxu0 0.0
    %1846 = vmatpush1.msra.mxu0 0.0
    %1847 = vmatprep.subr.mxu0 0.0
    %1848 = vmatpush1.msra.mxu0 0.0
    %1849 = vmatprep.subr.mxu0 0.0
    %1850 = vmatpush1.msra.mxu0 0.0
    %1851 = vmatprep.subr.mxu0 0.0
    %1852 = vmatpush1.msra.mxu0 0.0
    %1853 = vmatprep.subr.mxu0 0.0
    %1854 = vmatpush1.msra.mxu0 0.0
    %1855 = vmatprep.subr.mxu0 0.0
    %1856 = vmatpush1.msra.mxu0 0.0
    %1857 = vmatprep.subr.mxu0 0.0
    %1858 = vmatpush1.msra.mxu0 0.0
    %1859 = vmatprep.subr.mxu0 0.0
    %1860 = vmatpush1.msra.mxu0 0.0
    %1861 = vmatprep.subr.mxu0 0.0
    %1862 = vmatpush1.msra.mxu0 0.0
    %1863 = vmatprep.subr.mxu0 0.0
    %1864 = vmatpush1.msra.mxu0 0.0
    %1865 = vmatprep.subr.mxu0 0.0
    %1866 = vmatpush1.msra.mxu0 0.0
    %1867 = vmatprep.subr.mxu0 0.0
    %1868 = vmatpush1.msra.mxu0 0.0
    %1869 = vmatprep.subr.mxu0 0.0
    %1870 = vmatpush1.msra.mxu0 0.0
    %1871 = vmatprep.subr.mxu0 0.0
    %1872 = vmatpush1.msra.mxu0 0.0
    %1873 = vmatprep.subr.mxu0 0.0
    %1874 = vmatpush1.msra.mxu0 0.0
    %1875 = vmatprep.subr.mxu0 0.0
    %1876 = vmatpush1.msra.mxu0 0.0
    %1877 = vmatprep.subr.mxu0 0.0
    %1878 = vmatpush1.msra.mxu0 0.0
    %1879 = vmatprep.subr.mxu0 0.0
    %1880 = vmatpush1.msra.mxu0 0.0
    %1881 = vmatprep.subr.mxu0 0.0
    %1882 = vmatpush1.msra.mxu0 0.0
    %1883 = vmatprep.mubr.f32.mxu0 0.0
    %1884 = vmatmul.mubr.f32.gmra.mrb[0].mxu0 %v1813
    %v1885 = vpop.f32.mrb[0].mxu0
    %v1886 = vadd.f32 %v1809, %v1885
    %v1887 = vpop.f32.mrb[0].mxu0
    %1888 = vdwg.mxu0
    %v1889 = vld [vmem:[%s19] sm:$0xff]
    %v1890 = vld [vmem:[%s19 + $0x8] sm:$0xff]
    %v1891 = vld [vmem:[%s19 + $0x10] sm:$0xff]
    %v1892 = vld [vmem:[%s21] sm:$0xff]
    %v1893 = vld [vmem:[%s21 + $0x8] sm:$0xff]
    %v1894 = vld [vmem:[%s21 + $0x10] sm:$0xff]
    %v1895 = vld [vmem:[#allocation5] sm:$0xff]
    %v1896 = vld [vmem:[#allocation5 + $0x8] sm:$0xff]
    %v1897 = vld [vmem:[#allocation5 + $0x10] sm:$0xff]
    %v1898 = vld [vmem:[#allocation13] sm:$0xff]
    %v1899 = vld [vmem:[#allocation13 + $0x8] sm:$0xff]
    %v1900 = vld [vmem:[#allocation13 + $0x10] sm:$0xff]
    %v1901 = vld [vmem:[#allocation13 + $0x18] sm:$0xff]
    %v1902 = vld [vmem:[#allocation14] sm:$0x7]
    %v1903 = vld [vmem:[%s13] sm:$0xff]
    %v1904 = vld [vmem:[%s13 + $0x8] sm:$0xff]
    %v1905 = vld [vmem:[%s13 + $0x10] sm:$0xff]
    %v1906 = vld [vmem:[%s17] sm:$0xff]
    %v1907 = vld [vmem:[%s17 + $0x8] sm:$0xff]
    %v1908 = vld [vmem:[%s17 + $0x10] sm:$0xff]
    %v1909 = vld [vmem:[%s39] sm:$0xff]
    %v1910 = vld [vmem:[%s39 + $0x8] sm:$0xff]
    %v1911 = vld [vmem:[%s39 + $0x10] sm:$0xff]
    %v1912 = vld [vmem:[%s39 + $0x18] sm:$0xff]
    %vm1913 = vcmask 261120
    %v1915 = vsel %vm1913, %v1886, 0
    %1917 = vmatprep.subr.mxu0 0.0
    %1918 = vmatpush1.msra.mxu0 %v1909
    %1919 = vmatprep.subr.mxu0 0.0
    %1920 = vmatpush1.msra.mxu0 %v1910
    %1921 = vmatprep.subr.mxu0 0.0
    %1922 = vmatpush1.msra.mxu0 %v1911
    %1923 = vmatprep.subr.mxu0 0.0
    %1924 = vmatpush1.msra.mxu0 %v1912
    %1925 = vmatprep.subr.mxu0 0.0
    %1926 = vmatpush1.msra.mxu0 0.0
    %1927 = vmatprep.subr.mxu0 0.0
    %1928 = vmatpush1.msra.mxu0 0.0
    %1929 = vmatprep.subr.mxu0 0.0
    %1930 = vmatpush1.msra.mxu0 0.0
    %1931 = vmatprep.subr.mxu0 0.0
    %1932 = vmatpush1.msra.mxu0 0.0
    %1933 = vmatprep.subr.mxu0 0.0
    %1934 = vmatpush1.msra.mxu0 0.0
    %1935 = vmatprep.subr.mxu0 0.0
    %1936 = vmatpush1.msra.mxu0 0.0
    %1937 = vmatprep.subr.mxu0 0.0
    %1938 = vmatpush1.msra.mxu0 0.0
    %1939 = vmatprep.subr.mxu0 0.0
    %1940 = vmatpush1.msra.mxu0 0.0
    %1941 = vmatprep.subr.mxu0 0.0
    %1942 = vmatpush1.msra.mxu0 0.0
    %1943 = vmatprep.subr.mxu0 0.0
    %1944 = vmatpush1.msra.mxu0 0.0
    %1945 = vmatprep.subr.mxu0 0.0
    %1946 = vmatpush1.msra.mxu0 0.0
    %1947 = vmatprep.subr.mxu0 0.0
    %1948 = vmatpush1.msra.mxu0 0.0
    %1949 = vmatprep.subr.mxu0 0.0
    %1950 = vmatpush1.msra.mxu0 0.0
    %1951 = vmatprep.subr.mxu0 0.0
    %1952 = vmatpush1.msra.mxu0 0.0
    %1953 = vmatprep.subr.mxu0 0.0
    %1954 = vmatpush1.msra.mxu0 0.0
    %1955 = vmatprep.subr.mxu0 0.0
    %1956 = vmatpush1.msra.mxu0 0.0
    %1957 = vmatprep.subr.mxu0 0.0
    %1958 = vmatpush1.msra.mxu0 0.0
    %1959 = vmatprep.subr.mxu0 0.0
    %1960 = vmatpush1.msra.mxu0 0.0
    %1961 = vmatprep.subr.mxu0 0.0
    %1962 = vmatpush1.msra.mxu0 0.0
    %1963 = vmatprep.subr.mxu0 0.0
    %1964 = vmatpush1.msra.mxu0 0.0
    %1965 = vmatprep.subr.mxu0 0.0
    %1966 = vmatpush1.msra.mxu0 0.0
    %1967 = vmatprep.subr.mxu0 0.0
    %1968 = vmatpush1.msra.mxu0 0.0
    %1969 = vmatprep.subr.mxu0 0.0
    %1970 = vmatpush1.msra.mxu0 0.0
    %1971 = vmatprep.subr.mxu0 0.0
    %1972 = vmatpush1.msra.mxu0 0.0
    %1973 = vmatprep.subr.mxu0 0.0
    %1974 = vmatpush1.msra.mxu0 0.0
    %1975 = vmatprep.subr.mxu0 0.0
    %1976 = vmatpush1.msra.mxu0 0.0
    %1977 = vmatprep.subr.mxu0 0.0
    %1978 = vmatpush1.msra.mxu0 0.0
    %1979 = vmatprep.subr.mxu0 0.0
    %1980 = vmatpush1.msra.mxu0 0.0
    %1981 = vmatprep.mubr.f32.mxu0 0.0
    %1982 = vmatmul.mubr.f32.gmra.mrb[0].mxu0 %v1915
    %v1983 = vpop.f32.mrb[0].mxu0
    %v1984 = vadd.f32 0.0, %v1983
    %v1985 = vpop.f32.mrb[0].mxu0
    %1986 = vdwg.mxu0
    %v1987 = vld [vmem:[%s41] sm:$0xff]
    %v1988 = vld [vmem:[%s41 + $0x8] sm:$0xff]
    %v1989 = vld [vmem:[%s41 + $0x10] sm:$0xff]
    %v1990 = vld [vmem:[%s41 + $0x18] sm:$0xff]
    %1991 = vmatprep.subr.mxu0 0.0
    %1992 = vmatpush1.msra.mxu0 %v1987
    %1993 = vmatprep.subr.mxu0 0.0
    %1994 = vmatpush1.msra.mxu0 %v1988
    %1995 = vmatprep.subr.mxu0 0.0
    %1996 = vmatpush1.msra.mxu0 %v1989
    %1997 = vmatprep.subr.mxu0 0.0
    %1998 = vmatpush1.msra.mxu0 %v1990
    %1999 = vmatprep.subr.mxu0 0.0
    %2000 = vmatpush1.msra.mxu0 0.0
    %2001 = vmatprep.subr.mxu0 0.0
    %2002 = vmatpush1.msra.mxu0 0.0
    %2003 = vmatprep.subr.mxu0 0.0
    %2004 = vmatpush1.msra.mxu0 0.0
    %2005 = vmatprep.subr.mxu0 0.0
    %2006 = vmatpush1.msra.mxu0 0.0
    %2007 = vmatprep.subr.mxu0 0.0
    %2008 = vmatpush1.msra.mxu0 0.0
    %2009 = vmatprep.subr.mxu0 0.0
    %2010 = vmatpush1.msra.mxu0 0.0
    %2011 = vmatprep.subr.mxu0 0.0
    %2012 = vmatpush1.msra.mxu0 0.0
    %2013 = vmatprep.subr.mxu0 0.0
    %2014 = vmatpush1.msra.mxu0 0.0
    %2015 = vmatprep.subr.mxu0 0.0
    %2016 = vmatpush1.msra.mxu0 0.0
    %2017 = vmatprep.subr.mxu0 0.0
    %2018 = vmatpush1.msra.mxu0 0.0
    %2019 = vmatprep.subr.mxu0 0.0
    %2020 = vmatpush1.msra.mxu0 0.0
    %2021 = vmatprep.subr.mxu0 0.0
    %2022 = vmatpush1.msra.mxu0 0.0
    %2023 = vmatprep.subr.mxu0 0.0
    %2024 = vmatpush1.msra.mxu0 0.0
    %2025 = vmatprep.subr.mxu0 0.0
    %2026 = vmatpush1.msra.mxu0 0.0
    %2027 = vmatprep.subr.mxu0 0.0
    %2028 = vmatpush1.msra.mxu0 0.0
    %2029 = vmatprep.subr.mxu0 0.0
    %2030 = vmatpush1.msra.mxu0 0.0
    %2031 = vmatprep.subr.mxu0 0.0
    %2032 = vmatpush1.msra.mxu0 0.0
    %2033 = vmatprep.subr.mxu0 0.0
    %2034 = vmatpush1.msra.mxu0 0.0
    %2035 = vmatprep.subr.mxu0 0.0
    %2036 = vmatpush1.msra.mxu0 0.0
    %2037 = vmatprep.subr.mxu0 0.0
    %2038 = vmatpush1.msra.mxu0 0.0
    %2039 = vmatprep.subr.mxu0 0.0
    %2040 = vmatpush1.msra.mxu0 0.0
    %2041 = vmatprep.subr.mxu0 0.0
    %2042 = vmatpush1.msra.mxu0 0.0
    %2043 = vmatprep.subr.mxu0 0.0
    %2044 = vmatpush1.msra.mxu0 0.0
    %2045 = vmatprep.subr.mxu0 0.0
    %2046 = vmatpush1.msra.mxu0 0.0
    %2047 = vmatprep.subr.mxu0 0.0
    %2048 = vmatpush1.msra.mxu0 0.0
    %2049 = vmatprep.subr.mxu0 0.0
    %2050 = vmatpush1.msra.mxu0 0.0
    %2051 = vmatprep.subr.mxu0 0.0
    %2052 = vmatpush1.msra.mxu0 0.0
    %2053 = vmatprep.subr.mxu0 0.0
    %2054 = vmatpush1.msra.mxu0 0.0
    %2055 = vmatprep.mubr.f32.mxu0 0.0
    %2056 = vmatmul.mubr.f32.gmra.mrb[0].mxu0 %v1915
    %v2057 = vpop.f32.mrb[0].mxu0
    %v2058 = vadd.f32 0.0, %v2057
    %v2059 = vpop.f32.mrb[0].mxu0
    %2060 = vdwg.mxu0
    %vm2061 = vcmask 64512
    %v2063 = vsel %vm2061, %v1892, 0
    %v2066 = vsel %vm2061, %v1893, 0
    %v2069 = vsel %vm2061, %v1894, 0
    %2071 = vmatprep.subr.mxu0 0.0
    %2072 = vmatpush1.msra.mxu0 %v2058
    %2073 = vmatprep.subr.mxu0 0.0
    %2074 = vmatpush1.msra.mxu0 0.0
    %2075 = vmatprep.subr.mxu0 0.0
    %2076 = vmatpush1.msra.mxu0 0.0
    %2077 = vmatprep.subr.mxu0 0.0
    %2078 = vmatpush1.msra.mxu0 0.0
    %2079 = vmatprep.subr.mxu0 0.0
    %2080 = vmatpush1.msra.mxu0 0.0
    %2081 = vmatprep.subr.mxu0 0.0
    %2082 = vmatpush1.msra.mxu0 0.0
    %2083 = vmatprep.subr.mxu0 0.0
    %2084 = vmatpush1.msra.mxu0 0.0
    %2085 = vmatprep.subr.mxu0 0.0
    %2086 = vmatpush1.msra.mxu0 0.0
    %2087 = vmatprep.subr.mxu0 0.0
    %2088 = vmatpush1.msra.mxu0 0.0
    %2089 = vmatprep.subr.mxu0 0.0
    %2090 = vmatpush1.msra.mxu0 0.0
    %2091 = vmatprep.subr.mxu0 0.0
    %2092 = vmatpush1.msra.mxu0 0.0
    %2093 = vmatprep.subr.mxu0 0.0
    %2094 = vmatpush1.msra.mxu0 0.0
    %2095 = vmatprep.subr.mxu0 0.0
    %2096 = vmatpush1.msra.mxu0 0.0
    %2097 = vmatprep.subr.mxu0 0.0
    %2098 = vmatpush1.msra.mxu0 0.0
    %2099 = vmatprep.subr.mxu0 0.0
    %2100 = vmatpush1.msra.mxu0 0.0
    %2101 = vmatprep.subr.mxu0 0.0
    %2102 = vmatpush1.msra.mxu0 0.0
    %2103 = vmatprep.subr.mxu0 0.0
    %2104 = vmatpush1.msra.mxu0 0.0
    %2105 = vmatprep.subr.mxu0 0.0
    %2106 = vmatpush1.msra.mxu0 0.0
    %2107 = vmatprep.subr.mxu0 0.0
    %2108 = vmatpush1.msra.mxu0 0.0
    %2109 = vmatprep.subr.mxu0 0.0
    %2110 = vmatpush1.msra.mxu0 0.0
    %2111 = vmatprep.subr.mxu0 0.0
    %2112 = vmatpush1.msra.mxu0 0.0
    %2113 = vmatprep.subr.mxu0 0.0
    %2114 = vmatpush1.msra.mxu0 0.0
    %2115 = vmatprep.subr.mxu0 0.0
    %2116 = vmatpush1.msra.mxu0 0.0
    %2117 = vmatprep.subr.mxu0 0.0
    %2118 = vmatpush1.msra.mxu0 0.0
    %2119 = vmatprep.subr.mxu0 0.0
    %2120 = vmatpush1.msra.mxu0 0.0
    %2121 = vmatprep.subr.mxu0 0.0
    %2122 = vmatpush1.msra.mxu0 0.0
    %2123 = vmatprep.subr.mxu0 0.0
    %2124 = vmatpush1.msra.mxu0 0.0
    %2125 = vmatprep.subr.mxu0 0.0
    %2126 = vmatpush1.msra.mxu0 0.0
    %2127 = vmatprep.subr.mxu0 0.0
    %2128 = vmatpush1.msra.mxu0 0.0
    %2129 = vmatprep.subr.mxu0 0.0
    %2130 = vmatpush1.msra.mxu0 0.0
    %2131 = vmatprep.subr.mxu0 0.0
    %2132 = vmatpush1.msra.mxu0 0.0
    %2133 = vmatprep.subr.mxu0 0.0
    %2134 = vmatpush1.msra.mxu0 0.0
    %2135 = vmatprep.mubr.f32.mxu0 0.0
    %2136 = vmatmul.mubr.f32.gmra.mrb[0].mxu0 %v2063
    %v2137 = vpop.f32.mrb[0].mxu0
    %v2138 = vadd.f32 0.0, %v2137
    %v2139 = vpop.f32.mrb[0].mxu0
    %2140 = vmatprep.mubr.f32.mxu0 0.0
    %2141 = vmatmul.mubr.f32.gmra.mrb[0].mxu0 %v2066
    %v2142 = vpop.f32.mrb[0].mxu0
    %v2143 = vadd.f32 0.0, %v2142
    %v2144 = vpop.f32.mrb[0].mxu0
    %2145 = vmatprep.mubr.f32.mxu0 0.0
    %2146 = vmatmul.mubr.f32.gmra.mrb[0].mxu0 %v2069
    %v2147 = vpop.f32.mrb[0].mxu0
    %v2148 = vadd.f32 0.0, %v2147
    %v2149 = vpop.f32.mrb[0].mxu0
    %2150 = vdwg.mxu0
    %v2152 = vsel %vm2061, %v1889, 0
    %v2155 = vsel %vm2061, %v1890, 0
    %v2158 = vsel %vm2061, %v1891, 0
    %2160 = vmatprep.subr.mxu0 0.0
    %2161 = vmatpush1.msra.mxu0 %v1984
    %2162 = vmatprep.subr.mxu0 0.0
    %2163 = vmatpush1.msra.mxu0 0.0
    %2164 = vmatprep.subr.mxu0 0.0
    %2165 = vmatpush1.msra.mxu0 0.0
    %2166 = vmatprep.subr.mxu0 0.0
    %2167 = vmatpush1.msra.mxu0 0.0
    %2168 = vmatprep.subr.mxu0 0.0
    %2169 = vmatpush1.msra.mxu0 0.0
    %2170 = vmatprep.subr.mxu0 0.0
    %2171 = vmatpush1.msra.mxu0 0.0
    %2172 = vmatprep.subr.mxu0 0.0
    %2173 = vmatpush1.msra.mxu0 0.0
    %2174 = vmatprep.subr.mxu0 0.0
    %2175 = vmatpush1.msra.mxu0 0.0
    %2176 = vmatprep.subr.mxu0 0.0
    %2177 = vmatpush1.msra.mxu0 0.0
    %2178 = vmatprep.subr.mxu0 0.0
    %2179 = vmatpush1.msra.mxu0 0.0
    %2180 = vmatprep.subr.mxu0 0.0
    %2181 = vmatpush1.msra.mxu0 0.0
    %2182 = vmatprep.subr.mxu0 0.0
    %2183 = vmatpush1.msra.mxu0 0.0
    %2184 = vmatprep.subr.mxu0 0.0
    %2185 = vmatpush1.msra.mxu0 0.0
    %2186 = vmatprep.subr.mxu0 0.0
    %2187 = vmatpush1.msra.mxu0 0.0
    %2188 = vmatprep.subr.mxu0 0.0
    %2189 = vmatpush1.msra.mxu0 0.0
    %2190 = vmatprep.subr.mxu0 0.0
    %2191 = vmatpush1.msra.mxu0 0.0
    %2192 = vmatprep.subr.mxu0 0.0
    %2193 = vmatpush1.msra.mxu0 0.0
    %2194 = vmatprep.subr.mxu0 0.0
    %2195 = vmatpush1.msra.mxu0 0.0
    %2196 = vmatprep.subr.mxu0 0.0
    %2197 = vmatpush1.msra.mxu0 0.0
    %2198 = vmatprep.subr.mxu0 0.0
    %2199 = vmatpush1.msra.mxu0 0.0
    %2200 = vmatprep.subr.mxu0 0.0
    %2201 = vmatpush1.msra.mxu0 0.0
    %2202 = vmatprep.subr.mxu0 0.0
    %2203 = vmatpush1.msra.mxu0 0.0
    %2204 = vmatprep.subr.mxu0 0.0
    %2205 = vmatpush1.msra.mxu0 0.0
    %2206 = vmatprep.subr.mxu0 0.0
    %2207 = vmatpush1.msra.mxu0 0.0
    %2208 = vmatprep.subr.mxu0 0.0
    %2209 = vmatpush1.msra.mxu0 0.0
    %2210 = vmatprep.subr.mxu0 0.0
    %2211 = vmatpush1.msra.mxu0 0.0
    %2212 = vmatprep.subr.mxu0 0.0
    %2213 = vmatpush1.msra.mxu0 0.0
    %2214 = vmatprep.subr.mxu0 0.0
    %2215 = vmatpush1.msra.mxu0 0.0
    %2216 = vmatprep.subr.mxu0 0.0
    %2217 = vmatpush1.msra.mxu0 0.0
    %2218 = vmatprep.subr.mxu0 0.0
    %2219 = vmatpush1.msra.mxu0 0.0
    %2220 = vmatprep.subr.mxu0 0.0
    %2221 = vmatpush1.msra.mxu0 0.0
    %2222 = vmatprep.subr.mxu0 0.0
    %2223 = vmatpush1.msra.mxu0 0.0
    %2224 = vmatprep.mubr.f32.mxu0 0.0
    %2225 = vmatmul.mubr.f32.gmra.mrb[0].mxu0 %v2152
    %v2226 = vpop.f32.mrb[0].mxu0
    %v2227 = vadd.f32 %v2138, %v2226
    %v2228 = vpop.f32.mrb[0].mxu0
    %2229 = vmatprep.mubr.f32.mxu0 0.0
    %2230 = vmatmul.mubr.f32.gmra.mrb[0].mxu0 %v2155
    %v2231 = vpop.f32.mrb[0].mxu0
    %v2232 = vadd.f32 %v2143, %v2231
    %v2233 = vpop.f32.mrb[0].mxu0
    %2234 = vmatprep.mubr.f32.mxu0 0.0
    %2235 = vmatmul.mubr.f32.gmra.mrb[0].mxu0 %v2158
    %v2236 = vpop.f32.mrb[0].mxu0
    %v2237 = vadd.f32 %v2148, %v2236
    %v2238 = vpop.f32.mrb[0].mxu0
    %2239 = vdwg.mxu0
    %v2240 = vld [vmem:[%s45] sm:$0xff]
    %v2241 = vld [vmem:[%s45 + $0x8] sm:$0xff]
    %v2242 = vld [vmem:[%s45 + $0x10] sm:$0xff]
    %v2243 = vld [vmem:[%s45 + $0x18] sm:$0xff]
    %v2245 = vsel %vm1913, %v1799, 0
    %v2248 = vsel %vm1913, %v1800, 0
    %v2251 = vsel %vm1913, %v1801, 0
    %2253 = vmatprep.subr.mxu0 0.0
    %2254 = vmatpush1.msra.mxu0 %v2240
    %2255 = vmatprep.subr.mxu0 0.0
    %2256 = vmatpush1.msra.mxu0 %v2241
    %2257 = vmatprep.subr.mxu0 0.0
    %2258 = vmatpush1.msra.mxu0 %v2242
    %2259 = vmatprep.subr.mxu0 0.0
    %2260 = vmatpush1.msra.mxu0 %v2243
    %2261 = vmatprep.subr.mxu0 0.0
    %2262 = vmatpush1.msra.mxu0 0.0
    %2263 = vmatprep.subr.mxu0 0.0
    %2264 = vmatpush1.msra.mxu0 0.0
    %2265 = vmatprep.subr.mxu0 0.0
    %2266 = vmatpush1.msra.mxu0 0.0
    %2267 = vmatprep.subr.mxu0 0.0
    %2268 = vmatpush1.msra.mxu0 0.0
    %2269 = vmatprep.subr.mxu0 0.0
    %2270 = vmatpush1.msra.mxu0 0.0
    %2271 = vmatprep.subr.mxu0 0.0
    %2272 = vmatpush1.msra.mxu0 0.0
    %2273 = vmatprep.subr.mxu0 0.0
    %2274 = vmatpush1.msra.mxu0 0.0
    %2275 = vmatprep.subr.mxu0 0.0
    %2276 = vmatpush1.msra.mxu0 0.0
    %2277 = vmatprep.subr.mxu0 0.0
    %2278 = vmatpush1.msra.mxu0 0.0
    %2279 = vmatprep.subr.mxu0 0.0
    %2280 = vmatpush1.msra.mxu0 0.0
    %2281 = vmatprep.subr.mxu0 0.0
    %2282 = vmatpush1.msra.mxu0 0.0
    %2283 = vmatprep.subr.mxu0 0.0
    %2284 = vmatpush1.msra.mxu0 0.0
    %2285 = vmatprep.subr.mxu0 0.0
    %2286 = vmatpush1.msra.mxu0 0.0
    %2287 = vmatprep.subr.mxu0 0.0
    %2288 = vmatpush1.msra.mxu0 0.0
    %2289 = vmatprep.subr.mxu0 0.0
    %2290 = vmatpush1.msra.mxu0 0.0
    %2291 = vmatprep.subr.mxu0 0.0
    %2292 = vmatpush1.msra.mxu0 0.0
    %2293 = vmatprep.subr.mxu0 0.0
    %2294 = vmatpush1.msra.mxu0 0.0
    %2295 = vmatprep.subr.mxu0 0.0
    %2296 = vmatpush1.msra.mxu0 0.0
    %2297 = vmatprep.subr.mxu0 0.0
    %2298 = vmatpush1.msra.mxu0 0.0
    %2299 = vmatprep.subr.mxu0 0.0
    %2300 = vmatpush1.msra.mxu0 0.0
    %2301 = vmatprep.subr.mxu0 0.0
    %2302 = vmatpush1.msra.mxu0 0.0
    %2303 = vmatprep.subr.mxu0 0.0
    %2304 = vmatpush1.msra.mxu0 0.0
    %2305 = vmatprep.subr.mxu0 0.0
    %2306 = vmatpush1.msra.mxu0 0.0
    %2307 = vmatprep.subr.mxu0 0.0
    %2308 = vmatpush1.msra.mxu0 0.0
    %2309 = vmatprep.subr.mxu0 0.0
    %2310 = vmatpush1.msra.mxu0 0.0
    %2311 = vmatprep.subr.mxu0 0.0
    %2312 = vmatpush1.msra.mxu0 0.0
    %2313 = vmatprep.subr.mxu0 0.0
    %2314 = vmatpush1.msra.mxu0 0.0
    %2315 = vmatprep.subr.mxu0 0.0
    %2316 = vmatpush1.msra.mxu0 0.0
    %2317 = vmatprep.mubr.f32.mxu0 0.0
    %2318 = vmatmul.mubr.f32.gmra.mrb[0].mxu0 %v2245
    %v2319 = vpop.f32.mrb[0].mxu0
    %v2320 = vadd.f32 0.0, %v2319
    %v2321 = vpop.f32.mrb[0].mxu0
    %2322 = vmatprep.mubr.f32.mxu0 0.0
    %2323 = vmatmul.mubr.f32.gmra.mrb[0].mxu0 %v2248
    %v2324 = vpop.f32.mrb[0].mxu0
    %v2325 = vadd.f32 0.0, %v2324
    %v2326 = vpop.f32.mrb[0].mxu0
    %2327 = vmatprep.mubr.f32.mxu0 0.0
    %2328 = vmatmul.mubr.f32.gmra.mrb[0].mxu0 %v2251
    %v2329 = vpop.f32.mrb[0].mxu0
    %v2330 = vadd.f32 0.0, %v2329
    %v2331 = vpop.f32.mrb[0].mxu0
    %2332 = vdwg.mxu0
    %v2333 = vadd.f32 %v2227, %v2320
    %v2334 = vadd.f32 %v2232, %v2325
    %v2335 = vadd.f32 %v2237, %v2330
    %v2336 = vld [vmem:[#allocation16] sm:$0x3]
    %vm2337 = vcmask 15360
    %v2339 = vsel %vm2337, %v1903, 0
    %v2342 = vsel %vm2337, %v1904, 0
    %v2345 = vsel %vm2337, %v1905, 0
    %vm2347 = vcmask 1041408
    %v2349 = vsel %vm2347, %v2336, 0
    %2351 = vmatprep.subr.mxu0 0.0
    %2352 = vmatpush1.msra.mxu0 %v2349
    %2353 = vmatprep.subr.mxu0 0.0
    %2354 = vmatpush1.msra.mxu0 0.0
    %2355 = vmatprep.subr.mxu0 0.0
    %2356 = vmatpush1.msra.mxu0 0.0
    %2357 = vmatprep.subr.mxu0 0.0
    %2358 = vmatpush1.msra.mxu0 0.0
    %2359 = vmatprep.subr.mxu0 0.0
    %2360 = vmatpush1.msra.mxu0 0.0
    %2361 = vmatprep.subr.mxu0 0.0
    %2362 = vmatpush1.msra.mxu0 0.0
    %2363 = vmatprep.subr.mxu0 0.0
    %2364 = vmatpush1.msra.mxu0 0.0
    %2365 = vmatprep.subr.mxu0 0.0
    %2366 = vmatpush1.msra.mxu0 0.0
    %2367 = vmatprep.subr.mxu0 0.0
    %2368 = vmatpush1.msra.mxu0 0.0
    %2369 = vmatprep.subr.mxu0 0.0
    %2370 = vmatpush1.msra.mxu0 0.0
    %2371 = vmatprep.subr.mxu0 0.0
    %2372 = vmatpush1.msra.mxu0 0.0
    %2373 = vmatprep.subr.mxu0 0.0
    %2374 = vmatpush1.msra.mxu0 0.0
    %2375 = vmatprep.subr.mxu0 0.0
    %2376 = vmatpush1.msra.mxu0 0.0
    %2377 = vmatprep.subr.mxu0 0.0
    %2378 = vmatpush1.msra.mxu0 0.0
    %2379 = vmatprep.subr.mxu0 0.0
    %2380 = vmatpush1.msra.mxu0 0.0
    %2381 = vmatprep.subr.mxu0 0.0
    %2382 = vmatpush1.msra.mxu0 0.0
    %2383 = vmatprep.subr.mxu0 0.0
    %2384 = vmatpush1.msra.mxu0 0.0
    %2385 = vmatprep.subr.mxu0 0.0
    %2386 = vmatpush1.msra.mxu0 0.0
    %2387 = vmatprep.subr.mxu0 0.0
    %2388 = vmatpush1.msra.mxu0 0.0
    %2389 = vmatprep.subr.mxu0 0.0
    %2390 = vmatpush1.msra.mxu0 0.0
    %2391 = vmatprep.subr.mxu0 0.0
    %2392 = vmatpush1.msra.mxu0 0.0
    %2393 = vmatprep.subr.mxu0 0.0
    %2394 = vmatpush1.msra.mxu0 0.0
    %2395 = vmatprep.subr.mxu0 0.0
    %2396 = vmatpush1.msra.mxu0 0.0
    %2397 = vmatprep.subr.mxu0 0.0
    %2398 = vmatpush1.msra.mxu0 0.0
    %2399 = vmatprep.subr.mxu0 0.0
    %2400 = vmatpush1.msra.mxu0 0.0
    %2401 = vmatprep.subr.mxu0 0.0
    %2402 = vmatpush1.msra.mxu0 0.0
    %2403 = vmatprep.subr.mxu0 0.0
    %2404 = vmatpush1.msra.mxu0 0.0
    %2405 = vmatprep.subr.mxu0 0.0
    %2406 = vmatpush1.msra.mxu0 0.0
    %2407 = vmatprep.subr.mxu0 0.0
    %2408 = vmatpush1.msra.mxu0 0.0
    %2409 = vmatprep.subr.mxu0 0.0
    %2410 = vmatpush1.msra.mxu0 0.0
    %2411 = vmatprep.subr.mxu0 0.0
    %2412 = vmatpush1.msra.mxu0 0.0
    %2413 = vmatprep.subr.mxu0 0.0
    %2414 = vmatpush1.msra.mxu0 0.0
    %2415 = vmatprep.mubr.f32.mxu0 0.0
    %2416 = vmatmul.mubr.f32.gmra.mrb[0].mxu0 %v2339
    %v2417 = vpop.f32.mrb[0].mxu0
    %v2418 = vadd.f32 0.0, %v2417
    %v2419 = vpop.f32.mrb[0].mxu0
    %2420 = vmatprep.mubr.f32.mxu0 0.0
    %2421 = vmatmul.mubr.f32.gmra.mrb[0].mxu0 %v2342
    %v2422 = vpop.f32.mrb[0].mxu0
    %v2423 = vadd.f32 0.0, %v2422
    %v2424 = vpop.f32.mrb[0].mxu0
    %2425 = vmatprep.mubr.f32.mxu0 0.0
    %2426 = vmatmul.mubr.f32.gmra.mrb[0].mxu0 %v2345
    %v2427 = vpop.f32.mrb[0].mxu0
    %v2428 = vadd.f32 0.0, %v2427
    %v2429 = vpop.f32.mrb[0].mxu0
    %2430 = vdwg.mxu0
    %v2431 = vadd.f32 %v2333, %v2418
    %v2432 = vadd.f32 %v2334, %v2423
    %v2433 = vadd.f32 %v2335, %v2428
    %v2434 = vld [vmem:[#allocation17] sm:$0x1]
    %v2436 = vlaneseq
    %v2437 = vshrl.u32 %v2436, 7
    %v2438 = vsub.s32 0, %v2437
    %v2439 = vrot.slane %v2434, %v2438
    %v2441 = vadd.f32 %v2431, %v2439
    %v2442 = vadd.f32 %v2432, %v2439
    %v2443 = vadd.f32 %v2433, %v2439
    %v2444 = vld [vmem:[%s43] sm:$0xff]
    %v2445 = vld [vmem:[%s43 + $0x8] sm:$0x1]
    %2447 = vset.pattern.permute.xlu0 1
    %2448 = vperm.xlu0 %2447, %v574
    %v2449 = vpop.permute.xlu0 %2448
    %2452 = vset.pattern.permute.xlu0 1
    %2453 = vperm.xlu0 %2452, %v581
    %v2454 = vpop.permute.xlu0 %2453
    %2457 = vset.pattern.permute.xlu0 1
    %2458 = vperm.xlu0 %2457, %v588
    %v2459 = vpop.permute.xlu0 %2458
    %v2461 = vlaneseq
    %v2462 = vshrl.u32 %v2461, 7
    %v2463 = vsub.s32 0, %v2462
    %v2464 = vrot.slane %v2444, %v2463
    %v2465 = vmul.f32 %v2449, %v2464
    %v2466 = vmul.f32 %v2454, %v2464
    %v2467 = vmul.f32 %v2459, %v2464
    %v2468 = vadd.f32 %v2441, %v2465
    %v2469 = vadd.f32 %v2442, %v2466
    %v2470 = vadd.f32 %v2443, %v2467
    %2472 = vset.pattern.permute.xlu0 1
    %2473 = vperm.xlu0 %2472, %v766
    %v2474 = vpop.permute.xlu0 %2473
    %2477 = vset.pattern.permute.xlu0 1
    %2478 = vperm.xlu0 %2477, %v773
    %v2479 = vpop.permute.xlu0 %2478
    %2482 = vset.pattern.permute.xlu0 1
    %2483 = vperm.xlu0 %2482, %v780
    %v2484 = vpop.permute.xlu0 %2483
    %v2486 = vlaneseq
    %v2487 = vshrl.u32 %v2486, 7
    %v2488 = vsub.s32 1, %v2487
    %v2489 = vrot.slane %v2444, %v2488
    %v2490 = vmul.f32 %v2474, %v2489
    %v2491 = vmul.f32 %v2479, %v2489
    %v2492 = vmul.f32 %v2484, %v2489
    %v2493 = vadd.f32 %v2468, %v2490
    %v2494 = vadd.f32 %v2469, %v2491
    %v2495 = vadd.f32 %v2470, %v2492
    %2497 = vset.pattern.permute.xlu0 1
    %2498 = vperm.xlu0 %2497, %v835
    %v2499 = vpop.permute.xlu0 %2498
    %2502 = vset.pattern.permute.xlu0 1
    %2503 = vperm.xlu0 %2502, %v842
    %v2504 = vpop.permute.xlu0 %2503
    %2507 = vset.pattern.permute.xlu0 1
    %2508 = vperm.xlu0 %2507, %v849
    %v2509 = vpop.permute.xlu0 %2508
    %v2511 = vlaneseq
    %v2512 = vshrl.u32 %v2511, 7
    %v2513 = vsub.s32 2, %v2512
    %v2514 = vrot.slane %v2444, %v2513
    %v2515 = vmul.f32 %v2499, %v2514
    %v2516 = vmul.f32 %v2504, %v2514
    %v2517 = vmul.f32 %v2509, %v2514
    %v2518 = vadd.f32 %v2493, %v2515
    %v2519 = vadd.f32 %v2494, %v2516
    %v2520 = vadd.f32 %v2495, %v2517
    %v2521 = vlaneseq
    %v2522 = vshrl.u32 %v2521, 7
    %v2523 = vsub.s32 3, %v2522
    %v2524 = vrot.slane %v2444, %v2523
    %v2525 = vmul.f32 %v2474, %v2524
    %v2526 = vmul.f32 %v2479, %v2524
    %v2527 = vmul.f32 %v2484, %v2524
    %v2528 = vadd.f32 %v2518, %v2525
    %v2529 = vadd.f32 %v2519, %v2526
    %v2530 = vadd.f32 %v2520, %v2527
    %2532 = vset.pattern.permute.xlu0 0
    %2533 = vperm.xlu0 %2532, %v625
    %v2534 = vpop.permute.xlu0 %2533
    %2537 = vset.pattern.permute.xlu0 0
    %2538 = vperm.xlu0 %2537, %v632
    %v2539 = vpop.permute.xlu0 %2538
    %2542 = vset.pattern.permute.xlu0 0
    %2543 = vperm.xlu0 %2542, %v639
    %v2544 = vpop.permute.xlu0 %2543
    %v2546 = vlaneseq
    %v2547 = vshrl.u32 %v2546, 7
    %v2548 = vsub.s32 4, %v2547
    %v2549 = vrot.slane %v2444, %v2548
    %v2550 = vmul.f32 %v2534, %v2549
    %v2551 = vmul.f32 %v2539, %v2549
    %v2552 = vmul.f32 %v2544, %v2549
    %v2553 = vadd.f32 %v2528, %v2550
    %v2554 = vadd.f32 %v2529, %v2551
    %v2555 = vadd.f32 %v2530, %v2552
    %2557 = vset.pattern.permute.xlu0 0
    %2558 = vperm.xlu0 %2557, %v889
    %v2559 = vpop.permute.xlu0 %2558
    %2562 = vset.pattern.permute.xlu0 0
    %2563 = vperm.xlu0 %2562, %v896
    %v2564 = vpop.permute.xlu0 %2563
    %2567 = vset.pattern.permute.xlu0 0
    %2568 = vperm.xlu0 %2567, %v903
    %v2569 = vpop.permute.xlu0 %2568
    %v2571 = vlaneseq
    %v2572 = vshrl.u32 %v2571, 7
    %v2573 = vsub.s32 5, %v2572
    %v2574 = vrot.slane %v2444, %v2573
    %v2575 = vmul.f32 %v2559, %v2574
    %v2576 = vmul.f32 %v2564, %v2574
    %v2577 = vmul.f32 %v2569, %v2574
    %v2578 = vadd.f32 %v2553, %v2575
    %v2579 = vadd.f32 %v2554, %v2576
    %v2580 = vadd.f32 %v2555, %v2577
    %v2581 = vlaneseq
    %v2582 = vshrl.u32 %v2581, 7
    %v2583 = vsub.s32 6, %v2582
    %v2584 = vrot.slane %v2444, %v2583
    %v2585 = vmul.f32 %v2499, %v2584
    %v2586 = vmul.f32 %v2504, %v2584
    %v2587 = vmul.f32 %v2509, %v2584
    %v2588 = vadd.f32 %v2578, %v2585
    %v2589 = vadd.f32 %v2579, %v2586
    %v2590 = vadd.f32 %v2580, %v2587
    %v2591 = vlaneseq
    %v2592 = vshrl.u32 %v2591, 7
    %v2593 = vsub.s32 7, %v2592
    %v2594 = vrot.slane %v2444, %v2593
    %v2595 = vmul.f32 %v2559, %v2594
    %v2596 = vmul.f32 %v2564, %v2594
    %v2597 = vmul.f32 %v2569, %v2594
    %v2598 = vadd.f32 %v2588, %v2595
    %v2599 = vadd.f32 %v2589, %v2596
    %v2600 = vadd.f32 %v2590, %v2597
    %2602 = vset.pattern.permute.xlu0 0
    %2603 = vperm.xlu0 %2602, %v676
    %v2604 = vpop.permute.xlu0 %2603
    %2607 = vset.pattern.permute.xlu0 0
    %2608 = vperm.xlu0 %2607, %v683
    %v2609 = vpop.permute.xlu0 %2608
    %2612 = vset.pattern.permute.xlu0 0
    %2613 = vperm.xlu0 %2612, %v690
    %v2614 = vpop.permute.xlu0 %2613
    %v2616 = vlaneseq
    %v2617 = vshrl.u32 %v2616, 7
    %v2618 = vsub.s32 0, %v2617
    %v2619 = vrot.slane %v2445, %v2618
    %v2620 = vmul.f32 %v2604, %v2619
    %v2621 = vmul.f32 %v2609, %v2619
    %v2622 = vmul.f32 %v2614, %v2619
    %v2623 = vadd.f32 %v2598, %v2620
    %v2624 = vadd.f32 %v2599, %v2621
    %v2625 = vadd.f32 %v2600, %v2622
    %v2626 = vsub.f32 0.0, %v2623
    %v2627 = vsub.f32 0.0, %v2624
    %v2628 = vsub.f32 0.0, %v2625
    %v2629 = vmul.f32 %v2626, 1.442695
    %v2630 = vpow.pop %v2629
    %v2631 = vmul.f32 %v2627, 1.442695
    %v2632 = vpow.pop %v2631
    %v2633 = vmul.f32 %v2628, 1.442695
    %v2634 = vpow.pop %v2633
    %v2635 = vadd.f32 %v2630, 1.0
    %v2636 = vadd.f32 %v2632, 1.0
    %v2637 = vadd.f32 %v2634, 1.0
    %v2638 = vrcp.pop %v2635
    %v2639 = vmul.f32 1.0, %v2638
    %v2640 = vrcp.pop %v2636
    %v2641 = vmul.f32 1.0, %v2640
    %v2642 = vrcp.pop %v2637
    %v2643 = vmul.f32 1.0, %v2642
    %v2644 = vmul.f32 %v2623, %v2639
    %v2645 = vmul.f32 %v2624, %v2641
    %v2646 = vmul.f32 %v2625, %v2643
    %v2647 = vld [vmem:[%s51] sm:$0xff]
    %v2648 = vld [vmem:[%s51 + $0x8] sm:$0xff]
    %v2649 = vld [vmem:[%s51 + $0x10] sm:$0xff]
    %v2650 = vld [vmem:[%s51 + $0x18] sm:$0xff]
    %v2651 = vld [vmem:[#allocation19] sm:$0x1]
    %v2653 = vlaneseq
    %v2654 = vshrl.u32 %v2653, 7
    %v2655 = vsub.s32 0, %v2654
    %v2656 = vrot.slane %v2651, %v2655
    %v2659 = vsel %vm1913, %v2644, 0
    %v2662 = vsel %vm1913, %v2645, 0
    %v2665 = vsel %vm1913, %v2646, 0
    %2667 = vmatprep.subr.mxu0 0.0
    %2668 = vmatpush1.msra.mxu0 %v2647
    %2669 = vmatprep.subr.mxu0 0.0
    %2670 = vmatpush1.msra.mxu0 %v2648
    %2671 = vmatprep.subr.mxu0 0.0
    %2672 = vmatpush1.msra.mxu0 %v2649
    %2673 = vmatprep.subr.mxu0 0.0
    %2674 = vmatpush1.msra.mxu0 %v2650
    %2675 = vmatprep.subr.mxu0 0.0
    %2676 = vmatpush1.msra.mxu0 0.0
    %2677 = vmatprep.subr.mxu0 0.0
    %2678 = vmatpush1.msra.mxu0 0.0
    %2679 = vmatprep.subr.mxu0 0.0
    %2680 = vmatpush1.msra.mxu0 0.0
    %2681 = vmatprep.subr.mxu0 0.0
    %2682 = vmatpush1.msra.mxu0 0.0
    %2683 = vmatprep.subr.mxu0 0.0
    %2684 = vmatpush1.msra.mxu0 0.0
    %2685 = vmatprep.subr.mxu0 0.0
    %2686 = vmatpush1.msra.mxu0 0.0
    %2687 = vmatprep.subr.mxu0 0.0
    %2688 = vmatpush1.msra.mxu0 0.0
    %2689 = vmatprep.subr.mxu0 0.0
    %2690 = vmatpush1.msra.mxu0 0.0
    %2691 = vmatprep.subr.mxu0 0.0
    %2692 = vmatpush1.msra.mxu0 0.0
    %2693 = vmatprep.subr.mxu0 0.0
    %2694 = vmatpush1.msra.mxu0 0.0
    %2695 = vmatprep.subr.mxu0 0.0
    %2696 = vmatpush1.msra.mxu0 0.0
    %2697 = vmatprep.subr.mxu0 0.0
    %2698 = vmatpush1.msra.mxu0 0.0
    %2699 = vmatprep.subr.mxu0 0.0
    %2700 = vmatpush1.msra.mxu0 0.0
    %2701 = vmatprep.subr.mxu0 0.0
    %2702 = vmatpush1.msra.mxu0 0.0
    %2703 = vmatprep.subr.mxu0 0.0
    %2704 = vmatpush1.msra.mxu0 0.0
    %2705 = vmatprep.subr.mxu0 0.0
    %2706 = vmatpush1.msra.mxu0 0.0
    %2707 = vmatprep.subr.mxu0 0.0
    %2708 = vmatpush1.msra.mxu0 0.0
    %2709 = vmatprep.subr.mxu0 0.0
    %2710 = vmatpush1.msra.mxu0 0.0
    %2711 = vmatprep.subr.mxu0 0.0
    %2712 = vmatpush1.msra.mxu0 0.0
    %2713 = vmatprep.subr.mxu0 0.0
    %2714 = vmatpush1.msra.mxu0 0.0
    %2715 = vmatprep.subr.mxu0 0.0
    %2716 = vmatpush1.msra.mxu0 0.0
    %2717 = vmatprep.subr.mxu0 0.0
    %2718 = vmatpush1.msra.mxu0 0.0
    %2719 = vmatprep.subr.mxu0 0.0
    %2720 = vmatpush1.msra.mxu0 0.0
    %2721 = vmatprep.subr.mxu0 0.0
    %2722 = vmatpush1.msra.mxu0 0.0
    %2723 = vmatprep.subr.mxu0 0.0
    %2724 = vmatpush1.msra.mxu0 0.0
    %2725 = vmatprep.subr.mxu0 0.0
    %2726 = vmatpush1.msra.mxu0 0.0
    %2727 = vmatprep.subr.mxu0 0.0
    %2728 = vmatpush1.msra.mxu0 0.0
    %2729 = vmatprep.subr.mxu0 0.0
    %2730 = vmatpush1.msra.mxu0 0.0
    %2731 = vmatprep.mubr.f32.mxu0 0.0
    %2732 = vmatmul.mubr.f32.gmra.mrb[0].mxu0 %v2659
    %v2733 = vpop.f32.mrb[0].mxu0
    %v2734 = vadd.f32 %v2656, %v2733
    %v2735 = vpop.f32.mrb[0].mxu0
    %2736 = vmatprep.mubr.f32.mxu0 0.0
    %2737 = vmatmul.mubr.f32.gmra.mrb[0].mxu0 %v2662
    %v2738 = vpop.f32.mrb[0].mxu0
    %v2739 = vadd.f32 %v2656, %v2738
    %v2740 = vpop.f32.mrb[0].mxu0
    %2741 = vmatprep.mubr.f32.mxu0 0.0
    %2742 = vmatmul.mubr.f32.gmra.mrb[0].mxu0 %v2665
    %v2743 = vpop.f32.mrb[0].mxu0
    %v2744 = vadd.f32 %v2656, %v2743
    %v2745 = vpop.f32.mrb[0].mxu0
    %2746 = vdwg.mxu0
    %v2747 = vsub.f32 0.0, %v2734
    %v2748 = vsub.f32 0.0, %v2739
    %v2749 = vsub.f32 0.0, %v2744
    %v2750 = vmul.f32 %v2747, 1.442695
    %v2751 = vpow.pop %v2750
    %v2752 = vmul.f32 %v2748, 1.442695
    %v2753 = vpow.pop %v2752
    %v2754 = vmul.f32 %v2749, 1.442695
    %v2755 = vpow.pop %v2754
    %v2756 = vadd.f32 %v2751, 1.0
    %v2757 = vadd.f32 %v2753, 1.0
    %v2758 = vadd.f32 %v2755, 1.0
    %v2759 = vrcp.pop %v2756
    %v2760 = vmul.f32 1.0, %v2759
    %v2761 = vrcp.pop %v2757
    %v2762 = vmul.f32 1.0, %v2761
    %v2763 = vrcp.pop %v2758
    %v2764 = vmul.f32 1.0, %v2763
    %v2765 = vmul.f32 %v2734, %v2760
    %v2766 = vmul.f32 %v2739, %v2762
    %v2767 = vmul.f32 %v2744, %v2764
    %2769 = vset.pattern.permute.xlu0 0
    %2770 = vperm.xlu0 %2769, %v1906
    %v2771 = vpop.permute.xlu0 %2770
    %2774 = vset.pattern.permute.xlu0 0
    %2775 = vperm.xlu0 %2774, %v1907
    %v2776 = vpop.permute.xlu0 %2775
    %2779 = vset.pattern.permute.xlu0 0
    %2780 = vperm.xlu0 %2779, %v1908
    %v2781 = vpop.permute.xlu0 %2780
    %v2783 = vmul.f32 %v2765, %v2771
    %v2784 = vmul.f32 %v2766, %v2776
    %v2785 = vmul.f32 %v2767, %v2781
    %v2787 = vsel %vm1913, %v2783, 0
    %v2790 = vsel %vm1913, %v2784, 0
    %v2793 = vsel %vm1913, %v2785, 0
    %2795 = vmatprep.subr.mxu0 0.0
    %2796 = vmatpush1.msra.mxu0 %v1898
    %2797 = vmatprep.subr.mxu0 0.0
    %2798 = vmatpush1.msra.mxu0 %v1899
    %2799 = vmatprep.subr.mxu0 0.0
    %2800 = vmatpush1.msra.mxu0 %v1900
    %2801 = vmatprep.subr.mxu0 0.0
    %2802 = vmatpush1.msra.mxu0 %v1901
    %2803 = vmatprep.subr.mxu0 0.0
    %2804 = vmatpush1.msra.mxu0 0.0
    %2805 = vmatprep.subr.mxu0 0.0
    %2806 = vmatpush1.msra.mxu0 0.0
    %2807 = vmatprep.subr.mxu0 0.0
    %2808 = vmatpush1.msra.mxu0 0.0
    %2809 = vmatprep.subr.mxu0 0.0
    %2810 = vmatpush1.msra.mxu0 0.0
    %2811 = vmatprep.subr.mxu0 0.0
    %2812 = vmatpush1.msra.mxu0 0.0
    %2813 = vmatprep.subr.mxu0 0.0
    %2814 = vmatpush1.msra.mxu0 0.0
    %2815 = vmatprep.subr.mxu0 0.0
    %2816 = vmatpush1.msra.mxu0 0.0
    %2817 = vmatprep.subr.mxu0 0.0
    %2818 = vmatpush1.msra.mxu0 0.0
    %2819 = vmatprep.subr.mxu0 0.0
    %2820 = vmatpush1.msra.mxu0 0.0
    %2821 = vmatprep.subr.mxu0 0.0
    %2822 = vmatpush1.msra.mxu0 0.0
    %2823 = vmatprep.subr.mxu0 0.0
    %2824 = vmatpush1.msra.mxu0 0.0
    %2825 = vmatprep.subr.mxu0 0.0
    %2826 = vmatpush1.msra.mxu0 0.0
    %2827 = vmatprep.subr.mxu0 0.0
    %2828 = vmatpush1.msra.mxu0 0.0
    %2829 = vmatprep.subr.mxu0 0.0
    %2830 = vmatpush1.msra.mxu0 0.0
    %2831 = vmatprep.subr.mxu0 0.0
    %2832 = vmatpush1.msra.mxu0 0.0
    %2833 = vmatprep.subr.mxu0 0.0
    %2834 = vmatpush1.msra.mxu0 0.0
    %2835 = vmatprep.subr.mxu0 0.0
    %2836 = vmatpush1.msra.mxu0 0.0
    %2837 = vmatprep.subr.mxu0 0.0
    %2838 = vmatpush1.msra.mxu0 0.0
    %2839 = vmatprep.subr.mxu0 0.0
    %2840 = vmatpush1.msra.mxu0 0.0
    %2841 = vmatprep.subr.mxu0 0.0
    %2842 = vmatpush1.msra.mxu0 0.0
    %2843 = vmatprep.subr.mxu0 0.0
    %2844 = vmatpush1.msra.mxu0 0.0
    %2845 = vmatprep.subr.mxu0 0.0
    %2846 = vmatpush1.msra.mxu0 0.0
    %2847 = vmatprep.subr.mxu0 0.0
    %2848 = vmatpush1.msra.mxu0 0.0
    %2849 = vmatprep.subr.mxu0 0.0
    %2850 = vmatpush1.msra.mxu0 0.0
    %2851 = vmatprep.subr.mxu0 0.0
    %2852 = vmatpush1.msra.mxu0 0.0
    %2853 = vmatprep.subr.mxu0 0.0
    %2854 = vmatpush1.msra.mxu0 0.0
    %2855 = vmatprep.subr.mxu0 0.0
    %2856 = vmatpush1.msra.mxu0 0.0
    %2857 = vmatprep.subr.mxu0 0.0
    %2858 = vmatpush1.msra.mxu0 0.0
    %2859 = vmatprep.mubr.f32.mxu0 0.0
    %2860 = vmatmul.mubr.f32.gmra.mrb[0].mxu0 %v2787
    %v2861 = vpop.f32.mrb[0].mxu0
    %v2862 = vadd.f32 0.0, %v2861
    %v2863 = vpop.f32.mrb[0].mxu0
    %2864 = vmatprep.mubr.f32.mxu0 0.0
    %2865 = vmatmul.mubr.f32.gmra.mrb[0].mxu0 %v2790
    %v2866 = vpop.f32.mrb[0].mxu0
    %v2867 = vadd.f32 0.0, %v2866
    %v2868 = vpop.f32.mrb[0].mxu0
    %2869 = vmatprep.mubr.f32.mxu0 0.0
    %2870 = vmatmul.mubr.f32.gmra.mrb[0].mxu0 %v2793
    %v2871 = vpop.f32.mrb[0].mxu0
    %v2872 = vadd.f32 0.0, %v2871
    %v2873 = vpop.f32.mrb[0].mxu0
    %2874 = vdwg.mxu0
    %vm2875 = vcmask 195584
    %v2877 = vsel %vm2875, %v1895, 0
    %v2880 = vsel %vm2875, %v1896, 0
    %v2883 = vsel %vm2875, %v1897, 0
    %2885 = vmatprep.subr.mxu0 0.0
    %2886 = vmatpush1.msra.mxu0 %v2862
    %2887 = vmatprep.subr.mxu0 0.0
    %2888 = vmatpush1.msra.mxu0 %v2867
    %2889 = vmatprep.subr.mxu0 0.0
    %2890 = vmatpush1.msra.mxu0 %v2872
    %2891 = vmatprep.subr.mxu0 0.0
    %2892 = vmatpush1.msra.mxu0 0.0
    %2893 = vmatprep.subr.mxu0 0.0
    %2894 = vmatpush1.msra.mxu0 0.0
    %2895 = vmatprep.subr.mxu0 0.0
    %2896 = vmatpush1.msra.mxu0 0.0
    %2897 = vmatprep.subr.mxu0 0.0
    %2898 = vmatpush1.msra.mxu0 0.0
    %2899 = vmatprep.subr.mxu0 0.0
    %2900 = vmatpush1.msra.mxu0 0.0
    %2901 = vmatprep.subr.mxu0 0.0
    %2902 = vmatpush1.msra.mxu0 0.0
    %2903 = vmatprep.subr.mxu0 0.0
    %2904 = vmatpush1.msra.mxu0 0.0
    %2905 = vmatprep.subr.mxu0 0.0
    %2906 = vmatpush1.msra.mxu0 0.0
    %2907 = vmatprep.subr.mxu0 0.0
    %2908 = vmatpush1.msra.mxu0 0.0
    %2909 = vmatprep.subr.mxu0 0.0
    %2910 = vmatpush1.msra.mxu0 0.0
    %2911 = vmatprep.subr.mxu0 0.0
    %2912 = vmatpush1.msra.mxu0 0.0
    %2913 = vmatprep.subr.mxu0 0.0
    %2914 = vmatpush1.msra.mxu0 0.0
    %2915 = vmatprep.subr.mxu0 0.0
    %2916 = vmatpush1.msra.mxu0 0.0
    %2917 = vmatprep.subr.mxu0 0.0
    %2918 = vmatpush1.msra.mxu0 0.0
    %2919 = vmatprep.subr.mxu0 0.0
    %2920 = vmatpush1.msra.mxu0 0.0
    %2921 = vmatprep.subr.mxu0 0.0
    %2922 = vmatpush1.msra.mxu0 0.0
    %2923 = vmatprep.subr.mxu0 0.0
    %2924 = vmatpush1.msra.mxu0 0.0
    %2925 = vmatprep.subr.mxu0 0.0
    %2926 = vmatpush1.msra.mxu0 0.0
    %2927 = vmatprep.subr.mxu0 0.0
    %2928 = vmatpush1.msra.mxu0 0.0
    %2929 = vmatprep.subr.mxu0 0.0
    %2930 = vmatpush1.msra.mxu0 0.0
    %2931 = vmatprep.subr.mxu0 0.0
    %2932 = vmatpush1.msra.mxu0 0.0
    %2933 = vmatprep.subr.mxu0 0.0
    %2934 = vmatpush1.msra.mxu0 0.0
    %2935 = vmatprep.subr.mxu0 0.0
    %2936 = vmatpush1.msra.mxu0 0.0
    %2937 = vmatprep.subr.mxu0 0.0
    %2938 = vmatpush1.msra.mxu0 0.0
    %2939 = vmatprep.subr.mxu0 0.0
    %2940 = vmatpush1.msra.mxu0 0.0
    %2941 = vmatprep.subr.mxu0 0.0
    %2942 = vmatpush1.msra.mxu0 0.0
    %2943 = vmatprep.subr.mxu0 0.0
    %2944 = vmatpush1.msra.mxu0 0.0
    %2945 = vmatprep.subr.mxu0 0.0
    %2946 = vmatpush1.msra.mxu0 0.0
    %2947 = vmatprep.subr.mxu0 0.0
    %2948 = vmatpush1.msra.mxu0 0.0
    %2949 = vmatprep.mubr.f32.mxu0 0.0
    %2950 = vmatmul.mubr.f32.gmra.mrb[0].mxu0 %v2877
    %v2951 = vpop.f32.mrb[0].mxu0
    %v2952 = vadd.f32 0.0, %v2951
    %v2953 = vpop.f32.mrb[0].mxu0
    %2954 = vmatprep.mubr.f32.mxu0 0.0
    %2955 = vmatmul.mubr.f32.gmra.mrb[0].mxu0 %v2880
    %v2956 = vpop.f32.mrb[0].mxu0
    %v2957 = vadd.f32 0.0, %v2956
    %v2958 = vpop.f32.mrb[0].mxu0
    %2959 = vmatprep.mubr.f32.mxu0 0.0
    %2960 = vmatmul.mubr.f32.gmra.mrb[0].mxu0 %v2883
    %v2961 = vpop.f32.mrb[0].mxu0
    %v2962 = vadd.f32 0.0, %v2961
    %v2963 = vpop.f32.mrb[0].mxu0
    %2964 = vdwg.mxu0
    %v2965 = vmin.f32 %v2952, %v2957
    %v2966 = vmax.f32 %v2952, %v2957
    %v2967 = vmin.f32 %v2966, %v2962
    %v2968 = vmax.f32 %v2966, %v2962
    %v2969 = vmin.f32 %v2965, %v2967
    %v2970 = vmax.f32 %v2965, %v2967
    %v2971 = vlaneseq
    %v2972 = vshrl.u32 %v2971, 7
    %v2973 = vsub.s32 0, %v2972
    %v2974 = vrot.slane %v1902, %v2973
    %v2975 = vmul.f32 %v2969, %v2974
    %v2976 = vlaneseq
    %v2977 = vshrl.u32 %v2976, 7
    %v2978 = vsub.s32 1, %v2977
    %v2979 = vrot.slane %v1902, %v2978
    %v2980 = vmul.f32 %v2970, %v2979
    %v2981 = vadd.f32 %v2975, %v2980
    %v2982 = vlaneseq
    %v2983 = vshrl.u32 %v2982, 7
    %v2984 = vsub.s32 2, %v2983
    %v2985 = vrot.slane %v1902, %v2984
    %v2986 = vmul.f32 %v2968, %v2985
    %v2987 = vadd.f32 %v2981, %v2986
    %v2988 = vld [vmem:[#allocation20] sm:$0xff]
    %v2989 = vld [vmem:[#allocation20 + $0x8] sm:$0xff]
    %v2990 = vld [vmem:[#allocation20 + $0x10] sm:$0xff]
    %v2991 = vld [vmem:[#allocation20 + $0x18] sm:$0xff]
    %v2992 = vld [vmem:[#allocation22] sm:$0xff]
    %v2993 = vld [vmem:[#allocation22 + $0x8] sm:$0xff]
    %v2994 = vld [vmem:[#allocation22 + $0x10] sm:$0xff]
    %v2995 = vld [vmem:[#allocation22 + $0x18] sm:$0xff]
    %v2997 = vsel %vm1913, %v2987, 0
    %2999 = vmatprep.subr.mxu0 0.0
    %3000 = vmatpush1.msra.mxu0 %v2992
    %3001 = vmatprep.subr.mxu0 0.0
    %3002 = vmatpush1.msra.mxu0 %v2993
    %3003 = vmatprep.subr.mxu0 0.0
    %3004 = vmatpush1.msra.mxu0 %v2994
    %3005 = vmatprep.subr.mxu0 0.0
    %3006 = vmatpush1.msra.mxu0 %v2995
    %3007 = vmatprep.subr.mxu0 0.0
    %3008 = vmatpush1.msra.mxu0 0.0
    %3009 = vmatprep.subr.mxu0 0.0
    %3010 = vmatpush1.msra.mxu0 0.0
    %3011 = vmatprep.subr.mxu0 0.0
    %3012 = vmatpush1.msra.mxu0 0.0
    %3013 = vmatprep.subr.mxu0 0.0
    %3014 = vmatpush1.msra.mxu0 0.0
    %3015 = vmatprep.subr.mxu0 0.0
    %3016 = vmatpush1.msra.mxu0 0.0
    %3017 = vmatprep.subr.mxu0 0.0
    %3018 = vmatpush1.msra.mxu0 0.0
    %3019 = vmatprep.subr.mxu0 0.0
    %3020 = vmatpush1.msra.mxu0 0.0
    %3021 = vmatprep.subr.mxu0 0.0
    %3022 = vmatpush1.msra.mxu0 0.0
    %3023 = vmatprep.subr.mxu0 0.0
    %3024 = vmatpush1.msra.mxu0 0.0
    %3025 = vmatprep.subr.mxu0 0.0
    %3026 = vmatpush1.msra.mxu0 0.0
    %3027 = vmatprep.subr.mxu0 0.0
    %3028 = vmatpush1.msra.mxu0 0.0
    %3029 = vmatprep.subr.mxu0 0.0
    %3030 = vmatpush1.msra.mxu0 0.0
    %3031 = vmatprep.subr.mxu0 0.0
    %3032 = vmatpush1.msra.mxu0 0.0
    %3033 = vmatprep.subr.mxu0 0.0
    %3034 = vmatpush1.msra.mxu0 0.0
    %3035 = vmatprep.subr.mxu0 0.0
    %3036 = vmatpush1.msra.mxu0 0.0
    %3037 = vmatprep.subr.mxu0 0.0
    %3038 = vmatpush1.msra.mxu0 0.0
    %3039 = vmatprep.subr.mxu0 0.0
    %3040 = vmatpush1.msra.mxu0 0.0
    %3041 = vmatprep.subr.mxu0 0.0
    %3042 = vmatpush1.msra.mxu0 0.0
    %3043 = vmatprep.subr.mxu0 0.0
    %3044 = vmatpush1.msra.mxu0 0.0
    %3045 = vmatprep.subr.mxu0 0.0
    %3046 = vmatpush1.msra.mxu0 0.0
    %3047 = vmatprep.subr.mxu0 0.0
    %3048 = vmatpush1.msra.mxu0 0.0
    %3049 = vmatprep.subr.mxu0 0.0
    %3050 = vmatpush1.msra.mxu0 0.0
    %3051 = vmatprep.subr.mxu0 0.0
    %3052 = vmatpush1.msra.mxu0 0.0
    %3053 = vmatprep.subr.mxu0 0.0
    %3054 = vmatpush1.msra.mxu0 0.0
    %3055 = vmatprep.subr.mxu0 0.0
    %3056 = vmatpush1.msra.mxu0 0.0
    %3057 = vmatprep.subr.mxu0 0.0
    %3058 = vmatpush1.msra.mxu0 0.0
    %3059 = vmatprep.subr.mxu0 0.0
    %3060 = vmatpush1.msra.mxu0 0.0
    %3061 = vmatprep.subr.mxu0 0.0
    %3062 = vmatpush1.msra.mxu0 0.0
    %3063 = vmatprep.mubr.f32.mxu0 0.0
    %3064 = vmatmul.mubr.f32.gmra.mrb[0].mxu0 %v2997
    %v3065 = vpop.f32.mrb[0].mxu0
    %v3066 = vadd.f32 0.0, %v3065
    %v3067 = vpop.f32.mrb[0].mxu0
    %3068 = vdwg.mxu0
    %3069 = vmatprep.subr.mxu0 0.0
    %3070 = vmatpush1.msra.mxu0 %v2988
    %3071 = vmatprep.subr.mxu0 0.0
    %3072 = vmatpush1.msra.mxu0 %v2989
    %3073 = vmatprep.subr.mxu0 0.0
    %3074 = vmatpush1.msra.mxu0 %v2990
    %3075 = vmatprep.subr.mxu0 0.0
    %3076 = vmatpush1.msra.mxu0 %v2991
    %3077 = vmatprep.subr.mxu0 0.0
    %3078 = vmatpush1.msra.mxu0 0.0
    %3079 = vmatprep.subr.mxu0 0.0
    %3080 = vmatpush1.msra.mxu0 0.0
    %3081 = vmatprep.subr.mxu0 0.0
    %3082 = vmatpush1.msra.mxu0 0.0
    %3083 = vmatprep.subr.mxu0 0.0
    %3084 = vmatpush1.msra.mxu0 0.0
    %3085 = vmatprep.subr.mxu0 0.0
    %3086 = vmatpush1.msra.mxu0 0.0
    %3087 = vmatprep.subr.mxu0 0.0
    %3088 = vmatpush1.msra.mxu0 0.0
    %3089 = vmatprep.subr.mxu0 0.0
    %3090 = vmatpush1.msra.mxu0 0.0
    %3091 = vmatprep.subr.mxu0 0.0
    %3092 = vmatpush1.msra.mxu0 0.0
    %3093 = vmatprep.subr.mxu0 0.0
    %3094 = vmatpush1.msra.mxu0 0.0
    %3095 = vmatprep.subr.mxu0 0.0
    %3096 = vmatpush1.msra.mxu0 0.0
    %3097 = vmatprep.subr.mxu0 0.0
    %3098 = vmatpush1.msra.mxu0 0.0
    %3099 = vmatprep.subr.mxu0 0.0
    %3100 = vmatpush1.msra.mxu0 0.0
    %3101 = vmatprep.subr.mxu0 0.0
    %3102 = vmatpush1.msra.mxu0 0.0
    %3103 = vmatprep.subr.mxu0 0.0
    %3104 = vmatpush1.msra.mxu0 0.0
    %3105 = vmatprep.subr.mxu0 0.0
    %3106 = vmatpush1.msra.mxu0 0.0
    %3107 = vmatprep.subr.mxu0 0.0
    %3108 = vmatpush1.msra.mxu0 0.0
    %3109 = vmatprep.subr.mxu0 0.0
    %3110 = vmatpush1.msra.mxu0 0.0
    %3111 = vmatprep.subr.mxu0 0.0
    %3112 = vmatpush1.msra.mxu0 0.0
    %3113 = vmatprep.subr.mxu0 0.0
    %3114 = vmatpush1.msra.mxu0 0.0
    %3115 = vmatprep.subr.mxu0 0.0
    %3116 = vmatpush1.msra.mxu0 0.0
    %3117 = vmatprep.subr.mxu0 0.0
    %3118 = vmatpush1.msra.mxu0 0.0
    %3119 = vmatprep.subr.mxu0 0.0
    %3120 = vmatpush1.msra.mxu0 0.0
    %3121 = vmatprep.subr.mxu0 0.0
    %3122 = vmatpush1.msra.mxu0 0.0
    %3123 = vmatprep.subr.mxu0 0.0
    %3124 = vmatpush1.msra.mxu0 0.0
    %3125 = vmatprep.subr.mxu0 0.0
    %3126 = vmatpush1.msra.mxu0 0.0
    %3127 = vmatprep.subr.mxu0 0.0
    %3128 = vmatpush1.msra.mxu0 0.0
    %3129 = vmatprep.subr.mxu0 0.0
    %3130 = vmatpush1.msra.mxu0 0.0
    %3131 = vmatprep.subr.mxu0 0.0
    %3132 = vmatpush1.msra.mxu0 0.0
    %3133 = vmatprep.mubr.f32.mxu0 0.0
    %3134 = vmatmul.mubr.f32.gmra.mrb[0].mxu0 %v1915
    %v3135 = vpop.f32.mrb[0].mxu0
    %v3136 = vadd.f32 %v3066, %v3135
    %v3137 = vpop.f32.mrb[0].mxu0
    %3138 = vdwg.mxu0
    %v3139 = vld [vmem:[%s59] sm:$0x1f]
    %v3141 = vsel %vm1815, %v3139, 0
    %3143 = vmatprep.subr.mxu0 0.0
    %3144 = vmatpush1.msra.mxu0 %v3141
    %3145 = vmatprep.subr.mxu0 0.0
    %3146 = vmatpush1.msra.mxu0 0.0
    %3147 = vmatprep.subr.mxu0 0.0
    %3148 = vmatpush1.msra.mxu0 0.0
    %3149 = vmatprep.subr.mxu0 0.0
    %3150 = vmatpush1.msra.mxu0 0.0
    %3151 = vmatprep.subr.mxu0 0.0
    %3152 = vmatpush1.msra.mxu0 0.0
    %3153 = vmatprep.subr.mxu0 0.0
    %3154 = vmatpush1.msra.mxu0 0.0
    %3155 = vmatprep.subr.mxu0 0.0
    %3156 = vmatpush1.msra.mxu0 0.0
    %3157 = vmatprep.subr.mxu0 0.0
    %3158 = vmatpush1.msra.mxu0 0.0
    %3159 = vmatprep.subr.mxu0 0.0
    %3160 = vmatpush1.msra.mxu0 0.0
    %3161 = vmatprep.subr.mxu0 0.0
    %3162 = vmatpush1.msra.mxu0 0.0
    %3163 = vmatprep.subr.mxu0 0.0
    %3164 = vmatpush1.msra.mxu0 0.0
    %3165 = vmatprep.subr.mxu0 0.0
    %3166 = vmatpush1.msra.mxu0 0.0
    %3167 = vmatprep.subr.mxu0 0.0
    %3168 = vmatpush1.msra.mxu0 0.0
    %3169 = vmatprep.subr.mxu0 0.0
    %3170 = vmatpush1.msra.mxu0 0.0
    %3171 = vmatprep.subr.mxu0 0.0
    %3172 = vmatpush1.msra.mxu0 0.0
    %3173 = vmatprep.subr.mxu0 0.0
    %3174 = vmatpush1.msra.mxu0 0.0
    %3175 = vmatprep.subr.mxu0 0.0
    %3176 = vmatpush1.msra.mxu0 0.0
    %3177 = vmatprep.subr.mxu0 0.0
    %3178 = vmatpush1.msra.mxu0 0.0
    %3179 = vmatprep.subr.mxu0 0.0
    %3180 = vmatpush1.msra.mxu0 0.0
    %3181 = vmatprep.subr.mxu0 0.0
    %3182 = vmatpush1.msra.mxu0 0.0
    %3183 = vmatprep.subr.mxu0 0.0
    %3184 = vmatpush1.msra.mxu0 0.0
    %3185 = vmatprep.subr.mxu0 0.0
    %3186 = vmatpush1.msra.mxu0 0.0
    %3187 = vmatprep.subr.mxu0 0.0
    %3188 = vmatpush1.msra.mxu0 0.0
    %3189 = vmatprep.subr.mxu0 0.0
    %3190 = vmatpush1.msra.mxu0 0.0
    %3191 = vmatprep.subr.mxu0 0.0
    %3192 = vmatpush1.msra.mxu0 0.0
    %3193 = vmatprep.subr.mxu0 0.0
    %3194 = vmatpush1.msra.mxu0 0.0
    %3195 = vmatprep.subr.mxu0 0.0
    %3196 = vmatpush1.msra.mxu0 0.0
    %3197 = vmatprep.subr.mxu0 0.0
    %3198 = vmatpush1.msra.mxu0 0.0
    %3199 = vmatprep.subr.mxu0 0.0
    %3200 = vmatpush1.msra.mxu0 0.0
    %3201 = vmatprep.subr.mxu0 0.0
    %3202 = vmatpush1.msra.mxu0 0.0
    %3203 = vmatprep.subr.mxu0 0.0
    %3204 = vmatpush1.msra.mxu0 0.0
    %3205 = vmatprep.subr.mxu0 0.0
    %3206 = vmatpush1.msra.mxu0 0.0
    %3207 = vmatprep.mubr.f32.mxu0 0.0
    %3208 = vmatmul.mubr.f32.gmra.mrb[0].mxu0 %v1813
    %v3209 = vpop.f32.mrb[0].mxu0
    %v3210 = vadd.f32 0.0, %v3209
    %v3211 = vpop.f32.mrb[0].mxu0
    %3212 = vdwg.mxu0
    %v3213 = vadd.f32 %v3136, %v3210
    %v3214 = vld [vmem:[#allocation23] sm:$0x1]
    %v3216 = vlaneseq
    %v3217 = vshrl.u32 %v3216, 7
    %v3218 = vsub.s32 0, %v3217
    %v3219 = vrot.slane %v3214, %v3218
    %v3221 = vadd.f32 %v3213, %v3219
    %v3222 = vsub.f32 0.0, %v3221
    %v3223 = vmul.f32 %v3222, 1.442695
    %v3224 = vpow.pop %v3223
    %v3225 = vadd.f32 %v3224, 1.0
    %v3226 = vrcp.pop %v3225
    %v3227 = vmul.f32 1.0, %v3226
    %v3228 = vmul.f32 %v3221, %v3227
    %v3229 = vld [vmem:[#allocation25] sm:$0xff]
    %v3230 = vld [vmem:[#allocation25 + $0x8] sm:$0xff]
    %v3231 = vld [vmem:[#allocation25 + $0x10] sm:$0xff]
    %v3232 = vld [vmem:[#allocation25 + $0x18] sm:$0xff]
    %v3234 = vsel %vm1913, %v3228, 0
    %3236 = vmatprep.subr.mxu0 0.0
    %3237 = vmatpush1.msra.mxu0 %v3229
    %3238 = vmatprep.subr.mxu0 0.0
    %3239 = vmatpush1.msra.mxu0 %v3230
    %3240 = vmatprep.subr.mxu0 0.0
    %3241 = vmatpush1.msra.mxu0 %v3231
    %3242 = vmatprep.subr.mxu0 0.0
    %3243 = vmatpush1.msra.mxu0 %v3232
    %3244 = vmatprep.subr.mxu0 0.0
    %3245 = vmatpush1.msra.mxu0 0.0
    %3246 = vmatprep.subr.mxu0 0.0
    %3247 = vmatpush1.msra.mxu0 0.0
    %3248 = vmatprep.subr.mxu0 0.0
    %3249 = vmatpush1.msra.mxu0 0.0
    %3250 = vmatprep.subr.mxu0 0.0
    %3251 = vmatpush1.msra.mxu0 0.0
    %3252 = vmatprep.subr.mxu0 0.0
    %3253 = vmatpush1.msra.mxu0 0.0
    %3254 = vmatprep.subr.mxu0 0.0
    %3255 = vmatpush1.msra.mxu0 0.0
    %3256 = vmatprep.subr.mxu0 0.0
    %3257 = vmatpush1.msra.mxu0 0.0
    %3258 = vmatprep.subr.mxu0 0.0
    %3259 = vmatpush1.msra.mxu0 0.0
    %3260 = vmatprep.subr.mxu0 0.0
    %3261 = vmatpush1.msra.mxu0 0.0
    %3262 = vmatprep.subr.mxu0 0.0
    %3263 = vmatpush1.msra.mxu0 0.0
    %3264 = vmatprep.subr.mxu0 0.0
    %3265 = vmatpush1.msra.mxu0 0.0
    %3266 = vmatprep.subr.mxu0 0.0
    %3267 = vmatpush1.msra.mxu0 0.0
    %3268 = vmatprep.subr.mxu0 0.0
    %3269 = vmatpush1.msra.mxu0 0.0
    %3270 = vmatprep.subr.mxu0 0.0
    %3271 = vmatpush1.msra.mxu0 0.0
    %3272 = vmatprep.subr.mxu0 0.0
    %3273 = vmatpush1.msra.mxu0 0.0
    %3274 = vmatprep.subr.mxu0 0.0
    %3275 = vmatpush1.msra.mxu0 0.0
    %3276 = vmatprep.subr.mxu0 0.0
    %3277 = vmatpush1.msra.mxu0 0.0
    %3278 = vmatprep.subr.mxu0 0.0
    %3279 = vmatpush1.msra.mxu0 0.0
    %3280 = vmatprep.subr.mxu0 0.0
    %3281 = vmatpush1.msra.mxu0 0.0
    %3282 = vmatprep.subr.mxu0 0.0
    %3283 = vmatpush1.msra.mxu0 0.0
    %3284 = vmatprep.subr.mxu0 0.0
    %3285 = vmatpush1.msra.mxu0 0.0
    %3286 = vmatprep.subr.mxu0 0.0
    %3287 = vmatpush1.msra.mxu0 0.0
    %3288 = vmatprep.subr.mxu0 0.0
    %3289 = vmatpush1.msra.mxu0 0.0
    %3290 = vmatprep.subr.mxu0 0.0
    %3291 = vmatpush1.msra.mxu0 0.0
    %3292 = vmatprep.subr.mxu0 0.0
    %3293 = vmatpush1.msra.mxu0 0.0
    %3294 = vmatprep.subr.mxu0 0.0
    %3295 = vmatpush1.msra.mxu0 0.0
    %3296 = vmatprep.subr.mxu0 0.0
    %3297 = vmatpush1.msra.mxu0 0.0
    %3298 = vmatprep.subr.mxu0 0.0
    %3299 = vmatpush1.msra.mxu0 0.0
    %3300 = vmatprep.mubr.f32.mxu0 0.0
    %3301 = vmatmul.mubr.f32.gmra.mrb[0].mxu0 %v3234
    %v3302 = vpop.f32.mrb[0].mxu0
    %v3303 = vadd.f32 0.0, %v3302
    %v3304 = vpop.f32.mrb[0].mxu0
    %3305 = vdwg.mxu0
    %v3306 = vadd.f32 %v1886, %v3303
    %v3307 = vld [vmem:[#allocation26] sm:$0x1]
    %v3309 = vlaneseq
    %v3310 = vshrl.u32 %v3309, 7
    %v3311 = vsub.s32 0, %v3310
    %v3312 = vrot.slane %v3307, %v3311
    %v3314 = vadd.f32 %v3306, %v3312
    %s3315 = scalar_lea.vmem %s39, 32
    %v3316 = vld [vmem:[%s3315] sm:$0xff]
    %v3317 = vld [vmem:[%s3315 + $0x8] sm:$0xff]
    %v3318 = vld [vmem:[%s3315 + $0x10] sm:$0xff]
    %v3319 = vld [vmem:[%s3315 + $0x18] sm:$0xff]
    %v3321 = vsel %vm1913, %v3314, 0
    %3323 = vmatprep.subr.mxu0 0.0
    %3324 = vmatpush1.msra.mxu0 %v3316
    %3325 = vmatprep.subr.mxu0 0.0
    %3326 = vmatpush1.msra.mxu0 %v3317
    %3327 = vmatprep.subr.mxu0 0.0
    %3328 = vmatpush1.msra.mxu0 %v3318
    %3329 = vmatprep.subr.mxu0 0.0
    %3330 = vmatpush1.msra.mxu0 %v3319
    %3331 = vmatprep.subr.mxu0 0.0
    %3332 = vmatpush1.msra.mxu0 0.0
    %3333 = vmatprep.subr.mxu0 0.0
    %3334 = vmatpush1.msra.mxu0 0.0
    %3335 = vmatprep.subr.mxu0 0.0
    %3336 = vmatpush1.msra.mxu0 0.0
    %3337 = vmatprep.subr.mxu0 0.0
    %3338 = vmatpush1.msra.mxu0 0.0
    %3339 = vmatprep.subr.mxu0 0.0
    %3340 = vmatpush1.msra.mxu0 0.0
    %3341 = vmatprep.subr.mxu0 0.0
    %3342 = vmatpush1.msra.mxu0 0.0
    %3343 = vmatprep.subr.mxu0 0.0
    %3344 = vmatpush1.msra.mxu0 0.0
    %3345 = vmatprep.subr.mxu0 0.0
    %3346 = vmatpush1.msra.mxu0 0.0
    %3347 = vmatprep.subr.mxu0 0.0
    %3348 = vmatpush1.msra.mxu0 0.0
    %3349 = vmatprep.subr.mxu0 0.0
    %3350 = vmatpush1.msra.mxu0 0.0
    %3351 = vmatprep.subr.mxu0 0.0
    %3352 = vmatpush1.msra.mxu0 0.0
    %3353 = vmatprep.subr.mxu0 0.0
    %3354 = vmatpush1.msra.mxu0 0.0
    %3355 = vmatprep.subr.mxu0 0.0
    %3356 = vmatpush1.msra.mxu0 0.0
    %3357 = vmatprep.subr.mxu0 0.0
    %3358 = vmatpush1.msra.mxu0 0.0
    %3359 = vmatprep.subr.mxu0 0.0
    %3360 = vmatpush1.msra.mxu0 0.0
    %3361 = vmatprep.subr.mxu0 0.0
    %3362 = vmatpush1.msra.mxu0 0.0
    %3363 = vmatprep.subr.mxu0 0.0
    %3364 = vmatpush1.msra.mxu0 0.0
    %3365 = vmatprep.subr.mxu0 0.0
    %3366 = vmatpush1.msra.mxu0 0.0
    %3367 = vmatprep.subr.mxu0 0.0
    %3368 = vmatpush1.msra.mxu0 0.0
    %3369 = vmatprep.subr.mxu0 0.0
    %3370 = vmatpush1.msra.mxu0 0.0
    %3371 = vmatprep.subr.mxu0 0.0
    %3372 = vmatpush1.msra.mxu0 0.0
    %3373 = vmatprep.subr.mxu0 0.0
    %3374 = vmatpush1.msra.mxu0 0.0
    %3375 = vmatprep.subr.mxu0 0.0
    %3376 = vmatpush1.msra.mxu0 0.0
    %3377 = vmatprep.subr.mxu0 0.0
    %3378 = vmatpush1.msra.mxu0 0.0
    %3379 = vmatprep.subr.mxu0 0.0
    %3380 = vmatpush1.msra.mxu0 0.0
    %3381 = vmatprep.subr.mxu0 0.0
    %3382 = vmatpush1.msra.mxu0 0.0
    %3383 = vmatprep.subr.mxu0 0.0
    %3384 = vmatpush1.msra.mxu0 0.0
    %3385 = vmatprep.subr.mxu0 0.0
    %3386 = vmatpush1.msra.mxu0 0.0
    %3387 = vmatprep.mubr.f32.mxu0 0.0
    %3388 = vmatmul.mubr.f32.gmra.mrb[0].mxu0 %v3321
    %v3389 = vpop.f32.mrb[0].mxu0
    %v3390 = vadd.f32 0.0, %v3389
    %v3391 = vpop.f32.mrb[0].mxu0
    %3392 = vdwg.mxu0
    %s3393 = scalar_lea.vmem %s41, 32
    %v3394 = vld [vmem:[%s3393] sm:$0xff]
    %v3395 = vld [vmem:[%s3393 + $0x8] sm:$0xff]
    %v3396 = vld [vmem:[%s3393 + $0x10] sm:$0xff]
    %v3397 = vld [vmem:[%s3393 + $0x18] sm:$0xff]
    %3398 = vmatprep.subr.mxu0 0.0
    %3399 = vmatpush1.msra.mxu0 %v3394
    %3400 = vmatprep.subr.mxu0 0.0
    %3401 = vmatpush1.msra.mxu0 %v3395
    %3402 = vmatprep.subr.mxu0 0.0
    %3403 = vmatpush1.msra.mxu0 %v3396
    %3404 = vmatprep.subr.mxu0 0.0
    %3405 = vmatpush1.msra.mxu0 %v3397
    %3406 = vmatprep.subr.mxu0 0.0
    %3407 = vmatpush1.msra.mxu0 0.0
    %3408 = vmatprep.subr.mxu0 0.0
    %3409 = vmatpush1.msra.mxu0 0.0
    %3410 = vmatprep.subr.mxu0 0.0
    %3411 = vmatpush1.msra.mxu0 0.0
    %3412 = vmatprep.subr.mxu0 0.0
    %3413 = vmatpush1.msra.mxu0 0.0
    %3414 = vmatprep.subr.mxu0 0.0
    %3415 = vmatpush1.msra.mxu0 0.0
    %3416 = vmatprep.subr.mxu0 0.0
    %3417 = vmatpush1.msra.mxu0 0.0
    %3418 = vmatprep.subr.mxu0 0.0
    %3419 = vmatpush1.msra.mxu0 0.0
    %3420 = vmatprep.subr.mxu0 0.0
    %3421 = vmatpush1.msra.mxu0 0.0
    %3422 = vmatprep.subr.mxu0 0.0
    %3423 = vmatpush1.msra.mxu0 0.0
    %3424 = vmatprep.subr.mxu0 0.0
    %3425 = vmatpush1.msra.mxu0 0.0
    %3426 = vmatprep.subr.mxu0 0.0
    %3427 = vmatpush1.msra.mxu0 0.0
    %3428 = vmatprep.subr.mxu0 0.0
    %3429 = vmatpush1.msra.mxu0 0.0
    %3430 = vmatprep.subr.mxu0 0.0
    %3431 = vmatpush1.msra.mxu0 0.0
    %3432 = vmatprep.subr.mxu0 0.0
    %3433 = vmatpush1.msra.mxu0 0.0
    %3434 = vmatprep.subr.mxu0 0.0
    %3435 = vmatpush1.msra.mxu0 0.0
    %3436 = vmatprep.subr.mxu0 0.0
    %3437 = vmatpush1.msra.mxu0 0.0
    %3438 = vmatprep.subr.mxu0 0.0
    %3439 = vmatpush1.msra.mxu0 0.0
    %3440 = vmatprep.subr.mxu0 0.0
    %3441 = vmatpush1.msra.mxu0 0.0
    %3442 = vmatprep.subr.mxu0 0.0
    %3443 = vmatpush1.msra.mxu0 0.0
    %3444 = vmatprep.subr.mxu0 0.0
    %3445 = vmatpush1.msra.mxu0 0.0
    %3446 = vmatprep.subr.mxu0 0.0
    %3447 = vmatpush1.msra.mxu0 0.0
    %3448 = vmatprep.subr.mxu0 0.0
    %3449 = vmatpush1.msra.mxu0 0.0
    %3450 = vmatprep.subr.mxu0 0.0
    %3451 = vmatpush1.msra.mxu0 0.0
    %3452 = vmatprep.subr.mxu0 0.0
    %3453 = vmatpush1.msra.mxu0 0.0
    %3454 = vmatprep.subr.mxu0 0.0
    %3455 = vmatpush1.msra.mxu0 0.0
    %3456 = vmatprep.subr.mxu0 0.0
    %3457 = vmatpush1.msra.mxu0 0.0
    %3458 = vmatprep.subr.mxu0 0.0
    %3459 = vmatpush1.msra.mxu0 0.0
    %3460 = vmatprep.subr.mxu0 0.0
    %3461 = vmatpush1.msra.mxu0 0.0
    %3462 = vmatprep.mubr.f32.mxu0 0.0
    %3463 = vmatmul.mubr.f32.gmra.mrb[0].mxu0 %v3321
    %v3464 = vpop.f32.mrb[0].mxu0
    %v3465 = vadd.f32 0.0, %v3464
    %v3466 = vpop.f32.mrb[0].mxu0
    %3467 = vdwg.mxu0
    %3468 = vmatprep.subr.mxu0 0.0
    %3469 = vmatpush1.msra.mxu0 %v3465
    %3470 = vmatprep.subr.mxu0 0.0
    %3471 = vmatpush1.msra.mxu0 0.0
    %3472 = vmatprep.subr.mxu0 0.0
    %3473 = vmatpush1.msra.mxu0 0.0
    %3474 = vmatprep.subr.mxu0 0.0
    %3475 = vmatpush1.msra.mxu0 0.0
    %3476 = vmatprep.subr.mxu0 0.0
    %3477 = vmatpush1.msra.mxu0 0.0
    %3478 = vmatprep.subr.mxu0 0.0
    %3479 = vmatpush1.msra.mxu0 0.0
    %3480 = vmatprep.subr.mxu0 0.0
    %3481 = vmatpush1.msra.mxu0 0.0
    %3482 = vmatprep.subr.mxu0 0.0
    %3483 = vmatpush1.msra.mxu0 0.0
    %3484 = vmatprep.subr.mxu0 0.0
    %3485 = vmatpush1.msra.mxu0 0.0
    %3486 = vmatprep.subr.mxu0 0.0
    %3487 = vmatpush1.msra.mxu0 0.0
    %3488 = vmatprep.subr.mxu0 0.0
    %3489 = vmatpush1.msra.mxu0 0.0
    %3490 = vmatprep.subr.mxu0 0.0
    %3491 = vmatpush1.msra.mxu0 0.0
    %3492 = vmatprep.subr.mxu0 0.0
    %3493 = vmatpush1.msra.mxu0 0.0
    %3494 = vmatprep.subr.mxu0 0.0
    %3495 = vmatpush1.msra.mxu0 0.0
    %3496 = vmatprep.subr.mxu0 0.0
    %3497 = vmatpush1.msra.mxu0 0.0
    %3498 = vmatprep.subr.mxu0 0.0
    %3499 = vmatpush1.msra.mxu0 0.0
    %3500 = vmatprep.subr.mxu0 0.0
    %3501 = vmatpush1.msra.mxu0 0.0
    %3502 = vmatprep.subr.mxu0 0.0
    %3503 = vmatpush1.msra.mxu0 0.0
    %3504 = vmatprep.subr.mxu0 0.0
    %3505 = vmatpush1.msra.mxu0 0.0
    %3506 = vmatprep.subr.mxu0 0.0
    %3507 = vmatpush1.msra.mxu0 0.0
    %3508 = vmatprep.subr.mxu0 0.0
    %3509 = vmatpush1.msra.mxu0 0.0
    %3510 = vmatprep.subr.mxu0 0.0
    %3511 = vmatpush1.msra.mxu0 0.0
    %3512 = vmatprep.subr.mxu0 0.0
    %3513 = vmatpush1.msra.mxu0 0.0
    %3514 = vmatprep.subr.mxu0 0.0
    %3515 = vmatpush1.msra.mxu0 0.0
    %3516 = vmatprep.subr.mxu0 0.0
    %3517 = vmatpush1.msra.mxu0 0.0
    %3518 = vmatprep.subr.mxu0 0.0
    %3519 = vmatpush1.msra.mxu0 0.0
    %3520 = vmatprep.subr.mxu0 0.0
    %3521 = vmatpush1.msra.mxu0 0.0
    %3522 = vmatprep.subr.mxu0 0.0
    %3523 = vmatpush1.msra.mxu0 0.0
    %3524 = vmatprep.subr.mxu0 0.0
    %3525 = vmatpush1.msra.mxu0 0.0
    %3526 = vmatprep.subr.mxu0 0.0
    %3527 = vmatpush1.msra.mxu0 0.0
    %3528 = vmatprep.subr.mxu0 0.0
    %3529 = vmatpush1.msra.mxu0 0.0
    %3530 = vmatprep.subr.mxu0 0.0
    %3531 = vmatpush1.msra.mxu0 0.0
    %3532 = vmatprep.mubr.f32.mxu0 0.0
    %3533 = vmatmul.mubr.f32.gmra.mrb[0].mxu0 %v2063
    %v3534 = vpop.f32.mrb[0].mxu0
    %v3535 = vadd.f32 0.0, %v3534
    %v3536 = vpop.f32.mrb[0].mxu0
    %3537 = vmatprep.mubr.f32.mxu0 0.0
    %3538 = vmatmul.mubr.f32.gmra.mrb[0].mxu0 %v2066
    %v3539 = vpop.f32.mrb[0].mxu0
    %v3540 = vadd.f32 0.0, %v3539
    %v3541 = vpop.f32.mrb[0].mxu0
    %3542 = vmatprep.mubr.f32.mxu0 0.0
    %3543 = vmatmul.mubr.f32.gmra.mrb[0].mxu0 %v2069
    %v3544 = vpop.f32.mrb[0].mxu0
    %v3545 = vadd.f32 0.0, %v3544
    %v3546 = vpop.f32.mrb[0].mxu0
    %3547 = vdwg.mxu0
    %3548 = vmatprep.subr.mxu0 0.0
    %3549 = vmatpush1.msra.mxu0 %v3390
    %3550 = vmatprep.subr.mxu0 0.0
    %3551 = vmatpush1.msra.mxu0 0.0
    %3552 = vmatprep.subr.mxu0 0.0
    %3553 = vmatpush1.msra.mxu0 0.0
    %3554 = vmatprep.subr.mxu0 0.0
    %3555 = vmatpush1.msra.mxu0 0.0
    %3556 = vmatprep.subr.mxu0 0.0
    %3557 = vmatpush1.msra.mxu0 0.0
    %3558 = vmatprep.subr.mxu0 0.0
    %3559 = vmatpush1.msra.mxu0 0.0
    %3560 = vmatprep.subr.mxu0 0.0
    %3561 = vmatpush1.msra.mxu0 0.0
    %3562 = vmatprep.subr.mxu0 0.0
    %3563 = vmatpush1.msra.mxu0 0.0
    %3564 = vmatprep.subr.mxu0 0.0
    %3565 = vmatpush1.msra.mxu0 0.0
    %3566 = vmatprep.subr.mxu0 0.0
    %3567 = vmatpush1.msra.mxu0 0.0
    %3568 = vmatprep.subr.mxu0 0.0
    %3569 = vmatpush1.msra.mxu0 0.0
    %3570 = vmatprep.subr.mxu0 0.0
    %3571 = vmatpush1.msra.mxu0 0.0
    %3572 = vmatprep.subr.mxu0 0.0
    %3573 = vmatpush1.msra.mxu0 0.0
    %3574 = vmatprep.subr.mxu0 0.0
    %3575 = vmatpush1.msra.mxu0 0.0
    %3576 = vmatprep.subr.mxu0 0.0
    %3577 = vmatpush1.msra.mxu0 0.0
    %3578 = vmatprep.subr.mxu0 0.0
    %3579 = vmatpush1.msra.mxu0 0.0
    %3580 = vmatprep.subr.mxu0 0.0
    %3581 = vmatpush1.msra.mxu0 0.0
    %3582 = vmatprep.subr.mxu0 0.0
    %3583 = vmatpush1.msra.mxu0 0.0
    %3584 = vmatprep.subr.mxu0 0.0
    %3585 = vmatpush1.msra.mxu0 0.0
    %3586 = vmatprep.subr.mxu0 0.0
    %3587 = vmatpush1.msra.mxu0 0.0
    %3588 = vmatprep.subr.mxu0 0.0
    %3589 = vmatpush1.msra.mxu0 0.0
    %3590 = vmatprep.subr.mxu0 0.0
    %3591 = vmatpush1.msra.mxu0 0.0
    %3592 = vmatprep.subr.mxu0 0.0
    %3593 = vmatpush1.msra.mxu0 0.0
    %3594 = vmatprep.subr.mxu0 0.0
    %3595 = vmatpush1.msra.mxu0 0.0
    %3596 = vmatprep.subr.mxu0 0.0
    %3597 = vmatpush1.msra.mxu0 0.0
    %3598 = vmatprep.subr.mxu0 0.0
    %3599 = vmatpush1.msra.mxu0 0.0
    %3600 = vmatprep.subr.mxu0 0.0
    %3601 = vmatpush1.msra.mxu0 0.0
    %3602 = vmatprep.subr.mxu0 0.0
    %3603 = vmatpush1.msra.mxu0 0.0
    %3604 = vmatprep.subr.mxu0 0.0
    %3605 = vmatpush1.msra.mxu0 0.0
    %3606 = vmatprep.subr.mxu0 0.0
    %3607 = vmatpush1.msra.mxu0 0.0
    %3608 = vmatprep.subr.mxu0 0.0
    %3609 = vmatpush1.msra.mxu0 0.0
    %3610 = vmatprep.subr.mxu0 0.0
    %3611 = vmatpush1.msra.mxu0 0.0
    %3612 = vmatprep.mubr.f32.mxu0 0.0
    %3613 = vmatmul.mubr.f32.gmra.mrb[0].mxu0 %v2152
    %v3614 = vpop.f32.mrb[0].mxu0
    %v3615 = vadd.f32 %v3535, %v3614
    %v3616 = vpop.f32.mrb[0].mxu0
    %3617 = vmatprep.mubr.f32.mxu0 0.0
    %3618 = vmatmul.mubr.f32.gmra.mrb[0].mxu0 %v2155
    %v3619 = vpop.f32.mrb[0].mxu0
    %v3620 = vadd.f32 %v3540, %v3619
    %v3621 = vpop.f32.mrb[0].mxu0
    %3622 = vmatprep.mubr.f32.mxu0 0.0
    %3623 = vmatmul.mubr.f32.gmra.mrb[0].mxu0 %v2158
    %v3624 = vpop.f32.mrb[0].mxu0
    %v3625 = vadd.f32 %v3545, %v3624
    %v3626 = vpop.f32.mrb[0].mxu0
    %3627 = vdwg.mxu0
    %s3628 = scalar_lea.vmem %s45, 32
    %v3629 = vld [vmem:[%s3628] sm:$0xff]
    %v3630 = vld [vmem:[%s3628 + $0x8] sm:$0xff]
    %v3631 = vld [vmem:[%s3628 + $0x10] sm:$0xff]
    %v3632 = vld [vmem:[%s3628 + $0x18] sm:$0xff]
    %3633 = vmatprep.subr.mxu0 0.0
    %3634 = vmatpush1.msra.mxu0 %v3629
    %3635 = vmatprep.subr.mxu0 0.0
    %3636 = vmatpush1.msra.mxu0 %v3630
    %3637 = vmatprep.subr.mxu0 0.0
    %3638 = vmatpush1.msra.mxu0 %v3631
    %3639 = vmatprep.subr.mxu0 0.0
    %3640 = vmatpush1.msra.mxu0 %v3632
    %3641 = vmatprep.subr.mxu0 0.0
    %3642 = vmatpush1.msra.mxu0 0.0
    %3643 = vmatprep.subr.mxu0 0.0
    %3644 = vmatpush1.msra.mxu0 0.0
    %3645 = vmatprep.subr.mxu0 0.0
    %3646 = vmatpush1.msra.mxu0 0.0
    %3647 = vmatprep.subr.mxu0 0.0
    %3648 = vmatpush1.msra.mxu0 0.0
    %3649 = vmatprep.subr.mxu0 0.0
    %3650 = vmatpush1.msra.mxu0 0.0
    %3651 = vmatprep.subr.mxu0 0.0
    %3652 = vmatpush1.msra.mxu0 0.0
    %3653 = vmatprep.subr.mxu0 0.0
    %3654 = vmatpush1.msra.mxu0 0.0
    %3655 = vmatprep.subr.mxu0 0.0
    %3656 = vmatpush1.msra.mxu0 0.0
    %3657 = vmatprep.subr.mxu0 0.0
    %3658 = vmatpush1.msra.mxu0 0.0
    %3659 = vmatprep.subr.mxu0 0.0
    %3660 = vmatpush1.msra.mxu0 0.0
    %3661 = vmatprep.subr.mxu0 0.0
    %3662 = vmatpush1.msra.mxu0 0.0
    %3663 = vmatprep.subr.mxu0 0.0
    %3664 = vmatpush1.msra.mxu0 0.0
    %3665 = vmatprep.subr.mxu0 0.0
    %3666 = vmatpush1.msra.mxu0 0.0
    %3667 = vmatprep.subr.mxu0 0.0
    %3668 = vmatpush1.msra.mxu0 0.0
    %3669 = vmatprep.subr.mxu0 0.0
    %3670 = vmatpush1.msra.mxu0 0.0
    %3671 = vmatprep.subr.mxu0 0.0
    %3672 = vmatpush1.msra.mxu0 0.0
    %3673 = vmatprep.subr.mxu0 0.0
    %3674 = vmatpush1.msra.mxu0 0.0
    %3675 = vmatprep.subr.mxu0 0.0
    %3676 = vmatpush1.msra.mxu0 0.0
    %3677 = vmatprep.subr.mxu0 0.0
    %3678 = vmatpush1.msra.mxu0 0.0
    %3679 = vmatprep.subr.mxu0 0.0
    %3680 = vmatpush1.msra.mxu0 0.0
    %3681 = vmatprep.subr.mxu0 0.0
    %3682 = vmatpush1.msra.mxu0 0.0
    %3683 = vmatprep.subr.mxu0 0.0
    %3684 = vmatpush1.msra.mxu0 0.0
    %3685 = vmatprep.subr.mxu0 0.0
    %3686 = vmatpush1.msra.mxu0 0.0
    %3687 = vmatprep.subr.mxu0 0.0
    %3688 = vmatpush1.msra.mxu0 0.0
    %3689 = vmatprep.subr.mxu0 0.0
    %3690 = vmatpush1.msra.mxu0 0.0
    %3691 = vmatprep.subr.mxu0 0.0
    %3692 = vmatpush1.msra.mxu0 0.0
    %3693 = vmatprep.subr.mxu0 0.0
    %3694 = vmatpush1.msra.mxu0 0.0
    %3695 = vmatprep.subr.mxu0 0.0
    %3696 = vmatpush1.msra.mxu0 0.0
    %3697 = vmatprep.mubr.f32.mxu0 0.0
    %3698 = vmatmul.mubr.f32.gmra.mrb[0].mxu0 %v2245
    %v3699 = vpop.f32.mrb[0].mxu0
    %v3700 = vadd.f32 0.0, %v3699
    %v3701 = vpop.f32.mrb[0].mxu0
    %3702 = vmatprep.mubr.f32.mxu0 0.0
    %3703 = vmatmul.mubr.f32.gmra.mrb[0].mxu0 %v2248
    %v3704 = vpop.f32.mrb[0].mxu0
    %v3705 = vadd.f32 0.0, %v3704
    %v3706 = vpop.f32.mrb[0].mxu0
    %3707 = vmatprep.mubr.f32.mxu0 0.0
    %3708 = vmatmul.mubr.f32.gmra.mrb[0].mxu0 %v2251
    %v3709 = vpop.f32.mrb[0].mxu0
    %v3710 = vadd.f32 0.0, %v3709
    %v3711 = vpop.f32.mrb[0].mxu0
    %3712 = vdwg.mxu0
    %v3713 = vadd.f32 %v3615, %v3700
    %v3714 = vadd.f32 %v3620, %v3705
    %v3715 = vadd.f32 %v3625, %v3710
    %s3716 = scalar_lea.vmem [#allocation16], 2
    %v3717 = vld [vmem:[%s3716] sm:$0x3]
    %v3719 = vsel %vm2347, %v3717, 0
    %3721 = vmatprep.subr.mxu0 0.0
    %3722 = vmatpush1.msra.mxu0 %v3719
    %3723 = vmatprep.subr.mxu0 0.0
    %3724 = vmatpush1.msra.mxu0 0.0
    %3725 = vmatprep.subr.mxu0 0.0
    %3726 = vmatpush1.msra.mxu0 0.0
    %3727 = vmatprep.subr.mxu0 0.0
    %3728 = vmatpush1.msra.mxu0 0.0
    %3729 = vmatprep.subr.mxu0 0.0
    %3730 = vmatpush1.msra.mxu0 0.0
    %3731 = vmatprep.subr.mxu0 0.0
    %3732 = vmatpush1.msra.mxu0 0.0
    %3733 = vmatprep.subr.mxu0 0.0
    %3734 = vmatpush1.msra.mxu0 0.0
    %3735 = vmatprep.subr.mxu0 0.0
    %3736 = vmatpush1.msra.mxu0 0.0
    %3737 = vmatprep.subr.mxu0 0.0
    %3738 = vmatpush1.msra.mxu0 0.0
    %3739 = vmatprep.subr.mxu0 0.0
    %3740 = vmatpush1.msra.mxu0 0.0
    %3741 = vmatprep.subr.mxu0 0.0
    %3742 = vmatpush1.msra.mxu0 0.0
    %3743 = vmatprep.subr.mxu0 0.0
    %3744 = vmatpush1.msra.mxu0 0.0
    %3745 = vmatprep.subr.mxu0 0.0
    %3746 = vmatpush1.msra.mxu0 0.0
    %3747 = vmatprep.subr.mxu0 0.0
    %3748 = vmatpush1.msra.mxu0 0.0
    %3749 = vmatprep.subr.mxu0 0.0
    %3750 = vmatpush1.msra.mxu0 0.0
    %3751 = vmatprep.subr.mxu0 0.0
    %3752 = vmatpush1.msra.mxu0 0.0
    %3753 = vmatprep.subr.mxu0 0.0
    %3754 = vmatpush1.msra.mxu0 0.0
    %3755 = vmatprep.subr.mxu0 0.0
    %3756 = vmatpush1.msra.mxu0 0.0
    %3757 = vmatprep.subr.mxu0 0.0
    %3758 = vmatpush1.msra.mxu0 0.0
    %3759 = vmatprep.subr.mxu0 0.0
    %3760 = vmatpush1.msra.mxu0 0.0
    %3761 = vmatprep.subr.mxu0 0.0
    %3762 = vmatpush1.msra.mxu0 0.0
    %3763 = vmatprep.subr.mxu0 0.0
    %3764 = vmatpush1.msra.mxu0 0.0
    %3765 = vmatprep.subr.mxu0 0.0
    %3766 = vmatpush1.msra.mxu0 0.0
    %3767 = vmatprep.subr.mxu0 0.0
    %3768 = vmatpush1.msra.mxu0 0.0
    %3769 = vmatprep.subr.mxu0 0.0
    %3770 = vmatpush1.msra.mxu0 0.0
    %3771 = vmatprep.subr.mxu0 0.0
    %3772 = vmatpush1.msra.mxu0 0.0
    %3773 = vmatprep.subr.mxu0 0.0
    %3774 = vmatpush1.msra.mxu0 0.0
    %3775 = vmatprep.subr.mxu0 0.0
    %3776 = vmatpush1.msra.mxu0 0.0
    %3777 = vmatprep.subr.mxu0 0.0
    %3778 = vmatpush1.msra.mxu0 0.0
    %3779 = vmatprep.subr.mxu0 0.0
    %3780 = vmatpush1.msra.mxu0 0.0
    %3781 = vmatprep.subr.mxu0 0.0
    %3782 = vmatpush1.msra.mxu0 0.0
    %3783 = vmatprep.subr.mxu0 0.0
    %3784 = vmatpush1.msra.mxu0 0.0
    %3785 = vmatprep.mubr.f32.mxu0 0.0
    %3786 = vmatmul.mubr.f32.gmra.mrb[0].mxu0 %v2339
    %v3787 = vpop.f32.mrb[0].mxu0
    %v3788 = vadd.f32 0.0, %v3787
    %v3789 = vpop.f32.mrb[0].mxu0
    %3790 = vmatprep.mubr.f32.mxu0 0.0
    %3791 = vmatmul.mubr.f32.gmra.mrb[0].mxu0 %v2342
    %v3792 = vpop.f32.mrb[0].mxu0
    %v3793 = vadd.f32 0.0, %v3792
    %v3794 = vpop.f32.mrb[0].mxu0
    %3795 = vmatprep.mubr.f32.mxu0 0.0
    %3796 = vmatmul.mubr.f32.gmra.mrb[0].mxu0 %v2345
    %v3797 = vpop.f32.mrb[0].mxu0
    %v3798 = vadd.f32 0.0, %v3797
    %v3799 = vpop.f32.mrb[0].mxu0
    %3800 = vdwg.mxu0
    %v3801 = vadd.f32 %v3713, %v3788
    %v3802 = vadd.f32 %v3714, %v3793
    %v3803 = vadd.f32 %v3715, %v3798
    %s3804 = scalar_lea.vmem [#allocation17], 1
    %v3805 = vld [vmem:[%s3804] sm:$0x1]
    %v3807 = vlaneseq
    %v3808 = vshrl.u32 %v3807, 7
    %v3809 = vsub.s32 0, %v3808
    %v3810 = vrot.slane %v3805, %v3809
    %v3812 = vadd.f32 %v3801, %v3810
    %v3813 = vadd.f32 %v3802, %v3810
    %v3814 = vadd.f32 %v3803, %v3810
    %s3815 = scalar_lea.vmem %s43, 16
    %v3816 = vld [vmem:[%s3815] sm:$0xff]
    %v3817 = vld [vmem:[%s3815 + $0x8] sm:$0x1]
    %v3818 = vlaneseq
    %v3819 = vshrl.u32 %v3818, 7
    %v3820 = vsub.s32 0, %v3819
    %v3821 = vrot.slane %v3816, %v3820
    %v3822 = vmul.f32 %v2449, %v3821
    %v3823 = vmul.f32 %v2454, %v3821
    %v3824 = vmul.f32 %v2459, %v3821
    %v3825 = vadd.f32 %v3812, %v3822
    %v3826 = vadd.f32 %v3813, %v3823
    %v3827 = vadd.f32 %v3814, %v3824
    %v3828 = vlaneseq
    %v3829 = vshrl.u32 %v3828, 7
    %v3830 = vsub.s32 1, %v3829
    %v3831 = vrot.slane %v3816, %v3830
    %v3832 = vmul.f32 %v2474, %v3831
    %v3833 = vmul.f32 %v2479, %v3831
    %v3834 = vmul.f32 %v2484, %v3831
    %v3835 = vadd.f32 %v3825, %v3832
    %v3836 = vadd.f32 %v3826, %v3833
    %v3837 = vadd.f32 %v3827, %v3834
    %v3838 = vlaneseq
    %v3839 = vshrl.u32 %v3838, 7
    %v3840 = vsub.s32 2, %v3839
    %v3841 = vrot.slane %v3816, %v3840
    %v3842 = vmul.f32 %v2499, %v3841
    %v3843 = vmul.f32 %v2504, %v3841
    %v3844 = vmul.f32 %v2509, %v3841
    %v3845 = vadd.f32 %v3835, %v3842
    %v3846 = vadd.f32 %v3836, %v3843
    %v3847 = vadd.f32 %v3837, %v3844
    %v3848 = vlaneseq
    %v3849 = vshrl.u32 %v3848, 7
    %v3850 = vsub.s32 3, %v3849
    %v3851 = vrot.slane %v3816, %v3850
    %v3852 = vmul.f32 %v2474, %v3851
    %v3853 = vmul.f32 %v2479, %v3851
    %v3854 = vmul.f32 %v2484, %v3851
    %v3855 = vadd.f32 %v3845, %v3852
    %v3856 = vadd.f32 %v3846, %v3853
    %v3857 = vadd.f32 %v3847, %v3854
    %v3858 = vlaneseq
    %v3859 = vshrl.u32 %v3858, 7
    %v3860 = vsub.s32 4, %v3859
    %v3861 = vrot.slane %v3816, %v3860
    %v3862 = vmul.f32 %v2534, %v3861
    %v3863 = vmul.f32 %v2539, %v3861
    %v3864 = vmul.f32 %v2544, %v3861
    %v3865 = vadd.f32 %v3855, %v3862
    %v3866 = vadd.f32 %v3856, %v3863
    %v3867 = vadd.f32 %v3857, %v3864
    %v3868 = vlaneseq
    %v3869 = vshrl.u32 %v3868, 7
    %v3870 = vsub.s32 5, %v3869
    %v3871 = vrot.slane %v3816, %v3870
    %v3872 = vmul.f32 %v2559, %v3871
    %v3873 = vmul.f32 %v2564, %v3871
    %v3874 = vmul.f32 %v2569, %v3871
    %v3875 = vadd.f32 %v3865, %v3872
    %v3876 = vadd.f32 %v3866, %v3873
    %v3877 = vadd.f32 %v3867, %v3874
    %v3878 = vlaneseq
    %v3879 = vshrl.u32 %v3878, 7
    %v3880 = vsub.s32 6, %v3879
    %v3881 = vrot.slane %v3816, %v3880
    %v3882 = vmul.f32 %v2499, %v3881
    %v3883 = vmul.f32 %v2504, %v3881
    %v3884 = vmul.f32 %v2509, %v3881
    %v3885 = vadd.f32 %v3875, %v3882
    %v3886 = vadd.f32 %v3876, %v3883
    %v3887 = vadd.f32 %v3877, %v3884
    %v3888 = vlaneseq
    %v3889 = vshrl.u32 %v3888, 7
    %v3890 = vsub.s32 7, %v3889
    %v3891 = vrot.slane %v3816, %v3890
    %v3892 = vmul.f32 %v2559, %v3891
    %v3893 = vmul.f32 %v2564, %v3891
    %v3894 = vmul.f32 %v2569, %v3891
    %v3895 = vadd.f32 %v3885, %v3892
    %v3896 = vadd.f32 %v3886, %v3893
    %v3897 = vadd.f32 %v3887, %v3894
    %v3898 = vlaneseq
    %v3899 = vshrl.u32 %v3898, 7
    %v3900 = vsub.s32 0, %v3899
    %v3901 = vrot.slane %v3817, %v3900
    %v3902 = vmul.f32 %v2604, %v3901
    %v3903 = vmul.f32 %v2609, %v3901
    %v3904 = vmul.f32 %v2614, %v3901
    %v3905 = vadd.f32 %v3895, %v3902
    %v3906 = vadd.f32 %v3896, %v3903
    %v3907 = vadd.f32 %v3897, %v3904
    %v3908 = vsub.f32 0.0, %v3905
    %v3909 = vsub.f32 0.0, %v3906
    %v3910 = vsub.f32 0.0, %v3907
    %v3911 = vmul.f32 %v3908, 1.442695
    %v3912 = vpow.pop %v3911
    %v3913 = vmul.f32 %v3909, 1.442695
    %v3914 = vpow.pop %v3913
    %v3915 = vmul.f32 %v3910, 1.442695
    %v3916 = vpow.pop %v3915
    %v3917 = vadd.f32 %v3912, 1.0
    %v3918 = vadd.f32 %v3914, 1.0
    %v3919 = vadd.f32 %v3916, 1.0
    %v3920 = vrcp.pop %v3917
    %v3921 = vmul.f32 1.0, %v3920
    %v3922 = vrcp.pop %v3918
    %v3923 = vmul.f32 1.0, %v3922
    %v3924 = vrcp.pop %v3919
    %v3925 = vmul.f32 1.0, %v3924
    %v3926 = vmul.f32 %v3905, %v3921
    %v3927 = vmul.f32 %v3906, %v3923
    %v3928 = vmul.f32 %v3907, %v3925
    %s3929 = scalar_lea.vmem %s51, 32
    %v3930 = vld [vmem:[%s3929] sm:$0xff]
    %v3931 = vld [vmem:[%s3929 + $0x8] sm:$0xff]
    %v3932 = vld [vmem:[%s3929 + $0x10] sm:$0xff]
    %v3933 = vld [vmem:[%s3929 + $0x18] sm:$0xff]
    %s3934 = scalar_lea.vmem [#allocation19], 1
    %v3935 = vld [vmem:[%s3934] sm:$0x1]
    %v3937 = vlaneseq
    %v3938 = vshrl.u32 %v3937, 7
    %v3939 = vsub.s32 0, %v3938
    %v3940 = vrot.slane %v3935, %v3939
    %v3943 = vsel %vm1913, %v3926, 0
    %v3946 = vsel %vm1913, %v3927, 0
    %v3949 = vsel %vm1913, %v3928, 0
    %3951 = vmatprep.subr.mxu0 0.0
    %3952 = vmatpush1.msra.mxu0 %v3930
    %3953 = vmatprep.subr.mxu0 0.0
    %3954 = vmatpush1.msra.mxu0 %v3931
    %3955 = vmatprep.subr.mxu0 0.0
    %3956 = vmatpush1.msra.mxu0 %v3932
    %3957 = vmatprep.subr.mxu0 0.0
    %3958 = vmatpush1.msra.mxu0 %v3933
    %3959 = vmatprep.subr.mxu0 0.0
    %3960 = vmatpush1.msra.mxu0 0.0
    %3961 = vmatprep.subr.mxu0 0.0
    %3962 = vmatpush1.msra.mxu0 0.0
    %3963 = vmatprep.subr.mxu0 0.0
    %3964 = vmatpush1.msra.mxu0 0.0
    %3965 = vmatprep.subr.mxu0 0.0
    %3966 = vmatpush1.msra.mxu0 0.0
    %3967 = vmatprep.subr.mxu0 0.0
    %3968 = vmatpush1.msra.mxu0 0.0
    %3969 = vmatprep.subr.mxu0 0.0
    %3970 = vmatpush1.msra.mxu0 0.0
    %3971 = vmatprep.subr.mxu0 0.0
    %3972 = vmatpush1.msra.mxu0 0.0
    %3973 = vmatprep.subr.mxu0 0.0
    %3974 = vmatpush1.msra.mxu0 0.0
    %3975 = vmatprep.subr.mxu0 0.0
    %3976 = vmatpush1.msra.mxu0 0.0
    %3977 = vmatprep.subr.mxu0 0.0
    %3978 = vmatpush1.msra.mxu0 0.0
    %3979 = vmatprep.subr.mxu0 0.0
    %3980 = vmatpush1.msra.mxu0 0.0
    %3981 = vmatprep.subr.mxu0 0.0
    %3982 = vmatpush1.msra.mxu0 0.0
    %3983 = vmatprep.subr.mxu0 0.0
    %3984 = vmatpush1.msra.mxu0 0.0
    %3985 = vmatprep.subr.mxu0 0.0
    %3986 = vmatpush1.msra.mxu0 0.0
    %3987 = vmatprep.subr.mxu0 0.0
    %3988 = vmatpush1.msra.mxu0 0.0
    %3989 = vmatprep.subr.mxu0 0.0
    %3990 = vmatpush1.msra.mxu0 0.0
    %3991 = vmatprep.subr.mxu0 0.0
    %3992 = vmatpush1.msra.mxu0 0.0
    %3993 = vmatprep.subr.mxu0 0.0
    %3994 = vmatpush1.msra.mxu0 0.0
    %3995 = vmatprep.subr.mxu0 0.0
    %3996 = vmatpush1.msra.mxu0 0.0
    %3997 = vmatprep.subr.mxu0 0.0
    %3998 = vmatpush1.msra.mxu0 0.0
    %3999 = vmatprep.subr.mxu0 0.0
    %4000 = vmatpush1.msra.mxu0 0.0
    %4001 = vmatprep.subr.mxu0 0.0
    %4002 = vmatpush1.msra.mxu0 0.0
    %4003 = vmatprep.subr.mxu0 0.0
    %4004 = vmatpush1.msra.mxu0 0.0
    %4005 = vmatprep.subr.mxu0 0.0
    %4006 = vmatpush1.msra.mxu0 0.0
    %4007 = vmatprep.subr.mxu0 0.0
    %4008 = vmatpush1.msra.mxu0 0.0
    %4009 = vmatprep.subr.mxu0 0.0
    %4010 = vmatpush1.msra.mxu0 0.0
    %4011 = vmatprep.subr.mxu0 0.0
    %4012 = vmatpush1.msra.mxu0 0.0
    %4013 = vmatprep.subr.mxu0 0.0
    %4014 = vmatpush1.msra.mxu0 0.0
    %4015 = vmatprep.mubr.f32.mxu0 0.0
    %4016 = vmatmul.mubr.f32.gmra.mrb[0].mxu0 %v3943
    %v4017 = vpop.f32.mrb[0].mxu0
    %v4018 = vadd.f32 %v3940, %v4017
    %v4019 = vpop.f32.mrb[0].mxu0
    %4020 = vmatprep.mubr.f32.mxu0 0.0
    %4021 = vmatmul.mubr.f32.gmra.mrb[0].mxu0 %v3946
    %v4022 = vpop.f32.mrb[0].mxu0
    %v4023 = vadd.f32 %v3940, %v4022
    %v4024 = vpop.f32.mrb[0].mxu0
    %4025 = vmatprep.mubr.f32.mxu0 0.0
    %4026 = vmatmul.mubr.f32.gmra.mrb[0].mxu0 %v3949
    %v4027 = vpop.f32.mrb[0].mxu0
    %v4028 = vadd.f32 %v3940, %v4027
    %v4029 = vpop.f32.mrb[0].mxu0
    %4030 = vdwg.mxu0
    %v4031 = vsub.f32 0.0, %v4018
    %v4032 = vsub.f32 0.0, %v4023
    %v4033 = vsub.f32 0.0, %v4028
    %v4034 = vmul.f32 %v4031, 1.442695
    %v4035 = vpow.pop %v4034
    %v4036 = vmul.f32 %v4032, 1.442695
    %v4037 = vpow.pop %v4036
    %v4038 = vmul.f32 %v4033, 1.442695
    %v4039 = vpow.pop %v4038
    %v4040 = vadd.f32 %v4035, 1.0
    %v4041 = vadd.f32 %v4037, 1.0
    %v4042 = vadd.f32 %v4039, 1.0
    %v4043 = vrcp.pop %v4040
    %v4044 = vmul.f32 1.0, %v4043
    %v4045 = vrcp.pop %v4041
    %v4046 = vmul.f32 1.0, %v4045
    %v4047 = vrcp.pop %v4042
    %v4048 = vmul.f32 1.0, %v4047
    %v4049 = vmul.f32 %v4018, %v4044
    %v4050 = vmul.f32 %v4023, %v4046
    %v4051 = vmul.f32 %v4028, %v4048
    %v4052 = vmul.f32 %v4049, %v2771
    %v4053 = vmul.f32 %v4050, %v2776
    %v4054 = vmul.f32 %v4051, %v2781
    %v4056 = vsel %vm1913, %v4052, 0
    %v4059 = vsel %vm1913, %v4053, 0
    %v4062 = vsel %vm1913, %v4054, 0
    %4064 = vmatprep.subr.mxu0 0.0
    %4065 = vmatpush1.msra.mxu0 %v1898
    %4066 = vmatprep.subr.mxu0 0.0
    %4067 = vmatpush1.msra.mxu0 %v1899
    %4068 = vmatprep.subr.mxu0 0.0
    %4069 = vmatpush1.msra.mxu0 %v1900
    %4070 = vmatprep.subr.mxu0 0.0
    %4071 = vmatpush1.msra.mxu0 %v1901
    %4072 = vmatprep.subr.mxu0 0.0
    %4073 = vmatpush1.msra.mxu0 0.0
    %4074 = vmatprep.subr.mxu0 0.0
    %4075 = vmatpush1.msra.mxu0 0.0
    %4076 = vmatprep.subr.mxu0 0.0
    %4077 = vmatpush1.msra.mxu0 0.0
    %4078 = vmatprep.subr.mxu0 0.0
    %4079 = vmatpush1.msra.mxu0 0.0
    %4080 = vmatprep.subr.mxu0 0.0
    %4081 = vmatpush1.msra.mxu0 0.0
    %4082 = vmatprep.subr.mxu0 0.0
    %4083 = vmatpush1.msra.mxu0 0.0
    %4084 = vmatprep.subr.mxu0 0.0
    %4085 = vmatpush1.msra.mxu0 0.0
    %4086 = vmatprep.subr.mxu0 0.0
    %4087 = vmatpush1.msra.mxu0 0.0
    %4088 = vmatprep.subr.mxu0 0.0
    %4089 = vmatpush1.msra.mxu0 0.0
    %4090 = vmatprep.subr.mxu0 0.0
    %4091 = vmatpush1.msra.mxu0 0.0
    %4092 = vmatprep.subr.mxu0 0.0
    %4093 = vmatpush1.msra.mxu0 0.0
    %4094 = vmatprep.subr.mxu0 0.0
    %4095 = vmatpush1.msra.mxu0 0.0
    %4096 = vmatprep.subr.mxu0 0.0
    %4097 = vmatpush1.msra.mxu0 0.0
    %4098 = vmatprep.subr.mxu0 0.0
    %4099 = vmatpush1.msra.mxu0 0.0
    %4100 = vmatprep.subr.mxu0 0.0
    %4101 = vmatpush1.msra.mxu0 0.0
    %4102 = vmatprep.subr.mxu0 0.0
    %4103 = vmatpush1.msra.mxu0 0.0
    %4104 = vmatprep.subr.mxu0 0.0
    %4105 = vmatpush1.msra.mxu0 0.0
    %4106 = vmatprep.subr.mxu0 0.0
    %4107 = vmatpush1.msra.mxu0 0.0
    %4108 = vmatprep.subr.mxu0 0.0
    %4109 = vmatpush1.msra.mxu0 0.0
    %4110 = vmatprep.subr.mxu0 0.0
    %4111 = vmatpush1.msra.mxu0 0.0
    %4112 = vmatprep.subr.mxu0 0.0
    %4113 = vmatpush1.msra.mxu0 0.0
    %4114 = vmatprep.subr.mxu0 0.0
    %4115 = vmatpush1.msra.mxu0 0.0
    %4116 = vmatprep.subr.mxu0 0.0
    %4117 = vmatpush1.msra.mxu0 0.0
    %4118 = vmatprep.subr.mxu0 0.0
    %4119 = vmatpush1.msra.mxu0 0.0
    %4120 = vmatprep.subr.mxu0 0.0
    %4121 = vmatpush1.msra.mxu0 0.0
    %4122 = vmatprep.subr.mxu0 0.0
    %4123 = vmatpush1.msra.mxu0 0.0
    %4124 = vmatprep.subr.mxu0 0.0
    %4125 = vmatpush1.msra.mxu0 0.0
    %4126 = vmatprep.subr.mxu0 0.0
    %4127 = vmatpush1.msra.mxu0 0.0
    %4128 = vmatprep.mubr.f32.mxu0 0.0
    %4129 = vmatmul.mubr.f32.gmra.mrb[0].mxu0 %v4056
    %v4130 = vpop.f32.mrb[0].mxu0
    %v4131 = vadd.f32 0.0, %v4130
    %v4132 = vpop.f32.mrb[0].mxu0
    %4133 = vmatprep.mubr.f32.mxu0 0.0
    %4134 = vmatmul.mubr.f32.gmra.mrb[0].mxu0 %v4059
    %v4135 = vpop.f32.mrb[0].mxu0
    %v4136 = vadd.f32 0.0, %v4135
    %v4137 = vpop.f32.mrb[0].mxu0
    %4138 = vmatprep.mubr.f32.mxu0 0.0
    %4139 = vmatmul.mubr.f32.gmra.mrb[0].mxu0 %v4062
    %v4140 = vpop.f32.mrb[0].mxu0
    %v4141 = vadd.f32 0.0, %v4140
    %v4142 = vpop.f32.mrb[0].mxu0
    %4143 = vdwg.mxu0
    %4144 = vmatprep.subr.mxu0 0.0
    %4145 = vmatpush1.msra.mxu0 %v4131
    %4146 = vmatprep.subr.mxu0 0.0
    %4147 = vmatpush1.msra.mxu0 %v4136
    %4148 = vmatprep.subr.mxu0 0.0
    %4149 = vmatpush1.msra.mxu0 %v4141
    %4150 = vmatprep.subr.mxu0 0.0
    %4151 = vmatpush1.msra.mxu0 0.0
    %4152 = vmatprep.subr.mxu0 0.0
    %4153 = vmatpush1.msra.mxu0 0.0
    %4154 = vmatprep.subr.mxu0 0.0
    %4155 = vmatpush1.msra.mxu0 0.0
    %4156 = vmatprep.subr.mxu0 0.0
    %4157 = vmatpush1.msra.mxu0 0.0
    %4158 = vmatprep.subr.mxu0 0.0
    %4159 = vmatpush1.msra.mxu0 0.0
    %4160 = vmatprep.subr.mxu0 0.0
    %4161 = vmatpush1.msra.mxu0 0.0
    %4162 = vmatprep.subr.mxu0 0.0
    %4163 = vmatpush1.msra.mxu0 0.0
    %4164 = vmatprep.subr.mxu0 0.0
    %4165 = vmatpush1.msra.mxu0 0.0
    %4166 = vmatprep.subr.mxu0 0.0
    %4167 = vmatpush1.msra.mxu0 0.0
    %4168 = vmatprep.subr.mxu0 0.0
    %4169 = vmatpush1.msra.mxu0 0.0
    %4170 = vmatprep.subr.mxu0 0.0
    %4171 = vmatpush1.msra.mxu0 0.0
    %4172 = vmatprep.subr.mxu0 0.0
    %4173 = vmatpush1.msra.mxu0 0.0
    %4174 = vmatprep.subr.mxu0 0.0
    %4175 = vmatpush1.msra.mxu0 0.0
    %4176 = vmatprep.subr.mxu0 0.0
    %4177 = vmatpush1.msra.mxu0 0.0
    %4178 = vmatprep.subr.mxu0 0.0
    %4179 = vmatpush1.msra.mxu0 0.0
    %4180 = vmatprep.subr.mxu0 0.0
    %4181 = vmatpush1.msra.mxu0 0.0
    %4182 = vmatprep.subr.mxu0 0.0
    %4183 = vmatpush1.msra.mxu0 0.0
    %4184 = vmatprep.subr.mxu0 0.0
    %4185 = vmatpush1.msra.mxu0 0.0
    %4186 = vmatprep.subr.mxu0 0.0
    %4187 = vmatpush1.msra.mxu0 0.0
    %4188 = vmatprep.subr.mxu0 0.0
    %4189 = vmatpush1.msra.mxu0 0.0
    %4190 = vmatprep.subr.mxu0 0.0
    %4191 = vmatpush1.msra.mxu0 0.0
    %4192 = vmatprep.subr.mxu0 0.0
    %4193 = vmatpush1.msra.mxu0 0.0
    %4194 = vmatprep.subr.mxu0 0.0
    %4195 = vmatpush1.msra.mxu0 0.0
    %4196 = vmatprep.subr.mxu0 0.0
    %4197 = vmatpush1.msra.mxu0 0.0
    %4198 = vmatprep.subr.mxu0 0.0
    %4199 = vmatpush1.msra.mxu0 0.0
    %4200 = vmatprep.subr.mxu0 0.0
    %4201 = vmatpush1.msra.mxu0 0.0
    %4202 = vmatprep.subr.mxu0 0.0
    %4203 = vmatpush1.msra.mxu0 0.0
    %4204 = vmatprep.subr.mxu0 0.0
    %4205 = vmatpush1.msra.mxu0 0.0
    %4206 = vmatprep.subr.mxu0 0.0
    %4207 = vmatpush1.msra.mxu0 0.0
    %4208 = vmatprep.mubr.f32.mxu0 0.0
    %4209 = vmatmul.mubr.f32.gmra.mrb[0].mxu0 %v2877
    %v4210 = vpop.f32.mrb[0].mxu0
    %v4211 = vadd.f32 0.0, %v4210
    %v4212 = vpop.f32.mrb[0].mxu0
    %4213 = vmatprep.mubr.f32.mxu0 0.0
    %4214 = vmatmul.mubr.f32.gmra.mrb[0].mxu0 %v2880
    %v4215 = vpop.f32.mrb[0].mxu0
    %v4216 = vadd.f32 0.0, %v4215
    %v4217 = vpop.f32.mrb[0].mxu0
    %4218 = vmatprep.mubr.f32.mxu0 0.0
    %4219 = vmatmul.mubr.f32.gmra.mrb[0].mxu0 %v2883
    %v4220 = vpop.f32.mrb[0].mxu0
    %v4221 = vadd.f32 0.0, %v4220
    %v4222 = vpop.f32.mrb[0].mxu0
    %4223 = vdwg.mxu0
    %v4224 = vmin.f32 %v4211, %v4216
    %v4225 = vmax.f32 %v4211, %v4216
    %v4226 = vmin.f32 %v4225, %v4221
    %v4227 = vmax.f32 %v4225, %v4221
    %v4228 = vmin.f32 %v4224, %v4226
    %v4229 = vmax.f32 %v4224, %v4226
    %v4230 = vmul.f32 %v4228, %v2974
    %v4231 = vmul.f32 %v4229, %v2979
    %v4232 = vadd.f32 %v4230, %v4231
    %v4233 = vmul.f32 %v4227, %v2985
    %v4234 = vadd.f32 %v4232, %v4233
    %s4235 = scalar_lea.vmem [#allocation20], 32
    %v4236 = vld [vmem:[%s4235] sm:$0xff]
    %v4237 = vld [vmem:[%s4235 + $0x8] sm:$0xff]
    %v4238 = vld [vmem:[%s4235 + $0x10] sm:$0xff]
    %v4239 = vld [vmem:[%s4235 + $0x18] sm:$0xff]
    %s4240 = scalar_lea.vmem [#allocation22], 32
    %v4241 = vld [vmem:[%s4240] sm:$0xff]
    %v4242 = vld [vmem:[%s4240 + $0x8] sm:$0xff]
    %v4243 = vld [vmem:[%s4240 + $0x10] sm:$0xff]
    %v4244 = vld [vmem:[%s4240 + $0x18] sm:$0xff]
    %v4246 = vsel %vm1913, %v4234, 0
    %4248 = vmatprep.subr.mxu0 0.0
    %4249 = vmatpush1.msra.mxu0 %v4241
    %4250 = vmatprep.subr.mxu0 0.0
    %4251 = vmatpush1.msra.mxu0 %v4242
    %4252 = vmatprep.subr.mxu0 0.0
    %4253 = vmatpush1.msra.mxu0 %v4243
    %4254 = vmatprep.subr.mxu0 0.0
    %4255 = vmatpush1.msra.mxu0 %v4244
    %4256 = vmatprep.subr.mxu0 0.0
    %4257 = vmatpush1.msra.mxu0 0.0
    %4258 = vmatprep.subr.mxu0 0.0
    %4259 = vmatpush1.msra.mxu0 0.0
    %4260 = vmatprep.subr.mxu0 0.0
    %4261 = vmatpush1.msra.mxu0 0.0
    %4262 = vmatprep.subr.mxu0 0.0
    %4263 = vmatpush1.msra.mxu0 0.0
    %4264 = vmatprep.subr.mxu0 0.0
    %4265 = vmatpush1.msra.mxu0 0.0
    %4266 = vmatprep.subr.mxu0 0.0
    %4267 = vmatpush1.msra.mxu0 0.0
    %4268 = vmatprep.subr.mxu0 0.0
    %4269 = vmatpush1.msra.mxu0 0.0
    %4270 = vmatprep.subr.mxu0 0.0
    %4271 = vmatpush1.msra.mxu0 0.0
    %4272 = vmatprep.subr.mxu0 0.0
    %4273 = vmatpush1.msra.mxu0 0.0
    %4274 = vmatprep.subr.mxu0 0.0
    %4275 = vmatpush1.msra.mxu0 0.0
    %4276 = vmatprep.subr.mxu0 0.0
    %4277 = vmatpush1.msra.mxu0 0.0
    %4278 = vmatprep.subr.mxu0 0.0
    %4279 = vmatpush1.msra.mxu0 0.0
    %4280 = vmatprep.subr.mxu0 0.0
    %4281 = vmatpush1.msra.mxu0 0.0
    %4282 = vmatprep.subr.mxu0 0.0
    %4283 = vmatpush1.msra.mxu0 0.0
    %4284 = vmatprep.subr.mxu0 0.0
    %4285 = vmatpush1.msra.mxu0 0.0
    %4286 = vmatprep.subr.mxu0 0.0
    %4287 = vmatpush1.msra.mxu0 0.0
    %4288 = vmatprep.subr.mxu0 0.0
    %4289 = vmatpush1.msra.mxu0 0.0
    %4290 = vmatprep.subr.mxu0 0.0
    %4291 = vmatpush1.msra.mxu0 0.0
    %4292 = vmatprep.subr.mxu0 0.0
    %4293 = vmatpush1.msra.mxu0 0.0
    %4294 = vmatprep.subr.mxu0 0.0
    %4295 = vmatpush1.msra.mxu0 0.0
    %4296 = vmatprep.subr.mxu0 0.0
    %4297 = vmatpush1.msra.mxu0 0.0
    %4298 = vmatprep.subr.mxu0 0.0
    %4299 = vmatpush1.msra.mxu0 0.0
    %4300 = vmatprep.subr.mxu0 0.0
    %4301 = vmatpush1.msra.mxu0 0.0
    %4302 = vmatprep.subr.mxu0 0.0
    %4303 = vmatpush1.msra.mxu0 0.0
    %4304 = vmatprep.subr.mxu0 0.0
    %4305 = vmatpush1.msra.mxu0 0.0
    %4306 = vmatprep.subr.mxu0 0.0
    %4307 = vmatpush1.msra.mxu0 0.0
    %4308 = vmatprep.subr.mxu0 0.0
    %4309 = vmatpush1.msra.mxu0 0.0
    %4310 = vmatprep.subr.mxu0 0.0
    %4311 = vmatpush1.msra.mxu0 0.0
    %4312 = vmatprep.mubr.f32.mxu0 0.0
    %4313 = vmatmul.mubr.f32.gmra.mrb[0].mxu0 %v4246
    %v4314 = vpop.f32.mrb[0].mxu0
    %v4315 = vadd.f32 0.0, %v4314
    %v4316 = vpop.f32.mrb[0].mxu0
    %4317 = vdwg.mxu0
    %4318 = vmatprep.subr.mxu0 0.0
    %4319 = vmatpush1.msra.mxu0 %v4236
    %4320 = vmatprep.subr.mxu0 0.0
    %4321 = vmatpush1.msra.mxu0 %v4237
    %4322 = vmatprep.subr.mxu0 0.0
    %4323 = vmatpush1.msra.mxu0 %v4238
    %4324 = vmatprep.subr.mxu0 0.0
    %4325 = vmatpush1.msra.mxu0 %v4239
    %4326 = vmatprep.subr.mxu0 0.0
    %4327 = vmatpush1.msra.mxu0 0.0
    %4328 = vmatprep.subr.mxu0 0.0
    %4329 = vmatpush1.msra.mxu0 0.0
    %4330 = vmatprep.subr.mxu0 0.0
    %4331 = vmatpush1.msra.mxu0 0.0
    %4332 = vmatprep.subr.mxu0 0.0
    %4333 = vmatpush1.msra.mxu0 0.0
    %4334 = vmatprep.subr.mxu0 0.0
    %4335 = vmatpush1.msra.mxu0 0.0
    %4336 = vmatprep.subr.mxu0 0.0
    %4337 = vmatpush1.msra.mxu0 0.0
    %4338 = vmatprep.subr.mxu0 0.0
    %4339 = vmatpush1.msra.mxu0 0.0
    %4340 = vmatprep.subr.mxu0 0.0
    %4341 = vmatpush1.msra.mxu0 0.0
    %4342 = vmatprep.subr.mxu0 0.0
    %4343 = vmatpush1.msra.mxu0 0.0
    %4344 = vmatprep.subr.mxu0 0.0
    %4345 = vmatpush1.msra.mxu0 0.0
    %4346 = vmatprep.subr.mxu0 0.0
    %4347 = vmatpush1.msra.mxu0 0.0
    %4348 = vmatprep.subr.mxu0 0.0
    %4349 = vmatpush1.msra.mxu0 0.0
    %4350 = vmatprep.subr.mxu0 0.0
    %4351 = vmatpush1.msra.mxu0 0.0
    %4352 = vmatprep.subr.mxu0 0.0
    %4353 = vmatpush1.msra.mxu0 0.0
    %4354 = vmatprep.subr.mxu0 0.0
    %4355 = vmatpush1.msra.mxu0 0.0
    %4356 = vmatprep.subr.mxu0 0.0
    %4357 = vmatpush1.msra.mxu0 0.0
    %4358 = vmatprep.subr.mxu0 0.0
    %4359 = vmatpush1.msra.mxu0 0.0
    %4360 = vmatprep.subr.mxu0 0.0
    %4361 = vmatpush1.msra.mxu0 0.0
    %4362 = vmatprep.subr.mxu0 0.0
    %4363 = vmatpush1.msra.mxu0 0.0
    %4364 = vmatprep.subr.mxu0 0.0
    %4365 = vmatpush1.msra.mxu0 0.0
    %4366 = vmatprep.subr.mxu0 0.0
    %4367 = vmatpush1.msra.mxu0 0.0
    %4368 = vmatprep.subr.mxu0 0.0
    %4369 = vmatpush1.msra.mxu0 0.0
    %4370 = vmatprep.subr.mxu0 0.0
    %4371 = vmatpush1.msra.mxu0 0.0
    %4372 = vmatprep.subr.mxu0 0.0
    %4373 = vmatpush1.msra.mxu0 0.0
    %4374 = vmatprep.subr.mxu0 0.0
    %4375 = vmatpush1.msra.mxu0 0.0
    %4376 = vmatprep.subr.mxu0 0.0
    %4377 = vmatpush1.msra.mxu0 0.0
    %4378 = vmatprep.subr.mxu0 0.0
    %4379 = vmatpush1.msra.mxu0 0.0
    %4380 = vmatprep.subr.mxu0 0.0
    %4381 = vmatpush1.msra.mxu0 0.0
    %4382 = vmatprep.mubr.f32.mxu0 0.0
    %4383 = vmatmul.mubr.f32.gmra.mrb[0].mxu0 %v3321
    %v4384 = vpop.f32.mrb[0].mxu0
    %v4385 = vadd.f32 %v4315, %v4384
    %v4386 = vpop.f32.mrb[0].mxu0
    %4387 = vdwg.mxu0
    %s4388 = scalar_lea.vmem %s59, 8
    %v4389 = vld [vmem:[%s4388] sm:$0x1f]
    %v4391 = vsel %vm1815, %v4389, 0
    %4393 = vmatprep.subr.mxu0 0.0
    %4394 = vmatpush1.msra.mxu0 %v4391
    %4395 = vmatprep.subr.mxu0 0.0
    %4396 = vmatpush1.msra.mxu0 0.0
    %4397 = vmatprep.subr.mxu0 0.0
    %4398 = vmatpush1.msra.mxu0 0.0
    %4399 = vmatprep.subr.mxu0 0.0
    %4400 = vmatpush1.msra.mxu0 0.0
    %4401 = vmatprep.subr.mxu0 0.0
    %4402 = vmatpush1.msra.mxu0 0.0
    %4403 = vmatprep.subr.mxu0 0.0
    %4404 = vmatpush1.msra.mxu0 0.0
    %4405 = vmatprep.subr.mxu0 0.0
    %4406 = vmatpush1.msra.mxu0 0.0
    %4407 = vmatprep.subr.mxu0 0.0
    %4408 = vmatpush1.msra.mxu0 0.0
    %4409 = vmatprep.subr.mxu0 0.0
    %4410 = vmatpush1.msra.mxu0 0.0
    %4411 = vmatprep.subr.mxu0 0.0
    %4412 = vmatpush1.msra.mxu0 0.0
    %4413 = vmatprep.subr.mxu0 0.0
    %4414 = vmatpush1.msra.mxu0 0.0
    %4415 = vmatprep.subr.mxu0 0.0
    %4416 = vmatpush1.msra.mxu0 0.0
    %4417 = vmatprep.subr.mxu0 0.0
    %4418 = vmatpush1.msra.mxu0 0.0
    %4419 = vmatprep.subr.mxu0 0.0
    %4420 = vmatpush1.msra.mxu0 0.0
    %4421 = vmatprep.subr.mxu0 0.0
    %4422 = vmatpush1.msra.mxu0 0.0
    %4423 = vmatprep.subr.mxu0 0.0
    %4424 = vmatpush1.msra.mxu0 0.0
    %4425 = vmatprep.subr.mxu0 0.0
    %4426 = vmatpush1.msra.mxu0 0.0
    %4427 = vmatprep.subr.mxu0 0.0
    %4428 = vmatpush1.msra.mxu0 0.0
    %4429 = vmatprep.subr.mxu0 0.0
    %4430 = vmatpush1.msra.mxu0 0.0
    %4431 = vmatprep.subr.mxu0 0.0
    %4432 = vmatpush1.msra.mxu0 0.0
    %4433 = vmatprep.subr.mxu0 0.0
    %4434 = vmatpush1.msra.mxu0 0.0
    %4435 = vmatprep.subr.mxu0 0.0
    %4436 = vmatpush1.msra.mxu0 0.0
    %4437 = vmatprep.subr.mxu0 0.0
    %4438 = vmatpush1.msra.mxu0 0.0
    %4439 = vmatprep.subr.mxu0 0.0
    %4440 = vmatpush1.msra.mxu0 0.0
    %4441 = vmatprep.subr.mxu0 0.0
    %4442 = vmatpush1.msra.mxu0 0.0
    %4443 = vmatprep.subr.mxu0 0.0
    %4444 = vmatpush1.msra.mxu0 0.0
    %4445 = vmatprep.subr.mxu0 0.0
    %4446 = vmatpush1.msra.mxu0 0.0
    %4447 = vmatprep.subr.mxu0 0.0
    %4448 = vmatpush1.msra.mxu0 0.0
    %4449 = vmatprep.subr.mxu0 0.0
    %4450 = vmatpush1.msra.mxu0 0.0
    %4451 = vmatprep.subr.mxu0 0.0
    %4452 = vmatpush1.msra.mxu0 0.0
    %4453 = vmatprep.subr.mxu0 0.0
    %4454 = vmatpush1.msra.mxu0 0.0
    %4455 = vmatprep.subr.mxu0 0.0
    %4456 = vmatpush1.msra.mxu0 0.0
    %4457 = vmatprep.mubr.f32.mxu0 0.0
    %4458 = vmatmul.mubr.f32.gmra.mrb[0].mxu0 %v1813
    %v4459 = vpop.f32.mrb[0].mxu0
    %v4460 = vadd.f32 0.0, %v4459
    %v4461 = vpop.f32.mrb[0].mxu0
    %4462 = vdwg.mxu0
    %v4463 = vadd.f32 %v4385, %v4460
    %s4464 = scalar_lea.vmem [#allocation23], 1
    %v4465 = vld [vmem:[%s4464] sm:$0x1]
    %v4467 = vlaneseq
    %v4468 = vshrl.u32 %v4467, 7
    %v4469 = vsub.s32 0, %v4468
    %v4470 = vrot.slane %v4465, %v4469
    %v4472 = vadd.f32 %v4463, %v4470
    %v4473 = vsub.f32 0.0, %v4472
    %v4474 = vmul.f32 %v4473, 1.442695
    %v4475 = vpow.pop %v4474
    %v4476 = vadd.f32 %v4475, 1.0
    %v4477 = vrcp.pop %v4476
    %v4478 = vmul.f32 1.0, %v4477
    %v4479 = vmul.f32 %v4472, %v4478
    %s4480 = scalar_lea.vmem [#allocation25], 32
    %v4481 = vld [vmem:[%s4480] sm:$0xff]
    %v4482 = vld [vmem:[%s4480 + $0x8] sm:$0xff]
    %v4483 = vld [vmem:[%s4480 + $0x10] sm:$0xff]
    %v4484 = vld [vmem:[%s4480 + $0x18] sm:$0xff]
    %v4486 = vsel %vm1913, %v4479, 0
    %4488 = vmatprep.subr.mxu0 0.0
    %4489 = vmatpush1.msra.mxu0 %v4481
    %4490 = vmatprep.subr.mxu0 0.0
    %4491 = vmatpush1.msra.mxu0 %v4482
    %4492 = vmatprep.subr.mxu0 0.0
    %4493 = vmatpush1.msra.mxu0 %v4483
    %4494 = vmatprep.subr.mxu0 0.0
    %4495 = vmatpush1.msra.mxu0 %v4484
    %4496 = vmatprep.subr.mxu0 0.0
    %4497 = vmatpush1.msra.mxu0 0.0
    %4498 = vmatprep.subr.mxu0 0.0
    %4499 = vmatpush1.msra.mxu0 0.0
    %4500 = vmatprep.subr.mxu0 0.0
    %4501 = vmatpush1.msra.mxu0 0.0
    %4502 = vmatprep.subr.mxu0 0.0
    %4503 = vmatpush1.msra.mxu0 0.0
    %4504 = vmatprep.subr.mxu0 0.0
    %4505 = vmatpush1.msra.mxu0 0.0
    %4506 = vmatprep.subr.mxu0 0.0
    %4507 = vmatpush1.msra.mxu0 0.0
    %4508 = vmatprep.subr.mxu0 0.0
    %4509 = vmatpush1.msra.mxu0 0.0
    %4510 = vmatprep.subr.mxu0 0.0
    %4511 = vmatpush1.msra.mxu0 0.0
    %4512 = vmatprep.subr.mxu0 0.0
    %4513 = vmatpush1.msra.mxu0 0.0
    %4514 = vmatprep.subr.mxu0 0.0
    %4515 = vmatpush1.msra.mxu0 0.0
    %4516 = vmatprep.subr.mxu0 0.0
    %4517 = vmatpush1.msra.mxu0 0.0
    %4518 = vmatprep.subr.mxu0 0.0
    %4519 = vmatpush1.msra.mxu0 0.0
    %4520 = vmatprep.subr.mxu0 0.0
    %4521 = vmatpush1.msra.mxu0 0.0
    %4522 = vmatprep.subr.mxu0 0.0
    %4523 = vmatpush1.msra.mxu0 0.0
    %4524 = vmatprep.subr.mxu0 0.0
    %4525 = vmatpush1.msra.mxu0 0.0
    %4526 = vmatprep.subr.mxu0 0.0
    %4527 = vmatpush1.msra.mxu0 0.0
    %4528 = vmatprep.subr.mxu0 0.0
    %4529 = vmatpush1.msra.mxu0 0.0
    %4530 = vmatprep.subr.mxu0 0.0
    %4531 = vmatpush1.msra.mxu0 0.0
    %4532 = vmatprep.subr.mxu0 0.0
    %4533 = vmatpush1.msra.mxu0 0.0
    %4534 = vmatprep.subr.mxu0 0.0
    %4535 = vmatpush1.msra.mxu0 0.0
    %4536 = vmatprep.subr.mxu0 0.0
    %4537 = vmatpush1.msra.mxu0 0.0
    %4538 = vmatprep.subr.mxu0 0.0
    %4539 = vmatpush1.msra.mxu0 0.0
    %4540 = vmatprep.subr.mxu0 0.0
    %4541 = vmatpush1.msra.mxu0 0.0
    %4542 = vmatprep.subr.mxu0 0.0
    %4543 = vmatpush1.msra.mxu0 0.0
    %4544 = vmatprep.subr.mxu0 0.0
    %4545 = vmatpush1.msra.mxu0 0.0
    %4546 = vmatprep.subr.mxu0 0.0
    %4547 = vmatpush1.msra.mxu0 0.0
    %4548 = vmatprep.subr.mxu0 0.0
    %4549 = vmatpush1.msra.mxu0 0.0
    %4550 = vmatprep.subr.mxu0 0.0
    %4551 = vmatpush1.msra.mxu0 0.0
    %4552 = vmatprep.mubr.f32.mxu0 0.0
    %4553 = vmatmul.mubr.f32.gmra.mrb[0].mxu0 %v4486
    %v4554 = vpop.f32.mrb[0].mxu0
    %v4555 = vadd.f32 0.0, %v4554
    %v4556 = vpop.f32.mrb[0].mxu0
    %4557 = vdwg.mxu0
    %v4558 = vadd.f32 %v3314, %v4555
    %s4559 = scalar_lea.vmem [#allocation26], 1
    %v4560 = vld [vmem:[%s4559] sm:$0x1]
    %v4562 = vlaneseq
    %v4563 = vshrl.u32 %v4562, 7
    %v4564 = vsub.s32 0, %v4563
    %v4565 = vrot.slane %v4560, %v4564
    %v4567 = vadd.f32 %v4558, %v4565
    %s4568 = scalar_lea.vmem %s39, 64
    %v4569 = vld [vmem:[%s4568] sm:$0xff]
    %v4570 = vld [vmem:[%s4568 + $0x8] sm:$0xff]
    %v4571 = vld [vmem:[%s4568 + $0x10] sm:$0xff]
    %v4572 = vld [vmem:[%s4568 + $0x18] sm:$0xff]
    %v4574 = vsel %vm1913, %v4567, 0
    %4576 = vmatprep.subr.mxu0 0.0
    %4577 = vmatpush1.msra.mxu0 %v4569
    %4578 = vmatprep.subr.mxu0 0.0
    %4579 = vmatpush1.msra.mxu0 %v4570
    %4580 = vmatprep.subr.mxu0 0.0
    %4581 = vmatpush1.msra.mxu0 %v4571
    %4582 = vmatprep.subr.mxu0 0.0
    %4583 = vmatpush1.msra.mxu0 %v4572
    %4584 = vmatprep.subr.mxu0 0.0
    %4585 = vmatpush1.msra.mxu0 0.0
    %4586 = vmatprep.subr.mxu0 0.0
    %4587 = vmatpush1.msra.mxu0 0.0
    %4588 = vmatprep.subr.mxu0 0.0
    %4589 = vmatpush1.msra.mxu0 0.0
    %4590 = vmatprep.subr.mxu0 0.0
    %4591 = vmatpush1.msra.mxu0 0.0
    %4592 = vmatprep.subr.mxu0 0.0
    %4593 = vmatpush1.msra.mxu0 0.0
    %4594 = vmatprep.subr.mxu0 0.0
    %4595 = vmatpush1.msra.mxu0 0.0
    %4596 = vmatprep.subr.mxu0 0.0
    %4597 = vmatpush1.msra.mxu0 0.0
    %4598 = vmatprep.subr.mxu0 0.0
    %4599 = vmatpush1.msra.mxu0 0.0
    %4600 = vmatprep.subr.mxu0 0.0
    %4601 = vmatpush1.msra.mxu0 0.0
    %4602 = vmatprep.subr.mxu0 0.0
    %4603 = vmatpush1.msra.mxu0 0.0
    %4604 = vmatprep.subr.mxu0 0.0
    %4605 = vmatpush1.msra.mxu0 0.0
    %4606 = vmatprep.subr.mxu0 0.0
    %4607 = vmatpush1.msra.mxu0 0.0
    %4608 = vmatprep.subr.mxu0 0.0
    %4609 = vmatpush1.msra.mxu0 0.0
    %4610 = vmatprep.subr.mxu0 0.0
    %4611 = vmatpush1.msra.mxu0 0.0
    %4612 = vmatprep.subr.mxu0 0.0
    %4613 = vmatpush1.msra.mxu0 0.0
    %4614 = vmatprep.subr.mxu0 0.0
    %4615 = vmatpush1.msra.mxu0 0.0
    %4616 = vmatprep.subr.mxu0 0.0
    %4617 = vmatpush1.msra.mxu0 0.0
    %4618 = vmatprep.subr.mxu0 0.0
    %4619 = vmatpush1.msra.mxu0 0.0
    %4620 = vmatprep.subr.mxu0 0.0
    %4621 = vmatpush1.msra.mxu0 0.0
    %4622 = vmatprep.subr.mxu0 0.0
    %4623 = vmatpush1.msra.mxu0 0.0
    %4624 = vmatprep.subr.mxu0 0.0
    %4625 = vmatpush1.msra.mxu0 0.0
    %4626 = vmatprep.subr.mxu0 0.0
    %4627 = vmatpush1.msra.mxu0 0.0
    %4628 = vmatprep.subr.mxu0 0.0
    %4629 = vmatpush1.msra.mxu0 0.0
    %4630 = vmatprep.subr.mxu0 0.0
    %4631 = vmatpush1.msra.mxu0 0.0
    %4632 = vmatprep.subr.mxu0 0.0
    %4633 = vmatpush1.msra.mxu0 0.0
    %4634 = vmatprep.subr.mxu0 0.0
    %4635 = vmatpush1.msra.mxu0 0.0
    %4636 = vmatprep.subr.mxu0 0.0
    %4637 = vmatpush1.msra.mxu0 0.0
    %4638 = vmatprep.subr.mxu0 0.0
    %4639 = vmatpush1.msra.mxu0 0.0
    %4640 = vmatprep.mubr.f32.mxu0 0.0
    %4641 = vmatmul.mubr.f32.gmra.mrb[0].mxu0 %v4574
    %v4642 = vpop.f32.mrb[0].mxu0
    %v4643 = vadd.f32 0.0, %v4642
    %v4644 = vpop.f32.mrb[0].mxu0
    %4645 = vdwg.mxu0
    %s4646 = scalar_lea.vmem %s41, 64
    %v4647 = vld [vmem:[%s4646] sm:$0xff]
    %v4648 = vld [vmem:[%s4646 + $0x8] sm:$0xff]
    %v4649 = vld [vmem:[%s4646 + $0x10] sm:$0xff]
    %v4650 = vld [vmem:[%s4646 + $0x18] sm:$0xff]
    %4651 = vmatprep.subr.mxu0 0.0
    %4652 = vmatpush1.msra.mxu0 %v4647
    %4653 = vmatprep.subr.mxu0 0.0
    %4654 = vmatpush1.msra.mxu0 %v4648
    %4655 = vmatprep.subr.mxu0 0.0
    %4656 = vmatpush1.msra.mxu0 %v4649
    %4657 = vmatprep.subr.mxu0 0.0
    %4658 = vmatpush1.msra.mxu0 %v4650
    %4659 = vmatprep.subr.mxu0 0.0
    %4660 = vmatpush1.msra.mxu0 0.0
    %4661 = vmatprep.subr.mxu0 0.0
    %4662 = vmatpush1.msra.mxu0 0.0
    %4663 = vmatprep.subr.mxu0 0.0
    %4664 = vmatpush1.msra.mxu0 0.0
    %4665 = vmatprep.subr.mxu0 0.0
    %4666 = vmatpush1.msra.mxu0 0.0
    %4667 = vmatprep.subr.mxu0 0.0
    %4668 = vmatpush1.msra.mxu0 0.0
    %4669 = vmatprep.subr.mxu0 0.0
    %4670 = vmatpush1.msra.mxu0 0.0
    %4671 = vmatprep.subr.mxu0 0.0
    %4672 = vmatpush1.msra.mxu0 0.0
    %4673 = vmatprep.subr.mxu0 0.0
    %4674 = vmatpush1.msra.mxu0 0.0
    %4675 = vmatprep.subr.mxu0 0.0
    %4676 = vmatpush1.msra.mxu0 0.0
    %4677 = vmatprep.subr.mxu0 0.0
    %4678 = vmatpush1.msra.mxu0 0.0
    %4679 = vmatprep.subr.mxu0 0.0
    %4680 = vmatpush1.msra.mxu0 0.0
    %4681 = vmatprep.subr.mxu0 0.0
    %4682 = vmatpush1.msra.mxu0 0.0
    %4683 = vmatprep.subr.mxu0 0.0
    %4684 = vmatpush1.msra.mxu0 0.0
    %4685 = vmatprep.subr.mxu0 0.0
    %4686 = vmatpush1.msra.mxu0 0.0
    %4687 = vmatprep.subr.mxu0 0.0
    %4688 = vmatpush1.msra.mxu0 0.0
    %4689 = vmatprep.subr.mxu0 0.0
    %4690 = vmatpush1.msra.mxu0 0.0
    %4691 = vmatprep.subr.mxu0 0.0
    %4692 = vmatpush1.msra.mxu0 0.0
    %4693 = vmatprep.subr.mxu0 0.0
    %4694 = vmatpush1.msra.mxu0 0.0
    %4695 = vmatprep.subr.mxu0 0.0
    %4696 = vmatpush1.msra.mxu0 0.0
    %4697 = vmatprep.subr.mxu0 0.0
    %4698 = vmatpush1.msra.mxu0 0.0
    %4699 = vmatprep.subr.mxu0 0.0
    %4700 = vmatpush1.msra.mxu0 0.0
    %4701 = vmatprep.subr.mxu0 0.0
    %4702 = vmatpush1.msra.mxu0 0.0
    %4703 = vmatprep.subr.mxu0 0.0
    %4704 = vmatpush1.msra.mxu0 0.0
    %4705 = vmatprep.subr.mxu0 0.0
    %4706 = vmatpush1.msra.mxu0 0.0
    %4707 = vmatprep.subr.mxu0 0.0
    %4708 = vmatpush1.msra.mxu0 0.0
    %4709 = vmatprep.subr.mxu0 0.0
    %4710 = vmatpush1.msra.mxu0 0.0
    %4711 = vmatprep.subr.mxu0 0.0
    %4712 = vmatpush1.msra.mxu0 0.0
    %4713 = vmatprep.subr.mxu0 0.0
    %4714 = vmatpush1.msra.mxu0 0.0
    %4715 = vmatprep.mubr.f32.mxu0 0.0
    %4716 = vmatmul.mubr.f32.gmra.mrb[0].mxu0 %v4574
    %v4717 = vpop.f32.mrb[0].mxu0
    %v4718 = vadd.f32 0.0, %v4717
    %v4719 = vpop.f32.mrb[0].mxu0
    %4720 = vdwg.mxu0
    %4721 = vmatprep.subr.mxu0 0.0
    %4722 = vmatpush1.msra.mxu0 %v4718
    %4723 = vmatprep.subr.mxu0 0.0
    %4724 = vmatpush1.msra.mxu0 0.0
    %4725 = vmatprep.subr.mxu0 0.0
    %4726 = vmatpush1.msra.mxu0 0.0
    %4727 = vmatprep.subr.mxu0 0.0
    %4728 = vmatpush1.msra.mxu0 0.0
    %4729 = vmatprep.subr.mxu0 0.0
    %4730 = vmatpush1.msra.mxu0 0.0
    %4731 = vmatprep.subr.mxu0 0.0
    %4732 = vmatpush1.msra.mxu0 0.0
    %4733 = vmatprep.subr.mxu0 0.0
    %4734 = vmatpush1.msra.mxu0 0.0
    %4735 = vmatprep.subr.mxu0 0.0
    %4736 = vmatpush1.msra.mxu0 0.0
    %4737 = vmatprep.subr.mxu0 0.0
    %4738 = vmatpush1.msra.mxu0 0.0
    %4739 = vmatprep.subr.mxu0 0.0
    %4740 = vmatpush1.msra.mxu0 0.0
    %4741 = vmatprep.subr.mxu0 0.0
    %4742 = vmatpush1.msra.mxu0 0.0
    %4743 = vmatprep.subr.mxu0 0.0
    %4744 = vmatpush1.msra.mxu0 0.0
    %4745 = vmatprep.subr.mxu0 0.0
    %4746 = vmatpush1.msra.mxu0 0.0
    %4747 = vmatprep.subr.mxu0 0.0
    %4748 = vmatpush1.msra.mxu0 0.0
    %4749 = vmatprep.subr.mxu0 0.0
    %4750 = vmatpush1.msra.mxu0 0.0
    %4751 = vmatprep.subr.mxu0 0.0
    %4752 = vmatpush1.msra.mxu0 0.0
    %4753 = vmatprep.subr.mxu0 0.0
    %4754 = vmatpush1.msra.mxu0 0.0
    %4755 = vmatprep.subr.mxu0 0.0
    %4756 = vmatpush1.msra.mxu0 0.0
    %4757 = vmatprep.subr.mxu0 0.0
    %4758 = vmatpush1.msra.mxu0 0.0
    %4759 = vmatprep.subr.mxu0 0.0
    %4760 = vmatpush1.msra.mxu0 0.0
    %4761 = vmatprep.subr.mxu0 0.0
    %4762 = vmatpush1.msra.mxu0 0.0
    %4763 = vmatprep.subr.mxu0 0.0
    %4764 = vmatpush1.msra.mxu0 0.0
    %4765 = vmatprep.subr.mxu0 0.0
    %4766 = vmatpush1.msra.mxu0 0.0
    %4767 = vmatprep.subr.mxu0 0.0
    %4768 = vmatpush1.msra.mxu0 0.0
    %4769 = vmatprep.subr.mxu0 0.0
    %4770 = vmatpush1.msra.mxu0 0.0
    %4771 = vmatprep.subr.mxu0 0.0
    %4772 = vmatpush1.msra.mxu0 0.0
    %4773 = vmatprep.subr.mxu0 0.0
    %4774 = vmatpush1.msra.mxu0 0.0
    %4775 = vmatprep.subr.mxu0 0.0
    %4776 = vmatpush1.msra.mxu0 0.0
    %4777 = vmatprep.subr.mxu0 0.0
    %4778 = vmatpush1.msra.mxu0 0.0
    %4779 = vmatprep.subr.mxu0 0.0
    %4780 = vmatpush1.msra.mxu0 0.0
    %4781 = vmatprep.subr.mxu0 0.0
    %4782 = vmatpush1.msra.mxu0 0.0
    %4783 = vmatprep.subr.mxu0 0.0
    %4784 = vmatpush1.msra.mxu0 0.0
    %4785 = vmatprep.mubr.f32.mxu0 0.0
    %4786 = vmatmul.mubr.f32.gmra.mrb[0].mxu0 %v2063
    %v4787 = vpop.f32.mrb[0].mxu0
    %v4788 = vadd.f32 0.0, %v4787
    %v4789 = vpop.f32.mrb[0].mxu0
    %4790 = vmatprep.mubr.f32.mxu0 0.0
    %4791 = vmatmul.mubr.f32.gmra.mrb[0].mxu0 %v2066
    %v4792 = vpop.f32.mrb[0].mxu0
    %v4793 = vadd.f32 0.0, %v4792
    %v4794 = vpop.f32.mrb[0].mxu0
    %4795 = vmatprep.mubr.f32.mxu0 0.0
    %4796 = vmatmul.mubr.f32.gmra.mrb[0].mxu0 %v2069
    %v4797 = vpop.f32.mrb[0].mxu0
    %v4798 = vadd.f32 0.0, %v4797
    %v4799 = vpop.f32.mrb[0].mxu0
    %4800 = vdwg.mxu0
    %4801 = vmatprep.subr.mxu0 0.0
    %4802 = vmatpush1.msra.mxu0 %v4643
    %4803 = vmatprep.subr.mxu0 0.0
    %4804 = vmatpush1.msra.mxu0 0.0
    %4805 = vmatprep.subr.mxu0 0.0
    %4806 = vmatpush1.msra.mxu0 0.0
    %4807 = vmatprep.subr.mxu0 0.0
    %4808 = vmatpush1.msra.mxu0 0.0
    %4809 = vmatprep.subr.mxu0 0.0
    %4810 = vmatpush1.msra.mxu0 0.0
    %4811 = vmatprep.subr.mxu0 0.0
    %4812 = vmatpush1.msra.mxu0 0.0
    %4813 = vmatprep.subr.mxu0 0.0
    %4814 = vmatpush1.msra.mxu0 0.0
    %4815 = vmatprep.subr.mxu0 0.0
    %4816 = vmatpush1.msra.mxu0 0.0
    %4817 = vmatprep.subr.mxu0 0.0
    %4818 = vmatpush1.msra.mxu0 0.0
    %4819 = vmatprep.subr.mxu0 0.0
    %4820 = vmatpush1.msra.mxu0 0.0
    %4821 = vmatprep.subr.mxu0 0.0
    %4822 = vmatpush1.msra.mxu0 0.0
    %4823 = vmatprep.subr.mxu0 0.0
    %4824 = vmatpush1.msra.mxu0 0.0
    %4825 = vmatprep.subr.mxu0 0.0
    %4826 = vmatpush1.msra.mxu0 0.0
    %4827 = vmatprep.subr.mxu0 0.0
    %4828 = vmatpush1.msra.mxu0 0.0
    %4829 = vmatprep.subr.mxu0 0.0
    %4830 = vmatpush1.msra.mxu0 0.0
    %4831 = vmatprep.subr.mxu0 0.0
    %4832 = vmatpush1.msra.mxu0 0.0
    %4833 = vmatprep.subr.mxu0 0.0
    %4834 = vmatpush1.msra.mxu0 0.0
    %4835 = vmatprep.subr.mxu0 0.0
    %4836 = vmatpush1.msra.mxu0 0.0
    %4837 = vmatprep.subr.mxu0 0.0
    %4838 = vmatpush1.msra.mxu0 0.0
    %4839 = vmatprep.subr.mxu0 0.0
    %4840 = vmatpush1.msra.mxu0 0.0
    %4841 = vmatprep.subr.mxu0 0.0
    %4842 = vmatpush1.msra.mxu0 0.0
    %4843 = vmatprep.subr.mxu0 0.0
    %4844 = vmatpush1.msra.mxu0 0.0
    %4845 = vmatprep.subr.mxu0 0.0
    %4846 = vmatpush1.msra.mxu0 0.0
    %4847 = vmatprep.subr.mxu0 0.0
    %4848 = vmatpush1.msra.mxu0 0.0
    %4849 = vmatprep.subr.mxu0 0.0
    %4850 = vmatpush1.msra.mxu0 0.0
    %4851 = vmatprep.subr.mxu0 0.0
    %4852 = vmatpush1.msra.mxu0 0.0
    %4853 = vmatprep.subr.mxu0 0.0
    %4854 = vmatpush1.msra.mxu0 0.0
    %4855 = vmatprep.subr.mxu0 0.0
    %4856 = vmatpush1.msra.mxu0 0.0
    %4857 = vmatprep.subr.mxu0 0.0
    %4858 = vmatpush1.msra.mxu0 0.0
    %4859 = vmatprep.subr.mxu0 0.0
    %4860 = vmatpush1.msra.mxu0 0.0
    %4861 = vmatprep.subr.mxu0 0.0
    %4862 = vmatpush1.msra.mxu0 0.0
    %4863 = vmatprep.subr.mxu0 0.0
    %4864 = vmatpush1.msra.mxu0 0.0
    %4865 = vmatprep.mubr.f32.mxu0 0.0
    %4866 = vmatmul.mubr.f32.gmra.mrb[0].mxu0 %v2152
    %v4867 = vpop.f32.mrb[0].mxu0
    %v4868 = vadd.f32 %v4788, %v4867
    %v4869 = vpop.f32.mrb[0].mxu0
    %4870 = vmatprep.mubr.f32.mxu0 0.0
    %4871 = vmatmul.mubr.f32.gmra.mrb[0].mxu0 %v2155
    %v4872 = vpop.f32.mrb[0].mxu0
    %v4873 = vadd.f32 %v4793, %v4872
    %v4874 = vpop.f32.mrb[0].mxu0
    %4875 = vmatprep.mubr.f32.mxu0 0.0
    %4876 = vmatmul.mubr.f32.gmra.mrb[0].mxu0 %v2158
    %v4877 = vpop.f32.mrb[0].mxu0
    %v4878 = vadd.f32 %v4798, %v4877
    %v4879 = vpop.f32.mrb[0].mxu0
    %4880 = vdwg.mxu0
    %s4881 = scalar_lea.vmem %s45, 64
    %v4882 = vld [vmem:[%s4881] sm:$0xff]
    %v4883 = vld [vmem:[%s4881 + $0x8] sm:$0xff]
    %v4884 = vld [vmem:[%s4881 + $0x10] sm:$0xff]
    %v4885 = vld [vmem:[%s4881 + $0x18] sm:$0xff]
    %4886 = vmatprep.subr.mxu0 0.0
    %4887 = vmatpush1.msra.mxu0 %v4882
    %4888 = vmatprep.subr.mxu0 0.0
    %4889 = vmatpush1.msra.mxu0 %v4883
    %4890 = vmatprep.subr.mxu0 0.0
    %4891 = vmatpush1.msra.mxu0 %v4884
    %4892 = vmatprep.subr.mxu0 0.0
    %4893 = vmatpush1.msra.mxu0 %v4885
    %4894 = vmatprep.subr.mxu0 0.0
    %4895 = vmatpush1.msra.mxu0 0.0
    %4896 = vmatprep.subr.mxu0 0.0
    %4897 = vmatpush1.msra.mxu0 0.0
    %4898 = vmatprep.subr.mxu0 0.0
    %4899 = vmatpush1.msra.mxu0 0.0
    %4900 = vmatprep.subr.mxu0 0.0
    %4901 = vmatpush1.msra.mxu0 0.0
    %4902 = vmatprep.subr.mxu0 0.0
    %4903 = vmatpush1.msra.mxu0 0.0
    %4904 = vmatprep.subr.mxu0 0.0
    %4905 = vmatpush1.msra.mxu0 0.0
    %4906 = vmatprep.subr.mxu0 0.0
    %4907 = vmatpush1.msra.mxu0 0.0
    %4908 = vmatprep.subr.mxu0 0.0
    %4909 = vmatpush1.msra.mxu0 0.0
    %4910 = vmatprep.subr.mxu0 0.0
    %4911 = vmatpush1.msra.mxu0 0.0
    %4912 = vmatprep.subr.mxu0 0.0
    %4913 = vmatpush1.msra.mxu0 0.0
    %4914 = vmatprep.subr.mxu0 0.0
    %4915 = vmatpush1.msra.mxu0 0.0
    %4916 = vmatprep.subr.mxu0 0.0
    %4917 = vmatpush1.msra.mxu0 0.0
    %4918 = vmatprep.subr.mxu0 0.0
    %4919 = vmatpush1.msra.mxu0 0.0
    %4920 = vmatprep.subr.mxu0 0.0
    %4921 = vmatpush1.msra.mxu0 0.0
    %4922 = vmatprep.subr.mxu0 0.0
    %4923 = vmatpush1.msra.mxu0 0.0
    %4924 = vmatprep.subr.mxu0 0.0
    %4925 = vmatpush1.msra.mxu0 0.0
    %4926 = vmatprep.subr.mxu0 0.0
    %4927 = vmatpush1.msra.mxu0 0.0
    %4928 = vmatprep.subr.mxu0 0.0
    %4929 = vmatpush1.msra.mxu0 0.0
    %4930 = vmatprep.subr.mxu0 0.0
    %4931 = vmatpush1.msra.mxu0 0.0
    %4932 = vmatprep.subr.mxu0 0.0
    %4933 = vmatpush1.msra.mxu0 0.0
    %4934 = vmatprep.subr.mxu0 0.0
    %4935 = vmatpush1.msra.mxu0 0.0
    %4936 = vmatprep.subr.mxu0 0.0
    %4937 = vmatpush1.msra.mxu0 0.0
    %4938 = vmatprep.subr.mxu0 0.0
    %4939 = vmatpush1.msra.mxu0 0.0
    %4940 = vmatprep.subr.mxu0 0.0
    %4941 = vmatpush1.msra.mxu0 0.0
    %4942 = vmatprep.subr.mxu0 0.0
    %4943 = vmatpush1.msra.mxu0 0.0
    %4944 = vmatprep.subr.mxu0 0.0
    %4945 = vmatpush1.msra.mxu0 0.0
    %4946 = vmatprep.subr.mxu0 0.0
    %4947 = vmatpush1.msra.mxu0 0.0
    %4948 = vmatprep.subr.mxu0 0.0
    %4949 = vmatpush1.msra.mxu0 0.0
    %4950 = vmatprep.mubr.f32.mxu0 0.0
    %4951 = vmatmul.mubr.f32.gmra.mrb[0].mxu0 %v2245
    %v4952 = vpop.f32.mrb[0].mxu0
    %v4953 = vadd.f32 0.0, %v4952
    %v4954 = vpop.f32.mrb[0].mxu0
    %4955 = vmatprep.mubr.f32.mxu0 0.0
    %4956 = vmatmul.mubr.f32.gmra.mrb[0].mxu0 %v2248
    %v4957 = vpop.f32.mrb[0].mxu0
    %v4958 = vadd.f32 0.0, %v4957
    %v4959 = vpop.f32.mrb[0].mxu0
    %4960 = vmatprep.mubr.f32.mxu0 0.0
    %4961 = vmatmul.mubr.f32.gmra.mrb[0].mxu0 %v2251
    %v4962 = vpop.f32.mrb[0].mxu0
    %v4963 = vadd.f32 0.0, %v4962
    %v4964 = vpop.f32.mrb[0].mxu0
    %4965 = vdwg.mxu0
    %v4966 = vadd.f32 %v4868, %v4953
    %v4967 = vadd.f32 %v4873, %v4958
    %v4968 = vadd.f32 %v4878, %v4963
    %s4969 = scalar_lea.vmem [#allocation16], 4
    %v4970 = vld [vmem:[%s4969] sm:$0x3]
    %v4972 = vsel %vm2347, %v4970, 0
    %4974 = vmatprep.subr.mxu0 0.0
    %4975 = vmatpush1.msra.mxu0 %v4972
    %4976 = vmatprep.subr.mxu0 0.0
    %4977 = vmatpush1.msra.mxu0 0.0
    %4978 = vmatprep.subr.mxu0 0.0
    %4979 = vmatpush1.msra.mxu0 0.0
    %4980 = vmatprep.subr.mxu0 0.0
    %4981 = vmatpush1.msra.mxu0 0.0
    %4982 = vmatprep.subr.mxu0 0.0
    %4983 = vmatpush1.msra.mxu0 0.0
    %4984 = vmatprep.subr.mxu0 0.0
    %4985 = vmatpush1.msra.mxu0 0.0
    %4986 = vmatprep.subr.mxu0 0.0
    %4987 = vmatpush1.msra.mxu0 0.0
    %4988 = vmatprep.subr.mxu0 0.0
    %4989 = vmatpush1.msra.mxu0 0.0
    %4990 = vmatprep.subr.mxu0 0.0
    %4991 = vmatpush1.msra.mxu0 0.0
    %4992 = vmatprep.subr.mxu0 0.0
    %4993 = vmatpush1.msra.mxu0 0.0
    %4994 = vmatprep.subr.mxu0 0.0
    %4995 = vmatpush1.msra.mxu0 0.0
    %4996 = vmatprep.subr.mxu0 0.0
    %4997 = vmatpush1.msra.mxu0 0.0
    %4998 = vmatprep.subr.mxu0 0.0
    %4999 = vmatpush1.msra.mxu0 0.0
    %5000 = vmatprep.subr.mxu0 0.0
    %5001 = vmatpush1.msra.mxu0 0.0
    %5002 = vmatprep.subr.mxu0 0.0
    %5003 = vmatpush1.msra.mxu0 0.0
    %5004 = vmatprep.subr.mxu0 0.0
    %5005 = vmatpush1.msra.mxu0 0.0
    %5006 = vmatprep.subr.mxu0 0.0
    %5007 = vmatpush1.msra.mxu0 0.0
    %5008 = vmatprep.subr.mxu0 0.0
    %5009 = vmatpush1.msra.mxu0 0.0
    %5010 = vmatprep.subr.mxu0 0.0
    %5011 = vmatpush1.msra.mxu0 0.0
    %5012 = vmatprep.subr.mxu0 0.0
    %5013 = vmatpush1.msra.mxu0 0.0
    %5014 = vmatprep.subr.mxu0 0.0
    %5015 = vmatpush1.msra.mxu0 0.0
    %5016 = vmatprep.subr.mxu0 0.0
    %5017 = vmatpush1.msra.mxu0 0.0
    %5018 = vmatprep.subr.mxu0 0.0
    %5019 = vmatpush1.msra.mxu0 0.0
    %5020 = vmatprep.subr.mxu0 0.0
    %5021 = vmatpush1.msra.mxu0 0.0
    %5022 = vmatprep.subr.mxu0 0.0
    %5023 = vmatpush1.msra.mxu0 0.0
    %5024 = vmatprep.subr.mxu0 0.0
    %5025 = vmatpush1.msra.mxu0 0.0
    %5026 = vmatprep.subr.mxu0 0.0
    %5027 = vmatpush1.msra.mxu0 0.0
    %5028 = vmatprep.subr.mxu0 0.0
    %5029 = vmatpush1.msra.mxu0 0.0
    %5030 = vmatprep.subr.mxu0 0.0
    %5031 = vmatpush1.msra.mxu0 0.0
    %5032 = vmatprep.subr.mxu0 0.0
    %5033 = vmatpush1.msra.mxu0 0.0
    %5034 = vmatprep.subr.mxu0 0.0
    %5035 = vmatpush1.msra.mxu0 0.0
    %5036 = vmatprep.subr.mxu0 0.0
    %5037 = vmatpush1.msra.mxu0 0.0
    %5038 = vmatprep.mubr.f32.mxu0 0.0
    %5039 = vmatmul.mubr.f32.gmra.mrb[0].mxu0 %v2339
    %v5040 = vpop.f32.mrb[0].mxu0
    %v5041 = vadd.f32 0.0, %v5040
    %v5042 = vpop.f32.mrb[0].mxu0
    %5043 = vmatprep.mubr.f32.mxu0 0.0
    %5044 = vmatmul.mubr.f32.gmra.mrb[0].mxu0 %v2342
    %v5045 = vpop.f32.mrb[0].mxu0
    %v5046 = vadd.f32 0.0, %v5045
    %v5047 = vpop.f32.mrb[0].mxu0
    %5048 = vmatprep.mubr.f32.mxu0 0.0
    %5049 = vmatmul.mubr.f32.gmra.mrb[0].mxu0 %v2345
    %v5050 = vpop.f32.mrb[0].mxu0
    %v5051 = vadd.f32 0.0, %v5050
    %v5052 = vpop.f32.mrb[0].mxu0
    %5053 = vdwg.mxu0
    %v5054 = vadd.f32 %v4966, %v5041
    %v5055 = vadd.f32 %v4967, %v5046
    %v5056 = vadd.f32 %v4968, %v5051
    %s5057 = scalar_lea.vmem [#allocation17], 2
    %v5058 = vld [vmem:[%s5057] sm:$0x1]
    %v5060 = vlaneseq
    %v5061 = vshrl.u32 %v5060, 7
    %v5062 = vsub.s32 0, %v5061
    %v5063 = vrot.slane %v5058, %v5062
    %v5065 = vadd.f32 %v5054, %v5063
    %v5066 = vadd.f32 %v5055, %v5063
    %v5067 = vadd.f32 %v5056, %v5063
    %s5068 = scalar_lea.vmem %s43, 32
    %v5069 = vld [vmem:[%s5068] sm:$0xff]
    %v5070 = vld [vmem:[%s5068 + $0x8] sm:$0x1]
    %v5071 = vlaneseq
    %v5072 = vshrl.u32 %v5071, 7
    %v5073 = vsub.s32 0, %v5072
    %v5074 = vrot.slane %v5069, %v5073
    %v5075 = vmul.f32 %v2449, %v5074
    %v5076 = vmul.f32 %v2454, %v5074
    %v5077 = vmul.f32 %v2459, %v5074
    %v5078 = vadd.f32 %v5065, %v5075
    %v5079 = vadd.f32 %v5066, %v5076
    %v5080 = vadd.f32 %v5067, %v5077
    %v5081 = vlaneseq
    %v5082 = vshrl.u32 %v5081, 7
    %v5083 = vsub.s32 1, %v5082
    %v5084 = vrot.slane %v5069, %v5083
    %v5085 = vmul.f32 %v2474, %v5084
    %v5086 = vmul.f32 %v2479, %v5084
    %v5087 = vmul.f32 %v2484, %v5084
    %v5088 = vadd.f32 %v5078, %v5085
    %v5089 = vadd.f32 %v5079, %v5086
    %v5090 = vadd.f32 %v5080, %v5087
    %v5091 = vlaneseq
    %v5092 = vshrl.u32 %v5091, 7
    %v5093 = vsub.s32 2, %v5092
    %v5094 = vrot.slane %v5069, %v5093
    %v5095 = vmul.f32 %v2499, %v5094
    %v5096 = vmul.f32 %v2504, %v5094
    %v5097 = vmul.f32 %v2509, %v5094
    %v5098 = vadd.f32 %v5088, %v5095
    %v5099 = vadd.f32 %v5089, %v5096
    %v5100 = vadd.f32 %v5090, %v5097
    %v5101 = vlaneseq
    %v5102 = vshrl.u32 %v5101, 7
    %v5103 = vsub.s32 3, %v5102
    %v5104 = vrot.slane %v5069, %v5103
    %v5105 = vmul.f32 %v2474, %v5104
    %v5106 = vmul.f32 %v2479, %v5104
    %v5107 = vmul.f32 %v2484, %v5104
    %v5108 = vadd.f32 %v5098, %v5105
    %v5109 = vadd.f32 %v5099, %v5106
    %v5110 = vadd.f32 %v5100, %v5107
    %v5111 = vlaneseq
    %v5112 = vshrl.u32 %v5111, 7
    %v5113 = vsub.s32 4, %v5112
    %v5114 = vrot.slane %v5069, %v5113
    %v5115 = vmul.f32 %v2534, %v5114
    %v5116 = vmul.f32 %v2539, %v5114
    %v5117 = vmul.f32 %v2544, %v5114
    %v5118 = vadd.f32 %v5108, %v5115
    %v5119 = vadd.f32 %v5109, %v5116
    %v5120 = vadd.f32 %v5110, %v5117
    %v5121 = vlaneseq
    %v5122 = vshrl.u32 %v5121, 7
    %v5123 = vsub.s32 5, %v5122
    %v5124 = vrot.slane %v5069, %v5123
    %v5125 = vmul.f32 %v2559, %v5124
    %v5126 = vmul.f32 %v2564, %v5124
    %v5127 = vmul.f32 %v2569, %v5124
    %v5128 = vadd.f32 %v5118, %v5125
    %v5129 = vadd.f32 %v5119, %v5126
    %v5130 = vadd.f32 %v5120, %v5127
    %v5131 = vlaneseq
    %v5132 = vshrl.u32 %v5131, 7
    %v5133 = vsub.s32 6, %v5132
    %v5134 = vrot.slane %v5069, %v5133
    %v5135 = vmul.f32 %v2499, %v5134
    %v5136 = vmul.f32 %v2504, %v5134
    %v5137 = vmul.f32 %v2509, %v5134
    %v5138 = vadd.f32 %v5128, %v5135
    %v5139 = vadd.f32 %v5129, %v5136
    %v5140 = vadd.f32 %v5130, %v5137
    %v5141 = vlaneseq
    %v5142 = vshrl.u32 %v5141, 7
    %v5143 = vsub.s32 7, %v5142
    %v5144 = vrot.slane %v5069, %v5143
    %v5145 = vmul.f32 %v2559, %v5144
    %v5146 = vmul.f32 %v2564, %v5144
    %v5147 = vmul.f32 %v2569, %v5144
    %v5148 = vadd.f32 %v5138, %v5145
    %v5149 = vadd.f32 %v5139, %v5146
    %v5150 = vadd.f32 %v5140, %v5147
    %v5151 = vlaneseq
    %v5152 = vshrl.u32 %v5151, 7
    %v5153 = vsub.s32 0, %v5152
    %v5154 = vrot.slane %v5070, %v5153
    %v5155 = vmul.f32 %v2604, %v5154
    %v5156 = vmul.f32 %v2609, %v5154
    %v5157 = vmul.f32 %v2614, %v5154
    %v5158 = vadd.f32 %v5148, %v5155
    %v5159 = vadd.f32 %v5149, %v5156
    %v5160 = vadd.f32 %v5150, %v5157
    %v5161 = vsub.f32 0.0, %v5158
    %v5162 = vsub.f32 0.0, %v5159
    %v5163 = vsub.f32 0.0, %v5160
    %v5164 = vmul.f32 %v5161, 1.442695
    %v5165 = vpow.pop %v5164
    %v5166 = vmul.f32 %v5162, 1.442695
    %v5167 = vpow.pop %v5166
    %v5168 = vmul.f32 %v5163, 1.442695
    %v5169 = vpow.pop %v5168
    %v5170 = vadd.f32 %v5165, 1.0
    %v5171 = vadd.f32 %v5167, 1.0
    %v5172 = vadd.f32 %v5169, 1.0
    %v5173 = vrcp.pop %v5170
    %v5174 = vmul.f32 1.0, %v5173
    %v5175 = vrcp.pop %v5171
    %v5176 = vmul.f32 1.0, %v5175
    %v5177 = vrcp.pop %v5172
    %v5178 = vmul.f32 1.0, %v5177
    %v5179 = vmul.f32 %v5158, %v5174
    %v5180 = vmul.f32 %v5159, %v5176
    %v5181 = vmul.f32 %v5160, %v5178
    %s5182 = scalar_lea.vmem %s51, 64
    %v5183 = vld [vmem:[%s5182] sm:$0xff]
    %v5184 = vld [vmem:[%s5182 + $0x8] sm:$0xff]
    %v5185 = vld [vmem:[%s5182 + $0x10] sm:$0xff]
    %v5186 = vld [vmem:[%s5182 + $0x18] sm:$0xff]
    %s5187 = scalar_lea.vmem [#allocation19], 2
    %v5188 = vld [vmem:[%s5187] sm:$0x1]
    %v5190 = vlaneseq
    %v5191 = vshrl.u32 %v5190, 7
    %v5192 = vsub.s32 0, %v5191
    %v5193 = vrot.slane %v5188, %v5192
    %v5196 = vsel %vm1913, %v5179, 0
    %v5199 = vsel %vm1913, %v5180, 0
    %v5202 = vsel %vm1913, %v5181, 0
    %5204 = vmatprep.subr.mxu0 0.0
    %5205 = vmatpush1.msra.mxu0 %v5183
    %5206 = vmatprep.subr.mxu0 0.0
    %5207 = vmatpush1.msra.mxu0 %v5184
    %5208 = vmatprep.subr.mxu0 0.0
    %5209 = vmatpush1.msra.mxu0 %v5185
    %5210 = vmatprep.subr.mxu0 0.0
    %5211 = vmatpush1.msra.mxu0 %v5186
    %5212 = vmatprep.subr.mxu0 0.0
    %5213 = vmatpush1.msra.mxu0 0.0
    %5214 = vmatprep.subr.mxu0 0.0
    %5215 = vmatpush1.msra.mxu0 0.0
    %5216 = vmatprep.subr.mxu0 0.0
    %5217 = vmatpush1.msra.mxu0 0.0
    %5218 = vmatprep.subr.mxu0 0.0
    %5219 = vmatpush1.msra.mxu0 0.0
    %5220 = vmatprep.subr.mxu0 0.0
    %5221 = vmatpush1.msra.mxu0 0.0
    %5222 = vmatprep.subr.mxu0 0.0
    %5223 = vmatpush1.msra.mxu0 0.0
    %5224 = vmatprep.subr.mxu0 0.0
    %5225 = vmatpush1.msra.mxu0 0.0
    %5226 = vmatprep.subr.mxu0 0.0
    %5227 = vmatpush1.msra.mxu0 0.0
    %5228 = vmatprep.subr.mxu0 0.0
    %5229 = vmatpush1.msra.mxu0 0.0
    %5230 = vmatprep.subr.mxu0 0.0
    %5231 = vmatpush1.msra.mxu0 0.0
    %5232 = vmatprep.subr.mxu0 0.0
    %5233 = vmatpush1.msra.mxu0 0.0
    %5234 = vmatprep.subr.mxu0 0.0
    %5235 = vmatpush1.msra.mxu0 0.0
    %5236 = vmatprep.subr.mxu0 0.0
    %5237 = vmatpush1.msra.mxu0 0.0
    %5238 = vmatprep.subr.mxu0 0.0
    %5239 = vmatpush1.msra.mxu0 0.0
    %5240 = vmatprep.subr.mxu0 0.0
    %5241 = vmatpush1.msra.mxu0 0.0
    %5242 = vmatprep.subr.mxu0 0.0
    %5243 = vmatpush1.msra.mxu0 0.0
    %5244 = vmatprep.subr.mxu0 0.0
    %5245 = vmatpush1.msra.mxu0 0.0
    %5246 = vmatprep.subr.mxu0 0.0
    %5247 = vmatpush1.msra.mxu0 0.0
    %5248 = vmatprep.subr.mxu0 0.0
    %5249 = vmatpush1.msra.mxu0 0.0
    %5250 = vmatprep.subr.mxu0 0.0
    %5251 = vmatpush1.msra.mxu0 0.0
    %5252 = vmatprep.subr.mxu0 0.0
    %5253 = vmatpush1.msra.mxu0 0.0
    %5254 = vmatprep.subr.mxu0 0.0
    %5255 = vmatpush1.msra.mxu0 0.0
    %5256 = vmatprep.subr.mxu0 0.0
    %5257 = vmatpush1.msra.mxu0 0.0
    %5258 = vmatprep.subr.mxu0 0.0
    %5259 = vmatpush1.msra.mxu0 0.0
    %5260 = vmatprep.subr.mxu0 0.0
    %5261 = vmatpush1.msra.mxu0 0.0
    %5262 = vmatprep.subr.mxu0 0.0
    %5263 = vmatpush1.msra.mxu0 0.0
    %5264 = vmatprep.subr.mxu0 0.0
    %5265 = vmatpush1.msra.mxu0 0.0
    %5266 = vmatprep.subr.mxu0 0.0
    %5267 = vmatpush1.msra.mxu0 0.0
    %5268 = vmatprep.mubr.f32.mxu0 0.0
    %5269 = vmatmul.mubr.f32.gmra.mrb[0].mxu0 %v5196
    %v5270 = vpop.f32.mrb[0].mxu0
    %v5271 = vadd.f32 %v5193, %v5270
    %v5272 = vpop.f32.mrb[0].mxu0
    %5273 = vmatprep.mubr.f32.mxu0 0.0
    %5274 = vmatmul.mubr.f32.gmra.mrb[0].mxu0 %v5199
    %v5275 = vpop.f32.mrb[0].mxu0
    %v5276 = vadd.f32 %v5193, %v5275
    %v5277 = vpop.f32.mrb[0].mxu0
    %5278 = vmatprep.mubr.f32.mxu0 0.0
    %5279 = vmatmul.mubr.f32.gmra.mrb[0].mxu0 %v5202
    %v5280 = vpop.f32.mrb[0].mxu0
    %v5281 = vadd.f32 %v5193, %v5280
    %v5282 = vpop.f32.mrb[0].mxu0
    %5283 = vdwg.mxu0
    %v5284 = vsub.f32 0.0, %v5271
    %v5285 = vsub.f32 0.0, %v5276
    %v5286 = vsub.f32 0.0, %v5281
    %v5287 = vmul.f32 %v5284, 1.442695
    %v5288 = vpow.pop %v5287
    %v5289 = vmul.f32 %v5285, 1.442695
    %v5290 = vpow.pop %v5289
    %v5291 = vmul.f32 %v5286, 1.442695
    %v5292 = vpow.pop %v5291
    %v5293 = vadd.f32 %v5288, 1.0
    %v5294 = vadd.f32 %v5290, 1.0
    %v5295 = vadd.f32 %v5292, 1.0
    %v5296 = vrcp.pop %v5293
    %v5297 = vmul.f32 1.0, %v5296
    %v5298 = vrcp.pop %v5294
    %v5299 = vmul.f32 1.0, %v5298
    %v5300 = vrcp.pop %v5295
    %v5301 = vmul.f32 1.0, %v5300
    %v5302 = vmul.f32 %v5271, %v5297
    %v5303 = vmul.f32 %v5276, %v5299
    %v5304 = vmul.f32 %v5281, %v5301
    %v5305 = vmul.f32 %v5302, %v2771
    %v5306 = vmul.f32 %v5303, %v2776
    %v5307 = vmul.f32 %v5304, %v2781
    %v5309 = vsel %vm1913, %v5305, 0
    %v5312 = vsel %vm1913, %v5306, 0
    %v5315 = vsel %vm1913, %v5307, 0
    %5317 = vmatprep.subr.mxu0 0.0
    %5318 = vmatpush1.msra.mxu0 %v1898
    %5319 = vmatprep.subr.mxu0 0.0
    %5320 = vmatpush1.msra.mxu0 %v1899
    %5321 = vmatprep.subr.mxu0 0.0
    %5322 = vmatpush1.msra.mxu0 %v1900
    %5323 = vmatprep.subr.mxu0 0.0
    %5324 = vmatpush1.msra.mxu0 %v1901
    %5325 = vmatprep.subr.mxu0 0.0
    %5326 = vmatpush1.msra.mxu0 0.0
    %5327 = vmatprep.subr.mxu0 0.0
    %5328 = vmatpush1.msra.mxu0 0.0
    %5329 = vmatprep.subr.mxu0 0.0
    %5330 = vmatpush1.msra.mxu0 0.0
    %5331 = vmatprep.subr.mxu0 0.0
    %5332 = vmatpush1.msra.mxu0 0.0
    %5333 = vmatprep.subr.mxu0 0.0
    %5334 = vmatpush1.msra.mxu0 0.0
    %5335 = vmatprep.subr.mxu0 0.0
    %5336 = vmatpush1.msra.mxu0 0.0
    %5337 = vmatprep.subr.mxu0 0.0
    %5338 = vmatpush1.msra.mxu0 0.0
    %5339 = vmatprep.subr.mxu0 0.0
    %5340 = vmatpush1.msra.mxu0 0.0
    %5341 = vmatprep.subr.mxu0 0.0
    %5342 = vmatpush1.msra.mxu0 0.0
    %5343 = vmatprep.subr.mxu0 0.0
    %5344 = vmatpush1.msra.mxu0 0.0
    %5345 = vmatprep.subr.mxu0 0.0
    %5346 = vmatpush1.msra.mxu0 0.0
    %5347 = vmatprep.subr.mxu0 0.0
    %5348 = vmatpush1.msra.mxu0 0.0
    %5349 = vmatprep.subr.mxu0 0.0
    %5350 = vmatpush1.msra.mxu0 0.0
    %5351 = vmatprep.subr.mxu0 0.0
    %5352 = vmatpush1.msra.mxu0 0.0
    %5353 = vmatprep.subr.mxu0 0.0
    %5354 = vmatpush1.msra.mxu0 0.0
    %5355 = vmatprep.subr.mxu0 0.0
    %5356 = vmatpush1.msra.mxu0 0.0
    %5357 = vmatprep.subr.mxu0 0.0
    %5358 = vmatpush1.msra.mxu0 0.0
    %5359 = vmatprep.subr.mxu0 0.0
    %5360 = vmatpush1.msra.mxu0 0.0
    %5361 = vmatprep.subr.mxu0 0.0
    %5362 = vmatpush1.msra.mxu0 0.0
    %5363 = vmatprep.subr.mxu0 0.0
    %5364 = vmatpush1.msra.mxu0 0.0
    %5365 = vmatprep.subr.mxu0 0.0
    %5366 = vmatpush1.msra.mxu0 0.0
    %5367 = vmatprep.subr.mxu0 0.0
    %5368 = vmatpush1.msra.mxu0 0.0
    %5369 = vmatprep.subr.mxu0 0.0
    %5370 = vmatpush1.msra.mxu0 0.0
    %5371 = vmatprep.subr.mxu0 0.0
    %5372 = vmatpush1.msra.mxu0 0.0
    %5373 = vmatprep.subr.mxu0 0.0
    %5374 = vmatpush1.msra.mxu0 0.0
    %5375 = vmatprep.subr.mxu0 0.0
    %5376 = vmatpush1.msra.mxu0 0.0
    %5377 = vmatprep.subr.mxu0 0.0
    %5378 = vmatpush1.msra.mxu0 0.0
    %5379 = vmatprep.subr.mxu0 0.0
    %5380 = vmatpush1.msra.mxu0 0.0
    %5381 = vmatprep.mubr.f32.mxu0 0.0
    %5382 = vmatmul.mubr.f32.gmra.mrb[0].mxu0 %v5309
    %v5383 = vpop.f32.mrb[0].mxu0
    %v5384 = vadd.f32 0.0, %v5383
    %v5385 = vpop.f32.mrb[0].mxu0
    %5386 = vmatprep.mubr.f32.mxu0 0.0
    %5387 = vmatmul.mubr.f32.gmra.mrb[0].mxu0 %v5312
    %v5388 = vpop.f32.mrb[0].mxu0
    %v5389 = vadd.f32 0.0, %v5388
    %v5390 = vpop.f32.mrb[0].mxu0
    %5391 = vmatprep.mubr.f32.mxu0 0.0
    %5392 = vmatmul.mubr.f32.gmra.mrb[0].mxu0 %v5315
    %v5393 = vpop.f32.mrb[0].mxu0
    %v5394 = vadd.f32 0.0, %v5393
    %v5395 = vpop.f32.mrb[0].mxu0
    %5396 = vdwg.mxu0
    %5397 = vmatprep.subr.mxu0 0.0
    %5398 = vmatpush1.msra.mxu0 %v5384
    %5399 = vmatprep.subr.mxu0 0.0
    %5400 = vmatpush1.msra.mxu0 %v5389
    %5401 = vmatprep.subr.mxu0 0.0
    %5402 = vmatpush1.msra.mxu0 %v5394
    %5403 = vmatprep.subr.mxu0 0.0
    %5404 = vmatpush1.msra.mxu0 0.0
    %5405 = vmatprep.subr.mxu0 0.0
    %5406 = vmatpush1.msra.mxu0 0.0
    %5407 = vmatprep.subr.mxu0 0.0
    %5408 = vmatpush1.msra.mxu0 0.0
    %5409 = vmatprep.subr.mxu0 0.0
    %5410 = vmatpush1.msra.mxu0 0.0
    %5411 = vmatprep.subr.mxu0 0.0
    %5412 = vmatpush1.msra.mxu0 0.0
    %5413 = vmatprep.subr.mxu0 0.0
    %5414 = vmatpush1.msra.mxu0 0.0
    %5415 = vmatprep.subr.mxu0 0.0
    %5416 = vmatpush1.msra.mxu0 0.0
    %5417 = vmatprep.subr.mxu0 0.0
    %5418 = vmatpush1.msra.mxu0 0.0
    %5419 = vmatprep.subr.mxu0 0.0
    %5420 = vmatpush1.msra.mxu0 0.0
    %5421 = vmatprep.subr.mxu0 0.0
    %5422 = vmatpush1.msra.mxu0 0.0
    %5423 = vmatprep.subr.mxu0 0.0
    %5424 = vmatpush1.msra.mxu0 0.0
    %5425 = vmatprep.subr.mxu0 0.0
    %5426 = vmatpush1.msra.mxu0 0.0
    %5427 = vmatprep.subr.mxu0 0.0
    %5428 = vmatpush1.msra.mxu0 0.0
    %5429 = vmatprep.subr.mxu0 0.0
    %5430 = vmatpush1.msra.mxu0 0.0
    %5431 = vmatprep.subr.mxu0 0.0
    %5432 = vmatpush1.msra.mxu0 0.0
    %5433 = vmatprep.subr.mxu0 0.0
    %5434 = vmatpush1.msra.mxu0 0.0
    %5435 = vmatprep.subr.mxu0 0.0
    %5436 = vmatpush1.msra.mxu0 0.0
    %5437 = vmatprep.subr.mxu0 0.0
    %5438 = vmatpush1.msra.mxu0 0.0
    %5439 = vmatprep.subr.mxu0 0.0
    %5440 = vmatpush1.msra.mxu0 0.0
    %5441 = vmatprep.subr.mxu0 0.0
    %5442 = vmatpush1.msra.mxu0 0.0
    %5443 = vmatprep.subr.mxu0 0.0
    %5444 = vmatpush1.msra.mxu0 0.0
    %5445 = vmatprep.subr.mxu0 0.0
    %5446 = vmatpush1.msra.mxu0 0.0
    %5447 = vmatprep.subr.mxu0 0.0
    %5448 = vmatpush1.msra.mxu0 0.0
    %5449 = vmatprep.subr.mxu0 0.0
    %5450 = vmatpush1.msra.mxu0 0.0
    %5451 = vmatprep.subr.mxu0 0.0
    %5452 = vmatpush1.msra.mxu0 0.0
    %5453 = vmatprep.subr.mxu0 0.0
    %5454 = vmatpush1.msra.mxu0 0.0
    %5455 = vmatprep.subr.mxu0 0.0
    %5456 = vmatpush1.msra.mxu0 0.0
    %5457 = vmatprep.subr.mxu0 0.0
    %5458 = vmatpush1.msra.mxu0 0.0
    %5459 = vmatprep.subr.mxu0 0.0
    %5460 = vmatpush1.msra.mxu0 0.0
    %5461 = vmatprep.mubr.f32.mxu0 0.0
    %5462 = vmatmul.mubr.f32.gmra.mrb[0].mxu0 %v2877
    %v5463 = vpop.f32.mrb[0].mxu0
    %v5464 = vadd.f32 0.0, %v5463
    %v5465 = vpop.f32.mrb[0].mxu0
    %5466 = vmatprep.mubr.f32.mxu0 0.0
    %5467 = vmatmul.mubr.f32.gmra.mrb[0].mxu0 %v2880
    %v5468 = vpop.f32.mrb[0].mxu0
    %v5469 = vadd.f32 0.0, %v5468
    %v5470 = vpop.f32.mrb[0].mxu0
    %5471 = vmatprep.mubr.f32.mxu0 0.0
    %5472 = vmatmul.mubr.f32.gmra.mrb[0].mxu0 %v2883
    %v5473 = vpop.f32.mrb[0].mxu0
    %v5474 = vadd.f32 0.0, %v5473
    %v5475 = vpop.f32.mrb[0].mxu0
    %5476 = vdwg.mxu0
    %v5477 = vmin.f32 %v5464, %v5469
    %v5478 = vmax.f32 %v5464, %v5469
    %v5479 = vmin.f32 %v5478, %v5474
    %v5480 = vmax.f32 %v5478, %v5474
    %v5481 = vmin.f32 %v5477, %v5479
    %v5482 = vmax.f32 %v5477, %v5479
    %v5483 = vmul.f32 %v5481, %v2974
    %v5484 = vmul.f32 %v5482, %v2979
    %v5485 = vadd.f32 %v5483, %v5484
    %v5486 = vmul.f32 %v5480, %v2985
    %v5487 = vadd.f32 %v5485, %v5486
    %s5488 = scalar_lea.vmem [#allocation20], 64
    %v5489 = vld [vmem:[%s5488] sm:$0xff]
    %v5490 = vld [vmem:[%s5488 + $0x8] sm:$0xff]
    %v5491 = vld [vmem:[%s5488 + $0x10] sm:$0xff]
    %v5492 = vld [vmem:[%s5488 + $0x18] sm:$0xff]
    %s5493 = scalar_lea.vmem [#allocation22], 64
    %v5494 = vld [vmem:[%s5493] sm:$0xff]
    %v5495 = vld [vmem:[%s5493 + $0x8] sm:$0xff]
    %v5496 = vld [vmem:[%s5493 + $0x10] sm:$0xff]
    %v5497 = vld [vmem:[%s5493 + $0x18] sm:$0xff]
    %v5499 = vsel %vm1913, %v5487, 0
    %5501 = vmatprep.subr.mxu0 0.0
    %5502 = vmatpush1.msra.mxu0 %v5494
    %5503 = vmatprep.subr.mxu0 0.0
    %5504 = vmatpush1.msra.mxu0 %v5495
    %5505 = vmatprep.subr.mxu0 0.0
    %5506 = vmatpush1.msra.mxu0 %v5496
    %5507 = vmatprep.subr.mxu0 0.0
    %5508 = vmatpush1.msra.mxu0 %v5497
    %5509 = vmatprep.subr.mxu0 0.0
    %5510 = vmatpush1.msra.mxu0 0.0
    %5511 = vmatprep.subr.mxu0 0.0
    %5512 = vmatpush1.msra.mxu0 0.0
    %5513 = vmatprep.subr.mxu0 0.0
    %5514 = vmatpush1.msra.mxu0 0.0
    %5515 = vmatprep.subr.mxu0 0.0
    %5516 = vmatpush1.msra.mxu0 0.0
    %5517 = vmatprep.subr.mxu0 0.0
    %5518 = vmatpush1.msra.mxu0 0.0
    %5519 = vmatprep.subr.mxu0 0.0
    %5520 = vmatpush1.msra.mxu0 0.0
    %5521 = vmatprep.subr.mxu0 0.0
    %5522 = vmatpush1.msra.mxu0 0.0
    %5523 = vmatprep.subr.mxu0 0.0
    %5524 = vmatpush1.msra.mxu0 0.0
    %5525 = vmatprep.subr.mxu0 0.0
    %5526 = vmatpush1.msra.mxu0 0.0
    %5527 = vmatprep.subr.mxu0 0.0
    %5528 = vmatpush1.msra.mxu0 0.0
    %5529 = vmatprep.subr.mxu0 0.0
    %5530 = vmatpush1.msra.mxu0 0.0
    %5531 = vmatprep.subr.mxu0 0.0
    %5532 = vmatpush1.msra.mxu0 0.0
    %5533 = vmatprep.subr.mxu0 0.0
    %5534 = vmatpush1.msra.mxu0 0.0
    %5535 = vmatprep.subr.mxu0 0.0
    %5536 = vmatpush1.msra.mxu0 0.0
    %5537 = vmatprep.subr.mxu0 0.0
    %5538 = vmatpush1.msra.mxu0 0.0
    %5539 = vmatprep.subr.mxu0 0.0
    %5540 = vmatpush1.msra.mxu0 0.0
    %5541 = vmatprep.subr.mxu0 0.0
    %5542 = vmatpush1.msra.mxu0 0.0
    %5543 = vmatprep.subr.mxu0 0.0
    %5544 = vmatpush1.msra.mxu0 0.0
    %5545 = vmatprep.subr.mxu0 0.0
    %5546 = vmatpush1.msra.mxu0 0.0
    %5547 = vmatprep.subr.mxu0 0.0
    %5548 = vmatpush1.msra.mxu0 0.0
    %5549 = vmatprep.subr.mxu0 0.0
    %5550 = vmatpush1.msra.mxu0 0.0
    %5551 = vmatprep.subr.mxu0 0.0
    %5552 = vmatpush1.msra.mxu0 0.0
    %5553 = vmatprep.subr.mxu0 0.0
    %5554 = vmatpush1.msra.mxu0 0.0
    %5555 = vmatprep.subr.mxu0 0.0
    %5556 = vmatpush1.msra.mxu0 0.0
    %5557 = vmatprep.subr.mxu0 0.0
    %5558 = vmatpush1.msra.mxu0 0.0
    %5559 = vmatprep.subr.mxu0 0.0
    %5560 = vmatpush1.msra.mxu0 0.0
    %5561 = vmatprep.subr.mxu0 0.0
    %5562 = vmatpush1.msra.mxu0 0.0
    %5563 = vmatprep.subr.mxu0 0.0
    %5564 = vmatpush1.msra.mxu0 0.0
    %5565 = vmatprep.mubr.f32.mxu0 0.0
    %5566 = vmatmul.mubr.f32.gmra.mrb[0].mxu0 %v5499
    %v5567 = vpop.f32.mrb[0].mxu0
    %v5568 = vadd.f32 0.0, %v5567
    %v5569 = vpop.f32.mrb[0].mxu0
    %5570 = vdwg.mxu0
    %5571 = vmatprep.subr.mxu0 0.0
    %5572 = vmatpush1.msra.mxu0 %v5489
    %5573 = vmatprep.subr.mxu0 0.0
    %5574 = vmatpush1.msra.mxu0 %v5490
    %5575 = vmatprep.subr.mxu0 0.0
    %5576 = vmatpush1.msra.mxu0 %v5491
    %5577 = vmatprep.subr.mxu0 0.0
    %5578 = vmatpush1.msra.mxu0 %v5492
    %5579 = vmatprep.subr.mxu0 0.0
    %5580 = vmatpush1.msra.mxu0 0.0
    %5581 = vmatprep.subr.mxu0 0.0
    %5582 = vmatpush1.msra.mxu0 0.0
    %5583 = vmatprep.subr.mxu0 0.0
    %5584 = vmatpush1.msra.mxu0 0.0
    %5585 = vmatprep.subr.mxu0 0.0
    %5586 = vmatpush1.msra.mxu0 0.0
    %5587 = vmatprep.subr.mxu0 0.0
    %5588 = vmatpush1.msra.mxu0 0.0
    %5589 = vmatprep.subr.mxu0 0.0
    %5590 = vmatpush1.msra.mxu0 0.0
    %5591 = vmatprep.subr.mxu0 0.0
    %5592 = vmatpush1.msra.mxu0 0.0
    %5593 = vmatprep.subr.mxu0 0.0
    %5594 = vmatpush1.msra.mxu0 0.0
    %5595 = vmatprep.subr.mxu0 0.0
    %5596 = vmatpush1.msra.mxu0 0.0
    %5597 = vmatprep.subr.mxu0 0.0
    %5598 = vmatpush1.msra.mxu0 0.0
    %5599 = vmatprep.subr.mxu0 0.0
    %5600 = vmatpush1.msra.mxu0 0.0
    %5601 = vmatprep.subr.mxu0 0.0
    %5602 = vmatpush1.msra.mxu0 0.0
    %5603 = vmatprep.subr.mxu0 0.0
    %5604 = vmatpush1.msra.mxu0 0.0
    %5605 = vmatprep.subr.mxu0 0.0
    %5606 = vmatpush1.msra.mxu0 0.0
    %5607 = vmatprep.subr.mxu0 0.0
    %5608 = vmatpush1.msra.mxu0 0.0
    %5609 = vmatprep.subr.mxu0 0.0
    %5610 = vmatpush1.msra.mxu0 0.0
    %5611 = vmatprep.subr.mxu0 0.0
    %5612 = vmatpush1.msra.mxu0 0.0
    %5613 = vmatprep.subr.mxu0 0.0
    %5614 = vmatpush1.msra.mxu0 0.0
    %5615 = vmatprep.subr.mxu0 0.0
    %5616 = vmatpush1.msra.mxu0 0.0
    %5617 = vmatprep.subr.mxu0 0.0
    %5618 = vmatpush1.msra.mxu0 0.0
    %5619 = vmatprep.subr.mxu0 0.0
    %5620 = vmatpush1.msra.mxu0 0.0
    %5621 = vmatprep.subr.mxu0 0.0
    %5622 = vmatpush1.msra.mxu0 0.0
    %5623 = vmatprep.subr.mxu0 0.0
    %5624 = vmatpush1.msra.mxu0 0.0
    %5625 = vmatprep.subr.mxu0 0.0
    %5626 = vmatpush1.msra.mxu0 0.0
    %5627 = vmatprep.subr.mxu0 0.0
    %5628 = vmatpush1.msra.mxu0 0.0
    %5629 = vmatprep.subr.mxu0 0.0
    %5630 = vmatpush1.msra.mxu0 0.0
    %5631 = vmatprep.subr.mxu0 0.0
    %5632 = vmatpush1.msra.mxu0 0.0
    %5633 = vmatprep.subr.mxu0 0.0
    %5634 = vmatpush1.msra.mxu0 0.0
    %5635 = vmatprep.mubr.f32.mxu0 0.0
    %5636 = vmatmul.mubr.f32.gmra.mrb[0].mxu0 %v4574
    %v5637 = vpop.f32.mrb[0].mxu0
    %v5638 = vadd.f32 %v5568, %v5637
    %v5639 = vpop.f32.mrb[0].mxu0
    %5640 = vdwg.mxu0
    %s5641 = scalar_lea.vmem %s59, 16
    %v5642 = vld [vmem:[%s5641] sm:$0x1f]
    %v5644 = vsel %vm1815, %v5642, 0
    %5646 = vmatprep.subr.mxu0 0.0
    %5647 = vmatpush1.msra.mxu0 %v5644
    %5648 = vmatprep.subr.mxu0 0.0
    %5649 = vmatpush1.msra.mxu0 0.0
    %5650 = vmatprep.subr.mxu0 0.0
    %5651 = vmatpush1.msra.mxu0 0.0
    %5652 = vmatprep.subr.mxu0 0.0
    %5653 = vmatpush1.msra.mxu0 0.0
    %5654 = vmatprep.subr.mxu0 0.0
    %5655 = vmatpush1.msra.mxu0 0.0
    %5656 = vmatprep.subr.mxu0 0.0
    %5657 = vmatpush1.msra.mxu0 0.0
    %5658 = vmatprep.subr.mxu0 0.0
    %5659 = vmatpush1.msra.mxu0 0.0
    %5660 = vmatprep.subr.mxu0 0.0
    %5661 = vmatpush1.msra.mxu0 0.0
    %5662 = vmatprep.subr.mxu0 0.0
    %5663 = vmatpush1.msra.mxu0 0.0
    %5664 = vmatprep.subr.mxu0 0.0
    %5665 = vmatpush1.msra.mxu0 0.0
    %5666 = vmatprep.subr.mxu0 0.0
    %5667 = vmatpush1.msra.mxu0 0.0
    %5668 = vmatprep.subr.mxu0 0.0
    %5669 = vmatpush1.msra.mxu0 0.0
    %5670 = vmatprep.subr.mxu0 0.0
    %5671 = vmatpush1.msra.mxu0 0.0
    %5672 = vmatprep.subr.mxu0 0.0
    %5673 = vmatpush1.msra.mxu0 0.0
    %5674 = vmatprep.subr.mxu0 0.0
    %5675 = vmatpush1.msra.mxu0 0.0
    %5676 = vmatprep.subr.mxu0 0.0
    %5677 = vmatpush1.msra.mxu0 0.0
    %5678 = vmatprep.subr.mxu0 0.0
    %5679 = vmatpush1.msra.mxu0 0.0
    %5680 = vmatprep.subr.mxu0 0.0
    %5681 = vmatpush1.msra.mxu0 0.0
    %5682 = vmatprep.subr.mxu0 0.0
    %5683 = vmatpush1.msra.mxu0 0.0
    %5684 = vmatprep.subr.mxu0 0.0
    %5685 = vmatpush1.msra.mxu0 0.0
    %5686 = vmatprep.subr.mxu0 0.0
    %5687 = vmatpush1.msra.mxu0 0.0
    %5688 = vmatprep.subr.mxu0 0.0
    %5689 = vmatpush1.msra.mxu0 0.0
    %5690 = vmatprep.subr.mxu0 0.0
    %5691 = vmatpush1.msra.mxu0 0.0
    %5692 = vmatprep.subr.mxu0 0.0
    %5693 = vmatpush1.msra.mxu0 0.0
    %5694 = vmatprep.subr.mxu0 0.0
    %5695 = vmatpush1.msra.mxu0 0.0
    %5696 = vmatprep.subr.mxu0 0.0
    %5697 = vmatpush1.msra.mxu0 0.0
    %5698 = vmatprep.subr.mxu0 0.0
    %5699 = vmatpush1.msra.mxu0 0.0
    %5700 = vmatprep.subr.mxu0 0.0
    %5701 = vmatpush1.msra.mxu0 0.0
    %5702 = vmatprep.subr.mxu0 0.0
    %5703 = vmatpush1.msra.mxu0 0.0
    %5704 = vmatprep.subr.mxu0 0.0
    %5705 = vmatpush1.msra.mxu0 0.0
    %5706 = vmatprep.subr.mxu0 0.0
    %5707 = vmatpush1.msra.mxu0 0.0
    %5708 = vmatprep.subr.mxu0 0.0
    %5709 = vmatpush1.msra.mxu0 0.0
    %5710 = vmatprep.mubr.f32.mxu0 0.0
    %5711 = vmatmul.mubr.f32.gmra.mrb[0].mxu0 %v1813
    %v5712 = vpop.f32.mrb[0].mxu0
    %v5713 = vadd.f32 0.0, %v5712
    %v5714 = vpop.f32.mrb[0].mxu0
    %5715 = vdwg.mxu0
    %v5716 = vadd.f32 %v5638, %v5713
    %s5717 = scalar_lea.vmem [#allocation23], 2
    %v5718 = vld [vmem:[%s5717] sm:$0x1]
    %v5720 = vlaneseq
    %v5721 = vshrl.u32 %v5720, 7
    %v5722 = vsub.s32 0, %v5721
    %v5723 = vrot.slane %v5718, %v5722
    %v5725 = vadd.f32 %v5716, %v5723
    %v5726 = vsub.f32 0.0, %v5725
    %v5727 = vmul.f32 %v5726, 1.442695
    %v5728 = vpow.pop %v5727
    %v5729 = vadd.f32 %v5728, 1.0
    %v5730 = vrcp.pop %v5729
    %v5731 = vmul.f32 1.0, %v5730
    %v5732 = vmul.f32 %v5725, %v5731
    %s5733 = scalar_lea.vmem [#allocation25], 64
    %v5734 = vld [vmem:[%s5733] sm:$0xff]
    %v5735 = vld [vmem:[%s5733 + $0x8] sm:$0xff]
    %v5736 = vld [vmem:[%s5733 + $0x10] sm:$0xff]
    %v5737 = vld [vmem:[%s5733 + $0x18] sm:$0xff]
    %v5739 = vsel %vm1913, %v5732, 0
    %5741 = vmatprep.subr.mxu0 0.0
    %5742 = vmatpush1.msra.mxu0 %v5734
    %5743 = vmatprep.subr.mxu0 0.0
    %5744 = vmatpush1.msra.mxu0 %v5735
    %5745 = vmatprep.subr.mxu0 0.0
    %5746 = vmatpush1.msra.mxu0 %v5736
    %5747 = vmatprep.subr.mxu0 0.0
    %5748 = vmatpush1.msra.mxu0 %v5737
    %5749 = vmatprep.subr.mxu0 0.0
    %5750 = vmatpush1.msra.mxu0 0.0
    %5751 = vmatprep.subr.mxu0 0.0
    %5752 = vmatpush1.msra.mxu0 0.0
    %5753 = vmatprep.subr.mxu0 0.0
    %5754 = vmatpush1.msra.mxu0 0.0
    %5755 = vmatprep.subr.mxu0 0.0
    %5756 = vmatpush1.msra.mxu0 0.0
    %5757 = vmatprep.subr.mxu0 0.0
    %5758 = vmatpush1.msra.mxu0 0.0
    %5759 = vmatprep.subr.mxu0 0.0
    %5760 = vmatpush1.msra.mxu0 0.0
    %5761 = vmatprep.subr.mxu0 0.0
    %5762 = vmatpush1.msra.mxu0 0.0
    %5763 = vmatprep.subr.mxu0 0.0
    %5764 = vmatpush1.msra.mxu0 0.0
    %5765 = vmatprep.subr.mxu0 0.0
    %5766 = vmatpush1.msra.mxu0 0.0
    %5767 = vmatprep.subr.mxu0 0.0
    %5768 = vmatpush1.msra.mxu0 0.0
    %5769 = vmatprep.subr.mxu0 0.0
    %5770 = vmatpush1.msra.mxu0 0.0
    %5771 = vmatprep.subr.mxu0 0.0
    %5772 = vmatpush1.msra.mxu0 0.0
    %5773 = vmatprep.subr.mxu0 0.0
    %5774 = vmatpush1.msra.mxu0 0.0
    %5775 = vmatprep.subr.mxu0 0.0
    %5776 = vmatpush1.msra.mxu0 0.0
    %5777 = vmatprep.subr.mxu0 0.0
    %5778 = vmatpush1.msra.mxu0 0.0
    %5779 = vmatprep.subr.mxu0 0.0
    %5780 = vmatpush1.msra.mxu0 0.0
    %5781 = vmatprep.subr.mxu0 0.0
    %5782 = vmatpush1.msra.mxu0 0.0
    %5783 = vmatprep.subr.mxu0 0.0
    %5784 = vmatpush1.msra.mxu0 0.0
    %5785 = vmatprep.subr.mxu0 0.0
    %5786 = vmatpush1.msra.mxu0 0.0
    %5787 = vmatprep.subr.mxu0 0.0
    %5788 = vmatpush1.msra.mxu0 0.0
    %5789 = vmatprep.subr.mxu0 0.0
    %5790 = vmatpush1.msra.mxu0 0.0
    %5791 = vmatprep.subr.mxu0 0.0
    %5792 = vmatpush1.msra.mxu0 0.0
    %5793 = vmatprep.subr.mxu0 0.0
    %5794 = vmatpush1.msra.mxu0 0.0
    %5795 = vmatprep.subr.mxu0 0.0
    %5796 = vmatpush1.msra.mxu0 0.0
    %5797 = vmatprep.subr.mxu0 0.0
    %5798 = vmatpush1.msra.mxu0 0.0
    %5799 = vmatprep.subr.mxu0 0.0
    %5800 = vmatpush1.msra.mxu0 0.0
    %5801 = vmatprep.subr.mxu0 0.0
    %5802 = vmatpush1.msra.mxu0 0.0
    %5803 = vmatprep.subr.mxu0 0.0
    %5804 = vmatpush1.msra.mxu0 0.0
    %5805 = vmatprep.mubr.f32.mxu0 0.0
    %5806 = vmatmul.mubr.f32.gmra.mrb[0].mxu0 %v5739
    %v5807 = vpop.f32.mrb[0].mxu0
    %v5808 = vadd.f32 0.0, %v5807
    %v5809 = vpop.f32.mrb[0].mxu0
    %5810 = vdwg.mxu0
    %v5811 = vadd.f32 %v4567, %v5808
    %s5812 = scalar_lea.vmem [#allocation26], 2
    %v5813 = vld [vmem:[%s5812] sm:$0x1]
    %v5815 = vlaneseq
    %v5816 = vshrl.u32 %v5815, 7
    %v5817 = vsub.s32 0, %v5816
    %v5818 = vrot.slane %v5813, %v5817
    %v5820 = vadd.f32 %v5811, %v5818
    %s5821 = scalar_lea.vmem %s39, 96
    %v5822 = vld [vmem:[%s5821] sm:$0xff]
    %v5823 = vld [vmem:[%s5821 + $0x8] sm:$0xff]
    %v5824 = vld [vmem:[%s5821 + $0x10] sm:$0xff]
    %v5825 = vld [vmem:[%s5821 + $0x18] sm:$0xff]
    %v5827 = vsel %vm1913, %v5820, 0
    %5829 = vmatprep.subr.mxu0 0.0
    %5830 = vmatpush1.msra.mxu0 %v5822
    %5831 = vmatprep.subr.mxu0 0.0
    %5832 = vmatpush1.msra.mxu0 %v5823
    %5833 = vmatprep.subr.mxu0 0.0
    %5834 = vmatpush1.msra.mxu0 %v5824
    %5835 = vmatprep.subr.mxu0 0.0
    %5836 = vmatpush1.msra.mxu0 %v5825
    %5837 = vmatprep.subr.mxu0 0.0
    %5838 = vmatpush1.msra.mxu0 0.0
    %5839 = vmatprep.subr.mxu0 0.0
    %5840 = vmatpush1.msra.mxu0 0.0
    %5841 = vmatprep.subr.mxu0 0.0
    %5842 = vmatpush1.msra.mxu0 0.0
    %5843 = vmatprep.subr.mxu0 0.0
    %5844 = vmatpush1.msra.mxu0 0.0
    %5845 = vmatprep.subr.mxu0 0.0
    %5846 = vmatpush1.msra.mxu0 0.0
    %5847 = vmatprep.subr.mxu0 0.0
    %5848 = vmatpush1.msra.mxu0 0.0
    %5849 = vmatprep.subr.mxu0 0.0
    %5850 = vmatpush1.msra.mxu0 0.0
    %5851 = vmatprep.subr.mxu0 0.0
    %5852 = vmatpush1.msra.mxu0 0.0
    %5853 = vmatprep.subr.mxu0 0.0
    %5854 = vmatpush1.msra.mxu0 0.0
    %5855 = vmatprep.subr.mxu0 0.0
    %5856 = vmatpush1.msra.mxu0 0.0
    %5857 = vmatprep.subr.mxu0 0.0
    %5858 = vmatpush1.msra.mxu0 0.0
    %5859 = vmatprep.subr.mxu0 0.0
    %5860 = vmatpush1.msra.mxu0 0.0
    %5861 = vmatprep.subr.mxu0 0.0
    %5862 = vmatpush1.msra.mxu0 0.0
    %5863 = vmatprep.subr.mxu0 0.0
    %5864 = vmatpush1.msra.mxu0 0.0
    %5865 = vmatprep.subr.mxu0 0.0
    %5866 = vmatpush1.msra.mxu0 0.0
    %5867 = vmatprep.subr.mxu0 0.0
    %5868 = vmatpush1.msra.mxu0 0.0
    %5869 = vmatprep.subr.mxu0 0.0
    %5870 = vmatpush1.msra.mxu0 0.0
    %5871 = vmatprep.subr.mxu0 0.0
    %5872 = vmatpush1.msra.mxu0 0.0
    %5873 = vmatprep.subr.mxu0 0.0
    %5874 = vmatpush1.msra.mxu0 0.0
    %5875 = vmatprep.subr.mxu0 0.0
    %5876 = vmatpush1.msra.mxu0 0.0
    %5877 = vmatprep.subr.mxu0 0.0
    %5878 = vmatpush1.msra.mxu0 0.0
    %5879 = vmatprep.subr.mxu0 0.0
    %5880 = vmatpush1.msra.mxu0 0.0
    %5881 = vmatprep.subr.mxu0 0.0
    %5882 = vmatpush1.msra.mxu0 0.0
    %5883 = vmatprep.subr.mxu0 0.0
    %5884 = vmatpush1.msra.mxu0 0.0
    %5885 = vmatprep.subr.mxu0 0.0
    %5886 = vmatpush1.msra.mxu0 0.0
    %5887 = vmatprep.subr.mxu0 0.0
    %5888 = vmatpush1.msra.mxu0 0.0
    %5889 = vmatprep.subr.mxu0 0.0
    %5890 = vmatpush1.msra.mxu0 0.0
    %5891 = vmatprep.subr.mxu0 0.0
    %5892 = vmatpush1.msra.mxu0 0.0
    %5893 = vmatprep.mubr.f32.mxu0 0.0
    %5894 = vmatmul.mubr.f32.gmra.mrb[0].mxu0 %v5827
    %v5895 = vpop.f32.mrb[0].mxu0
    %v5896 = vadd.f32 0.0, %v5895
    %v5897 = vpop.f32.mrb[0].mxu0
    %5898 = vdwg.mxu0
    %s5899 = scalar_lea.vmem %s41, 96
    %v5900 = vld [vmem:[%s5899] sm:$0xff]
    %v5901 = vld [vmem:[%s5899 + $0x8] sm:$0xff]
    %v5902 = vld [vmem:[%s5899 + $0x10] sm:$0xff]
    %v5903 = vld [vmem:[%s5899 + $0x18] sm:$0xff]
    %5904 = vmatprep.subr.mxu0 0.0
    %5905 = vmatpush1.msra.mxu0 %v5900
    %5906 = vmatprep.subr.mxu0 0.0
    %5907 = vmatpush1.msra.mxu0 %v5901
    %5908 = vmatprep.subr.mxu0 0.0
    %5909 = vmatpush1.msra.mxu0 %v5902
    %5910 = vmatprep.subr.mxu0 0.0
    %5911 = vmatpush1.msra.mxu0 %v5903
    %5912 = vmatprep.subr.mxu0 0.0
    %5913 = vmatpush1.msra.mxu0 0.0
    %5914 = vmatprep.subr.mxu0 0.0
    %5915 = vmatpush1.msra.mxu0 0.0
    %5916 = vmatprep.subr.mxu0 0.0
    %5917 = vmatpush1.msra.mxu0 0.0
    %5918 = vmatprep.subr.mxu0 0.0
    %5919 = vmatpush1.msra.mxu0 0.0
    %5920 = vmatprep.subr.mxu0 0.0
    %5921 = vmatpush1.msra.mxu0 0.0
    %5922 = vmatprep.subr.mxu0 0.0
    %5923 = vmatpush1.msra.mxu0 0.0
    %5924 = vmatprep.subr.mxu0 0.0
    %5925 = vmatpush1.msra.mxu0 0.0
    %5926 = vmatprep.subr.mxu0 0.0
    %5927 = vmatpush1.msra.mxu0 0.0
    %5928 = vmatprep.subr.mxu0 0.0
    %5929 = vmatpush1.msra.mxu0 0.0
    %5930 = vmatprep.subr.mxu0 0.0
    %5931 = vmatpush1.msra.mxu0 0.0
    %5932 = vmatprep.subr.mxu0 0.0
    %5933 = vmatpush1.msra.mxu0 0.0
    %5934 = vmatprep.subr.mxu0 0.0
    %5935 = vmatpush1.msra.mxu0 0.0
    %5936 = vmatprep.subr.mxu0 0.0
    %5937 = vmatpush1.msra.mxu0 0.0
    %5938 = vmatprep.subr.mxu0 0.0
    %5939 = vmatpush1.msra.mxu0 0.0
    %5940 = vmatprep.subr.mxu0 0.0
    %5941 = vmatpush1.msra.mxu0 0.0
    %5942 = vmatprep.subr.mxu0 0.0
    %5943 = vmatpush1.msra.mxu0 0.0
    %5944 = vmatprep.subr.mxu0 0.0
    %5945 = vmatpush1.msra.mxu0 0.0
    %5946 = vmatprep.subr.mxu0 0.0
    %5947 = vmatpush1.msra.mxu0 0.0
    %5948 = vmatprep.subr.mxu0 0.0
    %5949 = vmatpush1.msra.mxu0 0.0
    %5950 = vmatprep.subr.mxu0 0.0
    %5951 = vmatpush1.msra.mxu0 0.0
    %5952 = vmatprep.subr.mxu0 0.0
    %5953 = vmatpush1.msra.mxu0 0.0
    %5954 = vmatprep.subr.mxu0 0.0
    %5955 = vmatpush1.msra.mxu0 0.0
    %5956 = vmatprep.subr.mxu0 0.0
    %5957 = vmatpush1.msra.mxu0 0.0
    %5958 = vmatprep.subr.mxu0 0.0
    %5959 = vmatpush1.msra.mxu0 0.0
    %5960 = vmatprep.subr.mxu0 0.0
    %5961 = vmatpush1.msra.mxu0 0.0
    %5962 = vmatprep.subr.mxu0 0.0
    %5963 = vmatpush1.msra.mxu0 0.0
    %5964 = vmatprep.subr.mxu0 0.0
    %5965 = vmatpush1.msra.mxu0 0.0
    %5966 = vmatprep.subr.mxu0 0.0
    %5967 = vmatpush1.msra.mxu0 0.0
    %5968 = vmatprep.mubr.f32.mxu0 0.0
    %5969 = vmatmul.mubr.f32.gmra.mrb[0].mxu0 %v5827
    %v5970 = vpop.f32.mrb[0].mxu0
    %v5971 = vadd.f32 0.0, %v5970
    %v5972 = vpop.f32.mrb[0].mxu0
    %5973 = vdwg.mxu0
    %5974 = vmatprep.subr.mxu0 0.0
    %5975 = vmatpush1.msra.mxu0 %v5971
    %5976 = vmatprep.subr.mxu0 0.0
    %5977 = vmatpush1.msra.mxu0 0.0
    %5978 = vmatprep.subr.mxu0 0.0
    %5979 = vmatpush1.msra.mxu0 0.0
    %5980 = vmatprep.subr.mxu0 0.0
    %5981 = vmatpush1.msra.mxu0 0.0
    %5982 = vmatprep.subr.mxu0 0.0
    %5983 = vmatpush1.msra.mxu0 0.0
    %5984 = vmatprep.subr.mxu0 0.0
    %5985 = vmatpush1.msra.mxu0 0.0
    %5986 = vmatprep.subr.mxu0 0.0
    %5987 = vmatpush1.msra.mxu0 0.0
    %5988 = vmatprep.subr.mxu0 0.0
    %5989 = vmatpush1.msra.mxu0 0.0
    %5990 = vmatprep.subr.mxu0 0.0
    %5991 = vmatpush1.msra.mxu0 0.0
    %5992 = vmatprep.subr.mxu0 0.0
    %5993 = vmatpush1.msra.mxu0 0.0
    %5994 = vmatprep.subr.mxu0 0.0
    %5995 = vmatpush1.msra.mxu0 0.0
    %5996 = vmatprep.subr.mxu0 0.0
    %5997 = vmatpush1.msra.mxu0 0.0
    %5998 = vmatprep.subr.mxu0 0.0
    %5999 = vmatpush1.msra.mxu0 0.0
    %6000 = vmatprep.subr.mxu0 0.0
    %6001 = vmatpush1.msra.mxu0 0.0
    %6002 = vmatprep.subr.mxu0 0.0
    %6003 = vmatpush1.msra.mxu0 0.0
    %6004 = vmatprep.subr.mxu0 0.0
    %6005 = vmatpush1.msra.mxu0 0.0
    %6006 = vmatprep.subr.mxu0 0.0
    %6007 = vmatpush1.msra.mxu0 0.0
    %6008 = vmatprep.subr.mxu0 0.0
    %6009 = vmatpush1.msra.mxu0 0.0
    %6010 = vmatprep.subr.mxu0 0.0
    %6011 = vmatpush1.msra.mxu0 0.0
    %6012 = vmatprep.subr.mxu0 0.0
    %6013 = vmatpush1.msra.mxu0 0.0
    %6014 = vmatprep.subr.mxu0 0.0
    %6015 = vmatpush1.msra.mxu0 0.0
    %6016 = vmatprep.subr.mxu0 0.0
    %6017 = vmatpush1.msra.mxu0 0.0
    %6018 = vmatprep.subr.mxu0 0.0
    %6019 = vmatpush1.msra.mxu0 0.0
    %6020 = vmatprep.subr.mxu0 0.0
    %6021 = vmatpush1.msra.mxu0 0.0
    %6022 = vmatprep.subr.mxu0 0.0
    %6023 = vmatpush1.msra.mxu0 0.0
    %6024 = vmatprep.subr.mxu0 0.0
    %6025 = vmatpush1.msra.mxu0 0.0
    %6026 = vmatprep.subr.mxu0 0.0
    %6027 = vmatpush1.msra.mxu0 0.0
    %6028 = vmatprep.subr.mxu0 0.0
    %6029 = vmatpush1.msra.mxu0 0.0
    %6030 = vmatprep.subr.mxu0 0.0
    %6031 = vmatpush1.msra.mxu0 0.0
    %6032 = vmatprep.subr.mxu0 0.0
    %6033 = vmatpush1.msra.mxu0 0.0
    %6034 = vmatprep.subr.mxu0 0.0
    %6035 = vmatpush1.msra.mxu0 0.0
    %6036 = vmatprep.subr.mxu0 0.0
    %6037 = vmatpush1.msra.mxu0 0.0
    %6038 = vmatprep.mubr.f32.mxu0 0.0
    %6039 = vmatmul.mubr.f32.gmra.mrb[0].mxu0 %v2063
    %v6040 = vpop.f32.mrb[0].mxu0
    %v6041 = vadd.f32 0.0, %v6040
    %v6042 = vpop.f32.mrb[0].mxu0
    %6043 = vmatprep.mubr.f32.mxu0 0.0
    %6044 = vmatmul.mubr.f32.gmra.mrb[0].mxu0 %v2066
    %v6045 = vpop.f32.mrb[0].mxu0
    %v6046 = vadd.f32 0.0, %v6045
    %v6047 = vpop.f32.mrb[0].mxu0
    %6048 = vmatprep.mubr.f32.mxu0 0.0
    %6049 = vmatmul.mubr.f32.gmra.mrb[0].mxu0 %v2069
    %v6050 = vpop.f32.mrb[0].mxu0
    %v6051 = vadd.f32 0.0, %v6050
    %v6052 = vpop.f32.mrb[0].mxu0
    %6053 = vdwg.mxu0
    %6054 = vmatprep.subr.mxu0 0.0
    %6055 = vmatpush1.msra.mxu0 %v5896
    %6056 = vmatprep.subr.mxu0 0.0
    %6057 = vmatpush1.msra.mxu0 0.0
    %6058 = vmatprep.subr.mxu0 0.0
    %6059 = vmatpush1.msra.mxu0 0.0
    %6060 = vmatprep.subr.mxu0 0.0
    %6061 = vmatpush1.msra.mxu0 0.0
    %6062 = vmatprep.subr.mxu0 0.0
    %6063 = vmatpush1.msra.mxu0 0.0
    %6064 = vmatprep.subr.mxu0 0.0
    %6065 = vmatpush1.msra.mxu0 0.0
    %6066 = vmatprep.subr.mxu0 0.0
    %6067 = vmatpush1.msra.mxu0 0.0
    %6068 = vmatprep.subr.mxu0 0.0
    %6069 = vmatpush1.msra.mxu0 0.0
    %6070 = vmatprep.subr.mxu0 0.0
    %6071 = vmatpush1.msra.mxu0 0.0
    %6072 = vmatprep.subr.mxu0 0.0
    %6073 = vmatpush1.msra.mxu0 0.0
    %6074 = vmatprep.subr.mxu0 0.0
    %6075 = vmatpush1.msra.mxu0 0.0
    %6076 = vmatprep.subr.mxu0 0.0
    %6077 = vmatpush1.msra.mxu0 0.0
    %6078 = vmatprep.subr.mxu0 0.0
    %6079 = vmatpush1.msra.mxu0 0.0
    %6080 = vmatprep.subr.mxu0 0.0
    %6081 = vmatpush1.msra.mxu0 0.0
    %6082 = vmatprep.subr.mxu0 0.0
    %6083 = vmatpush1.msra.mxu0 0.0
    %6084 = vmatprep.subr.mxu0 0.0
    %6085 = vmatpush1.msra.mxu0 0.0
    %6086 = vmatprep.subr.mxu0 0.0
    %6087 = vmatpush1.msra.mxu0 0.0
    %6088 = vmatprep.subr.mxu0 0.0
    %6089 = vmatpush1.msra.mxu0 0.0
    %6090 = vmatprep.subr.mxu0 0.0
    %6091 = vmatpush1.msra.mxu0 0.0
    %6092 = vmatprep.subr.mxu0 0.0
    %6093 = vmatpush1.msra.mxu0 0.0
    %6094 = vmatprep.subr.mxu0 0.0
    %6095 = vmatpush1.msra.mxu0 0.0
    %6096 = vmatprep.subr.mxu0 0.0
    %6097 = vmatpush1.msra.mxu0 0.0
    %6098 = vmatprep.subr.mxu0 0.0
    %6099 = vmatpush1.msra.mxu0 0.0
    %6100 = vmatprep.subr.mxu0 0.0
    %6101 = vmatpush1.msra.mxu0 0.0
    %6102 = vmatprep.subr.mxu0 0.0
    %6103 = vmatpush1.msra.mxu0 0.0
    %6104 = vmatprep.subr.mxu0 0.0
    %6105 = vmatpush1.msra.mxu0 0.0
    %6106 = vmatprep.subr.mxu0 0.0
    %6107 = vmatpush1.msra.mxu0 0.0
    %6108 = vmatprep.subr.mxu0 0.0
    %6109 = vmatpush1.msra.mxu0 0.0
    %6110 = vmatprep.subr.mxu0 0.0
    %6111 = vmatpush1.msra.mxu0 0.0
    %6112 = vmatprep.subr.mxu0 0.0
    %6113 = vmatpush1.msra.mxu0 0.0
    %6114 = vmatprep.subr.mxu0 0.0
    %6115 = vmatpush1.msra.mxu0 0.0
    %6116 = vmatprep.subr.mxu0 0.0
    %6117 = vmatpush1.msra.mxu0 0.0
    %6118 = vmatprep.mubr.f32.mxu0 0.0
    %6119 = vmatmul.mubr.f32.gmra.mrb[0].mxu0 %v2152
    %v6120 = vpop.f32.mrb[0].mxu0
    %v6121 = vadd.f32 %v6041, %v6120
    %v6122 = vpop.f32.mrb[0].mxu0
    %6123 = vmatprep.mubr.f32.mxu0 0.0
    %6124 = vmatmul.mubr.f32.gmra.mrb[0].mxu0 %v2155
    %v6125 = vpop.f32.mrb[0].mxu0
    %v6126 = vadd.f32 %v6046, %v6125
    %v6127 = vpop.f32.mrb[0].mxu0
    %6128 = vmatprep.mubr.f32.mxu0 0.0
    %6129 = vmatmul.mubr.f32.gmra.mrb[0].mxu0 %v2158
    %v6130 = vpop.f32.mrb[0].mxu0
    %v6131 = vadd.f32 %v6051, %v6130
    %v6132 = vpop.f32.mrb[0].mxu0
    %6133 = vdwg.mxu0
    %s6134 = scalar_lea.vmem %s45, 96
    %v6135 = vld [vmem:[%s6134] sm:$0xff]
    %v6136 = vld [vmem:[%s6134 + $0x8] sm:$0xff]
    %v6137 = vld [vmem:[%s6134 + $0x10] sm:$0xff]
    %v6138 = vld [vmem:[%s6134 + $0x18] sm:$0xff]
    %6139 = vmatprep.subr.mxu0 0.0
    %6140 = vmatpush1.msra.mxu0 %v6135
    %6141 = vmatprep.subr.mxu0 0.0
    %6142 = vmatpush1.msra.mxu0 %v6136
    %6143 = vmatprep.subr.mxu0 0.0
    %6144 = vmatpush1.msra.mxu0 %v6137
    %6145 = vmatprep.subr.mxu0 0.0
    %6146 = vmatpush1.msra.mxu0 %v6138
    %6147 = vmatprep.subr.mxu0 0.0
    %6148 = vmatpush1.msra.mxu0 0.0
    %6149 = vmatprep.subr.mxu0 0.0
    %6150 = vmatpush1.msra.mxu0 0.0
    %6151 = vmatprep.subr.mxu0 0.0
    %6152 = vmatpush1.msra.mxu0 0.0
    %6153 = vmatprep.subr.mxu0 0.0
    %6154 = vmatpush1.msra.mxu0 0.0
    %6155 = vmatprep.subr.mxu0 0.0
    %6156 = vmatpush1.msra.mxu0 0.0
    %6157 = vmatprep.subr.mxu0 0.0
    %6158 = vmatpush1.msra.mxu0 0.0
    %6159 = vmatprep.subr.mxu0 0.0
    %6160 = vmatpush1.msra.mxu0 0.0
    %6161 = vmatprep.subr.mxu0 0.0
    %6162 = vmatpush1.msra.mxu0 0.0
    %6163 = vmatprep.subr.mxu0 0.0
    %6164 = vmatpush1.msra.mxu0 0.0
    %6165 = vmatprep.subr.mxu0 0.0
    %6166 = vmatpush1.msra.mxu0 0.0
    %6167 = vmatprep.subr.mxu0 0.0
    %6168 = vmatpush1.msra.mxu0 0.0
    %6169 = vmatprep.subr.mxu0 0.0
    %6170 = vmatpush1.msra.mxu0 0.0
    %6171 = vmatprep.subr.mxu0 0.0
    %6172 = vmatpush1.msra.mxu0 0.0
    %6173 = vmatprep.subr.mxu0 0.0
    %6174 = vmatpush1.msra.mxu0 0.0
    %6175 = vmatprep.subr.mxu0 0.0
    %6176 = vmatpush1.msra.mxu0 0.0
    %6177 = vmatprep.subr.mxu0 0.0
    %6178 = vmatpush1.msra.mxu0 0.0
    %6179 = vmatprep.subr.mxu0 0.0
    %6180 = vmatpush1.msra.mxu0 0.0
    %6181 = vmatprep.subr.mxu0 0.0
    %6182 = vmatpush1.msra.mxu0 0.0
    %6183 = vmatprep.subr.mxu0 0.0
    %6184 = vmatpush1.msra.mxu0 0.0
    %6185 = vmatprep.subr.mxu0 0.0
    %6186 = vmatpush1.msra.mxu0 0.0
    %6187 = vmatprep.subr.mxu0 0.0
    %6188 = vmatpush1.msra.mxu0 0.0
    %6189 = vmatprep.subr.mxu0 0.0
    %6190 = vmatpush1.msra.mxu0 0.0
    %6191 = vmatprep.subr.mxu0 0.0
    %6192 = vmatpush1.msra.mxu0 0.0
    %6193 = vmatprep.subr.mxu0 0.0
    %6194 = vmatpush1.msra.mxu0 0.0
    %6195 = vmatprep.subr.mxu0 0.0
    %6196 = vmatpush1.msra.mxu0 0.0
    %6197 = vmatprep.subr.mxu0 0.0
    %6198 = vmatpush1.msra.mxu0 0.0
    %6199 = vmatprep.subr.mxu0 0.0
    %6200 = vmatpush1.msra.mxu0 0.0
    %6201 = vmatprep.subr.mxu0 0.0
    %6202 = vmatpush1.msra.mxu0 0.0
    %6203 = vmatprep.mubr.f32.mxu0 0.0
    %6204 = vmatmul.mubr.f32.gmra.mrb[0].mxu0 %v2245
    %v6205 = vpop.f32.mrb[0].mxu0
    %v6206 = vadd.f32 0.0, %v6205
    %v6207 = vpop.f32.mrb[0].mxu0
    %6208 = vmatprep.mubr.f32.mxu0 0.0
    %6209 = vmatmul.mubr.f32.gmra.mrb[0].mxu0 %v2248
    %v6210 = vpop.f32.mrb[0].mxu0
    %v6211 = vadd.f32 0.0, %v6210
    %v6212 = vpop.f32.mrb[0].mxu0
    %6213 = vmatprep.mubr.f32.mxu0 0.0
    %6214 = vmatmul.mubr.f32.gmra.mrb[0].mxu0 %v2251
    %v6215 = vpop.f32.mrb[0].mxu0
    %v6216 = vadd.f32 0.0, %v6215
    %v6217 = vpop.f32.mrb[0].mxu0
    %6218 = vdwg.mxu0
    %v6219 = vadd.f32 %v6121, %v6206
    %v6220 = vadd.f32 %v6126, %v6211
    %v6221 = vadd.f32 %v6131, %v6216
    %s6222 = scalar_lea.vmem [#allocation16], 6
    %v6223 = vld [vmem:[%s6222] sm:$0x3]
    %v6225 = vsel %vm2347, %v6223, 0
    %6227 = vmatprep.subr.mxu0 0.0
    %6228 = vmatpush1.msra.mxu0 %v6225
    %6229 = vmatprep.subr.mxu0 0.0
    %6230 = vmatpush1.msra.mxu0 0.0
    %6231 = vmatprep.subr.mxu0 0.0
    %6232 = vmatpush1.msra.mxu0 0.0
    %6233 = vmatprep.subr.mxu0 0.0
    %6234 = vmatpush1.msra.mxu0 0.0
    %6235 = vmatprep.subr.mxu0 0.0
    %6236 = vmatpush1.msra.mxu0 0.0
    %6237 = vmatprep.subr.mxu0 0.0
    %6238 = vmatpush1.msra.mxu0 0.0
    %6239 = vmatprep.subr.mxu0 0.0
    %6240 = vmatpush1.msra.mxu0 0.0
    %6241 = vmatprep.subr.mxu0 0.0
    %6242 = vmatpush1.msra.mxu0 0.0
    %6243 = vmatprep.subr.mxu0 0.0
    %6244 = vmatpush1.msra.mxu0 0.0
    %6245 = vmatprep.subr.mxu0 0.0
    %6246 = vmatpush1.msra.mxu0 0.0
    %6247 = vmatprep.subr.mxu0 0.0
    %6248 = vmatpush1.msra.mxu0 0.0
    %6249 = vmatprep.subr.mxu0 0.0
    %6250 = vmatpush1.msra.mxu0 0.0
    %6251 = vmatprep.subr.mxu0 0.0
    %6252 = vmatpush1.msra.mxu0 0.0
    %6253 = vmatprep.subr.mxu0 0.0
    %6254 = vmatpush1.msra.mxu0 0.0
    %6255 = vmatprep.subr.mxu0 0.0
    %6256 = vmatpush1.msra.mxu0 0.0
    %6257 = vmatprep.subr.mxu0 0.0
    %6258 = vmatpush1.msra.mxu0 0.0
    %6259 = vmatprep.subr.mxu0 0.0
    %6260 = vmatpush1.msra.mxu0 0.0
    %6261 = vmatprep.subr.mxu0 0.0
    %6262 = vmatpush1.msra.mxu0 0.0
    %6263 = vmatprep.subr.mxu0 0.0
    %6264 = vmatpush1.msra.mxu0 0.0
    %6265 = vmatprep.subr.mxu0 0.0
    %6266 = vmatpush1.msra.mxu0 0.0
    %6267 = vmatprep.subr.mxu0 0.0
    %6268 = vmatpush1.msra.mxu0 0.0
    %6269 = vmatprep.subr.mxu0 0.0
    %6270 = vmatpush1.msra.mxu0 0.0
    %6271 = vmatprep.subr.mxu0 0.0
    %6272 = vmatpush1.msra.mxu0 0.0
    %6273 = vmatprep.subr.mxu0 0.0
    %6274 = vmatpush1.msra.mxu0 0.0
    %6275 = vmatprep.subr.mxu0 0.0
    %6276 = vmatpush1.msra.mxu0 0.0
    %6277 = vmatprep.subr.mxu0 0.0
    %6278 = vmatpush1.msra.mxu0 0.0
    %6279 = vmatprep.subr.mxu0 0.0
    %6280 = vmatpush1.msra.mxu0 0.0
    %6281 = vmatprep.subr.mxu0 0.0
    %6282 = vmatpush1.msra.mxu0 0.0
    %6283 = vmatprep.subr.mxu0 0.0
    %6284 = vmatpush1.msra.mxu0 0.0
    %6285 = vmatprep.subr.mxu0 0.0
    %6286 = vmatpush1.msra.mxu0 0.0
    %6287 = vmatprep.subr.mxu0 0.0
    %6288 = vmatpush1.msra.mxu0 0.0
    %6289 = vmatprep.subr.mxu0 0.0
    %6290 = vmatpush1.msra.mxu0 0.0
    %6291 = vmatprep.mubr.f32.mxu0 0.0
    %6292 = vmatmul.mubr.f32.gmra.mrb[0].mxu0 %v2339
    %v6293 = vpop.f32.mrb[0].mxu0
    %v6294 = vadd.f32 0.0, %v6293
    %v6295 = vpop.f32.mrb[0].mxu0
    %6296 = vmatprep.mubr.f32.mxu0 0.0
    %6297 = vmatmul.mubr.f32.gmra.mrb[0].mxu0 %v2342
    %v6298 = vpop.f32.mrb[0].mxu0
    %v6299 = vadd.f32 0.0, %v6298
    %v6300 = vpop.f32.mrb[0].mxu0
    %6301 = vmatprep.mubr.f32.mxu0 0.0
    %6302 = vmatmul.mubr.f32.gmra.mrb[0].mxu0 %v2345
    %v6303 = vpop.f32.mrb[0].mxu0
    %v6304 = vadd.f32 0.0, %v6303
    %v6305 = vpop.f32.mrb[0].mxu0
    %6306 = vdwg.mxu0
    %v6307 = vadd.f32 %v6219, %v6294
    %v6308 = vadd.f32 %v6220, %v6299
    %v6309 = vadd.f32 %v6221, %v6304
    %s6310 = scalar_lea.vmem [#allocation17], 3
    %v6311 = vld [vmem:[%s6310] sm:$0x1]
    %v6313 = vlaneseq
    %v6314 = vshrl.u32 %v6313, 7
    %v6315 = vsub.s32 0, %v6314
    %v6316 = vrot.slane %v6311, %v6315
    %v6318 = vadd.f32 %v6307, %v6316
    %v6319 = vadd.f32 %v6308, %v6316
    %v6320 = vadd.f32 %v6309, %v6316
    %s6321 = scalar_lea.vmem %s43, 48
    %v6322 = vld [vmem:[%s6321] sm:$0xff]
    %v6323 = vld [vmem:[%s6321 + $0x8] sm:$0x1]
    %v6324 = vlaneseq
    %v6325 = vshrl.u32 %v6324, 7
    %v6326 = vsub.s32 0, %v6325
    %v6327 = vrot.slane %v6322, %v6326
    %v6328 = vmul.f32 %v2449, %v6327
    %v6329 = vmul.f32 %v2454, %v6327
    %v6330 = vmul.f32 %v2459, %v6327
    %v6331 = vadd.f32 %v6318, %v6328
    %v6332 = vadd.f32 %v6319, %v6329
    %v6333 = vadd.f32 %v6320, %v6330
    %v6334 = vlaneseq
    %v6335 = vshrl.u32 %v6334, 7
    %v6336 = vsub.s32 1, %v6335
    %v6337 = vrot.slane %v6322, %v6336
    %v6338 = vmul.f32 %v2474, %v6337
    %v6339 = vmul.f32 %v2479, %v6337
    %v6340 = vmul.f32 %v2484, %v6337
    %v6341 = vadd.f32 %v6331, %v6338
    %v6342 = vadd.f32 %v6332, %v6339
    %v6343 = vadd.f32 %v6333, %v6340
    %v6344 = vlaneseq
    %v6345 = vshrl.u32 %v6344, 7
    %v6346 = vsub.s32 2, %v6345
    %v6347 = vrot.slane %v6322, %v6346
    %v6348 = vmul.f32 %v2499, %v6347
    %v6349 = vmul.f32 %v2504, %v6347
    %v6350 = vmul.f32 %v2509, %v6347
    %v6351 = vadd.f32 %v6341, %v6348
    %v6352 = vadd.f32 %v6342, %v6349
    %v6353 = vadd.f32 %v6343, %v6350
    %v6354 = vlaneseq
    %v6355 = vshrl.u32 %v6354, 7
    %v6356 = vsub.s32 3, %v6355
    %v6357 = vrot.slane %v6322, %v6356
    %v6358 = vmul.f32 %v2474, %v6357
    %v6359 = vmul.f32 %v2479, %v6357
    %v6360 = vmul.f32 %v2484, %v6357
    %v6361 = vadd.f32 %v6351, %v6358
    %v6362 = vadd.f32 %v6352, %v6359
    %v6363 = vadd.f32 %v6353, %v6360
    %v6364 = vlaneseq
    %v6365 = vshrl.u32 %v6364, 7
    %v6366 = vsub.s32 4, %v6365
    %v6367 = vrot.slane %v6322, %v6366
    %v6368 = vmul.f32 %v2534, %v6367
    %v6369 = vmul.f32 %v2539, %v6367
    %v6370 = vmul.f32 %v2544, %v6367
    %v6371 = vadd.f32 %v6361, %v6368
    %v6372 = vadd.f32 %v6362, %v6369
    %v6373 = vadd.f32 %v6363, %v6370
    %v6374 = vlaneseq
    %v6375 = vshrl.u32 %v6374, 7
    %v6376 = vsub.s32 5, %v6375
    %v6377 = vrot.slane %v6322, %v6376
    %v6378 = vmul.f32 %v2559, %v6377
    %v6379 = vmul.f32 %v2564, %v6377
    %v6380 = vmul.f32 %v2569, %v6377
    %v6381 = vadd.f32 %v6371, %v6378
    %v6382 = vadd.f32 %v6372, %v6379
    %v6383 = vadd.f32 %v6373, %v6380
    %v6384 = vlaneseq
    %v6385 = vshrl.u32 %v6384, 7
    %v6386 = vsub.s32 6, %v6385
    %v6387 = vrot.slane %v6322, %v6386
    %v6388 = vmul.f32 %v2499, %v6387
    %v6389 = vmul.f32 %v2504, %v6387
    %v6390 = vmul.f32 %v2509, %v6387
    %v6391 = vadd.f32 %v6381, %v6388
    %v6392 = vadd.f32 %v6382, %v6389
    %v6393 = vadd.f32 %v6383, %v6390
    %v6394 = vlaneseq
    %v6395 = vshrl.u32 %v6394, 7
    %v6396 = vsub.s32 7, %v6395
    %v6397 = vrot.slane %v6322, %v6396
    %v6398 = vmul.f32 %v2559, %v6397
    %v6399 = vmul.f32 %v2564, %v6397
    %v6400 = vmul.f32 %v2569, %v6397
    %v6401 = vadd.f32 %v6391, %v6398
    %v6402 = vadd.f32 %v6392, %v6399
    %v6403 = vadd.f32 %v6393, %v6400
    %v6404 = vlaneseq
    %v6405 = vshrl.u32 %v6404, 7
    %v6406 = vsub.s32 0, %v6405
    %v6407 = vrot.slane %v6323, %v6406
    %v6408 = vmul.f32 %v2604, %v6407
    %v6409 = vmul.f32 %v2609, %v6407
    %v6410 = vmul.f32 %v2614, %v6407
    %v6411 = vadd.f32 %v6401, %v6408
    %v6412 = vadd.f32 %v6402, %v6409
    %v6413 = vadd.f32 %v6403, %v6410
    %v6414 = vsub.f32 0.0, %v6411
    %v6415 = vsub.f32 0.0, %v6412
    %v6416 = vsub.f32 0.0, %v6413
    %v6417 = vmul.f32 %v6414, 1.442695
    %v6418 = vpow.pop %v6417
    %v6419 = vmul.f32 %v6415, 1.442695
    %v6420 = vpow.pop %v6419
    %v6421 = vmul.f32 %v6416, 1.442695
    %v6422 = vpow.pop %v6421
    %v6423 = vadd.f32 %v6418, 1.0
    %v6424 = vadd.f32 %v6420, 1.0
    %v6425 = vadd.f32 %v6422, 1.0
    %v6426 = vrcp.pop %v6423
    %v6427 = vmul.f32 1.0, %v6426
    %v6428 = vrcp.pop %v6424
    %v6429 = vmul.f32 1.0, %v6428
    %v6430 = vrcp.pop %v6425
    %v6431 = vmul.f32 1.0, %v6430
    %v6432 = vmul.f32 %v6411, %v6427
    %v6433 = vmul.f32 %v6412, %v6429
    %v6434 = vmul.f32 %v6413, %v6431
    %s6435 = scalar_lea.vmem %s51, 96
    %v6436 = vld [vmem:[%s6435] sm:$0xff]
    %v6437 = vld [vmem:[%s6435 + $0x8] sm:$0xff]
    %v6438 = vld [vmem:[%s6435 + $0x10] sm:$0xff]
    %v6439 = vld [vmem:[%s6435 + $0x18] sm:$0xff]
    %s6440 = scalar_lea.vmem [#allocation19], 3
    %v6441 = vld [vmem:[%s6440] sm:$0x1]
    %v6443 = vlaneseq
    %v6444 = vshrl.u32 %v6443, 7
    %v6445 = vsub.s32 0, %v6444
    %v6446 = vrot.slane %v6441, %v6445
    %v6449 = vsel %vm1913, %v6432, 0
    %v6452 = vsel %vm1913, %v6433, 0
    %v6455 = vsel %vm1913, %v6434, 0
    %6457 = vmatprep.subr.mxu0 0.0
    %6458 = vmatpush1.msra.mxu0 %v6436
    %6459 = vmatprep.subr.mxu0 0.0
    %6460 = vmatpush1.msra.mxu0 %v6437
    %6461 = vmatprep.subr.mxu0 0.0
    %6462 = vmatpush1.msra.mxu0 %v6438
    %6463 = vmatprep.subr.mxu0 0.0
    %6464 = vmatpush1.msra.mxu0 %v6439
    %6465 = vmatprep.subr.mxu0 0.0
    %6466 = vmatpush1.msra.mxu0 0.0
    %6467 = vmatprep.subr.mxu0 0.0
    %6468 = vmatpush1.msra.mxu0 0.0
    %6469 = vmatprep.subr.mxu0 0.0
    %6470 = vmatpush1.msra.mxu0 0.0
    %6471 = vmatprep.subr.mxu0 0.0
    %6472 = vmatpush1.msra.mxu0 0.0
    %6473 = vmatprep.subr.mxu0 0.0
    %6474 = vmatpush1.msra.mxu0 0.0
    %6475 = vmatprep.subr.mxu0 0.0
    %6476 = vmatpush1.msra.mxu0 0.0
    %6477 = vmatprep.subr.mxu0 0.0
    %6478 = vmatpush1.msra.mxu0 0.0
    %6479 = vmatprep.subr.mxu0 0.0
    %6480 = vmatpush1.msra.mxu0 0.0
    %6481 = vmatprep.subr.mxu0 0.0
    %6482 = vmatpush1.msra.mxu0 0.0
    %6483 = vmatprep.subr.mxu0 0.0
    %6484 = vmatpush1.msra.mxu0 0.0
    %6485 = vmatprep.subr.mxu0 0.0
    %6486 = vmatpush1.msra.mxu0 0.0
    %6487 = vmatprep.subr.mxu0 0.0
    %6488 = vmatpush1.msra.mxu0 0.0
    %6489 = vmatprep.subr.mxu0 0.0
    %6490 = vmatpush1.msra.mxu0 0.0
    %6491 = vmatprep.subr.mxu0 0.0
    %6492 = vmatpush1.msra.mxu0 0.0
    %6493 = vmatprep.subr.mxu0 0.0
    %6494 = vmatpush1.msra.mxu0 0.0
    %6495 = vmatprep.subr.mxu0 0.0
    %6496 = vmatpush1.msra.mxu0 0.0
    %6497 = vmatprep.subr.mxu0 0.0
    %6498 = vmatpush1.msra.mxu0 0.0
    %6499 = vmatprep.subr.mxu0 0.0
    %6500 = vmatpush1.msra.mxu0 0.0
    %6501 = vmatprep.subr.mxu0 0.0
    %6502 = vmatpush1.msra.mxu0 0.0
    %6503 = vmatprep.subr.mxu0 0.0
    %6504 = vmatpush1.msra.mxu0 0.0
    %6505 = vmatprep.subr.mxu0 0.0
    %6506 = vmatpush1.msra.mxu0 0.0
    %6507 = vmatprep.subr.mxu0 0.0
    %6508 = vmatpush1.msra.mxu0 0.0
    %6509 = vmatprep.subr.mxu0 0.0
    %6510 = vmatpush1.msra.mxu0 0.0
    %6511 = vmatprep.subr.mxu0 0.0
    %6512 = vmatpush1.msra.mxu0 0.0
    %6513 = vmatprep.subr.mxu0 0.0
    %6514 = vmatpush1.msra.mxu0 0.0
    %6515 = vmatprep.subr.mxu0 0.0
    %6516 = vmatpush1.msra.mxu0 0.0
    %6517 = vmatprep.subr.mxu0 0.0
    %6518 = vmatpush1.msra.mxu0 0.0
    %6519 = vmatprep.subr.mxu0 0.0
    %6520 = vmatpush1.msra.mxu0 0.0
    %6521 = vmatprep.mubr.f32.mxu0 0.0
    %6522 = vmatmul.mubr.f32.gmra.mrb[0].mxu0 %v6449
    %v6523 = vpop.f32.mrb[0].mxu0
    %v6524 = vadd.f32 %v6446, %v6523
    %v6525 = vpop.f32.mrb[0].mxu0
    %6526 = vmatprep.mubr.f32.mxu0 0.0
    %6527 = vmatmul.mubr.f32.gmra.mrb[0].mxu0 %v6452
    %v6528 = vpop.f32.mrb[0].mxu0
    %v6529 = vadd.f32 %v6446, %v6528
    %v6530 = vpop.f32.mrb[0].mxu0
    %6531 = vmatprep.mubr.f32.mxu0 0.0
    %6532 = vmatmul.mubr.f32.gmra.mrb[0].mxu0 %v6455
    %v6533 = vpop.f32.mrb[0].mxu0
    %v6534 = vadd.f32 %v6446, %v6533
    %v6535 = vpop.f32.mrb[0].mxu0
    %6536 = vdwg.mxu0
    %v6537 = vsub.f32 0.0, %v6524
    %v6538 = vsub.f32 0.0, %v6529
    %v6539 = vsub.f32 0.0, %v6534
    %v6540 = vmul.f32 %v6537, 1.442695
    %v6541 = vpow.pop %v6540
    %v6542 = vmul.f32 %v6538, 1.442695
    %v6543 = vpow.pop %v6542
    %v6544 = vmul.f32 %v6539, 1.442695
    %v6545 = vpow.pop %v6544
    %v6546 = vadd.f32 %v6541, 1.0
    %v6547 = vadd.f32 %v6543, 1.0
    %v6548 = vadd.f32 %v6545, 1.0
    %v6549 = vrcp.pop %v6546
    %v6550 = vmul.f32 1.0, %v6549
    %v6551 = vrcp.pop %v6547
    %v6552 = vmul.f32 1.0, %v6551
    %v6553 = vrcp.pop %v6548
    %v6554 = vmul.f32 1.0, %v6553
    %v6555 = vmul.f32 %v6524, %v6550
    %v6556 = vmul.f32 %v6529, %v6552
    %v6557 = vmul.f32 %v6534, %v6554
    %v6558 = vmul.f32 %v6555, %v2771
    %v6559 = vmul.f32 %v6556, %v2776
    %v6560 = vmul.f32 %v6557, %v2781
    %v6562 = vsel %vm1913, %v6558, 0
    %v6565 = vsel %vm1913, %v6559, 0
    %v6568 = vsel %vm1913, %v6560, 0
    %6570 = vmatprep.subr.mxu0 0.0
    %6571 = vmatpush1.msra.mxu0 %v1898
    %6572 = vmatprep.subr.mxu0 0.0
    %6573 = vmatpush1.msra.mxu0 %v1899
    %6574 = vmatprep.subr.mxu0 0.0
    %6575 = vmatpush1.msra.mxu0 %v1900
    %6576 = vmatprep.subr.mxu0 0.0
    %6577 = vmatpush1.msra.mxu0 %v1901
    %6578 = vmatprep.subr.mxu0 0.0
    %6579 = vmatpush1.msra.mxu0 0.0
    %6580 = vmatprep.subr.mxu0 0.0
    %6581 = vmatpush1.msra.mxu0 0.0
    %6582 = vmatprep.subr.mxu0 0.0
    %6583 = vmatpush1.msra.mxu0 0.0
    %6584 = vmatprep.subr.mxu0 0.0
    %6585 = vmatpush1.msra.mxu0 0.0
    %6586 = vmatprep.subr.mxu0 0.0
    %6587 = vmatpush1.msra.mxu0 0.0
    %6588 = vmatprep.subr.mxu0 0.0
    %6589 = vmatpush1.msra.mxu0 0.0
    %6590 = vmatprep.subr.mxu0 0.0
    %6591 = vmatpush1.msra.mxu0 0.0
    %6592 = vmatprep.subr.mxu0 0.0
    %6593 = vmatpush1.msra.mxu0 0.0
    %6594 = vmatprep.subr.mxu0 0.0
    %6595 = vmatpush1.msra.mxu0 0.0
    %6596 = vmatprep.subr.mxu0 0.0
    %6597 = vmatpush1.msra.mxu0 0.0
    %6598 = vmatprep.subr.mxu0 0.0
    %6599 = vmatpush1.msra.mxu0 0.0
    %6600 = vmatprep.subr.mxu0 0.0
    %6601 = vmatpush1.msra.mxu0 0.0
    %6602 = vmatprep.subr.mxu0 0.0
    %6603 = vmatpush1.msra.mxu0 0.0
    %6604 = vmatprep.subr.mxu0 0.0
    %6605 = vmatpush1.msra.mxu0 0.0
    %6606 = vmatprep.subr.mxu0 0.0
    %6607 = vmatpush1.msra.mxu0 0.0
    %6608 = vmatprep.subr.mxu0 0.0
    %6609 = vmatpush1.msra.mxu0 0.0
    %6610 = vmatprep.subr.mxu0 0.0
    %6611 = vmatpush1.msra.mxu0 0.0
    %6612 = vmatprep.subr.mxu0 0.0
    %6613 = vmatpush1.msra.mxu0 0.0
    %6614 = vmatprep.subr.mxu0 0.0
    %6615 = vmatpush1.msra.mxu0 0.0
    %6616 = vmatprep.subr.mxu0 0.0
    %6617 = vmatpush1.msra.mxu0 0.0
    %6618 = vmatprep.subr.mxu0 0.0
    %6619 = vmatpush1.msra.mxu0 0.0
    %6620 = vmatprep.subr.mxu0 0.0
    %6621 = vmatpush1.msra.mxu0 0.0
    %6622 = vmatprep.subr.mxu0 0.0
    %6623 = vmatpush1.msra.mxu0 0.0
    %6624 = vmatprep.subr.mxu0 0.0
    %6625 = vmatpush1.msra.mxu0 0.0
    %6626 = vmatprep.subr.mxu0 0.0
    %6627 = vmatpush1.msra.mxu0 0.0
    %6628 = vmatprep.subr.mxu0 0.0
    %6629 = vmatpush1.msra.mxu0 0.0
    %6630 = vmatprep.subr.mxu0 0.0
    %6631 = vmatpush1.msra.mxu0 0.0
    %6632 = vmatprep.subr.mxu0 0.0
    %6633 = vmatpush1.msra.mxu0 0.0
    %6634 = vmatprep.mubr.f32.mxu0 0.0
    %6635 = vmatmul.mubr.f32.gmra.mrb[0].mxu0 %v6562
    %v6636 = vpop.f32.mrb[0].mxu0
    %v6637 = vadd.f32 0.0, %v6636
    %v6638 = vpop.f32.mrb[0].mxu0
    %6639 = vmatprep.mubr.f32.mxu0 0.0
    %6640 = vmatmul.mubr.f32.gmra.mrb[0].mxu0 %v6565
    %v6641 = vpop.f32.mrb[0].mxu0
    %v6642 = vadd.f32 0.0, %v6641
    %v6643 = vpop.f32.mrb[0].mxu0
    %6644 = vmatprep.mubr.f32.mxu0 0.0
    %6645 = vmatmul.mubr.f32.gmra.mrb[0].mxu0 %v6568
    %v6646 = vpop.f32.mrb[0].mxu0
    %v6647 = vadd.f32 0.0, %v6646
    %v6648 = vpop.f32.mrb[0].mxu0
    %6649 = vdwg.mxu0
    %6650 = vmatprep.subr.mxu0 0.0
    %6651 = vmatpush1.msra.mxu0 %v6637
    %6652 = vmatprep.subr.mxu0 0.0
    %6653 = vmatpush1.msra.mxu0 %v6642
    %6654 = vmatprep.subr.mxu0 0.0
    %6655 = vmatpush1.msra.mxu0 %v6647
    %6656 = vmatprep.subr.mxu0 0.0
    %6657 = vmatpush1.msra.mxu0 0.0
    %6658 = vmatprep.subr.mxu0 0.0
    %6659 = vmatpush1.msra.mxu0 0.0
    %6660 = vmatprep.subr.mxu0 0.0
    %6661 = vmatpush1.msra.mxu0 0.0
    %6662 = vmatprep.subr.mxu0 0.0
    %6663 = vmatpush1.msra.mxu0 0.0
    %6664 = vmatprep.subr.mxu0 0.0
    %6665 = vmatpush1.msra.mxu0 0.0
    %6666 = vmatprep.subr.mxu0 0.0
    %6667 = vmatpush1.msra.mxu0 0.0
    %6668 = vmatprep.subr.mxu0 0.0
    %6669 = vmatpush1.msra.mxu0 0.0
    %6670 = vmatprep.subr.mxu0 0.0
    %6671 = vmatpush1.msra.mxu0 0.0
    %6672 = vmatprep.subr.mxu0 0.0
    %6673 = vmatpush1.msra.mxu0 0.0
    %6674 = vmatprep.subr.mxu0 0.0
    %6675 = vmatpush1.msra.mxu0 0.0
    %6676 = vmatprep.subr.mxu0 0.0
    %6677 = vmatpush1.msra.mxu0 0.0
    %6678 = vmatprep.subr.mxu0 0.0
    %6679 = vmatpush1.msra.mxu0 0.0
    %6680 = vmatprep.subr.mxu0 0.0
    %6681 = vmatpush1.msra.mxu0 0.0
    %6682 = vmatprep.subr.mxu0 0.0
    %6683 = vmatpush1.msra.mxu0 0.0
    %6684 = vmatprep.subr.mxu0 0.0
    %6685 = vmatpush1.msra.mxu0 0.0
    %6686 = vmatprep.subr.mxu0 0.0
    %6687 = vmatpush1.msra.mxu0 0.0
    %6688 = vmatprep.subr.mxu0 0.0
    %6689 = vmatpush1.msra.mxu0 0.0
    %6690 = vmatprep.subr.mxu0 0.0
    %6691 = vmatpush1.msra.mxu0 0.0
    %6692 = vmatprep.subr.mxu0 0.0
    %6693 = vmatpush1.msra.mxu0 0.0
    %6694 = vmatprep.subr.mxu0 0.0
    %6695 = vmatpush1.msra.mxu0 0.0
    %6696 = vmatprep.subr.mxu0 0.0
    %6697 = vmatpush1.msra.mxu0 0.0
    %6698 = vmatprep.subr.mxu0 0.0
    %6699 = vmatpush1.msra.mxu0 0.0
    %6700 = vmatprep.subr.mxu0 0.0
    %6701 = vmatpush1.msra.mxu0 0.0
    %6702 = vmatprep.subr.mxu0 0.0
    %6703 = vmatpush1.msra.mxu0 0.0
    %6704 = vmatprep.subr.mxu0 0.0
    %6705 = vmatpush1.msra.mxu0 0.0
    %6706 = vmatprep.subr.mxu0 0.0
    %6707 = vmatpush1.msra.mxu0 0.0
    %6708 = vmatprep.subr.mxu0 0.0
    %6709 = vmatpush1.msra.mxu0 0.0
    %6710 = vmatprep.subr.mxu0 0.0
    %6711 = vmatpush1.msra.mxu0 0.0
    %6712 = vmatprep.subr.mxu0 0.0
    %6713 = vmatpush1.msra.mxu0 0.0
    %6714 = vmatprep.mubr.f32.mxu0 0.0
    %6715 = vmatmul.mubr.f32.gmra.mrb[0].mxu0 %v2877
    %v6716 = vpop.f32.mrb[0].mxu0
    %v6717 = vadd.f32 0.0, %v6716
    %v6718 = vpop.f32.mrb[0].mxu0
    %6719 = vmatprep.mubr.f32.mxu0 0.0
    %6720 = vmatmul.mubr.f32.gmra.mrb[0].mxu0 %v2880
    %v6721 = vpop.f32.mrb[0].mxu0
    %v6722 = vadd.f32 0.0, %v6721
    %v6723 = vpop.f32.mrb[0].mxu0
    %6724 = vmatprep.mubr.f32.mxu0 0.0
    %6725 = vmatmul.mubr.f32.gmra.mrb[0].mxu0 %v2883
    %v6726 = vpop.f32.mrb[0].mxu0
    %v6727 = vadd.f32 0.0, %v6726
    %v6728 = vpop.f32.mrb[0].mxu0
    %6729 = vdwg.mxu0
    %v6730 = vmin.f32 %v6717, %v6722
    %v6731 = vmax.f32 %v6717, %v6722
    %v6732 = vmin.f32 %v6731, %v6727
    %v6733 = vmax.f32 %v6731, %v6727
    %v6734 = vmin.f32 %v6730, %v6732
    %v6735 = vmax.f32 %v6730, %v6732
    %v6736 = vmul.f32 %v6734, %v2974
    %v6737 = vmul.f32 %v6735, %v2979
    %v6738 = vadd.f32 %v6736, %v6737
    %v6739 = vmul.f32 %v6733, %v2985
    %v6740 = vadd.f32 %v6738, %v6739
    %s6741 = scalar_lea.vmem [#allocation20], 96
    %v6742 = vld [vmem:[%s6741] sm:$0xff]
    %v6743 = vld [vmem:[%s6741 + $0x8] sm:$0xff]
    %v6744 = vld [vmem:[%s6741 + $0x10] sm:$0xff]
    %v6745 = vld [vmem:[%s6741 + $0x18] sm:$0xff]
    %s6746 = scalar_lea.vmem [#allocation22], 96
    %v6747 = vld [vmem:[%s6746] sm:$0xff]
    %v6748 = vld [vmem:[%s6746 + $0x8] sm:$0xff]
    %v6749 = vld [vmem:[%s6746 + $0x10] sm:$0xff]
    %v6750 = vld [vmem:[%s6746 + $0x18] sm:$0xff]
    %v6752 = vsel %vm1913, %v6740, 0
    %6754 = vmatprep.subr.mxu0 0.0
    %6755 = vmatpush1.msra.mxu0 %v6747
    %6756 = vmatprep.subr.mxu0 0.0
    %6757 = vmatpush1.msra.mxu0 %v6748
    %6758 = vmatprep.subr.mxu0 0.0
    %6759 = vmatpush1.msra.mxu0 %v6749
    %6760 = vmatprep.subr.mxu0 0.0
    %6761 = vmatpush1.msra.mxu0 %v6750
    %6762 = vmatprep.subr.mxu0 0.0
    %6763 = vmatpush1.msra.mxu0 0.0
    %6764 = vmatprep.subr.mxu0 0.0
    %6765 = vmatpush1.msra.mxu0 0.0
    %6766 = vmatprep.subr.mxu0 0.0
    %6767 = vmatpush1.msra.mxu0 0.0
    %6768 = vmatprep.subr.mxu0 0.0
    %6769 = vmatpush1.msra.mxu0 0.0
    %6770 = vmatprep.subr.mxu0 0.0
    %6771 = vmatpush1.msra.mxu0 0.0
    %6772 = vmatprep.subr.mxu0 0.0
    %6773 = vmatpush1.msra.mxu0 0.0
    %6774 = vmatprep.subr.mxu0 0.0
    %6775 = vmatpush1.msra.mxu0 0.0
    %6776 = vmatprep.subr.mxu0 0.0
    %6777 = vmatpush1.msra.mxu0 0.0
    %6778 = vmatprep.subr.mxu0 0.0
    %6779 = vmatpush1.msra.mxu0 0.0
    %6780 = vmatprep.subr.mxu0 0.0
    %6781 = vmatpush1.msra.mxu0 0.0
    %6782 = vmatprep.subr.mxu0 0.0
    %6783 = vmatpush1.msra.mxu0 0.0
    %6784 = vmatprep.subr.mxu0 0.0
    %6785 = vmatpush1.msra.mxu0 0.0
    %6786 = vmatprep.subr.mxu0 0.0
    %6787 = vmatpush1.msra.mxu0 0.0
    %6788 = vmatprep.subr.mxu0 0.0
    %6789 = vmatpush1.msra.mxu0 0.0
    %6790 = vmatprep.subr.mxu0 0.0
    %6791 = vmatpush1.msra.mxu0 0.0
    %6792 = vmatprep.subr.mxu0 0.0
    %6793 = vmatpush1.msra.mxu0 0.0
    %6794 = vmatprep.subr.mxu0 0.0
    %6795 = vmatpush1.msra.mxu0 0.0
    %6796 = vmatprep.subr.mxu0 0.0
    %6797 = vmatpush1.msra.mxu0 0.0
    %6798 = vmatprep.subr.mxu0 0.0
    %6799 = vmatpush1.msra.mxu0 0.0
    %6800 = vmatprep.subr.mxu0 0.0
    %6801 = vmatpush1.msra.mxu0 0.0
    %6802 = vmatprep.subr.mxu0 0.0
    %6803 = vmatpush1.msra.mxu0 0.0
    %6804 = vmatprep.subr.mxu0 0.0
    %6805 = vmatpush1.msra.mxu0 0.0
    %6806 = vmatprep.subr.mxu0 0.0
    %6807 = vmatpush1.msra.mxu0 0.0
    %6808 = vmatprep.subr.mxu0 0.0
    %6809 = vmatpush1.msra.mxu0 0.0
    %6810 = vmatprep.subr.mxu0 0.0
    %6811 = vmatpush1.msra.mxu0 0.0
    %6812 = vmatprep.subr.mxu0 0.0
    %6813 = vmatpush1.msra.mxu0 0.0
    %6814 = vmatprep.subr.mxu0 0.0
    %6815 = vmatpush1.msra.mxu0 0.0
    %6816 = vmatprep.subr.mxu0 0.0
    %6817 = vmatpush1.msra.mxu0 0.0
    %6818 = vmatprep.mubr.f32.mxu0 0.0
    %6819 = vmatmul.mubr.f32.gmra.mrb[0].mxu0 %v6752
    %v6820 = vpop.f32.mrb[0].mxu0
    %v6821 = vadd.f32 0.0, %v6820
    %v6822 = vpop.f32.mrb[0].mxu0
    %6823 = vdwg.mxu0
    %6824 = vmatprep.subr.mxu0 0.0
    %6825 = vmatpush1.msra.mxu0 %v6742
    %6826 = vmatprep.subr.mxu0 0.0
    %6827 = vmatpush1.msra.mxu0 %v6743
    %6828 = vmatprep.subr.mxu0 0.0
    %6829 = vmatpush1.msra.mxu0 %v6744
    %6830 = vmatprep.subr.mxu0 0.0
    %6831 = vmatpush1.msra.mxu0 %v6745
    %6832 = vmatprep.subr.mxu0 0.0
    %6833 = vmatpush1.msra.mxu0 0.0
    %6834 = vmatprep.subr.mxu0 0.0
    %6835 = vmatpush1.msra.mxu0 0.0
    %6836 = vmatprep.subr.mxu0 0.0
    %6837 = vmatpush1.msra.mxu0 0.0
    %6838 = vmatprep.subr.mxu0 0.0
    %6839 = vmatpush1.msra.mxu0 0.0
    %6840 = vmatprep.subr.mxu0 0.0
    %6841 = vmatpush1.msra.mxu0 0.0
    %6842 = vmatprep.subr.mxu0 0.0
    %6843 = vmatpush1.msra.mxu0 0.0
    %6844 = vmatprep.subr.mxu0 0.0
    %6845 = vmatpush1.msra.mxu0 0.0
    %6846 = vmatprep.subr.mxu0 0.0
    %6847 = vmatpush1.msra.mxu0 0.0
    %6848 = vmatprep.subr.mxu0 0.0
    %6849 = vmatpush1.msra.mxu0 0.0
    %6850 = vmatprep.subr.mxu0 0.0
    %6851 = vmatpush1.msra.mxu0 0.0
    %6852 = vmatprep.subr.mxu0 0.0
    %6853 = vmatpush1.msra.mxu0 0.0
    %6854 = vmatprep.subr.mxu0 0.0
    %6855 = vmatpush1.msra.mxu0 0.0
    %6856 = vmatprep.subr.mxu0 0.0
    %6857 = vmatpush1.msra.mxu0 0.0
    %6858 = vmatprep.subr.mxu0 0.0
    %6859 = vmatpush1.msra.mxu0 0.0
    %6860 = vmatprep.subr.mxu0 0.0
    %6861 = vmatpush1.msra.mxu0 0.0
    %6862 = vmatprep.subr.mxu0 0.0
    %6863 = vmatpush1.msra.mxu0 0.0
    %6864 = vmatprep.subr.mxu0 0.0
    %6865 = vmatpush1.msra.mxu0 0.0
    %6866 = vmatprep.subr.mxu0 0.0
    %6867 = vmatpush1.msra.mxu0 0.0
    %6868 = vmatprep.subr.mxu0 0.0
    %6869 = vmatpush1.msra.mxu0 0.0
    %6870 = vmatprep.subr.mxu0 0.0
    %6871 = vmatpush1.msra.mxu0 0.0
    %6872 = vmatprep.subr.mxu0 0.0
    %6873 = vmatpush1.msra.mxu0 0.0
    %6874 = vmatprep.subr.mxu0 0.0
    %6875 = vmatpush1.msra.mxu0 0.0
    %6876 = vmatprep.subr.mxu0 0.0
    %6877 = vmatpush1.msra.mxu0 0.0
    %6878 = vmatprep.subr.mxu0 0.0
    %6879 = vmatpush1.msra.mxu0 0.0
    %6880 = vmatprep.subr.mxu0 0.0
    %6881 = vmatpush1.msra.mxu0 0.0
    %6882 = vmatprep.subr.mxu0 0.0
    %6883 = vmatpush1.msra.mxu0 0.0
    %6884 = vmatprep.subr.mxu0 0.0
    %6885 = vmatpush1.msra.mxu0 0.0
    %6886 = vmatprep.subr.mxu0 0.0
    %6887 = vmatpush1.msra.mxu0 0.0
    %6888 = vmatprep.mubr.f32.mxu0 0.0
    %6889 = vmatmul.mubr.f32.gmra.mrb[0].mxu0 %v5827
    %v6890 = vpop.f32.mrb[0].mxu0
    %v6891 = vadd.f32 %v6821, %v6890
    %v6892 = vpop.f32.mrb[0].mxu0
    %6893 = vdwg.mxu0
    %s6894 = scalar_lea.vmem %s59, 24
    %v6895 = vld [vmem:[%s6894] sm:$0x1f]
    %v6897 = vsel %vm1815, %v6895, 0
    %6899 = vmatprep.subr.mxu0 0.0
    %6900 = vmatpush1.msra.mxu0 %v6897
    %6901 = vmatprep.subr.mxu0 0.0
    %6902 = vmatpush1.msra.mxu0 0.0
    %6903 = vmatprep.subr.mxu0 0.0
    %6904 = vmatpush1.msra.mxu0 0.0
    %6905 = vmatprep.subr.mxu0 0.0
    %6906 = vmatpush1.msra.mxu0 0.0
    %6907 = vmatprep.subr.mxu0 0.0
    %6908 = vmatpush1.msra.mxu0 0.0
    %6909 = vmatprep.subr.mxu0 0.0
    %6910 = vmatpush1.msra.mxu0 0.0
    %6911 = vmatprep.subr.mxu0 0.0
    %6912 = vmatpush1.msra.mxu0 0.0
    %6913 = vmatprep.subr.mxu0 0.0
    %6914 = vmatpush1.msra.mxu0 0.0
    %6915 = vmatprep.subr.mxu0 0.0
    %6916 = vmatpush1.msra.mxu0 0.0
    %6917 = vmatprep.subr.mxu0 0.0
    %6918 = vmatpush1.msra.mxu0 0.0
    %6919 = vmatprep.subr.mxu0 0.0
    %6920 = vmatpush1.msra.mxu0 0.0
    %6921 = vmatprep.subr.mxu0 0.0
    %6922 = vmatpush1.msra.mxu0 0.0
    %6923 = vmatprep.subr.mxu0 0.0
    %6924 = vmatpush1.msra.mxu0 0.0
    %6925 = vmatprep.subr.mxu0 0.0
    %6926 = vmatpush1.msra.mxu0 0.0
    %6927 = vmatprep.subr.mxu0 0.0
    %6928 = vmatpush1.msra.mxu0 0.0
    %6929 = vmatprep.subr.mxu0 0.0
    %6930 = vmatpush1.msra.mxu0 0.0
    %6931 = vmatprep.subr.mxu0 0.0
    %6932 = vmatpush1.msra.mxu0 0.0
    %6933 = vmatprep.subr.mxu0 0.0
    %6934 = vmatpush1.msra.mxu0 0.0
    %6935 = vmatprep.subr.mxu0 0.0
    %6936 = vmatpush1.msra.mxu0 0.0
    %6937 = vmatprep.subr.mxu0 0.0
    %6938 = vmatpush1.msra.mxu0 0.0
    %6939 = vmatprep.subr.mxu0 0.0
    %6940 = vmatpush1.msra.mxu0 0.0
    %6941 = vmatprep.subr.mxu0 0.0
    %6942 = vmatpush1.msra.mxu0 0.0
    %6943 = vmatprep.subr.mxu0 0.0
    %6944 = vmatpush1.msra.mxu0 0.0
    %6945 = vmatprep.subr.mxu0 0.0
    %6946 = vmatpush1.msra.mxu0 0.0
    %6947 = vmatprep.subr.mxu0 0.0
    %6948 = vmatpush1.msra.mxu0 0.0
    %6949 = vmatprep.subr.mxu0 0.0
    %6950 = vmatpush1.msra.mxu0 0.0
    %6951 = vmatprep.subr.mxu0 0.0
    %6952 = vmatpush1.msra.mxu0 0.0
    %6953 = vmatprep.subr.mxu0 0.0
    %6954 = vmatpush1.msra.mxu0 0.0
    %6955 = vmatprep.subr.mxu0 0.0
    %6956 = vmatpush1.msra.mxu0 0.0
    %6957 = vmatprep.subr.mxu0 0.0
    %6958 = vmatpush1.msra.mxu0 0.0
    %6959 = vmatprep.subr.mxu0 0.0
    %6960 = vmatpush1.msra.mxu0 0.0
    %6961 = vmatprep.subr.mxu0 0.0
    %6962 = vmatpush1.msra.mxu0 0.0
    %6963 = vmatprep.mubr.f32.mxu0 0.0
    %6964 = vmatmul.mubr.f32.gmra.mrb[0].mxu0 %v1813
    %v6965 = vpop.f32.mrb[0].mxu0
    %v6966 = vadd.f32 0.0, %v6965
    %v6967 = vpop.f32.mrb[0].mxu0
    %6968 = vdwg.mxu0
    %v6969 = vadd.f32 %v6891, %v6966
    %s6970 = scalar_lea.vmem [#allocation23], 3
    %v6971 = vld [vmem:[%s6970] sm:$0x1]
    %v6973 = vlaneseq
    %v6974 = vshrl.u32 %v6973, 7
    %v6975 = vsub.s32 0, %v6974
    %v6976 = vrot.slane %v6971, %v6975
    %v6978 = vadd.f32 %v6969, %v6976
    %v6979 = vsub.f32 0.0, %v6978
    %v6980 = vmul.f32 %v6979, 1.442695
    %v6981 = vpow.pop %v6980
    %v6982 = vadd.f32 %v6981, 1.0
    %v6983 = vrcp.pop %v6982
    %v6984 = vmul.f32 1.0, %v6983
    %v6985 = vmul.f32 %v6978, %v6984
    %s6986 = scalar_lea.vmem [#allocation25], 96
    %v6987 = vld [vmem:[%s6986] sm:$0xff]
    %v6988 = vld [vmem:[%s6986 + $0x8] sm:$0xff]
    %v6989 = vld [vmem:[%s6986 + $0x10] sm:$0xff]
    %v6990 = vld [vmem:[%s6986 + $0x18] sm:$0xff]
    %v6992 = vsel %vm1913, %v6985, 0
    %6994 = vmatprep.subr.mxu0 0.0
    %6995 = vmatpush1.msra.mxu0 %v6987
    %6996 = vmatprep.subr.mxu0 0.0
    %6997 = vmatpush1.msra.mxu0 %v6988
    %6998 = vmatprep.subr.mxu0 0.0
    %6999 = vmatpush1.msra.mxu0 %v6989
    %7000 = vmatprep.subr.mxu0 0.0
    %7001 = vmatpush1.msra.mxu0 %v6990
    %7002 = vmatprep.subr.mxu0 0.0
    %7003 = vmatpush1.msra.mxu0 0.0
    %7004 = vmatprep.subr.mxu0 0.0
    %7005 = vmatpush1.msra.mxu0 0.0
    %7006 = vmatprep.subr.mxu0 0.0
    %7007 = vmatpush1.msra.mxu0 0.0
    %7008 = vmatprep.subr.mxu0 0.0
    %7009 = vmatpush1.msra.mxu0 0.0
    %7010 = vmatprep.subr.mxu0 0.0
    %7011 = vmatpush1.msra.mxu0 0.0
    %7012 = vmatprep.subr.mxu0 0.0
    %7013 = vmatpush1.msra.mxu0 0.0
    %7014 = vmatprep.subr.mxu0 0.0
    %7015 = vmatpush1.msra.mxu0 0.0
    %7016 = vmatprep.subr.mxu0 0.0
    %7017 = vmatpush1.msra.mxu0 0.0
    %7018 = vmatprep.subr.mxu0 0.0
    %7019 = vmatpush1.msra.mxu0 0.0
    %7020 = vmatprep.subr.mxu0 0.0
    %7021 = vmatpush1.msra.mxu0 0.0
    %7022 = vmatprep.subr.mxu0 0.0
    %7023 = vmatpush1.msra.mxu0 0.0
    %7024 = vmatprep.subr.mxu0 0.0
    %7025 = vmatpush1.msra.mxu0 0.0
    %7026 = vmatprep.subr.mxu0 0.0
    %7027 = vmatpush1.msra.mxu0 0.0
    %7028 = vmatprep.subr.mxu0 0.0
    %7029 = vmatpush1.msra.mxu0 0.0
    %7030 = vmatprep.subr.mxu0 0.0
    %7031 = vmatpush1.msra.mxu0 0.0
    %7032 = vmatprep.subr.mxu0 0.0
    %7033 = vmatpush1.msra.mxu0 0.0
    %7034 = vmatprep.subr.mxu0 0.0
    %7035 = vmatpush1.msra.mxu0 0.0
    %7036 = vmatprep.subr.mxu0 0.0
    %7037 = vmatpush1.msra.mxu0 0.0
    %7038 = vmatprep.subr.mxu0 0.0
    %7039 = vmatpush1.msra.mxu0 0.0
    %7040 = vmatprep.subr.mxu0 0.0
    %7041 = vmatpush1.msra.mxu0 0.0
    %7042 = vmatprep.subr.mxu0 0.0
    %7043 = vmatpush1.msra.mxu0 0.0
    %7044 = vmatprep.subr.mxu0 0.0
    %7045 = vmatpush1.msra.mxu0 0.0
    %7046 = vmatprep.subr.mxu0 0.0
    %7047 = vmatpush1.msra.mxu0 0.0
    %7048 = vmatprep.subr.mxu0 0.0
    %7049 = vmatpush1.msra.mxu0 0.0
    %7050 = vmatprep.subr.mxu0 0.0
    %7051 = vmatpush1.msra.mxu0 0.0
    %7052 = vmatprep.subr.mxu0 0.0
    %7053 = vmatpush1.msra.mxu0 0.0
    %7054 = vmatprep.subr.mxu0 0.0
    %7055 = vmatpush1.msra.mxu0 0.0
    %7056 = vmatprep.subr.mxu0 0.0
    %7057 = vmatpush1.msra.mxu0 0.0
    %7058 = vmatprep.mubr.f32.mxu0 0.0
    %7059 = vmatmul.mubr.f32.gmra.mrb[0].mxu0 %v6992
    %v7060 = vpop.f32.mrb[0].mxu0
    %v7061 = vadd.f32 0.0, %v7060
    %v7062 = vpop.f32.mrb[0].mxu0
    %7063 = vdwg.mxu0
    %v7064 = vadd.f32 %v5820, %v7061
    %s7065 = scalar_lea.vmem [#allocation26], 3
    %v7066 = vld [vmem:[%s7065] sm:$0x1]
    %v7068 = vlaneseq
    %v7069 = vshrl.u32 %v7068, 7
    %v7070 = vsub.s32 0, %v7069
    %v7071 = vrot.slane %v7066, %v7070
    %v7073 = vadd.f32 %v7064, %v7071
    %v7074 = vld [vmem:[%s67] sm:$0xff]
    %v7075 = vld [vmem:[%s67 + $0x8] sm:$0xff]
    %v7076 = vld [vmem:[%s67 + $0x10] sm:$0xff]
    %v7077 = vld [vmem:[%s67 + $0x18] sm:$0xff]
    %v7078 = vld [vmem:[#allocation28] sm:$0x1]
    %v7080 = vlaneseq
    %v7081 = vshrl.u32 %v7080, 7
    %v7082 = vsub.s32 0, %v7081
    %v7083 = vrot.slane %v7078, %v7082
    %v7086 = vsel %vm1913, %v7073, 0
    %7088 = vmatprep.subr.mxu0 0.0
    %7089 = vmatpush1.msra.mxu0 %v7074
    %7090 = vmatprep.subr.mxu0 0.0
    %7091 = vmatpush1.msra.mxu0 %v7075
    %7092 = vmatprep.subr.mxu0 0.0
    %7093 = vmatpush1.msra.mxu0 %v7076
    %7094 = vmatprep.subr.mxu0 0.0
    %7095 = vmatpush1.msra.mxu0 %v7077
    %7096 = vmatprep.subr.mxu0 0.0
    %7097 = vmatpush1.msra.mxu0 0.0
    %7098 = vmatprep.subr.mxu0 0.0
    %7099 = vmatpush1.msra.mxu0 0.0
    %7100 = vmatprep.subr.mxu0 0.0
    %7101 = vmatpush1.msra.mxu0 0.0
    %7102 = vmatprep.subr.mxu0 0.0
    %7103 = vmatpush1.msra.mxu0 0.0
    %7104 = vmatprep.subr.mxu0 0.0
    %7105 = vmatpush1.msra.mxu0 0.0
    %7106 = vmatprep.subr.mxu0 0.0
    %7107 = vmatpush1.msra.mxu0 0.0
    %7108 = vmatprep.subr.mxu0 0.0
    %7109 = vmatpush1.msra.mxu0 0.0
    %7110 = vmatprep.subr.mxu0 0.0
    %7111 = vmatpush1.msra.mxu0 0.0
    %7112 = vmatprep.subr.mxu0 0.0
    %7113 = vmatpush1.msra.mxu0 0.0
    %7114 = vmatprep.subr.mxu0 0.0
    %7115 = vmatpush1.msra.mxu0 0.0
    %7116 = vmatprep.subr.mxu0 0.0
    %7117 = vmatpush1.msra.mxu0 0.0
    %7118 = vmatprep.subr.mxu0 0.0
    %7119 = vmatpush1.msra.mxu0 0.0
    %7120 = vmatprep.subr.mxu0 0.0
    %7121 = vmatpush1.msra.mxu0 0.0
    %7122 = vmatprep.subr.mxu0 0.0
    %7123 = vmatpush1.msra.mxu0 0.0
    %7124 = vmatprep.subr.mxu0 0.0
    %7125 = vmatpush1.msra.mxu0 0.0
    %7126 = vmatprep.subr.mxu0 0.0
    %7127 = vmatpush1.msra.mxu0 0.0
    %7128 = vmatprep.subr.mxu0 0.0
    %7129 = vmatpush1.msra.mxu0 0.0
    %7130 = vmatprep.subr.mxu0 0.0
    %7131 = vmatpush1.msra.mxu0 0.0
    %7132 = vmatprep.subr.mxu0 0.0
    %7133 = vmatpush1.msra.mxu0 0.0
    %7134 = vmatprep.subr.mxu0 0.0
    %7135 = vmatpush1.msra.mxu0 0.0
    %7136 = vmatprep.subr.mxu0 0.0
    %7137 = vmatpush1.msra.mxu0 0.0
    %7138 = vmatprep.subr.mxu0 0.0
    %7139 = vmatpush1.msra.mxu0 0.0
    %7140 = vmatprep.subr.mxu0 0.0
    %7141 = vmatpush1.msra.mxu0 0.0
    %7142 = vmatprep.subr.mxu0 0.0
    %7143 = vmatpush1.msra.mxu0 0.0
    %7144 = vmatprep.subr.mxu0 0.0
    %7145 = vmatpush1.msra.mxu0 0.0
    %7146 = vmatprep.subr.mxu0 0.0
    %7147 = vmatpush1.msra.mxu0 0.0
    %7148 = vmatprep.subr.mxu0 0.0
    %7149 = vmatpush1.msra.mxu0 0.0
    %7150 = vmatprep.subr.mxu0 0.0
    %7151 = vmatpush1.msra.mxu0 0.0
    %7152 = vmatprep.mubr.f32.mxu0 0.0
    %7153 = vmatmul.mubr.f32.gmra.mrb[0].mxu0 %v7086
    %v7154 = vpop.f32.mrb[0].mxu0
    %v7155 = vadd.f32 %v7083, %v7154
    %v7156 = vpop.f32.mrb[0].mxu0
    %7157 = vdwg.mxu0
    %v7158 = vsub.f32 0.0, %v7155
    %v7159 = vmul.f32 %v7158, 1.442695
    %v7160 = vpow.pop %v7159
    %v7161 = vadd.f32 %v7160, 1.0
    %v7162 = vrcp.pop %v7161
    %v7163 = vmul.f32 1.0, %v7162
    %v7164 = vmul.f32 %v7155, %v7163
    %v7165 = vld [vmem:[%s71] sm:$0xff]
    %v7166 = vld [vmem:[%s71 + $0x8] sm:$0xff]
    %v7167 = vld [vmem:[%s71 + $0x10] sm:$0xff]
    %v7168 = vld [vmem:[%s71 + $0x18] sm:$0xff]
    %v7169 = vld [vmem:[%s73] sm:$0x1]
    %v7171 = vlaneseq
    %v7172 = vshrl.u32 %v7171, 7
    %v7173 = vsub.s32 0, %v7172
    %v7174 = vrot.slane %v7169, %v7173
    %v7177 = vsel %vm1913, %v7164, 0
    %7179 = vmatprep.subr.mxu0 0.0
    %7180 = vmatpush1.msra.mxu0 %v7165
    %7181 = vmatprep.subr.mxu0 0.0
    %7182 = vmatpush1.msra.mxu0 %v7166
    %7183 = vmatprep.subr.mxu0 0.0
    %7184 = vmatpush1.msra.mxu0 %v7167
    %7185 = vmatprep.subr.mxu0 0.0
    %7186 = vmatpush1.msra.mxu0 %v7168
    %7187 = vmatprep.subr.mxu0 0.0
    %7188 = vmatpush1.msra.mxu0 0.0
    %7189 = vmatprep.subr.mxu0 0.0
    %7190 = vmatpush1.msra.mxu0 0.0
    %7191 = vmatprep.subr.mxu0 0.0
    %7192 = vmatpush1.msra.mxu0 0.0
    %7193 = vmatprep.subr.mxu0 0.0
    %7194 = vmatpush1.msra.mxu0 0.0
    %7195 = vmatprep.subr.mxu0 0.0
    %7196 = vmatpush1.msra.mxu0 0.0
    %7197 = vmatprep.subr.mxu0 0.0
    %7198 = vmatpush1.msra.mxu0 0.0
    %7199 = vmatprep.subr.mxu0 0.0
    %7200 = vmatpush1.msra.mxu0 0.0
    %7201 = vmatprep.subr.mxu0 0.0
    %7202 = vmatpush1.msra.mxu0 0.0
    %7203 = vmatprep.subr.mxu0 0.0
    %7204 = vmatpush1.msra.mxu0 0.0
    %7205 = vmatprep.subr.mxu0 0.0
    %7206 = vmatpush1.msra.mxu0 0.0
    %7207 = vmatprep.subr.mxu0 0.0
    %7208 = vmatpush1.msra.mxu0 0.0
    %7209 = vmatprep.subr.mxu0 0.0
    %7210 = vmatpush1.msra.mxu0 0.0
    %7211 = vmatprep.subr.mxu0 0.0
    %7212 = vmatpush1.msra.mxu0 0.0
    %7213 = vmatprep.subr.mxu0 0.0
    %7214 = vmatpush1.msra.mxu0 0.0
    %7215 = vmatprep.subr.mxu0 0.0
    %7216 = vmatpush1.msra.mxu0 0.0
    %7217 = vmatprep.subr.mxu0 0.0
    %7218 = vmatpush1.msra.mxu0 0.0
    %7219 = vmatprep.subr.mxu0 0.0
    %7220 = vmatpush1.msra.mxu0 0.0
    %7221 = vmatprep.subr.mxu0 0.0
    %7222 = vmatpush1.msra.mxu0 0.0
    %7223 = vmatprep.subr.mxu0 0.0
    %7224 = vmatpush1.msra.mxu0 0.0
    %7225 = vmatprep.subr.mxu0 0.0
    %7226 = vmatpush1.msra.mxu0 0.0
    %7227 = vmatprep.subr.mxu0 0.0
    %7228 = vmatpush1.msra.mxu0 0.0
    %7229 = vmatprep.subr.mxu0 0.0
    %7230 = vmatpush1.msra.mxu0 0.0
    %7231 = vmatprep.subr.mxu0 0.0
    %7232 = vmatpush1.msra.mxu0 0.0
    %7233 = vmatprep.subr.mxu0 0.0
    %7234 = vmatpush1.msra.mxu0 0.0
    %7235 = vmatprep.subr.mxu0 0.0
    %7236 = vmatpush1.msra.mxu0 0.0
    %7237 = vmatprep.subr.mxu0 0.0
    %7238 = vmatpush1.msra.mxu0 0.0
    %7239 = vmatprep.subr.mxu0 0.0
    %7240 = vmatpush1.msra.mxu0 0.0
    %7241 = vmatprep.subr.mxu0 0.0
    %7242 = vmatpush1.msra.mxu0 0.0
    %7243 = vmatprep.mubr.f32.mxu0 0.0
    %7244 = vmatmul.mubr.f32.gmra.mrb[0].mxu0 %v7177
    %v7245 = vpop.f32.mrb[0].mxu0
    %v7246 = vadd.f32 %v7174, %v7245
    %v7247 = vpop.f32.mrb[0].mxu0
    %7248 = vdwg.mxu0
    %v7249 = vld [vmem:[%s15] sm:$0xff]
    %7251 = vset.pattern.permute.xlu0 0
    %7252 = vperm.xlu0 %7251, %v7249
    %v7253 = vpop.permute.xlu0 %7252
    %v7255 = vmul.f32 %v7246, %v7253
    %v7256 = vld [vmem:[#allocation7] sm:$0xff]
    %v7257 = vld [vmem:[#allocation29] sm:$0xff]
    %v7258 = vld [vmem:[#allocation29 + $0x8] sm:$0xff]
    %v7259 = vld [vmem:[#allocation29 + $0x10] sm:$0xff]
    %v7260 = vld [vmem:[#allocation29 + $0x18] sm:$0xff]
    %v7262 = vsel %vm1913, %v7255, 0
    %7264 = vmatprep.subr.mxu0 0.0
    %7265 = vmatpush1.msra.mxu0 %v7257
    %7266 = vmatprep.subr.mxu0 0.0
    %7267 = vmatpush1.msra.mxu0 %v7258
    %7268 = vmatprep.subr.mxu0 0.0
    %7269 = vmatpush1.msra.mxu0 %v7259
    %7270 = vmatprep.subr.mxu0 0.0
    %7271 = vmatpush1.msra.mxu0 %v7260
    %7272 = vmatprep.subr.mxu0 0.0
    %7273 = vmatpush1.msra.mxu0 0.0
    %7274 = vmatprep.subr.mxu0 0.0
    %7275 = vmatpush1.msra.mxu0 0.0
    %7276 = vmatprep.subr.mxu0 0.0
    %7277 = vmatpush1.msra.mxu0 0.0
    %7278 = vmatprep.subr.mxu0 0.0
    %7279 = vmatpush1.msra.mxu0 0.0
    %7280 = vmatprep.subr.mxu0 0.0
    %7281 = vmatpush1.msra.mxu0 0.0
    %7282 = vmatprep.subr.mxu0 0.0
    %7283 = vmatpush1.msra.mxu0 0.0
    %7284 = vmatprep.subr.mxu0 0.0
    %7285 = vmatpush1.msra.mxu0 0.0
    %7286 = vmatprep.subr.mxu0 0.0
    %7287 = vmatpush1.msra.mxu0 0.0
    %7288 = vmatprep.subr.mxu0 0.0
    %7289 = vmatpush1.msra.mxu0 0.0
    %7290 = vmatprep.subr.mxu0 0.0
    %7291 = vmatpush1.msra.mxu0 0.0
    %7292 = vmatprep.subr.mxu0 0.0
    %7293 = vmatpush1.msra.mxu0 0.0
    %7294 = vmatprep.subr.mxu0 0.0
    %7295 = vmatpush1.msra.mxu0 0.0
    %7296 = vmatprep.subr.mxu0 0.0
    %7297 = vmatpush1.msra.mxu0 0.0
    %7298 = vmatprep.subr.mxu0 0.0
    %7299 = vmatpush1.msra.mxu0 0.0
    %7300 = vmatprep.subr.mxu0 0.0
    %7301 = vmatpush1.msra.mxu0 0.0
    %7302 = vmatprep.subr.mxu0 0.0
    %7303 = vmatpush1.msra.mxu0 0.0
    %7304 = vmatprep.subr.mxu0 0.0
    %7305 = vmatpush1.msra.mxu0 0.0
    %7306 = vmatprep.subr.mxu0 0.0
    %7307 = vmatpush1.msra.mxu0 0.0
    %7308 = vmatprep.subr.mxu0 0.0
    %7309 = vmatpush1.msra.mxu0 0.0
    %7310 = vmatprep.subr.mxu0 0.0
    %7311 = vmatpush1.msra.mxu0 0.0
    %7312 = vmatprep.subr.mxu0 0.0
    %7313 = vmatpush1.msra.mxu0 0.0
    %7314 = vmatprep.subr.mxu0 0.0
    %7315 = vmatpush1.msra.mxu0 0.0
    %7316 = vmatprep.subr.mxu0 0.0
    %7317 = vmatpush1.msra.mxu0 0.0
    %7318 = vmatprep.subr.mxu0 0.0
    %7319 = vmatpush1.msra.mxu0 0.0
    %7320 = vmatprep.subr.mxu0 0.0
    %7321 = vmatpush1.msra.mxu0 0.0
    %7322 = vmatprep.subr.mxu0 0.0
    %7323 = vmatpush1.msra.mxu0 0.0
    %7324 = vmatprep.subr.mxu0 0.0
    %7325 = vmatpush1.msra.mxu0 0.0
    %7326 = vmatprep.subr.mxu0 0.0
    %7327 = vmatpush1.msra.mxu0 0.0
    %7328 = vmatprep.mubr.f32.mxu0 0.0
    %7329 = vmatmul.mubr.f32.gmra.mrb[0].mxu0 %v7262
    %v7330 = vpop.f32.mrb[0].mxu0
    %v7331 = vadd.f32 0.0, %v7330
    %v7332 = vpop.f32.mrb[0].mxu0
    %7333 = vdwg.mxu0
    %v7335 = vsel %vm2061, %v7256, 0
    %7337 = vmatprep.subr.mxu0 0.0
    %7338 = vmatpush1.msra.mxu0 %v7331
    %7339 = vmatprep.subr.mxu0 0.0
    %7340 = vmatpush1.msra.mxu0 0.0
    %7341 = vmatprep.subr.mxu0 0.0
    %7342 = vmatpush1.msra.mxu0 0.0
    %7343 = vmatprep.subr.mxu0 0.0
    %7344 = vmatpush1.msra.mxu0 0.0
    %7345 = vmatprep.subr.mxu0 0.0
    %7346 = vmatpush1.msra.mxu0 0.0
    %7347 = vmatprep.subr.mxu0 0.0
    %7348 = vmatpush1.msra.mxu0 0.0
    %7349 = vmatprep.subr.mxu0 0.0
    %7350 = vmatpush1.msra.mxu0 0.0
    %7351 = vmatprep.subr.mxu0 0.0
    %7352 = vmatpush1.msra.mxu0 0.0
    %7353 = vmatprep.subr.mxu0 0.0
    %7354 = vmatpush1.msra.mxu0 0.0
    %7355 = vmatprep.subr.mxu0 0.0
    %7356 = vmatpush1.msra.mxu0 0.0
    %7357 = vmatprep.subr.mxu0 0.0
    %7358 = vmatpush1.msra.mxu0 0.0
    %7359 = vmatprep.subr.mxu0 0.0
    %7360 = vmatpush1.msra.mxu0 0.0
    %7361 = vmatprep.subr.mxu0 0.0
    %7362 = vmatpush1.msra.mxu0 0.0
    %7363 = vmatprep.subr.mxu0 0.0
    %7364 = vmatpush1.msra.mxu0 0.0
    %7365 = vmatprep.subr.mxu0 0.0
    %7366 = vmatpush1.msra.mxu0 0.0
    %7367 = vmatprep.subr.mxu0 0.0
    %7368 = vmatpush1.msra.mxu0 0.0
    %7369 = vmatprep.subr.mxu0 0.0
    %7370 = vmatpush1.msra.mxu0 0.0
    %7371 = vmatprep.subr.mxu0 0.0
    %7372 = vmatpush1.msra.mxu0 0.0
    %7373 = vmatprep.subr.mxu0 0.0
    %7374 = vmatpush1.msra.mxu0 0.0
    %7375 = vmatprep.subr.mxu0 0.0
    %7376 = vmatpush1.msra.mxu0 0.0
    %7377 = vmatprep.subr.mxu0 0.0
    %7378 = vmatpush1.msra.mxu0 0.0
    %7379 = vmatprep.subr.mxu0 0.0
    %7380 = vmatpush1.msra.mxu0 0.0
    %7381 = vmatprep.subr.mxu0 0.0
    %7382 = vmatpush1.msra.mxu0 0.0
    %7383 = vmatprep.subr.mxu0 0.0
    %7384 = vmatpush1.msra.mxu0 0.0
    %7385 = vmatprep.subr.mxu0 0.0
    %7386 = vmatpush1.msra.mxu0 0.0
    %7387 = vmatprep.subr.mxu0 0.0
    %7388 = vmatpush1.msra.mxu0 0.0
    %7389 = vmatprep.subr.mxu0 0.0
    %7390 = vmatpush1.msra.mxu0 0.0
    %7391 = vmatprep.subr.mxu0 0.0
    %7392 = vmatpush1.msra.mxu0 0.0
    %7393 = vmatprep.subr.mxu0 0.0
    %7394 = vmatpush1.msra.mxu0 0.0
    %7395 = vmatprep.subr.mxu0 0.0
    %7396 = vmatpush1.msra.mxu0 0.0
    %7397 = vmatprep.subr.mxu0 0.0
    %7398 = vmatpush1.msra.mxu0 0.0
    %7399 = vmatprep.subr.mxu0 0.0
    %7400 = vmatpush1.msra.mxu0 0.0
    %7401 = vmatprep.mubr.f32.mxu0 0.0
    %7402 = vmatmul.mubr.f32.gmra.mrb[0].mxu0 %v7335
    %v7403 = vpop.f32.mrb[0].mxu0
    %v7404 = vadd.f32 0.0, %v7403
    %v7405 = vpop.f32.mrb[0].mxu0
    %7406 = vdwg.mxu0
    %v7408 = vrot.slane %v7404, 2
    %v7410 = vmin.f32 %v7404, %v7408
    %v7411 = vmax.f32 %v7404, %v7408
    %v7413 = vrot.slane %v7410, 4
    %v7415 = vmin.f32 %v7411, %v7413
    %v7416 = vmax.f32 %v7411, %v7413
    %v7417 = vmin.f32 %v7410, %v7415
    %v7418 = vmax.f32 %v7410, %v7415
    %v7420 = vrot.slane %v7411, 4
    %v7422 = vmin.f32 %v7416, %v7420
    %v7423 = vmax.f32 %v7416, %v7420
    %v7424 = vmin.f32 %v7418, %v7422
    %v7425 = vmax.f32 %v7418, %v7422
    %v7426 = vld [vmem:[%s77] sm:$0xf]
    %v7427 = vlaneseq
    %v7428 = vshrl.u32 %v7427, 7
    %v7429 = vsub.s32 0, %v7428
    %v7430 = vrot.slane %v7426, %v7429
    %v7431 = vmul.f32 %v7417, %v7430
    %v7432 = vlaneseq
    %v7433 = vshrl.u32 %v7432, 7
    %v7434 = vsub.s32 1, %v7433
    %v7435 = vrot.slane %v7426, %v7434
    %v7436 = vmul.f32 %v7424, %v7435
    %v7437 = vadd.f32 %v7431, %v7436
    %v7438 = vlaneseq
    %v7439 = vshrl.u32 %v7438, 7
    %v7440 = vsub.s32 2, %v7439
    %v7441 = vrot.slane %v7426, %v7440
    %v7442 = vmul.f32 %v7425, %v7441
    %v7443 = vadd.f32 %v7437, %v7442
    %v7444 = vlaneseq
    %v7445 = vshrl.u32 %v7444, 7
    %v7446 = vsub.s32 3, %v7445
    %v7447 = vrot.slane %v7426, %v7446
    %v7448 = vmul.f32 %v7423, %v7447
    %v7449 = vadd.f32 %v7443, %v7448
    %v7450 = vld [vmem:[#allocation31] sm:$0xff]
    %v7451 = vld [vmem:[#allocation31 + $0x8] sm:$0xff]
    %v7452 = vld [vmem:[#allocation31 + $0x10] sm:$0xff]
    %v7453 = vld [vmem:[#allocation31 + $0x18] sm:$0xff]
    %v7454 = vld [vmem:[%s81] sm:$0x1]
    %v7456 = vlaneseq
    %v7457 = vshrl.u32 %v7456, 7
    %v7458 = vsub.s32 0, %v7457
    %v7459 = vrot.slane %v7454, %v7458
    %v7462 = vsel %vm1913, %v7449, 0
    %7464 = vmatprep.subr.mxu0 0.0
    %7465 = vmatpush1.msra.mxu0 %v7450
    %7466 = vmatprep.subr.mxu0 0.0
    %7467 = vmatpush1.msra.mxu0 %v7451
    %7468 = vmatprep.subr.mxu0 0.0
    %7469 = vmatpush1.msra.mxu0 %v7452
    %7470 = vmatprep.subr.mxu0 0.0
    %7471 = vmatpush1.msra.mxu0 %v7453
    %7472 = vmatprep.subr.mxu0 0.0
    %7473 = vmatpush1.msra.mxu0 0.0
    %7474 = vmatprep.subr.mxu0 0.0
    %7475 = vmatpush1.msra.mxu0 0.0
    %7476 = vmatprep.subr.mxu0 0.0
    %7477 = vmatpush1.msra.mxu0 0.0
    %7478 = vmatprep.subr.mxu0 0.0
    %7479 = vmatpush1.msra.mxu0 0.0
    %7480 = vmatprep.subr.mxu0 0.0
    %7481 = vmatpush1.msra.mxu0 0.0
    %7482 = vmatprep.subr.mxu0 0.0
    %7483 = vmatpush1.msra.mxu0 0.0
    %7484 = vmatprep.subr.mxu0 0.0
    %7485 = vmatpush1.msra.mxu0 0.0
    %7486 = vmatprep.subr.mxu0 0.0
    %7487 = vmatpush1.msra.mxu0 0.0
    %7488 = vmatprep.subr.mxu0 0.0
    %7489 = vmatpush1.msra.mxu0 0.0
    %7490 = vmatprep.subr.mxu0 0.0
    %7491 = vmatpush1.msra.mxu0 0.0
    %7492 = vmatprep.subr.mxu0 0.0
    %7493 = vmatpush1.msra.mxu0 0.0
    %7494 = vmatprep.subr.mxu0 0.0
    %7495 = vmatpush1.msra.mxu0 0.0
    %7496 = vmatprep.subr.mxu0 0.0
    %7497 = vmatpush1.msra.mxu0 0.0
    %7498 = vmatprep.subr.mxu0 0.0
    %7499 = vmatpush1.msra.mxu0 0.0
    %7500 = vmatprep.subr.mxu0 0.0
    %7501 = vmatpush1.msra.mxu0 0.0
    %7502 = vmatprep.subr.mxu0 0.0
    %7503 = vmatpush1.msra.mxu0 0.0
    %7504 = vmatprep.subr.mxu0 0.0
    %7505 = vmatpush1.msra.mxu0 0.0
    %7506 = vmatprep.subr.mxu0 0.0
    %7507 = vmatpush1.msra.mxu0 0.0
    %7508 = vmatprep.subr.mxu0 0.0
    %7509 = vmatpush1.msra.mxu0 0.0
    %7510 = vmatprep.subr.mxu0 0.0
    %7511 = vmatpush1.msra.mxu0 0.0
    %7512 = vmatprep.subr.mxu0 0.0
    %7513 = vmatpush1.msra.mxu0 0.0
    %7514 = vmatprep.subr.mxu0 0.0
    %7515 = vmatpush1.msra.mxu0 0.0
    %7516 = vmatprep.subr.mxu0 0.0
    %7517 = vmatpush1.msra.mxu0 0.0
    %7518 = vmatprep.subr.mxu0 0.0
    %7519 = vmatpush1.msra.mxu0 0.0
    %7520 = vmatprep.subr.mxu0 0.0
    %7521 = vmatpush1.msra.mxu0 0.0
    %7522 = vmatprep.subr.mxu0 0.0
    %7523 = vmatpush1.msra.mxu0 0.0
    %7524 = vmatprep.subr.mxu0 0.0
    %7525 = vmatpush1.msra.mxu0 0.0
    %7526 = vmatprep.subr.mxu0 0.0
    %7527 = vmatpush1.msra.mxu0 0.0
    %7528 = vmatprep.mubr.f32.mxu0 0.0
    %7529 = vmatmul.mubr.f32.gmra.mrb[0].mxu0 %v7462
    %v7530 = vpop.f32.mrb[0].mxu0
    %v7531 = vadd.f32 %v7459, %v7530
    %v7532 = vpop.f32.mrb[0].mxu0
    %7533 = vdwg.mxu0
    %v7534 = vsub.f32 0.0, %v7531
    %v7535 = vmul.f32 %v7534, 1.442695
    %v7536 = vpow.pop %v7535
    %v7537 = vadd.f32 %v7536, 1.0
    %v7538 = vrcp.pop %v7537
    %v7539 = vmul.f32 1.0, %v7538
    %v7540 = vmul.f32 %v7531, %v7539
    %v7541 = vld [vmem:[#allocation32] sm:$0xff]
    %v7542 = vld [vmem:[#allocation32 + $0x8] sm:$0xff]
    %v7543 = vld [vmem:[#allocation32 + $0x10] sm:$0xff]
    %v7544 = vld [vmem:[#allocation32 + $0x18] sm:$0xff]
    %v7545 = vld [vmem:[%s85] sm:$0x1]
    %v7547 = vlaneseq
    %v7548 = vshrl.u32 %v7547, 7
    %v7549 = vsub.s32 0, %v7548
    %v7550 = vrot.slane %v7545, %v7549
    %v7553 = vsel %vm1913, %v7540, 0
    %7555 = vmatprep.subr.mxu0 0.0
    %7556 = vmatpush1.msra.mxu0 %v7541
    %7557 = vmatprep.subr.mxu0 0.0
    %7558 = vmatpush1.msra.mxu0 %v7542
    %7559 = vmatprep.subr.mxu0 0.0
    %7560 = vmatpush1.msra.mxu0 %v7543
    %7561 = vmatprep.subr.mxu0 0.0
    %7562 = vmatpush1.msra.mxu0 %v7544
    %7563 = vmatprep.subr.mxu0 0.0
    %7564 = vmatpush1.msra.mxu0 0.0
    %7565 = vmatprep.subr.mxu0 0.0
    %7566 = vmatpush1.msra.mxu0 0.0
    %7567 = vmatprep.subr.mxu0 0.0
    %7568 = vmatpush1.msra.mxu0 0.0
    %7569 = vmatprep.subr.mxu0 0.0
    %7570 = vmatpush1.msra.mxu0 0.0
    %7571 = vmatprep.subr.mxu0 0.0
    %7572 = vmatpush1.msra.mxu0 0.0
    %7573 = vmatprep.subr.mxu0 0.0
    %7574 = vmatpush1.msra.mxu0 0.0
    %7575 = vmatprep.subr.mxu0 0.0
    %7576 = vmatpush1.msra.mxu0 0.0
    %7577 = vmatprep.subr.mxu0 0.0
    %7578 = vmatpush1.msra.mxu0 0.0
    %7579 = vmatprep.subr.mxu0 0.0
    %7580 = vmatpush1.msra.mxu0 0.0
    %7581 = vmatprep.subr.mxu0 0.0
    %7582 = vmatpush1.msra.mxu0 0.0
    %7583 = vmatprep.subr.mxu0 0.0
    %7584 = vmatpush1.msra.mxu0 0.0
    %7585 = vmatprep.subr.mxu0 0.0
    %7586 = vmatpush1.msra.mxu0 0.0
    %7587 = vmatprep.subr.mxu0 0.0
    %7588 = vmatpush1.msra.mxu0 0.0
    %7589 = vmatprep.subr.mxu0 0.0
    %7590 = vmatpush1.msra.mxu0 0.0
    %7591 = vmatprep.subr.mxu0 0.0
    %7592 = vmatpush1.msra.mxu0 0.0
    %7593 = vmatprep.subr.mxu0 0.0
    %7594 = vmatpush1.msra.mxu0 0.0
    %7595 = vmatprep.subr.mxu0 0.0
    %7596 = vmatpush1.msra.mxu0 0.0
    %7597 = vmatprep.subr.mxu0 0.0
    %7598 = vmatpush1.msra.mxu0 0.0
    %7599 = vmatprep.subr.mxu0 0.0
    %7600 = vmatpush1.msra.mxu0 0.0
    %7601 = vmatprep.subr.mxu0 0.0
    %7602 = vmatpush1.msra.mxu0 0.0
    %7603 = vmatprep.subr.mxu0 0.0
    %7604 = vmatpush1.msra.mxu0 0.0
    %7605 = vmatprep.subr.mxu0 0.0
    %7606 = vmatpush1.msra.mxu0 0.0
    %7607 = vmatprep.subr.mxu0 0.0
    %7608 = vmatpush1.msra.mxu0 0.0
    %7609 = vmatprep.subr.mxu0 0.0
    %7610 = vmatpush1.msra.mxu0 0.0
    %7611 = vmatprep.subr.mxu0 0.0
    %7612 = vmatpush1.msra.mxu0 0.0
    %7613 = vmatprep.subr.mxu0 0.0
    %7614 = vmatpush1.msra.mxu0 0.0
    %7615 = vmatprep.subr.mxu0 0.0
    %7616 = vmatpush1.msra.mxu0 0.0
    %7617 = vmatprep.subr.mxu0 0.0
    %7618 = vmatpush1.msra.mxu0 0.0
    %7619 = vmatprep.mubr.f32.mxu0 0.0
    %7620 = vmatmul.mubr.f32.gmra.mrb[0].mxu0 %v7553
    %v7621 = vpop.f32.mrb[0].mxu0
    %v7622 = vadd.f32 %v7550, %v7621
    %v7623 = vpop.f32.mrb[0].mxu0
    %7624 = vdwg.mxu0
    %v7625 = vsub.f32 0.0, %v7622
    %v7626 = vmul.f32 %v7625, 1.442695
    %v7627 = vpow.pop %v7626
    %v7628 = vadd.f32 %v7627, 1.0
    %v7629 = vrcp.pop %v7628
    %v7630 = vmul.f32 1.0, %v7629
    %v7631 = vmul.f32 %v7622, %v7630
    %v7632 = vld [vmem:[%s87] sm:$0xff]
    %v7633 = vld [vmem:[%s87 + $0x8] sm:$0xff]
    %v7634 = vld [vmem:[%s87 + $0x10] sm:$0xff]
    %v7635 = vld [vmem:[%s87 + $0x18] sm:$0xff]
    %v7636 = vld [vmem:[#allocation2] sm:$0x1]
    %v7638 = vlaneseq
    %v7639 = vshrl.u32 %v7638, 7
    %v7640 = vsub.s32 0, %v7639
    %v7641 = vrot.slane %v7636, %v7640
    %v7644 = vsel %vm1913, %v7631, 0
    %7646 = vmatprep.subr.mxu0 0.0
    %7647 = vmatpush1.msra.mxu0 %v7632
    %7648 = vmatprep.subr.mxu0 0.0
    %7649 = vmatpush1.msra.mxu0 %v7633
    %7650 = vmatprep.subr.mxu0 0.0
    %7651 = vmatpush1.msra.mxu0 %v7634
    %7652 = vmatprep.subr.mxu0 0.0
    %7653 = vmatpush1.msra.mxu0 %v7635
    %7654 = vmatprep.subr.mxu0 0.0
    %7655 = vmatpush1.msra.mxu0 0.0
    %7656 = vmatprep.subr.mxu0 0.0
    %7657 = vmatpush1.msra.mxu0 0.0
    %7658 = vmatprep.subr.mxu0 0.0
    %7659 = vmatpush1.msra.mxu0 0.0
    %7660 = vmatprep.subr.mxu0 0.0
    %7661 = vmatpush1.msra.mxu0 0.0
    %7662 = vmatprep.subr.mxu0 0.0
    %7663 = vmatpush1.msra.mxu0 0.0
    %7664 = vmatprep.subr.mxu0 0.0
    %7665 = vmatpush1.msra.mxu0 0.0
    %7666 = vmatprep.subr.mxu0 0.0
    %7667 = vmatpush1.msra.mxu0 0.0
    %7668 = vmatprep.subr.mxu0 0.0
    %7669 = vmatpush1.msra.mxu0 0.0
    %7670 = vmatprep.subr.mxu0 0.0
    %7671 = vmatpush1.msra.mxu0 0.0
    %7672 = vmatprep.subr.mxu0 0.0
    %7673 = vmatpush1.msra.mxu0 0.0
    %7674 = vmatprep.subr.mxu0 0.0
    %7675 = vmatpush1.msra.mxu0 0.0
    %7676 = vmatprep.subr.mxu0 0.0
    %7677 = vmatpush1.msra.mxu0 0.0
    %7678 = vmatprep.subr.mxu0 0.0
    %7679 = vmatpush1.msra.mxu0 0.0
    %7680 = vmatprep.subr.mxu0 0.0
    %7681 = vmatpush1.msra.mxu0 0.0
    %7682 = vmatprep.subr.mxu0 0.0
    %7683 = vmatpush1.msra.mxu0 0.0
    %7684 = vmatprep.subr.mxu0 0.0
    %7685 = vmatpush1.msra.mxu0 0.0
    %7686 = vmatprep.subr.mxu0 0.0
    %7687 = vmatpush1.msra.mxu0 0.0
    %7688 = vmatprep.subr.mxu0 0.0
    %7689 = vmatpush1.msra.mxu0 0.0
    %7690 = vmatprep.subr.mxu0 0.0
    %7691 = vmatpush1.msra.mxu0 0.0
    %7692 = vmatprep.subr.mxu0 0.0
    %7693 = vmatpush1.msra.mxu0 0.0
    %7694 = vmatprep.subr.mxu0 0.0
    %7695 = vmatpush1.msra.mxu0 0.0
    %7696 = vmatprep.subr.mxu0 0.0
    %7697 = vmatpush1.msra.mxu0 0.0
    %7698 = vmatprep.subr.mxu0 0.0
    %7699 = vmatpush1.msra.mxu0 0.0
    %7700 = vmatprep.subr.mxu0 0.0
    %7701 = vmatpush1.msra.mxu0 0.0
    %7702 = vmatprep.subr.mxu0 0.0
    %7703 = vmatpush1.msra.mxu0 0.0
    %7704 = vmatprep.subr.mxu0 0.0
    %7705 = vmatpush1.msra.mxu0 0.0
    %7706 = vmatprep.subr.mxu0 0.0
    %7707 = vmatpush1.msra.mxu0 0.0
    %7708 = vmatprep.subr.mxu0 0.0
    %7709 = vmatpush1.msra.mxu0 0.0
    %7710 = vmatprep.mubr.f32.mxu0 0.0
    %7711 = vmatmul.mubr.f32.gmra.mrb[0].mxu0 %v7644
    %v7712 = vpop.f32.mrb[0].mxu0
    %v7713 = vadd.f32 %v7641, %v7712
    %v7714 = vpop.f32.mrb[0].mxu0
    %7715 = vdwg.mxu0
    %vm7716 = vcmask 1024
    %7717 = vst.msk [vmem:[%s91] sm:$0x3] %vm7716, %v7713
    // Predicated region
    $region262: #{tpu_custom_call.1} parent=1 // pred_check
      _
    $region263: #{tpu_custom_call.1} parent=1 // pred_check_branch
      %7719 = sbr.rel (0) target = $region265
    $region264: #{tpu_custom_call.1} parent=1 // pred_region
      _
    $region265: #{tpu_custom_call.1} parent=1 // pred_fallthru
      _
    // Predicated region
    $region266: #{tpu_custom_call.1} parent=1 // pred_check
      _
    $region267: #{tpu_custom_call.1} parent=1 // pred_check_branch
      %7721 = sbr.rel (0) target = $region269
    $region268: #{tpu_custom_call.1} parent=1 // pred_region
      _
    $region269: #{tpu_custom_call.1} parent=1 // pred_fallthru
      _
    %7722 = vsyncpa [#allocation4], 1
    %7723 = vsyncpa [#allocation6], 1
    %7724 = vsyncpa [#allocation9], 1
    %7725 = vsyncpa [#allocation12], 1
    %7726 = vsyncpa [#allocation15], 1
    %7727 = vsyncpa [#allocation18], 1
    %7728 = vsyncpa [#allocation21], 1
    %7729 = vsyncpa [#allocation24], 1
    %7730 = vsyncpa [#allocation27], 1
    %7731 = vsyncpa [#allocation30], 1
    %7732 = vsyncpa [#allocation33], 1

</llo_original>
